<compile_context>
chip_gen: v5e
topology: v5e:2x2
jax: 0.10.0
libtpu: 0.0.40
codegen_flags: <defaults>
</compile_context>

<pallas_src>
import math

import jax
import jax.numpy as jnp
from jax import lax
from jax.experimental import pallas as pl
from jax.experimental.pallas import tpu as pltpu

EPS = 1e-5  # torch.nn.LayerNorm default eps


def _layernorm(h, gamma, beta):
    mu = jnp.mean(h, axis=-1, keepdims=True)
    var = jnp.mean((h - mu) ** 2, axis=-1, keepdims=True)
    return (h - mu) * lax.rsqrt(var + EPS) * gamma + beta


def _gelu_exact(x):
    # torch.nn.GELU() default = exact (erf-based) GELU
    return 0.5 * x * (1.0 + lax.erf(x * (1.0 / math.sqrt(2.0))))


def _make_kernel(ffn_chunk):
    def bert_layer_kernel(lens_ref,                       # scalar-prefetch (SMEM)
                          xq_ref, xkv_ref,                # activations
                          wq_ref, bq_ref, wk_ref, bk_ref, wv_ref, bv_ref,
                          wp_ref, bp_ref, g1_ref, be1_ref,
                          w1_ref, bf1_ref, w2_ref, bf2_ref, g2_ref, be2_ref,
                          out_ref):
        b = pl.program_id(0)
        klen = lens_ref[b]                                # valid key length

        xq = xq_ref[0]                                    # (TQ, E) f32
        xkv = xkv_ref[0]                                  # (S,  E) f32
        tq, n_embed = xq.shape
        h_dim = w1_ref.shape[1]

        xq_b = xq.astype(jnp.bfloat16)
        xkv_b = xkv.astype(jnp.bfloat16)

        # --- single attention head: QKV projections (bf16 MXU, f32 acc) ---
        q = jnp.dot(xq_b, wq_ref[...],
                    preferred_element_type=jnp.float32) + bq_ref[...]
        k = jnp.dot(xkv_b, wk_ref[...],
                    preferred_element_type=jnp.float32) + bk_ref[...]
        v = jnp.dot(xkv_b, wv_ref[...],
                    preferred_element_type=jnp.float32) + bv_ref[...]

        # fold 1/sqrt(E) into q (TQ*E scaling instead of TQ*S on the scores)
        q = q * jnp.float32(1.0 / math.sqrt(n_embed))

        # scores: contract last dims directly — no k transpose / relayout
        scores = lax.dot_general(
            q.astype(jnp.bfloat16), k.astype(jnp.bfloat16),
            dimension_numbers=(((1,), (1,)), ((), ())),
            preferred_element_type=jnp.float32)           # (TQ, S)

        # key-padding mask rebuilt in-kernel from the prefetched length
        col = lax.broadcasted_iota(jnp.int32, scores.shape, 1)
        scores = jnp.where(col < klen, scores, -1e9)

        # softmax in f32; denominator reciprocal on the EUP
        m = jnp.max(scores, axis=-1, keepdims=True)
        p = jnp.exp(scores - m)
        denom = jnp.sum(p, axis=-1, keepdims=True)
        p = p * pl.reciprocal(denom, approx=True)
        # score dropout: inference mode -> identity

        context = jnp.dot(p.astype(jnp.bfloat16), v.astype(jnp.bfloat16),
                          preferred_element_type=jnp.float32)        # (TQ, E)
        attn = jnp.dot(context.astype(jnp.bfloat16), wp_ref[...],
                       preferred_element_type=jnp.float32) + bp_ref[...]
        # projection dropout: inference mode -> identity

        # --- residual + LayerNorm 1 (f32) ---
        h = _layernorm(xq + attn, g1_ref[...], be1_ref[...])

        # --- feed-forward, chunked over the hidden dim H ---
        h_b = h.astype(jnp.bfloat16)
        hc = min(ffn_chunk, h_dim)
        ff = jnp.zeros((tq, n_embed), jnp.float32)
        for c in range(h_dim // hc):
            w1c = w1_ref[:, c * hc:(c + 1) * hc]          # (E, hc) bf16
            b1c = bf1_ref[:, c * hc:(c + 1) * hc]         # (1, hc) f32
            w2c = w2_ref[c * hc:(c + 1) * hc, :]          # (hc, E) bf16
            ffc = jnp.dot(h_b, w1c,
                          preferred_element_type=jnp.float32) + b1c
            ffc = _gelu_exact(ffc)
            ff = ff + jnp.dot(ffc.astype(jnp.bfloat16), w2c,
                              preferred_element_type=jnp.float32)
        ff = ff + bf2_ref[...]
        # ffwd dropout: inference mode -> identity

        # --- residual + LayerNorm 2 (f32) ---
        out_ref[0] = _layernorm(h + ff, g2_ref[...], be2_ref[...])

    return bert_layer_kernel


def bert_layer(x, lens, params, *, tq=128, ffn_chunk=512):
    """x: (B, S, E) f32; lens: (B,) int32 valid key lengths per batch.

    params: (wq, bq, wk, bk, wv, bv, wp, bp, g1, be1, w1, bf1, w2, bf2, g2, be2)
    with weight matrices in bf16 (in_features, out_features) and biases /
    LayerNorm params in f32 of shape (1, out_features).
    """
    B, S, E = x.shape
    (wq, bq, wk, bk, wv, bv, wp, bp,
     g1, be1, w1, bf1, w2, bf2, g2, be2) = params
    H = w1.shape[1]
    tq = min(tq, S)
    assert S % tq == 0
    assert H % min(ffn_chunk, H) == 0

    def weight_spec(shape):
        # constant block index -> fetched once; single-buffer to halve VMEM use
        return pl.BlockSpec(shape,
                            lambda b, qi, lens: tuple(0 for _ in shape),
                            pipeline_mode=pl.Buffered(buffer_count=1))

    in_specs = [
        pl.BlockSpec((1, tq, E), lambda b, qi, lens: (b, qi, 0)),  # x (queries)
        pl.BlockSpec((1, S, E), lambda b, qi, lens: (b, 0, 0)),    # x (keys/vals)
        weight_spec((E, E)), weight_spec((1, E)),                  # wq, bq
        weight_spec((E, E)), weight_spec((1, E)),                  # wk, bk
        weight_spec((E, E)), weight_spec((1, E)),                  # wv, bv
        weight_spec((E, E)), weight_spec((1, E)),                  # w_proj, b_proj
        weight_spec((1, E)), weight_spec((1, E)),                  # ln1 gamma, beta
        weight_spec((E, H)), weight_spec((1, H)),                  # ffwd w1, b1
        weight_spec((H, E)), weight_spec((1, E)),                  # ffwd w2, b2
        weight_spec((1, E)), weight_spec((1, E)),                  # ln2 gamma, beta
    ]

    return pl.pallas_call(
        _make_kernel(ffn_chunk),
        out_shape=jax.ShapeDtypeStruct((B, S, E), jnp.float32),
        grid_spec=pltpu.PrefetchScalarGridSpec(
            num_scalar_prefetch=1,
            grid=(B, S // tq),
            in_specs=in_specs,
            out_specs=pl.BlockSpec((1, tq, E), lambda b, qi, lens: (b, qi, 0)),
        ),
        compiler_params=pltpu.CompilerParams(
            dimension_semantics=("parallel", "parallel"),
            # explicit scoped-VMEM budget: safe on v5e/v6e (128 MiB phys) and
            # under v7x's 64 MiB per-TC VMEM.
            vmem_limit_bytes=48 * 1024 * 1024,
        ),
    )(lens, x, x,
      wq, bq, wk, bk, wv, bv, wp, bp,
      g1, be1, w1, bf1, w2, bf2, g2, be2)


def _reference(x, lens, params):
    """Pure-JAX reference mirroring the kernel's bf16-matmul / f32-acc recipe."""
    (wq, bq, wk, bk, wv, bv, wp, bp,
     g1, be1, w1, bf1, w2, bf2, g2, be2) = params
    B, S, E = x.shape

    def mm(a, w):  # bf16 operands, f32 accumulation
        return lax.dot_general(
            a.astype(jnp.bfloat16), w,
            dimension_numbers=(((a.ndim - 1,), (0,)), ((), ())),
            preferred_element_type=jnp.float32)

    q = mm(x, wq) + bq
    k = mm(x, wk) + bk
    v = mm(x, wv) + bv
    q = q * (1.0 / math.sqrt(E))
    scores = jnp.einsum('bqe,bke->bqk',
                        q.astype(jnp.bfloat16), k.astype(jnp.bfloat16),
                        preferred_element_type=jnp.float32)
    key_mask = jnp.arange(S)[None, :] < lens[:, None]          # (B, S)
    scores = jnp.where(key_mask[:, None, :], scores, -1e9)
    p = jax.nn.softmax(scores, axis=-1)
    context = jnp.einsum('bqk,bke->bqe',
                         p.astype(jnp.bfloat16), v.astype(jnp.bfloat16),
                         preferred_element_type=jnp.float32)
    attn = mm(context, wp) + bp
    h = _layernorm(x + attn, g1, be1)
    ff = mm(_gelu_exact(mm(h, w1) + bf1), w2) + bf2
    return _layernorm(h + ff, g2, be2)


if __name__ == "__main__":
    # lane-dense small shapes: E, S, TQ multiples of 128
    B, S, E = 2, 256, 128
    H = 4 * E

    key = jax.random.PRNGKey(0)
    ks = jax.random.split(key, 16)

    def lin(kw, kb, din, dout):
        w = 0.1 * jax.random.normal(kw, (din, dout), jnp.float32)
        b = 0.1 * jax.random.normal(kb, (1, dout), jnp.float32)
        return w.astype(jnp.bfloat16), b   # weights stored bf16, biases f32

    wq, bq = lin(ks[0], ks[1], E, E)
    wk, bk = lin(ks[2], ks[3], E, E)
    wv, bv = lin(ks[4], ks[5], E, E)
    wp, bp = lin(ks[6], ks[7], E, E)
    w1, bf1 = lin(ks[8], ks[9], E, H)
    w2, bf2 = lin(ks[10], ks[11], H, E)
    g1 = jnp.ones((1, E), jnp.float32)
    be1 = jnp.zeros((1, E), jnp.float32)
    g2 = jnp.ones((1, E), jnp.float32)
    be2 = jnp.zeros((1, E), jnp.float32)

    params = (wq, bq, wk, bk, wv, bv, wp, bp,
              g1, be1, w1, bf1, w2, bf2, g2, be2)

    x = jax.random.normal(ks[12], (B, S, E), jnp.float32)
    # key-padding: batch 0 attends to all S keys, batch 1 only to the first 200
    lens = jnp.array([S, 200], dtype=jnp.int32)

    out = bert_layer(x, lens, params, tq=128, ffn_chunk=256)
    out = jax.block_until_ready(out)

    ref = _reference(x, lens, params)
    assert out.shape == (B, S, E)
    assert jnp.allclose(out, ref, atol=1e-2, rtol=1e-2), \
        float(jnp.max(jnp.abs(out - ref)))

    print("KERNEL_OK")
</pallas_src>

<mosaic_0001>
module attributes {stable_mosaic.version = 11 : i64} {
  func.func @bert_layer_kernel(%arg0: i32, %arg1: i32, %arg2: memref<2xi32, #tpu.memory_space<smem>>, %arg3: memref<1x128x128xf32, #tpu.memory_space<vmem>>, %arg4: memref<1x256x128xf32, #tpu.memory_space<vmem>>, %arg5: memref<128x128xbf16, #tpu.memory_space<vmem>>, %arg6: memref<1x128xf32, #tpu.memory_space<vmem>>, %arg7: memref<128x128xbf16, #tpu.memory_space<vmem>>, %arg8: memref<1x128xf32, #tpu.memory_space<vmem>>, %arg9: memref<128x128xbf16, #tpu.memory_space<vmem>>, %arg10: memref<1x128xf32, #tpu.memory_space<vmem>>, %arg11: memref<128x128xbf16, #tpu.memory_space<vmem>>, %arg12: memref<1x128xf32, #tpu.memory_space<vmem>>, %arg13: memref<1x128xf32, #tpu.memory_space<vmem>>, %arg14: memref<1x128xf32, #tpu.memory_space<vmem>>, %arg15: memref<128x512xbf16, #tpu.memory_space<vmem>>, %arg16: memref<1x512xf32, #tpu.memory_space<vmem>>, %arg17: memref<512x128xbf16, #tpu.memory_space<vmem>>, %arg18: memref<1x128xf32, #tpu.memory_space<vmem>>, %arg19: memref<1x128xf32, #tpu.memory_space<vmem>>, %arg20: memref<1x128xf32, #tpu.memory_space<vmem>>, %arg21: memref<1x128x128xf32, #tpu.memory_space<vmem>>) attributes {dimension_semantics = [#tpu.dimension_semantics<parallel>, #tpu.dimension_semantics<parallel>], iteration_bounds = array<i64: 2, 2>, scalar_prefetch = 1 : i64, scratch_operands = 0 : i64, tpu.core_type = #tpu.core_type<tc>, window_params = [{transform_indices = @transform_0, window_bounds = array<i64: 1, 128, 128>}, {transform_indices = @transform_1, window_bounds = array<i64: 1, 256, 128>}, {pipeline_mode = #tpu.pipeline_mode<synchronous>, transform_indices = @transform_2, window_bounds = array<i64: 128, 128>}, {pipeline_mode = #tpu.pipeline_mode<synchronous>, transform_indices = @transform_3, window_bounds = array<i64: 1, 128>}, {pipeline_mode = #tpu.pipeline_mode<synchronous>, transform_indices = @transform_4, window_bounds = array<i64: 128, 128>}, {pipeline_mode = #tpu.pipeline_mode<synchronous>, transform_indices = @transform_5, window_bounds = array<i64: 1, 128>}, {pipeline_mode = #tpu.pipeline_mode<synchronous>, transform_indices = @transform_6, window_bounds = array<i64: 128, 128>}, {pipeline_mode = #tpu.pipeline_mode<synchronous>, transform_indices = @transform_7, window_bounds = array<i64: 1, 128>}, {pipeline_mode = #tpu.pipeline_mode<synchronous>, transform_indices = @transform_8, window_bounds = array<i64: 128, 128>}, {pipeline_mode = #tpu.pipeline_mode<synchronous>, transform_indices = @transform_9, window_bounds = array<i64: 1, 128>}, {pipeline_mode = #tpu.pipeline_mode<synchronous>, transform_indices = @transform_10, window_bounds = array<i64: 1, 128>}, {pipeline_mode = #tpu.pipeline_mode<synchronous>, transform_indices = @transform_11, window_bounds = array<i64: 1, 128>}, {pipeline_mode = #tpu.pipeline_mode<synchronous>, transform_indices = @transform_12, window_bounds = array<i64: 128, 512>}, {pipeline_mode = #tpu.pipeline_mode<synchronous>, transform_indices = @transform_13, window_bounds = array<i64: 1, 512>}, {pipeline_mode = #tpu.pipeline_mode<synchronous>, transform_indices = @transform_14, window_bounds = array<i64: 512, 128>}, {pipeline_mode = #tpu.pipeline_mode<synchronous>, transform_indices = @transform_15, window_bounds = array<i64: 1, 128>}, {pipeline_mode = #tpu.pipeline_mode<synchronous>, transform_indices = @transform_16, window_bounds = array<i64: 1, 128>}, {pipeline_mode = #tpu.pipeline_mode<synchronous>, transform_indices = @transform_17, window_bounds = array<i64: 1, 128>}, {transform_indices = @transform_18, window_bounds = array<i64: 1, 128, 128>}]} {
    %0 = arith.index_cast %arg0 : i32 to index
    %1 = memref.load %arg2[%0] : memref<2xi32, #tpu.memory_space<smem>>
    %c0 = arith.constant 0 : index
    %c0_0 = arith.constant 0 : index
    %c0_1 = arith.constant 0 : index
    %2 = vector.load %arg3[%c0, %c0_0, %c0_1] : memref<1x128x128xf32, #tpu.memory_space<vmem>>, vector<1x128x128xf32>
    %3 = vector.shape_cast %2 : vector<1x128x128xf32> to vector<128x128xf32>
    %c0_2 = arith.constant 0 : index
    %c0_3 = arith.constant 0 : index
    %c0_4 = arith.constant 0 : index
    %4 = vector.load %arg4[%c0_2, %c0_3, %c0_4] : memref<1x256x128xf32, #tpu.memory_space<vmem>>, vector<1x256x128xf32>
    %5 = vector.shape_cast %4 : vector<1x256x128xf32> to vector<256x128xf32>
    %6 = arith.truncf %3 : vector<128x128xf32> to vector<128x128xbf16>
    %7 = arith.truncf %5 : vector<256x128xf32> to vector<256x128xbf16>
    %c0_5 = arith.constant 0 : index
    %c0_6 = arith.constant 0 : index
    %8 = vector.load %arg5[%c0_5, %c0_6] : memref<128x128xbf16, #tpu.memory_space<vmem>>, vector<128x128xbf16>
    %cst = arith.constant dense<0.000000e+00> : vector<128x128xf32>
    %9 = tpu.matmul %6, %8, %cst {dimension_numbers = #tpu.dot_dimension_numbers<[1], [0], [0], [1], [0, 0, 1, 1], [], []>} : vector<128x128xbf16>, vector<128x128xbf16>, vector<128x128xf32> -> vector<128x128xf32>
    %c0_7 = arith.constant 0 : index
    %c0_8 = arith.constant 0 : index
    %10 = vector.load %arg6[%c0_7, %c0_8] : memref<1x128xf32, #tpu.memory_space<vmem>>, vector<1x128xf32>
    %11 = vector.broadcast %10 : vector<1x128xf32> to vector<128x128xf32>
    %12 = arith.addf %9, %11 : vector<128x128xf32>
    %c0_9 = arith.constant 0 : index
    %c0_10 = arith.constant 0 : index
    %13 = vector.load %arg7[%c0_9, %c0_10] : memref<128x128xbf16, #tpu.memory_space<vmem>>, vector<128x128xbf16>
    %cst_11 = arith.constant dense<0.000000e+00> : vector<256x128xf32>
    %14 = tpu.matmul %7, %13, %cst_11 {dimension_numbers = #tpu.dot_dimension_numbers<[1], [0], [0], [1], [0, 0, 1, 1], [], []>} : vector<256x128xbf16>, vector<128x128xbf16>, vector<256x128xf32> -> vector<256x128xf32>
    %c0_12 = arith.constant 0 : index
    %c0_13 = arith.constant 0 : index
    %15 = vector.load %arg8[%c0_12, %c0_13] : memref<1x128xf32, #tpu.memory_space<vmem>>, vector<1x128xf32>
    %16 = vector.broadcast %15 : vector<1x128xf32> to vector<256x128xf32>
    %17 = arith.addf %14, %16 : vector<256x128xf32>
    %c0_14 = arith.constant 0 : index
    %c0_15 = arith.constant 0 : index
    %18 = vector.load %arg9[%c0_14, %c0_15] : memref<128x128xbf16, #tpu.memory_space<vmem>>, vector<128x128xbf16>
    %cst_16 = arith.constant dense<0.000000e+00> : vector<256x128xf32>
    %19 = tpu.matmul %7, %18, %cst_16 {dimension_numbers = #tpu.dot_dimension_numbers<[1], [0], [0], [1], [0, 0, 1, 1], [], []>} : vector<256x128xbf16>, vector<128x128xbf16>, vector<256x128xf32> -> vector<256x128xf32>
    %c0_17 = arith.constant 0 : index
    %c0_18 = arith.constant 0 : index
    %20 = vector.load %arg10[%c0_17, %c0_18] : memref<1x128xf32, #tpu.memory_space<vmem>>, vector<1x128xf32>
    %21 = vector.broadcast %20 : vector<1x128xf32> to vector<256x128xf32>
    %22 = arith.addf %19, %21 : vector<256x128xf32>
    %cst_19 = arith.constant 0.0883883461 : f32
    %23 = vector.broadcast %cst_19 : f32 to vector<128x128xf32>
    %24 = arith.mulf %12, %23 : vector<128x128xf32>
    %25 = arith.truncf %24 : vector<128x128xf32> to vector<128x128xbf16>
    %26 = arith.truncf %17 : vector<256x128xf32> to vector<256x128xbf16>
    %cst_20 = arith.constant dense<0.000000e+00> : vector<128x256xf32>
    %27 = tpu.matmul %25, %26, %cst_20 {dimension_numbers = #tpu.dot_dimension_numbers<[1], [1], [0], [0], [0, 0, 1, 0], [], []>} : vector<128x128xbf16>, vector<256x128xbf16>, vector<128x256xf32> -> vector<128x256xf32>
    %28 = tpu.iota {dimensions = array<i32: 1>} : vector<128x256xi32>
    %29 = vector.broadcast %1 : i32 to vector<128x256xi32>
    %30 = arith.cmpi slt, %28, %29 : vector<128x256xi32>
    %cst_21 = arith.constant -1.000000e+09 : f32
    %31 = vector.broadcast %cst_21 : f32 to vector<128x256xf32>
    %32 = arith.select %30, %27, %31 : vector<128x256xi1>, vector<128x256xf32>
    %cst_22 = arith.constant dense<0xFF800000> : vector<128xf32>
    %33 = vector.multi_reduction <maximumf>, %32, %cst_22 [1] : vector<128x256xf32> to vector<128xf32>
    %34 = vector.shape_cast %33 : vector<128xf32> to vector<128x1xf32>
    %35 = vector.broadcast %34 : vector<128x1xf32> to vector<128x256xf32>
    %36 = arith.subf %32, %35 : vector<128x256xf32>
    %37 = math.exp %36 : vector<128x256xf32>
    %cst_23 = arith.constant dense<0.000000e+00> : vector<128xf32>
    %38 = vector.multi_reduction <add>, %37, %cst_23 [1] : vector<128x256xf32> to vector<128xf32>
    %39 = vector.shape_cast %38 : vector<128xf32> to vector<128x1xf32>
    %40 = tpu.reciprocal %39 {approx = true} : vector<128x1xf32> -> vector<128x1xf32>
    %41 = vector.broadcast %40 : vector<128x1xf32> to vector<128x256xf32>
    %42 = arith.mulf %37, %41 : vector<128x256xf32>
    %43 = arith.truncf %42 : vector<128x256xf32> to vector<128x256xbf16>
    %44 = arith.truncf %22 : vector<256x128xf32> to vector<256x128xbf16>
    %cst_24 = arith.constant dense<0.000000e+00> : vector<128x128xf32>
    %45 = tpu.matmul %43, %44, %cst_24 {dimension_numbers = #tpu.dot_dimension_numbers<[1], [0], [0], [1], [0, 0, 1, 1], [], []>} : vector<128x256xbf16>, vector<256x128xbf16>, vector<128x128xf32> -> vector<128x128xf32>
    %46 = arith.truncf %45 : vector<128x128xf32> to vector<128x128xbf16>
    %c0_25 = arith.constant 0 : index
    %c0_26 = arith.constant 0 : index
    %47 = vector.load %arg11[%c0_25, %c0_26] : memref<128x128xbf16, #tpu.memory_space<vmem>>, vector<128x128xbf16>
    %cst_27 = arith.constant dense<0.000000e+00> : vector<128x128xf32>
    %48 = tpu.matmul %46, %47, %cst_27 {dimension_numbers = #tpu.dot_dimension_numbers<[1], [0], [0], [1], [0, 0, 1, 1], [], []>} : vector<128x128xbf16>, vector<128x128xbf16>, vector<128x128xf32> -> vector<128x128xf32>
    %c0_28 = arith.constant 0 : index
    %c0_29 = arith.constant 0 : index
    %49 = vector.load %arg12[%c0_28, %c0_29] : memref<1x128xf32, #tpu.memory_space<vmem>>, vector<1x128xf32>
    %50 = vector.broadcast %49 : vector<1x128xf32> to vector<128x128xf32>
    %51 = arith.addf %48, %50 : vector<128x128xf32>
    %52 = arith.addf %3, %51 : vector<128x128xf32>
    %c0_30 = arith.constant 0 : index
    %c0_31 = arith.constant 0 : index
    %53 = vector.load %arg13[%c0_30, %c0_31] : memref<1x128xf32, #tpu.memory_space<vmem>>, vector<1x128xf32>
    %c0_32 = arith.constant 0 : index
    %c0_33 = arith.constant 0 : index
    %54 = vector.load %arg14[%c0_32, %c0_33] : memref<1x128xf32, #tpu.memory_space<vmem>>, vector<1x128xf32>
    %cst_34 = arith.constant dense<0.000000e+00> : vector<128xf32>
    %55 = vector.multi_reduction <add>, %52, %cst_34 [1] : vector<128x128xf32> to vector<128xf32>
    %56 = vector.shape_cast %55 : vector<128xf32> to vector<128x1xf32>
    %cst_35 = arith.constant 1.280000e+02 : f32
    %57 = vector.broadcast %cst_35 : f32 to vector<128x1xf32>
    %58 = arith.divf %56, %57 : vector<128x1xf32>
    %59 = vector.broadcast %58 : vector<128x1xf32> to vector<128x128xf32>
    %60 = arith.subf %52, %59 : vector<128x128xf32>
    %61 = arith.mulf %60, %60 : vector<128x128xf32>
    %cst_36 = arith.constant dense<0.000000e+00> : vector<128xf32>
    %62 = vector.multi_reduction <add>, %61, %cst_36 [1] : vector<128x128xf32> to vector<128xf32>
    %63 = vector.shape_cast %62 : vector<128xf32> to vector<128x1xf32>
    %cst_37 = arith.constant 1.280000e+02 : f32
    %64 = vector.broadcast %cst_37 : f32 to vector<128x1xf32>
    %65 = arith.divf %63, %64 : vector<128x1xf32>
    %66 = vector.broadcast %58 : vector<128x1xf32> to vector<128x128xf32>
    %67 = arith.subf %52, %66 : vector<128x128xf32>
    %cst_38 = arith.constant 9.99999974E-6 : f32
    %68 = vector.broadcast %cst_38 : f32 to vector<128x1xf32>
    %69 = arith.addf %65, %68 : vector<128x1xf32>
    %70 = math.rsqrt %69 : vector<128x1xf32>
    %71 = vector.broadcast %70 : vector<128x1xf32> to vector<128x128xf32>
    %72 = arith.mulf %67, %71 : vector<128x128xf32>
    %73 = vector.broadcast %53 : vector<1x128xf32> to vector<128x128xf32>
    %74 = arith.mulf %72, %73 : vector<128x128xf32>
    %75 = vector.broadcast %54 : vector<1x128xf32> to vector<128x128xf32>
    %76 = arith.addf %74, %75 : vector<128x128xf32>
    %77 = arith.truncf %76 : vector<128x128xf32> to vector<128x128xbf16>
    %cst_39 = arith.constant 0.000000e+00 : f32
    %78 = vector.broadcast %cst_39 : f32 to vector<128x128xf32>
    %c0_40 = arith.constant 0 : index
    %c0_41 = arith.constant 0 : index
    %79 = vector.load %arg15[%c0_40, %c0_41] : memref<128x512xbf16, #tpu.memory_space<vmem>>, vector<128x256xbf16>
    %c0_42 = arith.constant 0 : index
    %c0_43 = arith.constant 0 : index
    %80 = vector.load %arg16[%c0_42, %c0_43] : memref<1x512xf32, #tpu.memory_space<vmem>>, vector<1x256xf32>
    %c0_44 = arith.constant 0 : index
    %c0_45 = arith.constant 0 : index
    %81 = vector.load %arg17[%c0_44, %c0_45] : memref<512x128xbf16, #tpu.memory_space<vmem>>, vector<256x128xbf16>
    %cst_46 = arith.constant dense<0.000000e+00> : vector<128x256xf32>
    %82 = tpu.matmul %77, %79, %cst_46 {dimension_numbers = #tpu.dot_dimension_numbers<[1], [0], [0], [1], [0, 0, 1, 1], [], []>} : vector<128x128xbf16>, vector<128x256xbf16>, vector<128x256xf32> -> vector<128x256xf32>
    %83 = vector.broadcast %80 : vector<1x256xf32> to vector<128x256xf32>
    %84 = arith.addf %82, %83 : vector<128x256xf32>
    %cst_47 = arith.constant 5.000000e-01 : f32
    %85 = vector.broadcast %cst_47 : f32 to vector<128x256xf32>
    %86 = arith.mulf %85, %84 : vector<128x256xf32>
    %cst_48 = arith.constant 0.707106769 : f32
    %87 = vector.broadcast %cst_48 : f32 to vector<128x256xf32>
    %88 = arith.mulf %84, %87 : vector<128x256xf32>
    %89 = math.erf %88 : vector<128x256xf32>
    %cst_49 = arith.constant 1.000000e+00 : f32
    %90 = vector.broadcast %cst_49 : f32 to vector<128x256xf32>
    %91 = arith.addf %90, %89 : vector<128x256xf32>
    %92 = arith.mulf %86, %91 : vector<128x256xf32>
    %93 = arith.truncf %92 : vector<128x256xf32> to vector<128x256xbf16>
    %cst_50 = arith.constant dense<0.000000e+00> : vector<128x128xf32>
    %94 = tpu.matmul %93, %81, %cst_50 {dimension_numbers = #tpu.dot_dimension_numbers<[1], [0], [0], [1], [0, 0, 1, 1], [], []>} : vector<128x256xbf16>, vector<256x128xbf16>, vector<128x128xf32> -> vector<128x128xf32>
    %95 = arith.addf %78, %94 : vector<128x128xf32>
    %c0_51 = arith.constant 0 : index
    %c256 = arith.constant 256 : index
    %96 = vector.load %arg15[%c0_51, %c256] : memref<128x512xbf16, #tpu.memory_space<vmem>>, vector<128x256xbf16>
    %c0_52 = arith.constant 0 : index
    %c256_53 = arith.constant 256 : index
    %97 = vector.load %arg16[%c0_52, %c256_53] : memref<1x512xf32, #tpu.memory_space<vmem>>, vector<1x256xf32>
    %c256_54 = arith.constant 256 : index
    %c0_55 = arith.constant 0 : index
    %98 = vector.load %arg17[%c256_54, %c0_55] : memref<512x128xbf16, #tpu.memory_space<vmem>>, vector<256x128xbf16>
    %cst_56 = arith.constant dense<0.000000e+00> : vector<128x256xf32>
    %99 = tpu.matmul %77, %96, %cst_56 {dimension_numbers = #tpu.dot_dimension_numbers<[1], [0], [0], [1], [0, 0, 1, 1], [], []>} : vector<128x128xbf16>, vector<128x256xbf16>, vector<128x256xf32> -> vector<128x256xf32>
    %100 = vector.broadcast %97 : vector<1x256xf32> to vector<128x256xf32>
    %101 = arith.addf %99, %100 : vector<128x256xf32>
    %cst_57 = arith.constant 5.000000e-01 : f32
    %102 = vector.broadcast %cst_57 : f32 to vector<128x256xf32>
    %103 = arith.mulf %102, %101 : vector<128x256xf32>
    %cst_58 = arith.constant 0.707106769 : f32
    %104 = vector.broadcast %cst_58 : f32 to vector<128x256xf32>
    %105 = arith.mulf %101, %104 : vector<128x256xf32>
    %106 = math.erf %105 : vector<128x256xf32>
    %cst_59 = arith.constant 1.000000e+00 : f32
    %107 = vector.broadcast %cst_59 : f32 to vector<128x256xf32>
    %108 = arith.addf %107, %106 : vector<128x256xf32>
    %109 = arith.mulf %103, %108 : vector<128x256xf32>
    %110 = arith.truncf %109 : vector<128x256xf32> to vector<128x256xbf16>
    %cst_60 = arith.constant dense<0.000000e+00> : vector<128x128xf32>
    %111 = tpu.matmul %110, %98, %cst_60 {dimension_numbers = #tpu.dot_dimension_numbers<[1], [0], [0], [1], [0, 0, 1, 1], [], []>} : vector<128x256xbf16>, vector<256x128xbf16>, vector<128x128xf32> -> vector<128x128xf32>
    %112 = arith.addf %95, %111 : vector<128x128xf32>
    %c0_61 = arith.constant 0 : index
    %c0_62 = arith.constant 0 : index
    %113 = vector.load %arg18[%c0_61, %c0_62] : memref<1x128xf32, #tpu.memory_space<vmem>>, vector<1x128xf32>
    %114 = vector.broadcast %113 : vector<1x128xf32> to vector<128x128xf32>
    %115 = arith.addf %112, %114 : vector<128x128xf32>
    %116 = arith.addf %76, %115 : vector<128x128xf32>
    %c0_63 = arith.constant 0 : index
    %c0_64 = arith.constant 0 : index
    %117 = vector.load %arg19[%c0_63, %c0_64] : memref<1x128xf32, #tpu.memory_space<vmem>>, vector<1x128xf32>
    %c0_65 = arith.constant 0 : index
    %c0_66 = arith.constant 0 : index
    %118 = vector.load %arg20[%c0_65, %c0_66] : memref<1x128xf32, #tpu.memory_space<vmem>>, vector<1x128xf32>
    %cst_67 = arith.constant dense<0.000000e+00> : vector<128xf32>
    %119 = vector.multi_reduction <add>, %116, %cst_67 [1] : vector<128x128xf32> to vector<128xf32>
    %120 = vector.shape_cast %119 : vector<128xf32> to vector<128x1xf32>
    %cst_68 = arith.constant 1.280000e+02 : f32
    %121 = vector.broadcast %cst_68 : f32 to vector<128x1xf32>
    %122 = arith.divf %120, %121 : vector<128x1xf32>
    %123 = vector.broadcast %122 : vector<128x1xf32> to vector<128x128xf32>
    %124 = arith.subf %116, %123 : vector<128x128xf32>
    %125 = arith.mulf %124, %124 : vector<128x128xf32>
    %cst_69 = arith.constant dense<0.000000e+00> : vector<128xf32>
    %126 = vector.multi_reduction <add>, %125, %cst_69 [1] : vector<128x128xf32> to vector<128xf32>
    %127 = vector.shape_cast %126 : vector<128xf32> to vector<128x1xf32>
    %cst_70 = arith.constant 1.280000e+02 : f32
    %128 = vector.broadcast %cst_70 : f32 to vector<128x1xf32>
    %129 = arith.divf %127, %128 : vector<128x1xf32>
    %130 = vector.broadcast %122 : vector<128x1xf32> to vector<128x128xf32>
    %131 = arith.subf %116, %130 : vector<128x128xf32>
    %cst_71 = arith.constant 9.99999974E-6 : f32
    %132 = vector.broadcast %cst_71 : f32 to vector<128x1xf32>
    %133 = arith.addf %129, %132 : vector<128x1xf32>
    %134 = math.rsqrt %133 : vector<128x1xf32>
    %135 = vector.broadcast %134 : vector<128x1xf32> to vector<128x128xf32>
    %136 = arith.mulf %131, %135 : vector<128x128xf32>
    %137 = vector.broadcast %117 : vector<1x128xf32> to vector<128x128xf32>
    %138 = arith.mulf %136, %137 : vector<128x128xf32>
    %139 = vector.broadcast %118 : vector<1x128xf32> to vector<128x128xf32>
    %140 = arith.addf %138, %139 : vector<128x128xf32>
    %c0_72 = arith.constant 0 : index
    %c0_73 = arith.constant 0 : index
    %c0_74 = arith.constant 0 : index
    %141 = vector.load %arg21[%c0_72, %c0_73, %c0_74] : memref<1x128x128xf32, #tpu.memory_space<vmem>>, vector<1x128x128xf32>
    %142 = vector.shape_cast %141 : vector<1x128x128xf32> to vector<128x128xf32>
    %143 = vector.shape_cast %140 : vector<128x128xf32> to vector<1x128x128xf32>
    tpu.vector_store %arg21[%c0_72, %c0_73, %c0_74], %143 {strides = array<i32>} : memref<1x128x128xf32, #tpu.memory_space<vmem>>, vector<1x128x128xf32>,
    return
  }
  func.func @transform_0(%arg0: i32, %arg1: i32, %arg2: memref<2xi32, #tpu.memory_space<smem>>) -> (i32, i32, i32) {
    %c0_i32 = arith.constant 0 : i32
    %c0_i32_0 = arith.constant 0 : i32
    return %arg0, %arg1, %c0_i32 : i32, i32, i32
  }
  func.func @transform_1(%arg0: i32, %arg1: i32, %arg2: memref<2xi32, #tpu.memory_space<smem>>) -> (i32, i32, i32) {
    %c0_i32 = arith.constant 0 : i32
    %c0_i32_0 = arith.constant 0 : i32
    %c0_i32_1 = arith.constant 0 : i32
    return %arg0, %c0_i32, %c0_i32_0 : i32, i32, i32
  }
  func.func @transform_2(%arg0: i32, %arg1: i32, %arg2: memref<2xi32, #tpu.memory_space<smem>>) -> (i32, i32) {
    %c0_i32 = arith.constant 0 : i32
    %c0_i32_0 = arith.constant 0 : i32
    %c0_i32_1 = arith.constant 0 : i32
    return %c0_i32, %c0_i32_0 : i32, i32
  }
  func.func @transform_3(%arg0: i32, %arg1: i32, %arg2: memref<2xi32, #tpu.memory_space<smem>>) -> (i32, i32) {
    %c0_i32 = arith.constant 0 : i32
    %c0_i32_0 = arith.constant 0 : i32
    %c0_i32_1 = arith.constant 0 : i32
    return %c0_i32, %c0_i32_0 : i32, i32
  }
  func.func @transform_4(%arg0: i32, %arg1: i32, %arg2: memref<2xi32, #tpu.memory_space<smem>>) -> (i32, i32) {
    %c0_i32 = arith.constant 0 : i32
    %c0_i32_0 = arith.constant 0 : i32
    %c0_i32_1 = arith.constant 0 : i32
    return %c0_i32, %c0_i32_0 : i32, i32
  }
  func.func @transform_5(%arg0: i32, %arg1: i32, %arg2: memref<2xi32, #tpu.memory_space<smem>>) -> (i32, i32) {
    %c0_i32 = arith.constant 0 : i32
    %c0_i32_0 = arith.constant 0 : i32
    %c0_i32_1 = arith.constant 0 : i32
    return %c0_i32, %c0_i32_0 : i32, i32
  }
  func.func @transform_6(%arg0: i32, %arg1: i32, %arg2: memref<2xi32, #tpu.memory_space<smem>>) -> (i32, i32) {
    %c0_i32 = arith.constant 0 : i32
    %c0_i32_0 = arith.constant 0 : i32
    %c0_i32_1 = arith.constant 0 : i32
    return %c0_i32, %c0_i32_0 : i32, i32
  }
  func.func @transform_7(%arg0: i32, %arg1: i32, %arg2: memref<2xi32, #tpu.memory_space<smem>>) -> (i32, i32) {
    %c0_i32 = arith.constant 0 : i32
    %c0_i32_0 = arith.constant 0 : i32
    %c0_i32_1 = arith.constant 0 : i32
    return %c0_i32, %c0_i32_0 : i32, i32
  }
  func.func @transform_8(%arg0: i32, %arg1: i32, %arg2: memref<2xi32, #tpu.memory_space<smem>>) -> (i32, i32) {
    %c0_i32 = arith.constant 0 : i32
    %c0_i32_0 = arith.constant 0 : i32
    %c0_i32_1 = arith.constant 0 : i32
    return %c0_i32, %c0_i32_0 : i32, i32
  }
  func.func @transform_9(%arg0: i32, %arg1: i32, %arg2: memref<2xi32, #tpu.memory_space<smem>>) -> (i32, i32) {
    %c0_i32 = arith.constant 0 : i32
    %c0_i32_0 = arith.constant 0 : i32
    %c0_i32_1 = arith.constant 0 : i32
    return %c0_i32, %c0_i32_0 : i32, i32
  }
  func.func @transform_10(%arg0: i32, %arg1: i32, %arg2: memref<2xi32, #tpu.memory_space<smem>>) -> (i32, i32) {
    %c0_i32 = arith.constant 0 : i32
    %c0_i32_0 = arith.constant 0 : i32
    %c0_i32_1 = arith.constant 0 : i32
    return %c0_i32, %c0_i32_0 : i32, i32
  }
  func.func @transform_11(%arg0: i32, %arg1: i32, %arg2: memref<2xi32, #tpu.memory_space<smem>>) -> (i32, i32) {
    %c0_i32 = arith.constant 0 : i32
    %c0_i32_0 = arith.constant 0 : i32
    %c0_i32_1 = arith.constant 0 : i32
    return %c0_i32, %c0_i32_0 : i32, i32
  }
  func.func @transform_12(%arg0: i32, %arg1: i32, %arg2: memref<2xi32, #tpu.memory_space<smem>>) -> (i32, i32) {
    %c0_i32 = arith.constant 0 : i32
    %c0_i32_0 = arith.constant 0 : i32
    %c0_i32_1 = arith.constant 0 : i32
    return %c0_i32, %c0_i32_0 : i32, i32
  }
  func.func @transform_13(%arg0: i32, %arg1: i32, %arg2: memref<2xi32, #tpu.memory_space<smem>>) -> (i32, i32) {
    %c0_i32 = arith.constant 0 : i32
    %c0_i32_0 = arith.constant 0 : i32
    %c0_i32_1 = arith.constant 0 : i32
    return %c0_i32, %c0_i32_0 : i32, i32
  }
  func.func @transform_14(%arg0: i32, %arg1: i32, %arg2: memref<2xi32, #tpu.memory_space<smem>>) -> (i32, i32) {
    %c0_i32 = arith.constant 0 : i32
    %c0_i32_0 = arith.constant 0 : i32
    %c0_i32_1 = arith.constant 0 : i32
    return %c0_i32, %c0_i32_0 : i32, i32
  }
  func.func @transform_15(%arg0: i32, %arg1: i32, %arg2: memref<2xi32, #tpu.memory_space<smem>>) -> (i32, i32) {
    %c0_i32 = arith.constant 0 : i32
    %c0_i32_0 = arith.constant 0 : i32
    %c0_i32_1 = arith.constant 0 : i32
    return %c0_i32, %c0_i32_0 : i32, i32
  }
  func.func @transform_16(%arg0: i32, %arg1: i32, %arg2: memref<2xi32, #tpu.memory_space<smem>>) -> (i32, i32) {
    %c0_i32 = arith.constant 0 : i32
    %c0_i32_0 = arith.constant 0 : i32
    %c0_i32_1 = arith.constant 0 : i32
    return %c0_i32, %c0_i32_0 : i32, i32
  }
  func.func @transform_17(%arg0: i32, %arg1: i32, %arg2: memref<2xi32, #tpu.memory_space<smem>>) -> (i32, i32) {
    %c0_i32 = arith.constant 0 : i32
    %c0_i32_0 = arith.constant 0 : i32
    %c0_i32_1 = arith.constant 0 : i32
    return %c0_i32, %c0_i32_0 : i32, i32
  }
  func.func @transform_18(%arg0: i32, %arg1: i32, %arg2: memref<2xi32, #tpu.memory_space<smem>>) -> (i32, i32, i32) {
    %c0_i32 = arith.constant 0 : i32
    %c0_i32_0 = arith.constant 0 : i32
    return %arg0, %arg1, %c0_i32 : i32, i32, i32
  }
}

</mosaic_0001>

<llo_original>
// kernel: tpu_custom_call.1
$region0: #{tpu_custom_call.1}
  #allocation0 [shape = 'u32[]', space=smem, size = 0x4, offset = 0x4, fixed_abs, tag = 'smem constant byte address 0x4 - core index']
  #allocation1 [shape = 'u32[72,128]{1,0:T(1,128)}', space=vmem, size = 0x9000, scoped, tag = 'internal scratch']
  #allocation2 [shape = 's32[1]{0}', space=sflag, size = 0x4, scoped, tag = 'scoped memory for tpu_custom_call.1']
  #allocation3 [shape = 'u8[512]{0}', space=smem, size = 0x200, scoped, tag = 'prefetched SMEM operand 0']
  %s0 = inlined_call_operand.hbm [shape: s32[2], index: 0, kind: input, shape index: {}]
  %s1 = inlined_call_operand.hbm [shape: f32[2,256,128], index: 1, kind: input, shape index: {}]
  %s2 = inlined_call_operand.hbm [shape: f32[2,256,128], index: 2, kind: input, shape index: {}]
  %s3 = inlined_call_operand.hbm [shape: bf16[128,128], index: 3, kind: input, shape index: {}]
  %s4 = inlined_call_operand.vmem [shape: f32[1,128], index: 4, kind: input, shape index: {}]
  %s5 = inlined_call_operand.hbm [shape: bf16[128,128], index: 5, kind: input, shape index: {}]
  %s6 = inlined_call_operand.vmem [shape: f32[1,128], index: 6, kind: input, shape index: {}]
  %s7 = inlined_call_operand.hbm [shape: bf16[128,128], index: 7, kind: input, shape index: {}]
  %s8 = inlined_call_operand.vmem [shape: f32[1,128], index: 8, kind: input, shape index: {}]
  %s9 = inlined_call_operand.hbm [shape: bf16[128,128], index: 9, kind: input, shape index: {}]
  %s10 = inlined_call_operand.vmem [shape: f32[1,128], index: 10, kind: input, shape index: {}]
  %s11 = inlined_call_operand.vmem [shape: f32[1,128], index: 11, kind: input, shape index: {}]
  %s12 = inlined_call_operand.vmem [shape: f32[1,128], index: 12, kind: input, shape index: {}]
  %s13 = inlined_call_operand.hbm [shape: bf16[128,512], index: 13, kind: input, shape index: {}]
  %s14 = inlined_call_operand.vmem [shape: f32[1,512], index: 14, kind: input, shape index: {}]
  %s15 = inlined_call_operand.hbm [shape: bf16[512,128], index: 15, kind: input, shape index: {}]
  %s16 = inlined_call_operand.vmem [shape: f32[1,128], index: 16, kind: input, shape index: {}]
  %s17 = inlined_call_operand.vmem [shape: f32[1,128], index: 17, kind: input, shape index: {}]
  %s18 = inlined_call_operand.vmem [shape: f32[1,128], index: 18, kind: input, shape index: {}]
  %s19 = inlined_call_operand.hbm [shape: f32[2,256,128], index: 19, kind: output, shape index: {}]
  %s20 = sld [smem:[#allocation0]]
  $region137: #{tpu_custom_call.1} parent=0
    _
  %s22 = ssub.s32 1, %s20
  %s23 = scalar_select 0, %s22, %s20
  %s25 = sshll.u32 %s0, 4
  %s26 = int_to_ptr.hbm [resolvable:$true] %s25
  %28 = dma.hbm_to_smem %s26, 16, [#allocation3], [#allocation2]
  %30 = dma.done [#allocation2], 16
  %31 = sfence
  $region1: #{tpu_custom_call.1} parent=0
    #allocation4 [shape = 'u8[131072]{0}', space=vmem, size = 0x20000, scoped, tag = 'input window, operand 1']
    #allocation5 [shape = 's32[2]{0}', space=sflag, size = 0x8, scoped, tag = 'scoped memory for tpu_custom_call.1']
    #allocation6 [shape = 's32[2]{0}', space=sflag, size = 0x8, scoped, tag = 'scoped memory for tpu_custom_call.1']
    #allocation7 [shape = 'u8[262144]{0}', space=vmem, size = 0x40000, scoped, tag = 'input window, operand 2']
    #allocation8 [shape = 's32[2]{0}', space=sflag, size = 0x8, scoped, tag = 'scoped memory for tpu_custom_call.1']
    #allocation9 [shape = 'u8[32768]{0}', space=vmem, size = 0x8000, scoped, tag = 'input window, operand 3, single buffered']
    #allocation10 [shape = 'u8[32768]{0}', space=vmem, size = 0x8000, scoped, tag = 'input window, operand 5, single buffered']
    #allocation11 [shape = 's32[1]{0}', space=sflag, size = 0x4, scoped, tag = 'scoped memory for tpu_custom_call.1']
    #allocation12 [shape = 'u8[32768]{0}', space=vmem, size = 0x8000, scoped, tag = 'input window, operand 7, single buffered']
    #allocation13 [shape = 'u8[32768]{0}', space=vmem, size = 0x8000, scoped, tag = 'input window, operand 9, single buffered']
    #allocation14 [shape = 's32[1]{0}', space=sflag, size = 0x4, scoped, tag = 'scoped memory for tpu_custom_call.1']
    #allocation15 [shape = 'u8[131072]{0}', space=vmem, size = 0x20000, scoped, tag = 'input window, operand 13, single buffered']
    #allocation16 [shape = 'u8[131072]{0}', space=vmem, size = 0x20000, scoped, tag = 'input window, operand 15, single buffered']
    #allocation17 [shape = 's32[1]{0}', space=sflag, size = 0x4, scoped, tag = 'scoped memory for tpu_custom_call.1']
    #allocation18 [shape = 'u8[131072]{0}', space=vmem, size = 0x20000, scoped, tag = 'output window, operand 0']
    %32 = vsyncpa [#allocation5], 0
    %s33 = scalar_lea.sflag [#allocation5], 1
    %34 = vsyncpa %s33, 0
    %35 = vsyncpa [#allocation8], 0
    %s36 = scalar_lea.sflag [#allocation8], 1
    %37 = vsyncpa %s36, 0
    %38 = vsyncpa [#allocation11], 0
    %39 = vsyncpa [#allocation14], 0
    %40 = vsyncpa [#allocation17], 0
    %41 = vsyncpa [#allocation6], 0
    %s42 = scalar_lea.sflag [#allocation6], 1
    %43 = vsyncpa %s42, 0
    loop: start=0, step=1, limit=6
    $region2: #{tpu_custom_call.1} parent=1 // loop_pre_header
      _
    $region3: #{tpu_custom_call.1} parent=1 // loop_header
      %s45 = sphi 0, %s49
      %p46 = scmp.ge.s32.totalorder %s45, 6
      %s52 = sphi 0, %s64
      %s53 = sphi 0, %s60
      %s54 = sphi 0, %s52
      %s55 = sphi 0, %s53
      %s56 = sphi 0, %s54
      %s57 = sphi 0, %s55
      %s69 = sphi 0, %s71
      %s72 = sphi 0, %s69
      %s73 = sphi 0, %s72
      %s89 = sphi 0, %s73
      %s95 = sphi 0, %s97
      %s98 = sphi 0, %s95
      %s99 = sphi 0, %s98
      %s115 = sphi 0, %s99
      %s119 = sphi 0, %s119
      %s121 = sphi 0, %s119
      %s122 = sphi 0, %s121
      %s136 = sphi 0, %s122
      %s140 = sphi 0, %s140
      %s142 = sphi 0, %s140
      %s143 = sphi 0, %s142
      %s157 = sphi 0, %s143
      %s161 = sphi 0, %s161
      %s163 = sphi 0, %s161
      %s164 = sphi 0, %s163
      %s178 = sphi 0, %s164
      %s182 = sphi 0, %s182
      %s184 = sphi 0, %s182
      %s185 = sphi 0, %s184
      %s199 = sphi 0, %s185
      %s203 = sphi 0, %s203
      %s205 = sphi 0, %s203
      %s206 = sphi 0, %s205
      %s220 = sphi 0, %s206
      %s224 = sphi 0, %s224
      %s226 = sphi 0, %s224
      %s227 = sphi 0, %s226
      %s241 = sphi 0, %s227
      %s245 = sphi 0, %s245
      %s247 = sphi 0, %s245
      %s248 = sphi 0, %s247
      %s262 = sphi 0, %s248
      %s266 = sphi 0, %s266
      %s268 = sphi 0, %s266
      %s269 = sphi 0, %s268
      %s283 = sphi 0, %s269
      %s287 = sphi 0, %s287
      %s289 = sphi 0, %s287
      %s290 = sphi 0, %s289
      %s304 = sphi 0, %s290
      %s308 = sphi 0, %s308
      %s310 = sphi 0, %s308
      %s311 = sphi 0, %s310
      %s325 = sphi 0, %s311
      %s329 = sphi 0, %s329
      %s331 = sphi 0, %s329
      %s332 = sphi 0, %s331
      %s346 = sphi 0, %s332
      %s350 = sphi 0, %s350
      %s352 = sphi 0, %s350
      %s353 = sphi 0, %s352
      %s367 = sphi 0, %s353
      %s371 = sphi 0, %s371
      %s373 = sphi 0, %s371
      %s374 = sphi 0, %s373
      %s388 = sphi 0, %s374
      %s392 = sphi 0, %s392
      %s394 = sphi 0, %s392
      %s395 = sphi 0, %s394
      %s409 = sphi 0, %s395
      %s413 = sphi 0, %s413
      %s415 = sphi 0, %s413
      %s416 = sphi 0, %s415
      %s430 = sphi 0, %s416
      %s434 = sphi 0, %s434
      %s436 = sphi 0, %s434
      %s437 = sphi 0, %s436
      %s451 = sphi 0, %s437
      %s459 = sphi 0, %s461
      %s462 = sphi 0, %s459
      %s463 = sphi 0, %s462
      %s479 = sphi 0, %s463
    $region4: #{tpu_custom_call.1} parent=1 // loop_header_branch
      %48 = sbr.rel (%p46) target = $region8
    $region5: #{tpu_custom_call.1} parent=1 // loop_body
      %s50 = ssub.s32 %s45, 1
      %s51 = ssub.s32 %s45, 2
      %s58 = sadd.s32 1, %s53
      %p59 = scmp.ge.s32.totalorder %s58, 2
      %s60 = scalar_select %p59, 0, %s58
      %s61 = sadd.s32 1, %s52
      %s62 = scalar_select %p59, %s61, %s52
      %p63 = scmp.ge.s32.totalorder %s62, 2
      %s64 = scalar_select %p63, 0, %s62
      %s65 = ssub.s32 %s52, %s64
      %s66 = ssub.s32 %s53, %s60
      %s67 = sor.u32 %s65, %s66
      %p68 = scmp.eq.s32.totalorder %s67, 0
      %s70 = sadd.s32 %s69, 1
      %s71 = scalar_select %p68, %s69, %s70
      %p74 = pneg %p68
      %p75 = scmp.eq.s32.totalorder %s45, 3
      %p76 = por %p74, %p75
      %p77 = scmp.ne.s32.totalorder %s69, %s72
      %p78 = scmp.eq.s32.totalorder %s45, 0
      %p79 = por %p77, %p78
      %p80 = scmp.ne.s32.totalorder %s69, %s72
      %p81 = scmp.eq.s32.totalorder %s50, 3
      %p82 = por %p80, %p81
      %p83 = scmp.ne.s32.totalorder %s72, %s73
      %p84 = scmp.eq.s32.totalorder %s50, 0
      %p85 = por %p83, %p84
      %p86 = scmp.ne.s32.totalorder %s72, %s73
      %p87 = scmp.eq.s32.totalorder %s51, 3
      %p88 = por %p86, %p87
      %p90 = scmp.ne.s32.totalorder %s73, %s89
      %p91 = scmp.eq.s32.totalorder %s51, 0
      %p92 = por %p90, %p91
      %s93 = ssub.s32 %s52, %s64
      %p94 = scmp.eq.s32.totalorder %s93, 0
      %s96 = sadd.s32 %s95, 1
      %s97 = scalar_select %p94, %s95, %s96
      %p100 = pneg %p94
      %p101 = scmp.eq.s32.totalorder %s45, 3
      %p102 = por %p100, %p101
      %p103 = scmp.ne.s32.totalorder %s95, %s98
      %p104 = scmp.eq.s32.totalorder %s45, 0
      %p105 = por %p103, %p104
      %p106 = scmp.ne.s32.totalorder %s95, %s98
      %p107 = scmp.eq.s32.totalorder %s50, 3
      %p108 = por %p106, %p107
      %p109 = scmp.ne.s32.totalorder %s98, %s99
      %p110 = scmp.eq.s32.totalorder %s50, 0
      %p111 = por %p109, %p110
      %p112 = scmp.ne.s32.totalorder %s98, %s99
      %p113 = scmp.eq.s32.totalorder %s51, 3
      %p114 = por %p112, %p113
      %p116 = scmp.ne.s32.totalorder %s99, %s115
      %p117 = scmp.eq.s32.totalorder %s51, 0
      %p118 = por %p116, %p117
      %s120 = sadd.s32 %s119, 1
      %p123 = scmp.eq.s32.totalorder %s45, 3
      %p124 = scmp.ne.s32.totalorder %s119, %s121
      %p125 = scmp.eq.s32.totalorder %s45, 0
      %p126 = por %p124, %p125
      %p127 = scmp.ne.s32.totalorder %s119, %s121
      %p128 = scmp.eq.s32.totalorder %s50, 3
      %p129 = por %p127, %p128
      %p130 = scmp.ne.s32.totalorder %s121, %s122
      %p131 = scmp.eq.s32.totalorder %s50, 0
      %p132 = por %p130, %p131
      %p133 = scmp.ne.s32.totalorder %s121, %s122
      %p134 = scmp.eq.s32.totalorder %s51, 3
      %p135 = por %p133, %p134
      %p137 = scmp.ne.s32.totalorder %s122, %s136
      %p138 = scmp.eq.s32.totalorder %s51, 0
      %p139 = por %p137, %p138
      %s141 = sadd.s32 %s140, 1
      %p144 = scmp.eq.s32.totalorder %s45, 3
      %p145 = scmp.ne.s32.totalorder %s140, %s142
      %p146 = scmp.eq.s32.totalorder %s45, 0
      %p147 = por %p145, %p146
      %p148 = scmp.ne.s32.totalorder %s140, %s142
      %p149 = scmp.eq.s32.totalorder %s50, 3
      %p150 = por %p148, %p149
      %p151 = scmp.ne.s32.totalorder %s142, %s143
      %p152 = scmp.eq.s32.totalorder %s50, 0
      %p153 = por %p151, %p152
      %p154 = scmp.ne.s32.totalorder %s142, %s143
      %p155 = scmp.eq.s32.totalorder %s51, 3
      %p156 = por %p154, %p155
      %p158 = scmp.ne.s32.totalorder %s143, %s157
      %p159 = scmp.eq.s32.totalorder %s51, 0
      %p160 = por %p158, %p159
      %s162 = sadd.s32 %s161, 1
      %p165 = scmp.eq.s32.totalorder %s45, 3
      %p166 = scmp.ne.s32.totalorder %s161, %s163
      %p167 = scmp.eq.s32.totalorder %s45, 0
      %p168 = por %p166, %p167
      %p169 = scmp.ne.s32.totalorder %s161, %s163
      %p170 = scmp.eq.s32.totalorder %s50, 3
      %p171 = por %p169, %p170
      %p172 = scmp.ne.s32.totalorder %s163, %s164
      %p173 = scmp.eq.s32.totalorder %s50, 0
      %p174 = por %p172, %p173
      %p175 = scmp.ne.s32.totalorder %s163, %s164
      %p176 = scmp.eq.s32.totalorder %s51, 3
      %p177 = por %p175, %p176
      %p179 = scmp.ne.s32.totalorder %s164, %s178
      %p180 = scmp.eq.s32.totalorder %s51, 0
      %p181 = por %p179, %p180
      %s183 = sadd.s32 %s182, 1
      %p186 = scmp.eq.s32.totalorder %s45, 3
      %p187 = scmp.ne.s32.totalorder %s182, %s184
      %p188 = scmp.eq.s32.totalorder %s45, 0
      %p189 = por %p187, %p188
      %p190 = scmp.ne.s32.totalorder %s182, %s184
      %p191 = scmp.eq.s32.totalorder %s50, 3
      %p192 = por %p190, %p191
      %p193 = scmp.ne.s32.totalorder %s184, %s185
      %p194 = scmp.eq.s32.totalorder %s50, 0
      %p195 = por %p193, %p194
      %p196 = scmp.ne.s32.totalorder %s184, %s185
      %p197 = scmp.eq.s32.totalorder %s51, 3
      %p198 = por %p196, %p197
      %p200 = scmp.ne.s32.totalorder %s185, %s199
      %p201 = scmp.eq.s32.totalorder %s51, 0
      %p202 = por %p200, %p201
      %s204 = sadd.s32 %s203, 1
      %p207 = scmp.eq.s32.totalorder %s45, 3
      %p208 = scmp.ne.s32.totalorder %s203, %s205
      %p209 = scmp.eq.s32.totalorder %s45, 0
      %p210 = por %p208, %p209
      %p211 = scmp.ne.s32.totalorder %s203, %s205
      %p212 = scmp.eq.s32.totalorder %s50, 3
      %p213 = por %p211, %p212
      %p214 = scmp.ne.s32.totalorder %s205, %s206
      %p215 = scmp.eq.s32.totalorder %s50, 0
      %p216 = por %p214, %p215
      %p217 = scmp.ne.s32.totalorder %s205, %s206
      %p218 = scmp.eq.s32.totalorder %s51, 3
      %p219 = por %p217, %p218
      %p221 = scmp.ne.s32.totalorder %s206, %s220
      %p222 = scmp.eq.s32.totalorder %s51, 0
      %p223 = por %p221, %p222
      %s225 = sadd.s32 %s224, 1
      %p228 = scmp.eq.s32.totalorder %s45, 3
      %p229 = scmp.ne.s32.totalorder %s224, %s226
      %p230 = scmp.eq.s32.totalorder %s45, 0
      %p231 = por %p229, %p230
      %p232 = scmp.ne.s32.totalorder %s224, %s226
      %p233 = scmp.eq.s32.totalorder %s50, 3
      %p234 = por %p232, %p233
      %p235 = scmp.ne.s32.totalorder %s226, %s227
      %p236 = scmp.eq.s32.totalorder %s50, 0
      %p237 = por %p235, %p236
      %p238 = scmp.ne.s32.totalorder %s226, %s227
      %p239 = scmp.eq.s32.totalorder %s51, 3
      %p240 = por %p238, %p239
      %p242 = scmp.ne.s32.totalorder %s227, %s241
      %p243 = scmp.eq.s32.totalorder %s51, 0
      %p244 = por %p242, %p243
      %s246 = sadd.s32 %s245, 1
      %p249 = scmp.eq.s32.totalorder %s45, 3
      %p250 = scmp.ne.s32.totalorder %s245, %s247
      %p251 = scmp.eq.s32.totalorder %s45, 0
      %p252 = por %p250, %p251
      %p253 = scmp.ne.s32.totalorder %s245, %s247
      %p254 = scmp.eq.s32.totalorder %s50, 3
      %p255 = por %p253, %p254
      %p256 = scmp.ne.s32.totalorder %s247, %s248
      %p257 = scmp.eq.s32.totalorder %s50, 0
      %p258 = por %p256, %p257
      %p259 = scmp.ne.s32.totalorder %s247, %s248
      %p260 = scmp.eq.s32.totalorder %s51, 3
      %p261 = por %p259, %p260
      %p263 = scmp.ne.s32.totalorder %s248, %s262
      %p264 = scmp.eq.s32.totalorder %s51, 0
      %p265 = por %p263, %p264
      %s267 = sadd.s32 %s266, 1
      %p270 = scmp.eq.s32.totalorder %s45, 3
      %p271 = scmp.ne.s32.totalorder %s266, %s268
      %p272 = scmp.eq.s32.totalorder %s45, 0
      %p273 = por %p271, %p272
      %p274 = scmp.ne.s32.totalorder %s266, %s268
      %p275 = scmp.eq.s32.totalorder %s50, 3
      %p276 = por %p274, %p275
      %p277 = scmp.ne.s32.totalorder %s268, %s269
      %p278 = scmp.eq.s32.totalorder %s50, 0
      %p279 = por %p277, %p278
      %p280 = scmp.ne.s32.totalorder %s268, %s269
      %p281 = scmp.eq.s32.totalorder %s51, 3
      %p282 = por %p280, %p281
      %p284 = scmp.ne.s32.totalorder %s269, %s283
      %p285 = scmp.eq.s32.totalorder %s51, 0
      %p286 = por %p284, %p285
      %s288 = sadd.s32 %s287, 1
      %p291 = scmp.eq.s32.totalorder %s45, 3
      %p292 = scmp.ne.s32.totalorder %s287, %s289
      %p293 = scmp.eq.s32.totalorder %s45, 0
      %p294 = por %p292, %p293
      %p295 = scmp.ne.s32.totalorder %s287, %s289
      %p296 = scmp.eq.s32.totalorder %s50, 3
      %p297 = por %p295, %p296
      %p298 = scmp.ne.s32.totalorder %s289, %s290
      %p299 = scmp.eq.s32.totalorder %s50, 0
      %p300 = por %p298, %p299
      %p301 = scmp.ne.s32.totalorder %s289, %s290
      %p302 = scmp.eq.s32.totalorder %s51, 3
      %p303 = por %p301, %p302
      %p305 = scmp.ne.s32.totalorder %s290, %s304
      %p306 = scmp.eq.s32.totalorder %s51, 0
      %p307 = por %p305, %p306
      %s309 = sadd.s32 %s308, 1
      %p312 = scmp.eq.s32.totalorder %s45, 3
      %p313 = scmp.ne.s32.totalorder %s308, %s310
      %p314 = scmp.eq.s32.totalorder %s45, 0
      %p315 = por %p313, %p314
      %p316 = scmp.ne.s32.totalorder %s308, %s310
      %p317 = scmp.eq.s32.totalorder %s50, 3
      %p318 = por %p316, %p317
      %p319 = scmp.ne.s32.totalorder %s310, %s311
      %p320 = scmp.eq.s32.totalorder %s50, 0
      %p321 = por %p319, %p320
      %p322 = scmp.ne.s32.totalorder %s310, %s311
      %p323 = scmp.eq.s32.totalorder %s51, 3
      %p324 = por %p322, %p323
      %p326 = scmp.ne.s32.totalorder %s311, %s325
      %p327 = scmp.eq.s32.totalorder %s51, 0
      %p328 = por %p326, %p327
      %s330 = sadd.s32 %s329, 1
      %p333 = scmp.eq.s32.totalorder %s45, 3
      %p334 = scmp.ne.s32.totalorder %s329, %s331
      %p335 = scmp.eq.s32.totalorder %s45, 0
      %p336 = por %p334, %p335
      %p337 = scmp.ne.s32.totalorder %s329, %s331
      %p338 = scmp.eq.s32.totalorder %s50, 3
      %p339 = por %p337, %p338
      %p340 = scmp.ne.s32.totalorder %s331, %s332
      %p341 = scmp.eq.s32.totalorder %s50, 0
      %p342 = por %p340, %p341
      %p343 = scmp.ne.s32.totalorder %s331, %s332
      %p344 = scmp.eq.s32.totalorder %s51, 3
      %p345 = por %p343, %p344
      %p347 = scmp.ne.s32.totalorder %s332, %s346
      %p348 = scmp.eq.s32.totalorder %s51, 0
      %p349 = por %p347, %p348
      %s351 = sadd.s32 %s350, 1
      %p354 = scmp.eq.s32.totalorder %s45, 3
      %p355 = scmp.ne.s32.totalorder %s350, %s352
      %p356 = scmp.eq.s32.totalorder %s45, 0
      %p357 = por %p355, %p356
      %p358 = scmp.ne.s32.totalorder %s350, %s352
      %p359 = scmp.eq.s32.totalorder %s50, 3
      %p360 = por %p358, %p359
      %p361 = scmp.ne.s32.totalorder %s352, %s353
      %p362 = scmp.eq.s32.totalorder %s50, 0
      %p363 = por %p361, %p362
      %p364 = scmp.ne.s32.totalorder %s352, %s353
      %p365 = scmp.eq.s32.totalorder %s51, 3
      %p366 = por %p364, %p365
      %p368 = scmp.ne.s32.totalorder %s353, %s367
      %p369 = scmp.eq.s32.totalorder %s51, 0
      %p370 = por %p368, %p369
      %s372 = sadd.s32 %s371, 1
      %p375 = scmp.eq.s32.totalorder %s45, 3
      %p376 = scmp.ne.s32.totalorder %s371, %s373
      %p377 = scmp.eq.s32.totalorder %s45, 0
      %p378 = por %p376, %p377
      %p379 = scmp.ne.s32.totalorder %s371, %s373
      %p380 = scmp.eq.s32.totalorder %s50, 3
      %p381 = por %p379, %p380
      %p382 = scmp.ne.s32.totalorder %s373, %s374
      %p383 = scmp.eq.s32.totalorder %s50, 0
      %p384 = por %p382, %p383
      %p385 = scmp.ne.s32.totalorder %s373, %s374
      %p386 = scmp.eq.s32.totalorder %s51, 3
      %p387 = por %p385, %p386
      %p389 = scmp.ne.s32.totalorder %s374, %s388
      %p390 = scmp.eq.s32.totalorder %s51, 0
      %p391 = por %p389, %p390
      %s393 = sadd.s32 %s392, 1
      %p396 = scmp.eq.s32.totalorder %s45, 3
      %p397 = scmp.ne.s32.totalorder %s392, %s394
      %p398 = scmp.eq.s32.totalorder %s45, 0
      %p399 = por %p397, %p398
      %p400 = scmp.ne.s32.totalorder %s392, %s394
      %p401 = scmp.eq.s32.totalorder %s50, 3
      %p402 = por %p400, %p401
      %p403 = scmp.ne.s32.totalorder %s394, %s395
      %p404 = scmp.eq.s32.totalorder %s50, 0
      %p405 = por %p403, %p404
      %p406 = scmp.ne.s32.totalorder %s394, %s395
      %p407 = scmp.eq.s32.totalorder %s51, 3
      %p408 = por %p406, %p407
      %p410 = scmp.ne.s32.totalorder %s395, %s409
      %p411 = scmp.eq.s32.totalorder %s51, 0
      %p412 = por %p410, %p411
      %s414 = sadd.s32 %s413, 1
      %p417 = scmp.eq.s32.totalorder %s45, 3
      %p418 = scmp.ne.s32.totalorder %s413, %s415
      %p419 = scmp.eq.s32.totalorder %s45, 0
      %p420 = por %p418, %p419
      %p421 = scmp.ne.s32.totalorder %s413, %s415
      %p422 = scmp.eq.s32.totalorder %s50, 3
      %p423 = por %p421, %p422
      %p424 = scmp.ne.s32.totalorder %s415, %s416
      %p425 = scmp.eq.s32.totalorder %s50, 0
      %p426 = por %p424, %p425
      %p427 = scmp.ne.s32.totalorder %s415, %s416
      %p428 = scmp.eq.s32.totalorder %s51, 3
      %p429 = por %p427, %p428
      %p431 = scmp.ne.s32.totalorder %s416, %s430
      %p432 = scmp.eq.s32.totalorder %s51, 0
      %p433 = por %p431, %p432
      %s435 = sadd.s32 %s434, 1
      %p438 = scmp.eq.s32.totalorder %s45, 3
      %p439 = scmp.ne.s32.totalorder %s434, %s436
      %p440 = scmp.eq.s32.totalorder %s45, 0
      %p441 = por %p439, %p440
      %p442 = scmp.ne.s32.totalorder %s434, %s436
      %p443 = scmp.eq.s32.totalorder %s50, 3
      %p444 = por %p442, %p443
      %p445 = scmp.ne.s32.totalorder %s436, %s437
      %p446 = scmp.eq.s32.totalorder %s50, 0
      %p447 = por %p445, %p446
      %p448 = scmp.ne.s32.totalorder %s436, %s437
      %p449 = scmp.eq.s32.totalorder %s51, 3
      %p450 = por %p448, %p449
      %p452 = scmp.ne.s32.totalorder %s437, %s451
      %p453 = scmp.eq.s32.totalorder %s51, 0
      %p454 = por %p452, %p453
      %s455 = ssub.s32 %s52, %s64
      %s456 = ssub.s32 %s53, %s60
      %s457 = sor.u32 %s455, %s456
      %p458 = scmp.eq.s32.totalorder %s457, 0
      %s460 = sadd.s32 %s459, 1
      %s461 = scalar_select %p458, %s459, %s460
      %p464 = pneg %p458
      %p465 = scmp.eq.s32.totalorder %s45, 3
      %p466 = por %p464, %p465
      %p467 = scmp.ne.s32.totalorder %s459, %s462
      %p468 = scmp.eq.s32.totalorder %s45, 0
      %p469 = por %p467, %p468
      %p470 = scmp.ne.s32.totalorder %s459, %s462
      %p471 = scmp.eq.s32.totalorder %s50, 3
      %p472 = por %p470, %p471
      %p473 = scmp.ne.s32.totalorder %s462, %s463
      %p474 = scmp.eq.s32.totalorder %s50, 0
      %p475 = por %p473, %p474
      %p476 = scmp.ne.s32.totalorder %s462, %s463
      %p477 = scmp.eq.s32.totalorder %s51, 3
      %p478 = por %p476, %p477
      %p480 = scmp.ne.s32.totalorder %s463, %s479
      %p481 = scmp.eq.s32.totalorder %s51, 0
      %p482 = por %p480, %p481
      %p483 = scmp.le.s32.totalorder 1, %s45
      %p484 = scmp.lt.s32.totalorder %s45, 5
      %p485 = pnand %p483, %p484
      %p486 = pneg %p485
      // Predicated region
      $region9: #{tpu_custom_call.1} parent=5 // pred_check
        _
      $region10: #{tpu_custom_call.1} parent=5 // pred_check_branch
        %488 = sbr.rel (%p485) target = $region12
      $region11: #{tpu_custom_call.1} parent=5 // pred_region
        %s489 = ssub.s32 %s45, 1
        // Predicated region
        $region13: #{tpu_custom_call.1} parent=11 // pred_check
          %p490 = pneg %p132
        $region14: #{tpu_custom_call.1} parent=11 // pred_check_branch
          %492 = sbr.rel (%p490) target = $region16
        $region15: #{tpu_custom_call.1} parent=11 // pred_region
          %494 = vsyncadd [#allocation8], 0
          %s495 = sshll.u32 %s3, 4
          %s496 = int_to_ptr.hbm [resolvable:$true] %s495
          %s497 = sshll.u32 [#allocation9], 4
          %s498 = int_to_ptr.vmem [resolvable:$true] %s497
          %503 = dma.hbm_to_vmem [thread:$0]  %s496, 1024, %s498, [#allocation8], 64, 64, 4
        $region16: #{tpu_custom_call.1} parent=11 // pred_fallthru
          _
        // Predicated region
        $region17: #{tpu_custom_call.1} parent=11 // pred_check
          %p504 = pneg %p153
        $region18: #{tpu_custom_call.1} parent=11 // pred_check_branch
          %506 = sbr.rel (%p504) target = $region20
        $region19: #{tpu_custom_call.1} parent=11 // pred_region
          _
        $region20: #{tpu_custom_call.1} parent=11 // pred_fallthru
          _
        // Predicated region
        $region21: #{tpu_custom_call.1} parent=11 // pred_check
          %p507 = pneg %p174
        $region22: #{tpu_custom_call.1} parent=11 // pred_check_branch
          %509 = sbr.rel (%p507) target = $region24
        $region23: #{tpu_custom_call.1} parent=11 // pred_region
          %511 = vsyncadd [#allocation11], 0
          %s512 = sshll.u32 %s5, 4
          %s513 = int_to_ptr.hbm [resolvable:$true] %s512
          %s514 = sshll.u32 [#allocation10], 4
          %s515 = int_to_ptr.vmem [resolvable:$true] %s514
          %520 = dma.hbm_to_vmem [thread:$0]  %s513, 1024, %s515, [#allocation11], 64, 64, 4
        $region24: #{tpu_custom_call.1} parent=11 // pred_fallthru
          _
        // Predicated region
        $region25: #{tpu_custom_call.1} parent=11 // pred_check
          %p521 = pneg %p195
        $region26: #{tpu_custom_call.1} parent=11 // pred_check_branch
          %523 = sbr.rel (%p521) target = $region28
        $region27: #{tpu_custom_call.1} parent=11 // pred_region
          _
        $region28: #{tpu_custom_call.1} parent=11 // pred_fallthru
          _
        // Predicated region
        $region29: #{tpu_custom_call.1} parent=11 // pred_check
          %p524 = pneg %p216
        $region30: #{tpu_custom_call.1} parent=11 // pred_check_branch
          %526 = sbr.rel (%p524) target = $region32
        $region31: #{tpu_custom_call.1} parent=11 // pred_region
          %528 = vsyncadd [#allocation11], 0
          %s529 = sshll.u32 %s7, 4
          %s530 = int_to_ptr.hbm [resolvable:$true] %s529
          %s531 = sshll.u32 [#allocation12], 4
          %s532 = int_to_ptr.vmem [resolvable:$true] %s531
          %537 = dma.hbm_to_vmem [thread:$0]  %s530, 1024, %s532, [#allocation11], 64, 64, 4
        $region32: #{tpu_custom_call.1} parent=11 // pred_fallthru
          _
        // Predicated region
        $region33: #{tpu_custom_call.1} parent=11 // pred_check
          %p538 = pneg %p237
        $region34: #{tpu_custom_call.1} parent=11 // pred_check_branch
          %540 = sbr.rel (%p538) target = $region36
        $region35: #{tpu_custom_call.1} parent=11 // pred_region
          _
        $region36: #{tpu_custom_call.1} parent=11 // pred_fallthru
          _
        // Predicated region
        $region37: #{tpu_custom_call.1} parent=11 // pred_check
          %p541 = pneg %p258
        $region38: #{tpu_custom_call.1} parent=11 // pred_check_branch
          %543 = sbr.rel (%p541) target = $region40
        $region39: #{tpu_custom_call.1} parent=11 // pred_region
          %545 = vsyncadd [#allocation14], 0
          %s546 = sshll.u32 %s9, 4
          %s547 = int_to_ptr.hbm [resolvable:$true] %s546
          %s548 = sshll.u32 [#allocation13], 4
          %s549 = int_to_ptr.vmem [resolvable:$true] %s548
          %554 = dma.hbm_to_vmem [thread:$0]  %s547, 1024, %s549, [#allocation14], 64, 64, 4
        $region40: #{tpu_custom_call.1} parent=11 // pred_fallthru
          _
        // Predicated region
        $region41: #{tpu_custom_call.1} parent=11 // pred_check
          %p555 = pneg %p279
        $region42: #{tpu_custom_call.1} parent=11 // pred_check_branch
          %557 = sbr.rel (%p555) target = $region44
        $region43: #{tpu_custom_call.1} parent=11 // pred_region
          _
        $region44: #{tpu_custom_call.1} parent=11 // pred_fallthru
          _
        // Predicated region
        $region45: #{tpu_custom_call.1} parent=11 // pred_check
          %p558 = pneg %p300
        $region46: #{tpu_custom_call.1} parent=11 // pred_check_branch
          %560 = sbr.rel (%p558) target = $region48
        $region47: #{tpu_custom_call.1} parent=11 // pred_region
          _
        $region48: #{tpu_custom_call.1} parent=11 // pred_fallthru
          _
        // Predicated region
        $region49: #{tpu_custom_call.1} parent=11 // pred_check
          %p561 = pneg %p321
        $region50: #{tpu_custom_call.1} parent=11 // pred_check_branch
          %563 = sbr.rel (%p561) target = $region52
        $region51: #{tpu_custom_call.1} parent=11 // pred_region
          _
        $region52: #{tpu_custom_call.1} parent=11 // pred_fallthru
          _
        // Predicated region
        $region53: #{tpu_custom_call.1} parent=11 // pred_check
          %p564 = pneg %p342
        $region54: #{tpu_custom_call.1} parent=11 // pred_check_branch
          %566 = sbr.rel (%p564) target = $region56
        $region55: #{tpu_custom_call.1} parent=11 // pred_region
          %568 = vsyncadd [#allocation14], 0
          %s569 = sshll.u32 %s13, 4
          %s570 = int_to_ptr.hbm [resolvable:$true] %s569
          %s571 = sshll.u32 [#allocation15], 4
          %s572 = int_to_ptr.vmem [resolvable:$true] %s571
          %577 = dma.hbm_to_vmem [thread:$0]  %s570, 4096, %s572, [#allocation14], 256, 256, 16
        $region56: #{tpu_custom_call.1} parent=11 // pred_fallthru
          _
        // Predicated region
        $region57: #{tpu_custom_call.1} parent=11 // pred_check
          %p578 = pneg %p363
        $region58: #{tpu_custom_call.1} parent=11 // pred_check_branch
          %580 = sbr.rel (%p578) target = $region60
        $region59: #{tpu_custom_call.1} parent=11 // pred_region
          _
        $region60: #{tpu_custom_call.1} parent=11 // pred_fallthru
          _
        // Predicated region
        $region61: #{tpu_custom_call.1} parent=11 // pred_check
          %p581 = pneg %p384
        $region62: #{tpu_custom_call.1} parent=11 // pred_check_branch
          %583 = sbr.rel (%p581) target = $region64
        $region63: #{tpu_custom_call.1} parent=11 // pred_region
          %585 = vsyncadd [#allocation17], 0
          %s586 = sshll.u32 %s15, 4
          %s587 = int_to_ptr.hbm [resolvable:$true] %s586
          %s588 = sshll.u32 [#allocation16], 4
          %s589 = int_to_ptr.vmem [resolvable:$true] %s588
          %594 = dma.hbm_to_vmem [thread:$0]  %s587, 4096, %s589, [#allocation17], 64, 64, 4
        $region64: #{tpu_custom_call.1} parent=11 // pred_fallthru
          _
        // Predicated region
        $region65: #{tpu_custom_call.1} parent=11 // pred_check
          %p595 = pneg %p405
        $region66: #{tpu_custom_call.1} parent=11 // pred_check_branch
          %597 = sbr.rel (%p595) target = $region68
        $region67: #{tpu_custom_call.1} parent=11 // pred_region
          _
        $region68: #{tpu_custom_call.1} parent=11 // pred_fallthru
          _
        // Predicated region
        $region69: #{tpu_custom_call.1} parent=11 // pred_check
          %p598 = pneg %p426
        $region70: #{tpu_custom_call.1} parent=11 // pred_check_branch
          %600 = sbr.rel (%p598) target = $region72
        $region71: #{tpu_custom_call.1} parent=11 // pred_region
          _
        $region72: #{tpu_custom_call.1} parent=11 // pred_fallthru
          _
        // Predicated region
        $region73: #{tpu_custom_call.1} parent=11 // pred_check
          %p601 = pneg %p447
        $region74: #{tpu_custom_call.1} parent=11 // pred_check_branch
          %603 = sbr.rel (%p601) target = $region76
        $region75: #{tpu_custom_call.1} parent=11 // pred_region
          _
        $region76: #{tpu_custom_call.1} parent=11 // pred_fallthru
          _
      $region12: #{tpu_custom_call.1} parent=5 // pred_fallthru
        _
      %p604 = scmp.lt.s32.totalorder %s45, 4
      // Predicated region
      $region77: #{tpu_custom_call.1} parent=5 // pred_check
        %p605 = pneg %p604
      $region78: #{tpu_custom_call.1} parent=5 // pred_check_branch
        %607 = sbr.rel (%p605) target = $region80
      $region79: #{tpu_custom_call.1} parent=5 // pred_region
        // Predicated region
        $region81: #{tpu_custom_call.1} parent=79 // pred_check
          %p608 = pneg %p79
        $region82: #{tpu_custom_call.1} parent=79 // pred_check_branch
          %610 = sbr.rel (%p608) target = $region84
        $region83: #{tpu_custom_call.1} parent=79 // pred_region
          %s611 = sand.u32 %s69, 1
          %s612 = scalar_lea.sflag [#allocation5], %s611
          %s613 = sand.u32 %s69, 1
          %s614 = smul.addr %s613, 128
          %s615 = scalar_lea.vmem [#allocation4], %s614
          %s616 = smul.u32 16, %s53
          %618 = vsyncadd %s612, 0
          %s619 = smul.addr %s52, 32
          %s620 = sadd.s32 %s616, %s619
          %s621 = smul.addr %s620, 8
          %s622 = scalar_lea.hbm %s1, %s621
          %s623 = sshll.u32 %s622, 4
          %s624 = int_to_ptr.hbm [resolvable:$true] %s623
          %s625 = sshll.u32 %s615, 4
          %s626 = int_to_ptr.vmem [resolvable:$true] %s625
          %631 = dma.hbm_to_vmem [thread:$0]  %s624, 2048, %s626, %s612, 128, 128, 8
        $region84: #{tpu_custom_call.1} parent=79 // pred_fallthru
          _
        // Predicated region
        $region85: #{tpu_custom_call.1} parent=79 // pred_check
          %p632 = pneg %p105
        $region86: #{tpu_custom_call.1} parent=79 // pred_check_branch
          %634 = sbr.rel (%p632) target = $region88
        $region87: #{tpu_custom_call.1} parent=79 // pred_region
          %s635 = sand.u32 %s45, 1
          %s636 = scalar_lea.sflag [#allocation8], %s635
          %s637 = sand.u32 %s95, 1
          %s638 = smul.addr %s637, 256
          %s639 = scalar_lea.vmem [#allocation7], %s638
          %641 = vsyncadd %s636, 0
          %s642 = smul.addr %s52, 32
          %s643 = smul.addr %s642, 8
          %s644 = scalar_lea.hbm %s2, %s643
          %s645 = sshll.u32 %s644, 4
          %s646 = int_to_ptr.hbm [resolvable:$true] %s645
          %s647 = sshll.u32 %s639, 4
          %s648 = int_to_ptr.vmem [resolvable:$true] %s647
          %653 = dma.hbm_to_vmem [thread:$0]  %s646, 4096, %s648, %s636, 128, 128, 8
        $region88: #{tpu_custom_call.1} parent=79 // pred_fallthru
          _
      $region80: #{tpu_custom_call.1} parent=5 // pred_fallthru
        _
      %p654 = scmp.le.s32.totalorder 1, %s45
      %p655 = scmp.lt.s32.totalorder %s45, 5
      %p656 = pnand %p654, %p655
      %p657 = pneg %p656
      // Predicated region
      $region89: #{tpu_custom_call.1} parent=5 // pred_check
        _
      $region90: #{tpu_custom_call.1} parent=5 // pred_check_branch
        %659 = sbr.rel (%p656) target = $region92
      $region91: #{tpu_custom_call.1} parent=5 // pred_region
        %s660 = ssub.s32 %s45, 1
        %s661 = sand.u32 %s72, 1
        %s662 = scalar_lea.sflag [#allocation5], %s661
        %s663 = sand.u32 %s72, 1
        %s664 = smul.addr %s663, 128
        %s665 = scalar_lea.vmem [#allocation4], %s664
        // Predicated region
        $region93: #{tpu_custom_call.1} parent=91 // pred_check
          %p666 = pneg %p85
        $region94: #{tpu_custom_call.1} parent=91 // pred_check_branch
          %668 = sbr.rel (%p666) target = $region96
        $region95: #{tpu_custom_call.1} parent=91 // pred_region
          %670 = dma.done %s662, 2048
        $region96: #{tpu_custom_call.1} parent=91 // pred_fallthru
          _
        %s671 = sand.u32 %s50, 1
        %s672 = scalar_lea.sflag [#allocation8], %s671
        %s673 = sand.u32 %s98, 1
        %s674 = smul.addr %s673, 256
        %s675 = scalar_lea.vmem [#allocation7], %s674
        // Predicated region
        $region97: #{tpu_custom_call.1} parent=91 // pred_check
          %p676 = pneg %p111
        $region98: #{tpu_custom_call.1} parent=91 // pred_check_branch
          %678 = sbr.rel (%p676) target = $region100
        $region99: #{tpu_custom_call.1} parent=91 // pred_region
          %680 = dma.done %s672, 4096
        $region100: #{tpu_custom_call.1} parent=91 // pred_fallthru
          _
        // Predicated region
        $region101: #{tpu_custom_call.1} parent=91 // pred_check
          %p681 = pneg %p132
        $region102: #{tpu_custom_call.1} parent=91 // pred_check_branch
          %683 = sbr.rel (%p681) target = $region104
        $region103: #{tpu_custom_call.1} parent=91 // pred_region
          %685 = dma.done [#allocation8], 1024
        $region104: #{tpu_custom_call.1} parent=91 // pred_fallthru
          _
        // Predicated region
        $region105: #{tpu_custom_call.1} parent=91 // pred_check
          %p686 = pneg %p174
        $region106: #{tpu_custom_call.1} parent=91 // pred_check_branch
          %688 = sbr.rel (%p686) target = $region108
        $region107: #{tpu_custom_call.1} parent=91 // pred_region
          %690 = dma.done [#allocation11], 1024
        $region108: #{tpu_custom_call.1} parent=91 // pred_fallthru
          _
        // Predicated region
        $region109: #{tpu_custom_call.1} parent=91 // pred_check
          %p691 = pneg %p216
        $region110: #{tpu_custom_call.1} parent=91 // pred_check_branch
          %693 = sbr.rel (%p691) target = $region112
        $region111: #{tpu_custom_call.1} parent=91 // pred_region
          %695 = dma.done [#allocation11], 1024
        $region112: #{tpu_custom_call.1} parent=91 // pred_fallthru
          _
        // Predicated region
        $region113: #{tpu_custom_call.1} parent=91 // pred_check
          %p696 = pneg %p258
        $region114: #{tpu_custom_call.1} parent=91 // pred_check_branch
          %698 = sbr.rel (%p696) target = $region116
        $region115: #{tpu_custom_call.1} parent=91 // pred_region
          %700 = dma.done [#allocation14], 1024
        $region116: #{tpu_custom_call.1} parent=91 // pred_fallthru
          _
        // Predicated region
        $region117: #{tpu_custom_call.1} parent=91 // pred_check
          %p701 = pneg %p342
        $region118: #{tpu_custom_call.1} parent=91 // pred_check_branch
          %703 = sbr.rel (%p701) target = $region120
        $region119: #{tpu_custom_call.1} parent=91 // pred_region
          %705 = dma.done [#allocation14], 4096
        $region120: #{tpu_custom_call.1} parent=91 // pred_fallthru
          _
        // Predicated region
        $region121: #{tpu_custom_call.1} parent=91 // pred_check
          %p706 = pneg %p384
        $region122: #{tpu_custom_call.1} parent=91 // pred_check_branch
          %708 = sbr.rel (%p706) target = $region124
        $region123: #{tpu_custom_call.1} parent=91 // pred_region
          %710 = dma.done [#allocation17], 4096
        $region124: #{tpu_custom_call.1} parent=91 // pred_fallthru
          _
        %s711 = sand.u32 %s72, 1
        %s712 = scalar_lea.sflag [#allocation5], %s711
        %s713 = sand.u32 %s72, 1
        %s714 = smul.addr %s713, 128
        %s715 = scalar_lea.vmem [#allocation4], %s714
        %p716 = pneg %p85
        %p717 = pneg %p82
        %s718 = sand.u32 %s50, 1
        %s719 = scalar_lea.sflag [#allocation8], %s718
        %s720 = sand.u32 %s98, 1
        %s721 = smul.addr %s720, 256
        %s722 = scalar_lea.vmem [#allocation7], %s721
        %p723 = pneg %p111
        %p724 = pneg %p108
        %p725 = pneg %p132
        %p726 = pneg %p129
        %p727 = pneg %p153
        %p728 = pneg %p150
        %p729 = pneg %p174
        %p730 = pneg %p171
        %p731 = pneg %p195
        %p732 = pneg %p192
        %p733 = pneg %p216
        %p734 = pneg %p213
        %p735 = pneg %p237
        %p736 = pneg %p234
        %p737 = pneg %p258
        %p738 = pneg %p255
        %p739 = pneg %p279
        %p740 = pneg %p276
        %p741 = pneg %p300
        %p742 = pneg %p297
        %p743 = pneg %p321
        %p744 = pneg %p318
        %p745 = pneg %p342
        %p746 = pneg %p339
        %p747 = pneg %p363
        %p748 = pneg %p360
        %p749 = pneg %p384
        %p750 = pneg %p381
        %p751 = pneg %p405
        %p752 = pneg %p402
        %p753 = pneg %p426
        %p754 = pneg %p423
        %p755 = pneg %p447
        %p756 = pneg %p444
        %p757 = pneg %p475
        %p758 = pneg %p472
        %s759 = sand.u32 %s462, 1
        %s760 = scalar_lea.sflag [#allocation6], %s759
        %s761 = sand.u32 %s462, 1
        %s762 = smul.addr %s761, 128
        %s763 = scalar_lea.vmem [#allocation18], %s762
        %s764 = smul.u32 16, %s55
        %s765 = smul.u32 16, %s55
        %s766 = sld [smem:[#allocation3 + %s54]]
        %v767 = vld [vmem:[%s665] sm:$0xff]
        %v768 = vld [vmem:[%s665 + $0x8] sm:$0xff]
        %v769 = vld [vmem:[%s665 + $0x10] sm:$0xff]
        %v770 = vld [vmem:[%s665 + $0x18] sm:$0xff]
        %v771 = vld [vmem:[%s665 + $0x20] sm:$0xff]
        %v772 = vld [vmem:[%s665 + $0x28] sm:$0xff]
        %v773 = vld [vmem:[%s665 + $0x30] sm:$0xff]
        %v774 = vld [vmem:[%s665 + $0x38] sm:$0xff]
        %v775 = vld [vmem:[%s665 + $0x40] sm:$0xff]
        %v776 = vld [vmem:[%s665 + $0x48] sm:$0xff]
        %v777 = vld [vmem:[%s665 + $0x50] sm:$0xff]
        %v778 = vld [vmem:[%s665 + $0x58] sm:$0xff]
        %v779 = vld [vmem:[%s665 + $0x60] sm:$0xff]
        %v780 = vld [vmem:[%s665 + $0x68] sm:$0xff]
        %v781 = vld [vmem:[%s665 + $0x70] sm:$0xff]
        %v782 = vld [vmem:[%s665 + $0x78] sm:$0xff]
        %v783 = vld [vmem:[%s675] sm:$0xff]
        %v784 = vld [vmem:[%s675 + $0x8] sm:$0xff]
        %v785 = vld [vmem:[%s675 + $0x10] sm:$0xff]
        %v786 = vld [vmem:[%s675 + $0x18] sm:$0xff]
        %v787 = vld [vmem:[%s675 + $0x20] sm:$0xff]
        %v788 = vld [vmem:[%s675 + $0x28] sm:$0xff]
        %v789 = vld [vmem:[%s675 + $0x30] sm:$0xff]
        %v790 = vld [vmem:[%s675 + $0x38] sm:$0xff]
        %v791 = vld [vmem:[%s675 + $0x40] sm:$0xff]
        %v792 = vld [vmem:[%s675 + $0x48] sm:$0xff]
        %v793 = vld [vmem:[%s675 + $0x50] sm:$0xff]
        %v794 = vld [vmem:[%s675 + $0x58] sm:$0xff]
        %v795 = vld [vmem:[%s675 + $0x60] sm:$0xff]
        %v796 = vld [vmem:[%s675 + $0x68] sm:$0xff]
        %v797 = vld [vmem:[%s675 + $0x70] sm:$0xff]
        %v798 = vld [vmem:[%s675 + $0x78] sm:$0xff]
        %v799 = vld [vmem:[%s675 + $0x80] sm:$0xff]
        %v800 = vld [vmem:[%s675 + $0x88] sm:$0xff]
        %v801 = vld [vmem:[%s675 + $0x90] sm:$0xff]
        %v802 = vld [vmem:[%s675 + $0x98] sm:$0xff]
        %v803 = vld [vmem:[%s675 + $0xa0] sm:$0xff]
        %v804 = vld [vmem:[%s675 + $0xa8] sm:$0xff]
        %v805 = vld [vmem:[%s675 + $0xb0] sm:$0xff]
        %v806 = vld [vmem:[%s675 + $0xb8] sm:$0xff]
        %v807 = vld [vmem:[%s675 + $0xc0] sm:$0xff]
        %v808 = vld [vmem:[%s675 + $0xc8] sm:$0xff]
        %v809 = vld [vmem:[%s675 + $0xd0] sm:$0xff]
        %v810 = vld [vmem:[%s675 + $0xd8] sm:$0xff]
        %v811 = vld [vmem:[%s675 + $0xe0] sm:$0xff]
        %v812 = vld [vmem:[%s675 + $0xe8] sm:$0xff]
        %v813 = vld [vmem:[%s675 + $0xf0] sm:$0xff]
        %v814 = vld [vmem:[%s675 + $0xf8] sm:$0xff]
        %v815 = vpack.c.bf16 %v768, %v767
        %v816 = vpack.c.bf16 %v770, %v769
        %v817 = vpack.c.bf16 %v772, %v771
        %v818 = vpack.c.bf16 %v774, %v773
        %v819 = vpack.c.bf16 %v776, %v775
        %v820 = vpack.c.bf16 %v778, %v777
        %v821 = vpack.c.bf16 %v780, %v779
        %v822 = vpack.c.bf16 %v782, %v781
        %v823 = vpack.c.bf16 %v784, %v783
        %v824 = vpack.c.bf16 %v786, %v785
        %v825 = vpack.c.bf16 %v788, %v787
        %v826 = vpack.c.bf16 %v790, %v789
        %v827 = vpack.c.bf16 %v792, %v791
        %v828 = vpack.c.bf16 %v794, %v793
        %v829 = vpack.c.bf16 %v796, %v795
        %v830 = vpack.c.bf16 %v798, %v797
        %v831 = vpack.c.bf16 %v800, %v799
        %v832 = vpack.c.bf16 %v802, %v801
        %v833 = vpack.c.bf16 %v804, %v803
        %v834 = vpack.c.bf16 %v806, %v805
        %v835 = vpack.c.bf16 %v808, %v807
        %v836 = vpack.c.bf16 %v810, %v809
        %v837 = vpack.c.bf16 %v812, %v811
        %v838 = vpack.c.bf16 %v814, %v813
        %v839 = vld [vmem:[#allocation9] sm:$0xf]
        %v840 = vld [vmem:[#allocation9 + $0x4] sm:$0xf]
        %v841 = vld [vmem:[#allocation9 + $0x8] sm:$0xf]
        %v842 = vld [vmem:[#allocation9 + $0xc] sm:$0xf]
        %v843 = vld [vmem:[#allocation9 + $0x10] sm:$0xf]
        %v844 = vld [vmem:[#allocation9 + $0x14] sm:$0xf]
        %v845 = vld [vmem:[#allocation9 + $0x18] sm:$0xf]
        %v846 = vld [vmem:[#allocation9 + $0x1c] sm:$0xf]
        %v847 = vld [vmem:[#allocation9 + $0x20] sm:$0xf]
        %v848 = vld [vmem:[#allocation9 + $0x24] sm:$0xf]
        %v849 = vld [vmem:[#allocation9 + $0x28] sm:$0xf]
        %v850 = vld [vmem:[#allocation9 + $0x2c] sm:$0xf]
        %v851 = vld [vmem:[#allocation9 + $0x30] sm:$0xf]
        %v852 = vld [vmem:[#allocation9 + $0x34] sm:$0xf]
        %v853 = vld [vmem:[#allocation9 + $0x38] sm:$0xf]
        %v854 = vld [vmem:[#allocation9 + $0x3c] sm:$0xf]
        %v855 = vld [vmem:[%s4] sm:$0x1]
        %v857 = vperm.slane %v855, 0
        %v875 = vunpack.c.l.b16 %v839
        %v876 = vunpack.c.l.b16 %v840
        %v877 = vunpack.c.l.b16 %v841
        %v878 = vunpack.c.l.b16 %v842
        %v879 = vunpack.c.l.b16 %v843
        %v880 = vunpack.c.l.b16 %v844
        %v881 = vunpack.c.l.b16 %v845
        %v882 = vunpack.c.l.b16 %v846
        %v883 = vunpack.c.l.b16 %v847
        %v884 = vunpack.c.l.b16 %v848
        %v885 = vunpack.c.l.b16 %v849
        %v886 = vunpack.c.l.b16 %v850
        %v887 = vunpack.c.l.b16 %v851
        %v888 = vunpack.c.l.b16 %v852
        %v889 = vunpack.c.l.b16 %v853
        %v890 = vunpack.c.l.b16 %v854
        %v891 = vpack.c.b16 %v876, %v875
        %v892 = vpack.c.b16 %v878, %v877
        %v893 = vpack.c.b16 %v880, %v879
        %v894 = vpack.c.b16 %v882, %v881
        %v895 = vpack.c.b16 %v884, %v883
        %v896 = vpack.c.b16 %v886, %v885
        %v897 = vpack.c.b16 %v888, %v887
        %v898 = vpack.c.b16 %v890, %v889
        %907 = vmatpush.bf16.msra.mxu0 %v898
        %908 = vmatpush.bf16.msra.mxu0 %v897
        %909 = vmatpush.bf16.msra.mxu0 %v896
        %910 = vmatpush.bf16.msra.mxu0 %v895
        %911 = vmatpush.bf16.msra.mxu0 %v894
        %912 = vmatpush.bf16.msra.mxu0 %v893
        %913 = vmatpush.bf16.msra.mxu0 %v892
        %914 = vmatpush.bf16.msra.mxu0 %v891
        %915 = vmatmul.bf16.gmra.mxu0 %v815
        %v916 = vpop.f32.mrf.mxu0
        %v917 = vadd.f32 %v857, %v916
        %v918 = vpop.f32.mrf.mxu0
        %v919 = vadd.f32 %v857, %v918
        %920 = vmatmul.bf16.gmra.mxu0 %v816
        %v921 = vpop.f32.mrf.mxu0
        %v922 = vadd.f32 %v857, %v921
        %v923 = vpop.f32.mrf.mxu0
        %v924 = vadd.f32 %v857, %v923
        %925 = vmatmul.bf16.gmra.mxu0 %v817
        %v926 = vpop.f32.mrf.mxu0
        %v927 = vadd.f32 %v857, %v926
        %v928 = vpop.f32.mrf.mxu0
        %v929 = vadd.f32 %v857, %v928
        %930 = vmatmul.bf16.gmra.mxu0 %v818
        %v931 = vpop.f32.mrf.mxu0
        %v932 = vadd.f32 %v857, %v931
        %v933 = vpop.f32.mrf.mxu0
        %v934 = vadd.f32 %v857, %v933
        %935 = vmatmul.bf16.gmra.mxu0 %v819
        %v936 = vpop.f32.mrf.mxu0
        %v937 = vadd.f32 %v857, %v936
        %v938 = vpop.f32.mrf.mxu0
        %v939 = vadd.f32 %v857, %v938
        %940 = vmatmul.bf16.gmra.mxu0 %v820
        %v941 = vpop.f32.mrf.mxu0
        %v942 = vadd.f32 %v857, %v941
        %v943 = vpop.f32.mrf.mxu0
        %v944 = vadd.f32 %v857, %v943
        %945 = vmatmul.bf16.gmra.mxu0 %v821
        %v946 = vpop.f32.mrf.mxu0
        %v947 = vadd.f32 %v857, %v946
        %v948 = vpop.f32.mrf.mxu0
        %v949 = vadd.f32 %v857, %v948
        %950 = vmatmul.bf16.gmra.mxu0 %v822
        %v951 = vpop.f32.mrf.mxu0
        %v952 = vadd.f32 %v857, %v951
        %v953 = vpop.f32.mrf.mxu0
        %v954 = vadd.f32 %v857, %v953
        %955 = vdwg.mxu0
        %v956 = vld [vmem:[#allocation10] sm:$0xf]
        %v957 = vld [vmem:[#allocation10 + $0x4] sm:$0xf]
        %v958 = vld [vmem:[#allocation10 + $0x8] sm:$0xf]
        %v959 = vld [vmem:[#allocation10 + $0xc] sm:$0xf]
        %v960 = vld [vmem:[#allocation10 + $0x10] sm:$0xf]
        %v961 = vld [vmem:[#allocation10 + $0x14] sm:$0xf]
        %v962 = vld [vmem:[#allocation10 + $0x18] sm:$0xf]
        %v963 = vld [vmem:[#allocation10 + $0x1c] sm:$0xf]
        %v964 = vld [vmem:[#allocation10 + $0x20] sm:$0xf]
        %v965 = vld [vmem:[#allocation10 + $0x24] sm:$0xf]
        %v966 = vld [vmem:[#allocation10 + $0x28] sm:$0xf]
        %v967 = vld [vmem:[#allocation10 + $0x2c] sm:$0xf]
        %v968 = vld [vmem:[#allocation10 + $0x30] sm:$0xf]
        %v969 = vld [vmem:[#allocation10 + $0x34] sm:$0xf]
        %v970 = vld [vmem:[#allocation10 + $0x38] sm:$0xf]
        %v971 = vld [vmem:[#allocation10 + $0x3c] sm:$0xf]
        %v972 = vld [vmem:[%s6] sm:$0x1]
        %v974 = vperm.slane %v972, 0
        %v992 = vunpack.c.l.b16 %v956
        %v993 = vunpack.c.l.b16 %v957
        %v994 = vunpack.c.l.b16 %v958
        %v995 = vunpack.c.l.b16 %v959
        %v996 = vunpack.c.l.b16 %v960
        %v997 = vunpack.c.l.b16 %v961
        %v998 = vunpack.c.l.b16 %v962
        %v999 = vunpack.c.l.b16 %v963
        %v1000 = vunpack.c.l.b16 %v964
        %v1001 = vunpack.c.l.b16 %v965
        %v1002 = vunpack.c.l.b16 %v966
        %v1003 = vunpack.c.l.b16 %v967
        %v1004 = vunpack.c.l.b16 %v968
        %v1005 = vunpack.c.l.b16 %v969
        %v1006 = vunpack.c.l.b16 %v970
        %v1007 = vunpack.c.l.b16 %v971
        %v1008 = vpack.c.b16 %v993, %v992
        %v1009 = vpack.c.b16 %v995, %v994
        %v1010 = vpack.c.b16 %v997, %v996
        %v1011 = vpack.c.b16 %v999, %v998
        %v1012 = vpack.c.b16 %v1001, %v1000
        %v1013 = vpack.c.b16 %v1003, %v1002
        %v1014 = vpack.c.b16 %v1005, %v1004
        %v1015 = vpack.c.b16 %v1007, %v1006
        %1024 = vmatpush.bf16.msra.mxu0 %v1015
        %1025 = vmatpush.bf16.msra.mxu0 %v1014
        %1026 = vmatpush.bf16.msra.mxu0 %v1013
        %1027 = vmatpush.bf16.msra.mxu0 %v1012
        %1028 = vmatpush.bf16.msra.mxu0 %v1011
        %1029 = vmatpush.bf16.msra.mxu0 %v1010
        %1030 = vmatpush.bf16.msra.mxu0 %v1009
        %1031 = vmatpush.bf16.msra.mxu0 %v1008
        %1032 = vmatmul.bf16.gmra.mxu0 %v823
        %v1033 = vpop.f32.mrf.mxu0
        %v1034 = vadd.f32 %v974, %v1033
        %v1035 = vpop.f32.mrf.mxu0
        %v1036 = vadd.f32 %v974, %v1035
        %1037 = vmatmul.bf16.gmra.mxu0 %v824
        %v1038 = vpop.f32.mrf.mxu0
        %v1039 = vadd.f32 %v974, %v1038
        %v1040 = vpop.f32.mrf.mxu0
        %v1041 = vadd.f32 %v974, %v1040
        %1042 = vmatmul.bf16.gmra.mxu0 %v825
        %v1043 = vpop.f32.mrf.mxu0
        %v1044 = vadd.f32 %v974, %v1043
        %v1045 = vpop.f32.mrf.mxu0
        %v1046 = vadd.f32 %v974, %v1045
        %1047 = vmatmul.bf16.gmra.mxu0 %v826
        %v1048 = vpop.f32.mrf.mxu0
        %v1049 = vadd.f32 %v974, %v1048
        %v1050 = vpop.f32.mrf.mxu0
        %v1051 = vadd.f32 %v974, %v1050
        %1052 = vmatmul.bf16.gmra.mxu0 %v827
        %v1053 = vpop.f32.mrf.mxu0
        %v1054 = vadd.f32 %v974, %v1053
        %v1055 = vpop.f32.mrf.mxu0
        %v1056 = vadd.f32 %v974, %v1055
        %1057 = vmatmul.bf16.gmra.mxu0 %v828
        %v1058 = vpop.f32.mrf.mxu0
        %v1059 = vadd.f32 %v974, %v1058
        %v1060 = vpop.f32.mrf.mxu0
        %v1061 = vadd.f32 %v974, %v1060
        %1062 = vmatmul.bf16.gmra.mxu0 %v829
        %v1063 = vpop.f32.mrf.mxu0
        %v1064 = vadd.f32 %v974, %v1063
        %v1065 = vpop.f32.mrf.mxu0
        %v1066 = vadd.f32 %v974, %v1065
        %1067 = vmatmul.bf16.gmra.mxu0 %v830
        %v1068 = vpop.f32.mrf.mxu0
        %v1069 = vadd.f32 %v974, %v1068
        %v1070 = vpop.f32.mrf.mxu0
        %v1071 = vadd.f32 %v974, %v1070
        %1072 = vmatmul.bf16.gmra.mxu0 %v831
        %v1073 = vpop.f32.mrf.mxu0
        %v1074 = vadd.f32 %v974, %v1073
        %v1075 = vpop.f32.mrf.mxu0
        %v1076 = vadd.f32 %v974, %v1075
        %1077 = vmatmul.bf16.gmra.mxu0 %v832
        %v1078 = vpop.f32.mrf.mxu0
        %v1079 = vadd.f32 %v974, %v1078
        %v1080 = vpop.f32.mrf.mxu0
        %v1081 = vadd.f32 %v974, %v1080
        %1082 = vmatmul.bf16.gmra.mxu0 %v833
        %v1083 = vpop.f32.mrf.mxu0
        %v1084 = vadd.f32 %v974, %v1083
        %v1085 = vpop.f32.mrf.mxu0
        %v1086 = vadd.f32 %v974, %v1085
        %1087 = vmatmul.bf16.gmra.mxu0 %v834
        %v1088 = vpop.f32.mrf.mxu0
        %v1089 = vadd.f32 %v974, %v1088
        %v1090 = vpop.f32.mrf.mxu0
        %v1091 = vadd.f32 %v974, %v1090
        %1092 = vmatmul.bf16.gmra.mxu0 %v835
        %v1093 = vpop.f32.mrf.mxu0
        %v1094 = vadd.f32 %v974, %v1093
        %v1095 = vpop.f32.mrf.mxu0
        %v1096 = vadd.f32 %v974, %v1095
        %1097 = vmatmul.bf16.gmra.mxu0 %v836
        %v1098 = vpop.f32.mrf.mxu0
        %v1099 = vadd.f32 %v974, %v1098
        %v1100 = vpop.f32.mrf.mxu0
        %v1101 = vadd.f32 %v974, %v1100
        %1102 = vmatmul.bf16.gmra.mxu0 %v837
        %v1103 = vpop.f32.mrf.mxu0
        %v1104 = vadd.f32 %v974, %v1103
        %v1105 = vpop.f32.mrf.mxu0
        %v1106 = vadd.f32 %v974, %v1105
        %1107 = vmatmul.bf16.gmra.mxu0 %v838
        %v1108 = vpop.f32.mrf.mxu0
        %v1109 = vadd.f32 %v974, %v1108
        %v1110 = vpop.f32.mrf.mxu0
        %v1111 = vadd.f32 %v974, %v1110
        %1112 = vdwg.mxu0
        %v1113 = vld [vmem:[#allocation12] sm:$0xf]
        %v1114 = vld [vmem:[#allocation12 + $0x4] sm:$0xf]
        %v1115 = vld [vmem:[#allocation12 + $0x8] sm:$0xf]
        %v1116 = vld [vmem:[#allocation12 + $0xc] sm:$0xf]
        %v1117 = vld [vmem:[#allocation12 + $0x10] sm:$0xf]
        %v1118 = vld [vmem:[#allocation12 + $0x14] sm:$0xf]
        %v1119 = vld [vmem:[#allocation12 + $0x18] sm:$0xf]
        %v1120 = vld [vmem:[#allocation12 + $0x1c] sm:$0xf]
        %v1121 = vld [vmem:[#allocation12 + $0x20] sm:$0xf]
        %v1122 = vld [vmem:[#allocation12 + $0x24] sm:$0xf]
        %v1123 = vld [vmem:[#allocation12 + $0x28] sm:$0xf]
        %v1124 = vld [vmem:[#allocation12 + $0x2c] sm:$0xf]
        %v1125 = vld [vmem:[#allocation12 + $0x30] sm:$0xf]
        %v1126 = vld [vmem:[#allocation12 + $0x34] sm:$0xf]
        %v1127 = vld [vmem:[#allocation12 + $0x38] sm:$0xf]
        %v1128 = vld [vmem:[#allocation12 + $0x3c] sm:$0xf]
        %v1129 = vld [vmem:[%s8] sm:$0x1]
        %v1131 = vperm.slane %v1129, 0
        %v1149 = vunpack.c.l.b16 %v1113
        %v1150 = vunpack.c.l.b16 %v1114
        %v1151 = vunpack.c.l.b16 %v1115
        %v1152 = vunpack.c.l.b16 %v1116
        %v1153 = vunpack.c.l.b16 %v1117
        %v1154 = vunpack.c.l.b16 %v1118
        %v1155 = vunpack.c.l.b16 %v1119
        %v1156 = vunpack.c.l.b16 %v1120
        %v1157 = vunpack.c.l.b16 %v1121
        %v1158 = vunpack.c.l.b16 %v1122
        %v1159 = vunpack.c.l.b16 %v1123
        %v1160 = vunpack.c.l.b16 %v1124
        %v1161 = vunpack.c.l.b16 %v1125
        %v1162 = vunpack.c.l.b16 %v1126
        %v1163 = vunpack.c.l.b16 %v1127
        %v1164 = vunpack.c.l.b16 %v1128
        %v1165 = vpack.c.b16 %v1150, %v1149
        %v1166 = vpack.c.b16 %v1152, %v1151
        %v1167 = vpack.c.b16 %v1154, %v1153
        %v1168 = vpack.c.b16 %v1156, %v1155
        %v1169 = vpack.c.b16 %v1158, %v1157
        %v1170 = vpack.c.b16 %v1160, %v1159
        %v1171 = vpack.c.b16 %v1162, %v1161
        %v1172 = vpack.c.b16 %v1164, %v1163
        %1181 = vmatpush.bf16.msra.mxu0 %v1172
        %1182 = vmatpush.bf16.msra.mxu0 %v1171
        %1183 = vmatpush.bf16.msra.mxu0 %v1170
        %1184 = vmatpush.bf16.msra.mxu0 %v1169
        %1185 = vmatpush.bf16.msra.mxu0 %v1168
        %1186 = vmatpush.bf16.msra.mxu0 %v1167
        %1187 = vmatpush.bf16.msra.mxu0 %v1166
        %1188 = vmatpush.bf16.msra.mxu0 %v1165
        %1189 = vmatmul.bf16.gmra.mxu0 %v823
        %v1190 = vpop.f32.mrf.mxu0
        %v1191 = vadd.f32 %v1131, %v1190
        %v1192 = vpop.f32.mrf.mxu0
        %v1193 = vadd.f32 %v1131, %v1192
        %1194 = vmatmul.bf16.gmra.mxu0 %v824
        %v1195 = vpop.f32.mrf.mxu0
        %v1196 = vadd.f32 %v1131, %v1195
        %v1197 = vpop.f32.mrf.mxu0
        %v1198 = vadd.f32 %v1131, %v1197
        %1199 = vmatmul.bf16.gmra.mxu0 %v825
        %v1200 = vpop.f32.mrf.mxu0
        %v1201 = vadd.f32 %v1131, %v1200
        %v1202 = vpop.f32.mrf.mxu0
        %v1203 = vadd.f32 %v1131, %v1202
        %1204 = vmatmul.bf16.gmra.mxu0 %v826
        %v1205 = vpop.f32.mrf.mxu0
        %v1206 = vadd.f32 %v1131, %v1205
        %v1207 = vpop.f32.mrf.mxu0
        %v1208 = vadd.f32 %v1131, %v1207
        %1209 = vmatmul.bf16.gmra.mxu0 %v827
        %v1210 = vpop.f32.mrf.mxu0
        %v1211 = vadd.f32 %v1131, %v1210
        %v1212 = vpop.f32.mrf.mxu0
        %v1213 = vadd.f32 %v1131, %v1212
        %1214 = vmatmul.bf16.gmra.mxu0 %v828
        %v1215 = vpop.f32.mrf.mxu0
        %v1216 = vadd.f32 %v1131, %v1215
        %v1217 = vpop.f32.mrf.mxu0
        %v1218 = vadd.f32 %v1131, %v1217
        %1219 = vmatmul.bf16.gmra.mxu0 %v829
        %v1220 = vpop.f32.mrf.mxu0
        %v1221 = vadd.f32 %v1131, %v1220
        %v1222 = vpop.f32.mrf.mxu0
        %v1223 = vadd.f32 %v1131, %v1222
        %1224 = vmatmul.bf16.gmra.mxu0 %v830
        %v1225 = vpop.f32.mrf.mxu0
        %v1226 = vadd.f32 %v1131, %v1225
        %v1227 = vpop.f32.mrf.mxu0
        %v1228 = vadd.f32 %v1131, %v1227
        %1229 = vmatmul.bf16.gmra.mxu0 %v831
        %v1230 = vpop.f32.mrf.mxu0
        %v1231 = vadd.f32 %v1131, %v1230
        %v1232 = vpop.f32.mrf.mxu0
        %v1233 = vadd.f32 %v1131, %v1232
        %1234 = vmatmul.bf16.gmra.mxu0 %v832
        %v1235 = vpop.f32.mrf.mxu0
        %v1236 = vadd.f32 %v1131, %v1235
        %v1237 = vpop.f32.mrf.mxu0
        %v1238 = vadd.f32 %v1131, %v1237
        %1239 = vmatmul.bf16.gmra.mxu0 %v833
        %v1240 = vpop.f32.mrf.mxu0
        %v1241 = vadd.f32 %v1131, %v1240
        %v1242 = vpop.f32.mrf.mxu0
        %v1243 = vadd.f32 %v1131, %v1242
        %1244 = vmatmul.bf16.gmra.mxu0 %v834
        %v1245 = vpop.f32.mrf.mxu0
        %v1246 = vadd.f32 %v1131, %v1245
        %v1247 = vpop.f32.mrf.mxu0
        %v1248 = vadd.f32 %v1131, %v1247
        %1249 = vmatmul.bf16.gmra.mxu0 %v835
        %v1250 = vpop.f32.mrf.mxu0
        %v1251 = vadd.f32 %v1131, %v1250
        %v1252 = vpop.f32.mrf.mxu0
        %v1253 = vadd.f32 %v1131, %v1252
        %1254 = vmatmul.bf16.gmra.mxu0 %v836
        %v1255 = vpop.f32.mrf.mxu0
        %v1256 = vadd.f32 %v1131, %v1255
        %v1257 = vpop.f32.mrf.mxu0
        %v1258 = vadd.f32 %v1131, %v1257
        %1259 = vmatmul.bf16.gmra.mxu0 %v837
        %v1260 = vpop.f32.mrf.mxu0
        %v1261 = vadd.f32 %v1131, %v1260
        %v1262 = vpop.f32.mrf.mxu0
        %v1263 = vadd.f32 %v1131, %v1262
        %1264 = vmatmul.bf16.gmra.mxu0 %v838
        %v1265 = vpop.f32.mrf.mxu0
        %v1266 = vadd.f32 %v1131, %v1265
        %v1267 = vpop.f32.mrf.mxu0
        %v1268 = vadd.f32 %v1131, %v1267
        %1269 = vdwg.mxu0
        %v1270 = vmul.f32 %v917, 0.088388346
        %v1271 = vmul.f32 %v919, 0.088388346
        %v1272 = vmul.f32 %v922, 0.088388346
        %v1273 = vmul.f32 %v924, 0.088388346
        %v1274 = vmul.f32 %v927, 0.088388346
        %v1275 = vmul.f32 %v929, 0.088388346
        %v1276 = vmul.f32 %v932, 0.088388346
        %v1277 = vmul.f32 %v934, 0.088388346
        %v1278 = vmul.f32 %v937, 0.088388346
        %v1279 = vmul.f32 %v939, 0.088388346
        %v1280 = vmul.f32 %v942, 0.088388346
        %v1281 = vmul.f32 %v944, 0.088388346
        %v1282 = vmul.f32 %v947, 0.088388346
        %v1283 = vmul.f32 %v949, 0.088388346
        %v1284 = vmul.f32 %v952, 0.088388346
        %v1285 = vmul.f32 %v954, 0.088388346
        %v1286 = vpack.c.bf16 %v1271, %v1270
        %v1287 = vpack.c.bf16 %v1273, %v1272
        %v1288 = vpack.c.bf16 %v1275, %v1274
        %v1289 = vpack.c.bf16 %v1277, %v1276
        %v1290 = vpack.c.bf16 %v1279, %v1278
        %v1291 = vpack.c.bf16 %v1281, %v1280
        %v1292 = vpack.c.bf16 %v1283, %v1282
        %v1293 = vpack.c.bf16 %v1285, %v1284
        %v1294 = vpack.c.bf16 %v1036, %v1034
        %v1295 = vpack.c.bf16 %v1041, %v1039
        %v1296 = vpack.c.bf16 %v1046, %v1044
        %v1297 = vpack.c.bf16 %v1051, %v1049
        %v1298 = vpack.c.bf16 %v1056, %v1054
        %v1299 = vpack.c.bf16 %v1061, %v1059
        %v1300 = vpack.c.bf16 %v1066, %v1064
        %v1301 = vpack.c.bf16 %v1071, %v1069
        %v1302 = vpack.c.bf16 %v1076, %v1074
        %v1303 = vpack.c.bf16 %v1081, %v1079
        %v1304 = vpack.c.bf16 %v1086, %v1084
        %v1305 = vpack.c.bf16 %v1091, %v1089
        %v1306 = vpack.c.bf16 %v1096, %v1094
        %v1307 = vpack.c.bf16 %v1101, %v1099
        %v1308 = vpack.c.bf16 %v1106, %v1104
        %v1309 = vpack.c.bf16 %v1111, %v1109
        %1310 = vmatpush.bf16.xpose.msra.mxu0 %v1301
        %1311 = vmatpush.bf16.xpose.msra.mxu0 %v1300
        %1312 = vmatpush.bf16.xpose.msra.mxu0 %v1299
        %1313 = vmatpush.bf16.xpose.msra.mxu0 %v1298
        %1314 = vmatpush.bf16.xpose.msra.mxu0 %v1297
        %1315 = vmatpush.bf16.xpose.msra.mxu0 %v1296
        %1316 = vmatpush.bf16.xpose.msra.mxu0 %v1295
        %1317 = vmatpush.bf16.xpose.msra.mxu0 %v1294
        %1318 = vmatmul.bf16.gmra.mxu0 %v1286
        %v1319 = vpop.f32.mrf.mxu0
        %v1320 = vadd.f32 0.0, %v1319
        %v1321 = vpop.f32.mrf.mxu0
        %v1322 = vadd.f32 0.0, %v1321
        %1323 = vmatmul.bf16.gmra.mxu0 %v1287
        %v1324 = vpop.f32.mrf.mxu0
        %v1325 = vadd.f32 0.0, %v1324
        %v1326 = vpop.f32.mrf.mxu0
        %v1327 = vadd.f32 0.0, %v1326
        %1328 = vmatmul.bf16.gmra.mxu0 %v1288
        %v1329 = vpop.f32.mrf.mxu0
        %v1330 = vadd.f32 0.0, %v1329
        %v1331 = vpop.f32.mrf.mxu0
        %v1332 = vadd.f32 0.0, %v1331
        %1333 = vmatmul.bf16.gmra.mxu0 %v1289
        %v1334 = vpop.f32.mrf.mxu0
        %v1335 = vadd.f32 0.0, %v1334
        %v1336 = vpop.f32.mrf.mxu0
        %v1337 = vadd.f32 0.0, %v1336
        %1338 = vmatmul.bf16.gmra.mxu0 %v1290
        %v1339 = vpop.f32.mrf.mxu0
        %v1340 = vadd.f32 0.0, %v1339
        %v1341 = vpop.f32.mrf.mxu0
        %v1342 = vadd.f32 0.0, %v1341
        %1343 = vmatmul.bf16.gmra.mxu0 %v1291
        %v1344 = vpop.f32.mrf.mxu0
        %v1345 = vadd.f32 0.0, %v1344
        %v1346 = vpop.f32.mrf.mxu0
        %v1347 = vadd.f32 0.0, %v1346
        %1348 = vmatmul.bf16.gmra.mxu0 %v1292
        %v1349 = vpop.f32.mrf.mxu0
        %v1350 = vadd.f32 0.0, %v1349
        %v1351 = vpop.f32.mrf.mxu0
        %v1352 = vadd.f32 0.0, %v1351
        %1353 = vmatmul.bf16.gmra.mxu0 %v1293
        %v1354 = vpop.f32.mrf.mxu0
        %v1355 = vadd.f32 0.0, %v1354
        %v1356 = vpop.f32.mrf.mxu0
        %v1357 = vadd.f32 0.0, %v1356
        %1358 = vdwg.mxu0
        %1359 = vmatpush.bf16.xpose.msra.mxu0 %v1309
        %1360 = vmatpush.bf16.xpose.msra.mxu0 %v1308
        %1361 = vmatpush.bf16.xpose.msra.mxu0 %v1307
        %1362 = vmatpush.bf16.xpose.msra.mxu0 %v1306
        %1363 = vmatpush.bf16.xpose.msra.mxu0 %v1305
        %1364 = vmatpush.bf16.xpose.msra.mxu0 %v1304
        %1365 = vmatpush.bf16.xpose.msra.mxu0 %v1303
        %1366 = vmatpush.bf16.xpose.msra.mxu0 %v1302
        %1367 = vmatmul.bf16.gmra.mxu0 %v1286
        %v1368 = vpop.f32.mrf.mxu0
        %v1369 = vadd.f32 0.0, %v1368
        %v1370 = vpop.f32.mrf.mxu0
        %v1371 = vadd.f32 0.0, %v1370
        %1372 = vmatmul.bf16.gmra.mxu0 %v1287
        %v1373 = vpop.f32.mrf.mxu0
        %v1374 = vadd.f32 0.0, %v1373
        %v1375 = vpop.f32.mrf.mxu0
        %v1376 = vadd.f32 0.0, %v1375
        %1377 = vmatmul.bf16.gmra.mxu0 %v1288
        %v1378 = vpop.f32.mrf.mxu0
        %v1379 = vadd.f32 0.0, %v1378
        %v1380 = vpop.f32.mrf.mxu0
        %v1381 = vadd.f32 0.0, %v1380
        %1382 = vmatmul.bf16.gmra.mxu0 %v1289
        %v1383 = vpop.f32.mrf.mxu0
        %v1384 = vadd.f32 0.0, %v1383
        %v1385 = vpop.f32.mrf.mxu0
        %v1386 = vadd.f32 0.0, %v1385
        %1387 = vmatmul.bf16.gmra.mxu0 %v1290
        %v1388 = vpop.f32.mrf.mxu0
        %v1389 = vadd.f32 0.0, %v1388
        %v1390 = vpop.f32.mrf.mxu0
        %v1391 = vadd.f32 0.0, %v1390
        %1392 = vmatmul.bf16.gmra.mxu0 %v1291
        %v1393 = vpop.f32.mrf.mxu0
        %v1394 = vadd.f32 0.0, %v1393
        %v1395 = vpop.f32.mrf.mxu0
        %v1396 = vadd.f32 0.0, %v1395
        %1397 = vmatmul.bf16.gmra.mxu0 %v1292
        %v1398 = vpop.f32.mrf.mxu0
        %v1399 = vadd.f32 0.0, %v1398
        %v1400 = vpop.f32.mrf.mxu0
        %v1401 = vadd.f32 0.0, %v1400
        %1402 = vmatmul.bf16.gmra.mxu0 %v1293
        %v1403 = vpop.f32.mrf.mxu0
        %v1404 = vadd.f32 0.0, %v1403
        %v1405 = vpop.f32.mrf.mxu0
        %v1406 = vadd.f32 0.0, %v1405
        %1407 = vdwg.mxu0
        %v1408 = vlaneseq
        %v1409 = vand.u32 %v1408, 127
        %v1410 = vadd.s32 %v1409, 128
        %v1411 = vstv %s766
        %vm1412 = vcmp.lt.s32.totalorder %v1409, %v1411
        %vm1413 = vcmp.lt.s32.totalorder %v1410, %v1411
        %v1414 = vsel %vm1412, %v1320, -1e+09
        %v1415 = vsel %vm1413, %v1369, -1e+09
        %v1416 = vsel %vm1412, %v1322, -1e+09
        %v1417 = vsel %vm1413, %v1371, -1e+09
        %v1418 = vsel %vm1412, %v1325, -1e+09
        %v1419 = vsel %vm1413, %v1374, -1e+09
        %v1420 = vsel %vm1412, %v1327, -1e+09
        %v1421 = vsel %vm1413, %v1376, -1e+09
        %v1422 = vsel %vm1412, %v1330, -1e+09
        %v1423 = vsel %vm1413, %v1379, -1e+09
        %v1424 = vsel %vm1412, %v1332, -1e+09
        %v1425 = vsel %vm1413, %v1381, -1e+09
        %v1426 = vsel %vm1412, %v1335, -1e+09
        %v1427 = vsel %vm1413, %v1384, -1e+09
        %v1428 = vsel %vm1412, %v1337, -1e+09
        %v1429 = vsel %vm1413, %v1386, -1e+09
        %v1430 = vsel %vm1412, %v1340, -1e+09
        %v1431 = vsel %vm1413, %v1389, -1e+09
        %v1432 = vsel %vm1412, %v1342, -1e+09
        %v1433 = vsel %vm1413, %v1391, -1e+09
        %v1434 = vsel %vm1412, %v1345, -1e+09
        %v1435 = vsel %vm1413, %v1394, -1e+09
        %v1436 = vsel %vm1412, %v1347, -1e+09
        %v1437 = vsel %vm1413, %v1396, -1e+09
        %v1438 = vsel %vm1412, %v1350, -1e+09
        %v1439 = vsel %vm1413, %v1399, -1e+09
        %v1440 = vsel %vm1412, %v1352, -1e+09
        %v1441 = vsel %vm1413, %v1401, -1e+09
        %v1442 = vsel %vm1412, %v1355, -1e+09
        %v1443 = vsel %vm1413, %v1404, -1e+09
        %v1444 = vsel %vm1412, %v1357, -1e+09
        %v1445 = vsel %vm1413, %v1406, -1e+09
        %v1446 = vmax.f32 %v1414, %v1415
        %1447 = vmax.xlane.f32.xlu0 %v1446
        %v1448 = vpop.xlane.xlu0 %1447
        %v1449 = vmax.f32 %v1416, %v1417
        %1450 = vmax.xlane.f32.xlu0 %v1449
        %v1451 = vpop.xlane.xlu0 %1450
        %v1452 = vmax.f32 %v1418, %v1419
        %1453 = vmax.xlane.f32.xlu0 %v1452
        %v1454 = vpop.xlane.xlu0 %1453
        %v1455 = vmax.f32 %v1420, %v1421
        %1456 = vmax.xlane.f32.xlu0 %v1455
        %v1457 = vpop.xlane.xlu0 %1456
        %v1458 = vmax.f32 %v1422, %v1423
        %1459 = vmax.xlane.f32.xlu0 %v1458
        %v1460 = vpop.xlane.xlu0 %1459
        %v1461 = vmax.f32 %v1424, %v1425
        %1462 = vmax.xlane.f32.xlu0 %v1461
        %v1463 = vpop.xlane.xlu0 %1462
        %v1464 = vmax.f32 %v1426, %v1427
        %1465 = vmax.xlane.f32.xlu0 %v1464
        %v1466 = vpop.xlane.xlu0 %1465
        %v1467 = vmax.f32 %v1428, %v1429
        %1468 = vmax.xlane.f32.xlu0 %v1467
        %v1469 = vpop.xlane.xlu0 %1468
        %v1470 = vmax.f32 %v1430, %v1431
        %1471 = vmax.xlane.f32.xlu0 %v1470
        %v1472 = vpop.xlane.xlu0 %1471
        %v1473 = vmax.f32 %v1432, %v1433
        %1474 = vmax.xlane.f32.xlu0 %v1473
        %v1475 = vpop.xlane.xlu0 %1474
        %v1476 = vmax.f32 %v1434, %v1435
        %1477 = vmax.xlane.f32.xlu0 %v1476
        %v1478 = vpop.xlane.xlu0 %1477
        %v1479 = vmax.f32 %v1436, %v1437
        %1480 = vmax.xlane.f32.xlu0 %v1479
        %v1481 = vpop.xlane.xlu0 %1480
        %v1482 = vmax.f32 %v1438, %v1439
        %1483 = vmax.xlane.f32.xlu0 %v1482
        %v1484 = vpop.xlane.xlu0 %1483
        %v1485 = vmax.f32 %v1440, %v1441
        %1486 = vmax.xlane.f32.xlu0 %v1485
        %v1487 = vpop.xlane.xlu0 %1486
        %v1488 = vmax.f32 %v1442, %v1443
        %1489 = vmax.xlane.f32.xlu0 %v1488
        %v1490 = vpop.xlane.xlu0 %1489
        %v1491 = vmax.f32 %v1444, %v1445
        %1492 = vmax.xlane.f32.xlu0 %v1491
        %v1493 = vpop.xlane.xlu0 %1492
        %v1494 = vsub.f32 %v1414, %v1448
        %v1495 = vsub.f32 %v1415, %v1448
        %v1496 = vsub.f32 %v1416, %v1451
        %v1497 = vsub.f32 %v1417, %v1451
        %v1498 = vsub.f32 %v1418, %v1454
        %v1499 = vsub.f32 %v1419, %v1454
        %v1500 = vsub.f32 %v1420, %v1457
        %v1501 = vsub.f32 %v1421, %v1457
        %v1502 = vsub.f32 %v1422, %v1460
        %v1503 = vsub.f32 %v1423, %v1460
        %v1504 = vsub.f32 %v1424, %v1463
        %v1505 = vsub.f32 %v1425, %v1463
        %v1506 = vsub.f32 %v1426, %v1466
        %v1507 = vsub.f32 %v1427, %v1466
        %v1508 = vsub.f32 %v1428, %v1469
        %v1509 = vsub.f32 %v1429, %v1469
        %v1510 = vsub.f32 %v1430, %v1472
        %v1511 = vsub.f32 %v1431, %v1472
        %v1512 = vsub.f32 %v1432, %v1475
        %v1513 = vsub.f32 %v1433, %v1475
        %v1514 = vsub.f32 %v1434, %v1478
        %v1515 = vsub.f32 %v1435, %v1478
        %v1516 = vsub.f32 %v1436, %v1481
        %v1517 = vsub.f32 %v1437, %v1481
        %v1518 = vsub.f32 %v1438, %v1484
        %v1519 = vsub.f32 %v1439, %v1484
        %v1520 = vsub.f32 %v1440, %v1487
        %v1521 = vsub.f32 %v1441, %v1487
        %v1522 = vsub.f32 %v1442, %v1490
        %v1523 = vsub.f32 %v1443, %v1490
        %v1524 = vsub.f32 %v1444, %v1493
        %v1525 = vsub.f32 %v1445, %v1493
        %v1526 = vmul.f32 %v1494, 1.442695
        %v1527 = vpow.pop %v1526
        %v1528 = vmul.f32 %v1495, 1.442695
        %v1529 = vpow.pop %v1528
        %v1530 = vmul.f32 %v1496, 1.442695
        %v1531 = vpow.pop %v1530
        %v1532 = vmul.f32 %v1497, 1.442695
        %v1533 = vpow.pop %v1532
        %v1534 = vmul.f32 %v1498, 1.442695
        %v1535 = vpow.pop %v1534
        %v1536 = vmul.f32 %v1499, 1.442695
        %v1537 = vpow.pop %v1536
        %v1538 = vmul.f32 %v1500, 1.442695
        %v1539 = vpow.pop %v1538
        %v1540 = vmul.f32 %v1501, 1.442695
        %v1541 = vpow.pop %v1540
        %v1542 = vmul.f32 %v1502, 1.442695
        %v1543 = vpow.pop %v1542
        %v1544 = vmul.f32 %v1503, 1.442695
        %v1545 = vpow.pop %v1544
        %v1546 = vmul.f32 %v1504, 1.442695
        %v1547 = vpow.pop %v1546
        %v1548 = vmul.f32 %v1505, 1.442695
        %v1549 = vpow.pop %v1548
        %v1550 = vmul.f32 %v1506, 1.442695
        %v1551 = vpow.pop %v1550
        %v1552 = vmul.f32 %v1507, 1.442695
        %v1553 = vpow.pop %v1552
        %v1554 = vmul.f32 %v1508, 1.442695
        %v1555 = vpow.pop %v1554
        %v1556 = vmul.f32 %v1509, 1.442695
        %v1557 = vpow.pop %v1556
        %v1558 = vmul.f32 %v1510, 1.442695
        %v1559 = vpow.pop %v1558
        %v1560 = vmul.f32 %v1511, 1.442695
        %v1561 = vpow.pop %v1560
        %v1562 = vmul.f32 %v1512, 1.442695
        %v1563 = vpow.pop %v1562
        %v1564 = vmul.f32 %v1513, 1.442695
        %v1565 = vpow.pop %v1564
        %v1566 = vmul.f32 %v1514, 1.442695
        %v1567 = vpow.pop %v1566
        %v1568 = vmul.f32 %v1515, 1.442695
        %v1569 = vpow.pop %v1568
        %v1570 = vmul.f32 %v1516, 1.442695
        %v1571 = vpow.pop %v1570
        %v1572 = vmul.f32 %v1517, 1.442695
        %v1573 = vpow.pop %v1572
        %v1574 = vmul.f32 %v1518, 1.442695
        %v1575 = vpow.pop %v1574
        %v1576 = vmul.f32 %v1519, 1.442695
        %v1577 = vpow.pop %v1576
        %v1578 = vmul.f32 %v1520, 1.442695
        %v1579 = vpow.pop %v1578
        %v1580 = vmul.f32 %v1521, 1.442695
        %v1581 = vpow.pop %v1580
        %v1582 = vmul.f32 %v1522, 1.442695
        %v1583 = vpow.pop %v1582
        %v1584 = vmul.f32 %v1523, 1.442695
        %v1585 = vpow.pop %v1584
        %v1586 = vmul.f32 %v1524, 1.442695
        %v1587 = vpow.pop %v1586
        %v1588 = vmul.f32 %v1525, 1.442695
        %v1589 = vpow.pop %v1588
        %v1590 = vadd.f32 %v1527, %v1529
        %1591 = vadd.xlane.f32.xlu0 %v1590
        %v1592 = vpop.xlane.xlu0 %1591
        %v1593 = vadd.f32 %v1531, %v1533
        %1594 = vadd.xlane.f32.xlu0 %v1593
        %v1595 = vpop.xlane.xlu0 %1594
        %v1596 = vadd.f32 %v1535, %v1537
        %1597 = vadd.xlane.f32.xlu0 %v1596
        %v1598 = vpop.xlane.xlu0 %1597
        %v1599 = vadd.f32 %v1539, %v1541
        %1600 = vadd.xlane.f32.xlu0 %v1599
        %v1601 = vpop.xlane.xlu0 %1600
        %v1602 = vadd.f32 %v1543, %v1545
        %1603 = vadd.xlane.f32.xlu0 %v1602
        %v1604 = vpop.xlane.xlu0 %1603
        %v1605 = vadd.f32 %v1547, %v1549
        %1606 = vadd.xlane.f32.xlu0 %v1605
        %v1607 = vpop.xlane.xlu0 %1606
        %v1608 = vadd.f32 %v1551, %v1553
        %1609 = vadd.xlane.f32.xlu0 %v1608
        %v1610 = vpop.xlane.xlu0 %1609
        %v1611 = vadd.f32 %v1555, %v1557
        %1612 = vadd.xlane.f32.xlu0 %v1611
        %v1613 = vpop.xlane.xlu0 %1612
        %v1614 = vadd.f32 %v1559, %v1561
        %1615 = vadd.xlane.f32.xlu0 %v1614
        %v1616 = vpop.xlane.xlu0 %1615
        %v1617 = vadd.f32 %v1563, %v1565
        %1618 = vadd.xlane.f32.xlu0 %v1617
        %v1619 = vpop.xlane.xlu0 %1618
        %v1620 = vadd.f32 %v1567, %v1569
        %1621 = vadd.xlane.f32.xlu0 %v1620
        %v1622 = vpop.xlane.xlu0 %1621
        %v1623 = vadd.f32 %v1571, %v1573
        %1624 = vadd.xlane.f32.xlu0 %v1623
        %v1625 = vpop.xlane.xlu0 %1624
        %v1626 = vadd.f32 %v1575, %v1577
        %1627 = vadd.xlane.f32.xlu0 %v1626
        %v1628 = vpop.xlane.xlu0 %1627
        %v1629 = vadd.f32 %v1579, %v1581
        %1630 = vadd.xlane.f32.xlu0 %v1629
        %v1631 = vpop.xlane.xlu0 %1630
        %v1632 = vadd.f32 %v1583, %v1585
        %1633 = vadd.xlane.f32.xlu0 %v1632
        %v1634 = vpop.xlane.xlu0 %1633
        %v1635 = vadd.f32 %v1587, %v1589
        %1636 = vadd.xlane.f32.xlu0 %v1635
        %v1637 = vpop.xlane.xlu0 %1636
        %v1638 = vrcp.pop %v1592
        %v1639 = vrcp.pop %v1595
        %v1640 = vrcp.pop %v1598
        %v1641 = vrcp.pop %v1601
        %v1642 = vrcp.pop %v1604
        %v1643 = vrcp.pop %v1607
        %v1644 = vrcp.pop %v1610
        %v1645 = vrcp.pop %v1613
        %v1646 = vrcp.pop %v1616
        %v1647 = vrcp.pop %v1619
        %v1648 = vrcp.pop %v1622
        %v1649 = vrcp.pop %v1625
        %v1650 = vrcp.pop %v1628
        %v1651 = vrcp.pop %v1631
        %v1652 = vrcp.pop %v1634
        %v1653 = vrcp.pop %v1637
        %v1654 = vmul.f32 %v1527, %v1638
        %v1655 = vmul.f32 %v1529, %v1638
        %v1656 = vmul.f32 %v1531, %v1639
        %v1657 = vmul.f32 %v1533, %v1639
        %v1658 = vmul.f32 %v1535, %v1640
        %v1659 = vmul.f32 %v1537, %v1640
        %v1660 = vmul.f32 %v1539, %v1641
        %v1661 = vmul.f32 %v1541, %v1641
        %v1662 = vmul.f32 %v1543, %v1642
        %v1663 = vmul.f32 %v1545, %v1642
        %v1664 = vmul.f32 %v1547, %v1643
        %v1665 = vmul.f32 %v1549, %v1643
        %v1666 = vmul.f32 %v1551, %v1644
        %v1667 = vmul.f32 %v1553, %v1644
        %v1668 = vmul.f32 %v1555, %v1645
        %v1669 = vmul.f32 %v1557, %v1645
        %v1670 = vmul.f32 %v1559, %v1646
        %v1671 = vmul.f32 %v1561, %v1646
        %v1672 = vmul.f32 %v1563, %v1647
        %v1673 = vmul.f32 %v1565, %v1647
        %v1674 = vmul.f32 %v1567, %v1648
        %v1675 = vmul.f32 %v1569, %v1648
        %v1676 = vmul.f32 %v1571, %v1649
        %v1677 = vmul.f32 %v1573, %v1649
        %v1678 = vmul.f32 %v1575, %v1650
        %v1679 = vmul.f32 %v1577, %v1650
        %v1680 = vmul.f32 %v1579, %v1651
        %v1681 = vmul.f32 %v1581, %v1651
        %v1682 = vmul.f32 %v1583, %v1652
        %v1683 = vmul.f32 %v1585, %v1652
        %v1684 = vmul.f32 %v1587, %v1653
        %v1685 = vmul.f32 %v1589, %v1653
        %v1686 = vpack.c.bf16 %v1656, %v1654
        %v1687 = vpack.c.bf16 %v1657, %v1655
        %v1688 = vpack.c.bf16 %v1660, %v1658
        %v1689 = vpack.c.bf16 %v1661, %v1659
        %v1690 = vpack.c.bf16 %v1664, %v1662
        %v1691 = vpack.c.bf16 %v1665, %v1663
        %v1692 = vpack.c.bf16 %v1668, %v1666
        %v1693 = vpack.c.bf16 %v1669, %v1667
        %v1694 = vpack.c.bf16 %v1672, %v1670
        %v1695 = vpack.c.bf16 %v1673, %v1671
        %v1696 = vpack.c.bf16 %v1676, %v1674
        %v1697 = vpack.c.bf16 %v1677, %v1675
        %v1698 = vpack.c.bf16 %v1680, %v1678
        %v1699 = vpack.c.bf16 %v1681, %v1679
        %v1700 = vpack.c.bf16 %v1684, %v1682
        %v1701 = vpack.c.bf16 %v1685, %v1683
        %v1702 = vpack.c.bf16 %v1193, %v1191
        %v1703 = vpack.c.bf16 %v1198, %v1196
        %v1704 = vpack.c.bf16 %v1203, %v1201
        %v1705 = vpack.c.bf16 %v1208, %v1206
        %v1706 = vpack.c.bf16 %v1213, %v1211
        %v1707 = vpack.c.bf16 %v1218, %v1216
        %v1708 = vpack.c.bf16 %v1223, %v1221
        %v1709 = vpack.c.bf16 %v1228, %v1226
        %v1710 = vpack.c.bf16 %v1233, %v1231
        %v1711 = vpack.c.bf16 %v1238, %v1236
        %v1712 = vpack.c.bf16 %v1243, %v1241
        %v1713 = vpack.c.bf16 %v1248, %v1246
        %v1714 = vpack.c.bf16 %v1253, %v1251
        %v1715 = vpack.c.bf16 %v1258, %v1256
        %v1716 = vpack.c.bf16 %v1263, %v1261
        %v1717 = vpack.c.bf16 %v1268, %v1266
        %1718 = vmatpush.bf16.msra.mxu0 %v1709
        %1719 = vmatpush.bf16.msra.mxu0 %v1708
        %1720 = vmatpush.bf16.msra.mxu0 %v1707
        %1721 = vmatpush.bf16.msra.mxu0 %v1706
        %1722 = vmatpush.bf16.msra.mxu0 %v1705
        %1723 = vmatpush.bf16.msra.mxu0 %v1704
        %1724 = vmatpush.bf16.msra.mxu0 %v1703
        %1725 = vmatpush.bf16.msra.mxu0 %v1702
        %1726 = vmatmul.bf16.gmra.mxu0 %v1686
        %v1727 = vpop.f32.mrf.mxu0
        %v1728 = vadd.f32 0.0, %v1727
        %v1729 = vpop.f32.mrf.mxu0
        %v1730 = vadd.f32 0.0, %v1729
        %1731 = vmatmul.bf16.gmra.mxu0 %v1688
        %v1732 = vpop.f32.mrf.mxu0
        %v1733 = vadd.f32 0.0, %v1732
        %v1734 = vpop.f32.mrf.mxu0
        %v1735 = vadd.f32 0.0, %v1734
        %1736 = vmatmul.bf16.gmra.mxu0 %v1690
        %v1737 = vpop.f32.mrf.mxu0
        %v1738 = vadd.f32 0.0, %v1737
        %v1739 = vpop.f32.mrf.mxu0
        %v1740 = vadd.f32 0.0, %v1739
        %1741 = vmatmul.bf16.gmra.mxu0 %v1692
        %v1742 = vpop.f32.mrf.mxu0
        %v1743 = vadd.f32 0.0, %v1742
        %v1744 = vpop.f32.mrf.mxu0
        %v1745 = vadd.f32 0.0, %v1744
        %1746 = vmatmul.bf16.gmra.mxu0 %v1694
        %v1747 = vpop.f32.mrf.mxu0
        %v1748 = vadd.f32 0.0, %v1747
        %v1749 = vpop.f32.mrf.mxu0
        %v1750 = vadd.f32 0.0, %v1749
        %1751 = vmatmul.bf16.gmra.mxu0 %v1696
        %v1752 = vpop.f32.mrf.mxu0
        %v1753 = vadd.f32 0.0, %v1752
        %v1754 = vpop.f32.mrf.mxu0
        %v1755 = vadd.f32 0.0, %v1754
        %1756 = vmatmul.bf16.gmra.mxu0 %v1698
        %v1757 = vpop.f32.mrf.mxu0
        %v1758 = vadd.f32 0.0, %v1757
        %v1759 = vpop.f32.mrf.mxu0
        %v1760 = vadd.f32 0.0, %v1759
        %1761 = vmatmul.bf16.gmra.mxu0 %v1700
        %v1762 = vpop.f32.mrf.mxu0
        %v1763 = vadd.f32 0.0, %v1762
        %v1764 = vpop.f32.mrf.mxu0
        %v1765 = vadd.f32 0.0, %v1764
        %1766 = vdwg.mxu0
        %1767 = vmatpush.bf16.msra.mxu0 %v1717
        %1768 = vmatpush.bf16.msra.mxu0 %v1716
        %1769 = vmatpush.bf16.msra.mxu0 %v1715
        %1770 = vmatpush.bf16.msra.mxu0 %v1714
        %1771 = vmatpush.bf16.msra.mxu0 %v1713
        %1772 = vmatpush.bf16.msra.mxu0 %v1712
        %1773 = vmatpush.bf16.msra.mxu0 %v1711
        %1774 = vmatpush.bf16.msra.mxu0 %v1710
        %1775 = vmatmul.bf16.gmra.mxu0 %v1687
        %v1776 = vpop.f32.mrf.mxu0
        %v1777 = vadd.f32 %v1728, %v1776
        %v1778 = vpop.f32.mrf.mxu0
        %v1779 = vadd.f32 %v1730, %v1778
        %1780 = vmatmul.bf16.gmra.mxu0 %v1689
        %v1781 = vpop.f32.mrf.mxu0
        %v1782 = vadd.f32 %v1733, %v1781
        %v1783 = vpop.f32.mrf.mxu0
        %v1784 = vadd.f32 %v1735, %v1783
        %1785 = vmatmul.bf16.gmra.mxu0 %v1691
        %v1786 = vpop.f32.mrf.mxu0
        %v1787 = vadd.f32 %v1738, %v1786
        %v1788 = vpop.f32.mrf.mxu0
        %v1789 = vadd.f32 %v1740, %v1788
        %1790 = vmatmul.bf16.gmra.mxu0 %v1693
        %v1791 = vpop.f32.mrf.mxu0
        %v1792 = vadd.f32 %v1743, %v1791
        %v1793 = vpop.f32.mrf.mxu0
        %v1794 = vadd.f32 %v1745, %v1793
        %1795 = vmatmul.bf16.gmra.mxu0 %v1695
        %v1796 = vpop.f32.mrf.mxu0
        %v1797 = vadd.f32 %v1748, %v1796
        %v1798 = vpop.f32.mrf.mxu0
        %v1799 = vadd.f32 %v1750, %v1798
        %1800 = vmatmul.bf16.gmra.mxu0 %v1697
        %v1801 = vpop.f32.mrf.mxu0
        %v1802 = vadd.f32 %v1753, %v1801
        %v1803 = vpop.f32.mrf.mxu0
        %v1804 = vadd.f32 %v1755, %v1803
        %1805 = vmatmul.bf16.gmra.mxu0 %v1699
        %v1806 = vpop.f32.mrf.mxu0
        %v1807 = vadd.f32 %v1758, %v1806
        %v1808 = vpop.f32.mrf.mxu0
        %v1809 = vadd.f32 %v1760, %v1808
        %1810 = vmatmul.bf16.gmra.mxu0 %v1701
        %v1811 = vpop.f32.mrf.mxu0
        %v1812 = vadd.f32 %v1763, %v1811
        %v1813 = vpop.f32.mrf.mxu0
        %v1814 = vadd.f32 %v1765, %v1813
        %1815 = vdwg.mxu0
        %v1816 = vpack.c.bf16 %v1779, %v1777
        %v1817 = vpack.c.bf16 %v1784, %v1782
        %v1818 = vpack.c.bf16 %v1789, %v1787
        %v1819 = vpack.c.bf16 %v1794, %v1792
        %v1820 = vpack.c.bf16 %v1799, %v1797
        %v1821 = vpack.c.bf16 %v1804, %v1802
        %v1822 = vpack.c.bf16 %v1809, %v1807
        %v1823 = vpack.c.bf16 %v1814, %v1812
        %v1824 = vld [vmem:[#allocation13] sm:$0xf]
        %v1825 = vld [vmem:[#allocation13 + $0x4] sm:$0xf]
        %v1826 = vld [vmem:[#allocation13 + $0x8] sm:$0xf]
        %v1827 = vld [vmem:[#allocation13 + $0xc] sm:$0xf]
        %v1828 = vld [vmem:[#allocation13 + $0x10] sm:$0xf]
        %v1829 = vld [vmem:[#allocation13 + $0x14] sm:$0xf]
        %v1830 = vld [vmem:[#allocation13 + $0x18] sm:$0xf]
        %v1831 = vld [vmem:[#allocation13 + $0x1c] sm:$0xf]
        %v1832 = vld [vmem:[#allocation13 + $0x20] sm:$0xf]
        %v1833 = vld [vmem:[#allocation13 + $0x24] sm:$0xf]
        %v1834 = vld [vmem:[#allocation13 + $0x28] sm:$0xf]
        %v1835 = vld [vmem:[#allocation13 + $0x2c] sm:$0xf]
        %v1836 = vld [vmem:[#allocation13 + $0x30] sm:$0xf]
        %v1837 = vld [vmem:[#allocation13 + $0x34] sm:$0xf]
        %v1838 = vld [vmem:[#allocation13 + $0x38] sm:$0xf]
        %v1839 = vld [vmem:[#allocation13 + $0x3c] sm:$0xf]
        %v1840 = vld [vmem:[%s10] sm:$0x1]
        %v1842 = vperm.slane %v1840, 0
        %v1860 = vunpack.c.l.b16 %v1824
        %v1861 = vunpack.c.l.b16 %v1825
        %v1862 = vunpack.c.l.b16 %v1826
        %v1863 = vunpack.c.l.b16 %v1827
        %v1864 = vunpack.c.l.b16 %v1828
        %v1865 = vunpack.c.l.b16 %v1829
        %v1866 = vunpack.c.l.b16 %v1830
        %v1867 = vunpack.c.l.b16 %v1831
        %v1868 = vunpack.c.l.b16 %v1832
        %v1869 = vunpack.c.l.b16 %v1833
        %v1870 = vunpack.c.l.b16 %v1834
        %v1871 = vunpack.c.l.b16 %v1835
        %v1872 = vunpack.c.l.b16 %v1836
        %v1873 = vunpack.c.l.b16 %v1837
        %v1874 = vunpack.c.l.b16 %v1838
        %v1875 = vunpack.c.l.b16 %v1839
        %v1876 = vpack.c.b16 %v1861, %v1860
        %v1877 = vpack.c.b16 %v1863, %v1862
        %v1878 = vpack.c.b16 %v1865, %v1864
        %v1879 = vpack.c.b16 %v1867, %v1866
        %v1880 = vpack.c.b16 %v1869, %v1868
        %v1881 = vpack.c.b16 %v1871, %v1870
        %v1882 = vpack.c.b16 %v1873, %v1872
        %v1883 = vpack.c.b16 %v1875, %v1874
        %1892 = vmatpush.bf16.msra.mxu0 %v1883
        %1893 = vmatpush.bf16.msra.mxu0 %v1882
        %1894 = vmatpush.bf16.msra.mxu0 %v1881
        %1895 = vmatpush.bf16.msra.mxu0 %v1880
        %1896 = vmatpush.bf16.msra.mxu0 %v1879
        %1897 = vmatpush.bf16.msra.mxu0 %v1878
        %1898 = vmatpush.bf16.msra.mxu0 %v1877
        %1899 = vmatpush.bf16.msra.mxu0 %v1876
        %1900 = vmatmul.bf16.gmra.mxu0 %v1816
        %v1901 = vpop.f32.mrf.mxu0
        %v1902 = vadd.f32 %v1842, %v1901
        %v1903 = vpop.f32.mrf.mxu0
        %v1904 = vadd.f32 %v1842, %v1903
        %1905 = vmatmul.bf16.gmra.mxu0 %v1817
        %v1906 = vpop.f32.mrf.mxu0
        %v1907 = vadd.f32 %v1842, %v1906
        %v1908 = vpop.f32.mrf.mxu0
        %v1909 = vadd.f32 %v1842, %v1908
        %1910 = vmatmul.bf16.gmra.mxu0 %v1818
        %v1911 = vpop.f32.mrf.mxu0
        %v1912 = vadd.f32 %v1842, %v1911
        %v1913 = vpop.f32.mrf.mxu0
        %v1914 = vadd.f32 %v1842, %v1913
        %1915 = vmatmul.bf16.gmra.mxu0 %v1819
        %v1916 = vpop.f32.mrf.mxu0
        %v1917 = vadd.f32 %v1842, %v1916
        %v1918 = vpop.f32.mrf.mxu0
        %v1919 = vadd.f32 %v1842, %v1918
        %1920 = vmatmul.bf16.gmra.mxu0 %v1820
        %v1921 = vpop.f32.mrf.mxu0
        %v1922 = vadd.f32 %v1842, %v1921
        %v1923 = vpop.f32.mrf.mxu0
        %v1924 = vadd.f32 %v1842, %v1923
        %1925 = vmatmul.bf16.gmra.mxu0 %v1821
        %v1926 = vpop.f32.mrf.mxu0
        %v1927 = vadd.f32 %v1842, %v1926
        %v1928 = vpop.f32.mrf.mxu0
        %v1929 = vadd.f32 %v1842, %v1928
        %1930 = vmatmul.bf16.gmra.mxu0 %v1822
        %v1931 = vpop.f32.mrf.mxu0
        %v1932 = vadd.f32 %v1842, %v1931
        %v1933 = vpop.f32.mrf.mxu0
        %v1934 = vadd.f32 %v1842, %v1933
        %1935 = vmatmul.bf16.gmra.mxu0 %v1823
        %v1936 = vpop.f32.mrf.mxu0
        %v1937 = vadd.f32 %v1842, %v1936
        %v1938 = vpop.f32.mrf.mxu0
        %v1939 = vadd.f32 %v1842, %v1938
        %1940 = vdwg.mxu0
        %v1941 = vadd.f32 %v767, %v1902
        %v1942 = vadd.f32 %v768, %v1904
        %v1943 = vadd.f32 %v769, %v1907
        %v1944 = vadd.f32 %v770, %v1909
        %v1945 = vadd.f32 %v771, %v1912
        %v1946 = vadd.f32 %v772, %v1914
        %v1947 = vadd.f32 %v773, %v1917
        %v1948 = vadd.f32 %v774, %v1919
        %v1949 = vadd.f32 %v775, %v1922
        %v1950 = vadd.f32 %v776, %v1924
        %v1951 = vadd.f32 %v777, %v1927
        %v1952 = vadd.f32 %v778, %v1929
        %v1953 = vadd.f32 %v779, %v1932
        %v1954 = vadd.f32 %v780, %v1934
        %v1955 = vadd.f32 %v781, %v1937
        %v1956 = vadd.f32 %v782, %v1939
        %v1957 = vld [vmem:[%s11] sm:$0x1]
        %v1958 = vld [vmem:[%s12] sm:$0x1]
        %1959 = vadd.xlane.f32.xlu0 %v1941
        %v1960 = vpop.xlane.xlu0 %1959
        %1961 = vadd.xlane.f32.xlu0 %v1942
        %v1962 = vpop.xlane.xlu0 %1961
        %1963 = vadd.xlane.f32.xlu0 %v1943
        %v1964 = vpop.xlane.xlu0 %1963
        %1965 = vadd.xlane.f32.xlu0 %v1944
        %v1966 = vpop.xlane.xlu0 %1965
        %1967 = vadd.xlane.f32.xlu0 %v1945
        %v1968 = vpop.xlane.xlu0 %1967
        %1969 = vadd.xlane.f32.xlu0 %v1946
        %v1970 = vpop.xlane.xlu0 %1969
        %1971 = vadd.xlane.f32.xlu0 %v1947
        %v1972 = vpop.xlane.xlu0 %1971
        %1973 = vadd.xlane.f32.xlu0 %v1948
        %v1974 = vpop.xlane.xlu0 %1973
        %1975 = vadd.xlane.f32.xlu0 %v1949
        %v1976 = vpop.xlane.xlu0 %1975
        %1977 = vadd.xlane.f32.xlu0 %v1950
        %v1978 = vpop.xlane.xlu0 %1977
        %1979 = vadd.xlane.f32.xlu0 %v1951
        %v1980 = vpop.xlane.xlu0 %1979
        %1981 = vadd.xlane.f32.xlu0 %v1952
        %v1982 = vpop.xlane.xlu0 %1981
        %1983 = vadd.xlane.f32.xlu0 %v1953
        %v1984 = vpop.xlane.xlu0 %1983
        %1985 = vadd.xlane.f32.xlu0 %v1954
        %v1986 = vpop.xlane.xlu0 %1985
        %1987 = vadd.xlane.f32.xlu0 %v1955
        %v1988 = vpop.xlane.xlu0 %1987
        %1989 = vadd.xlane.f32.xlu0 %v1956
        %v1990 = vpop.xlane.xlu0 %1989
        %v1991 = vrcp.pop 128.0
        %v1992 = vmul.f32 128.0, %v1991
        %v1993 = vsub.f32 1.0, %v1992
        %v1994 = vmul.f32 %v1991, %v1993
        %v1995 = vadd.f32 %v1991, %v1994
        %vm1996 = vweird.f32 %v1991
        %v1997 = vsel %vm1996, %v1991, %v1995
        %v1998 = vmul.f32 %v1960, %v1997
        %v1999 = vmul.f32 %v1962, %v1997
        %v2000 = vmul.f32 %v1964, %v1997
        %v2001 = vmul.f32 %v1966, %v1997
        %v2002 = vmul.f32 %v1968, %v1997
        %v2003 = vmul.f32 %v1970, %v1997
        %v2004 = vmul.f32 %v1972, %v1997
        %v2005 = vmul.f32 %v1974, %v1997
        %v2006 = vmul.f32 %v1976, %v1997
        %v2007 = vmul.f32 %v1978, %v1997
        %v2008 = vmul.f32 %v1980, %v1997
        %v2009 = vmul.f32 %v1982, %v1997
        %v2010 = vmul.f32 %v1984, %v1997
        %v2011 = vmul.f32 %v1986, %v1997
        %v2012 = vmul.f32 %v1988, %v1997
        %v2013 = vmul.f32 %v1990, %v1997
        %v2014 = vsub.f32 %v1941, %v1998
        %v2015 = vsub.f32 %v1942, %v1999
        %v2016 = vsub.f32 %v1943, %v2000
        %v2017 = vsub.f32 %v1944, %v2001
        %v2018 = vsub.f32 %v1945, %v2002
        %v2019 = vsub.f32 %v1946, %v2003
        %v2020 = vsub.f32 %v1947, %v2004
        %v2021 = vsub.f32 %v1948, %v2005
        %v2022 = vsub.f32 %v1949, %v2006
        %v2023 = vsub.f32 %v1950, %v2007
        %v2024 = vsub.f32 %v1951, %v2008
        %v2025 = vsub.f32 %v1952, %v2009
        %v2026 = vsub.f32 %v1953, %v2010
        %v2027 = vsub.f32 %v1954, %v2011
        %v2028 = vsub.f32 %v1955, %v2012
        %v2029 = vsub.f32 %v1956, %v2013
        %v2030 = vmul.f32 %v2014, %v2014
        %v2031 = vmul.f32 %v2015, %v2015
        %v2032 = vmul.f32 %v2016, %v2016
        %v2033 = vmul.f32 %v2017, %v2017
        %v2034 = vmul.f32 %v2018, %v2018
        %v2035 = vmul.f32 %v2019, %v2019
        %v2036 = vmul.f32 %v2020, %v2020
        %v2037 = vmul.f32 %v2021, %v2021
        %v2038 = vmul.f32 %v2022, %v2022
        %v2039 = vmul.f32 %v2023, %v2023
        %v2040 = vmul.f32 %v2024, %v2024
        %v2041 = vmul.f32 %v2025, %v2025
        %v2042 = vmul.f32 %v2026, %v2026
        %v2043 = vmul.f32 %v2027, %v2027
        %v2044 = vmul.f32 %v2028, %v2028
        %v2045 = vmul.f32 %v2029, %v2029
        %2046 = vadd.xlane.f32.xlu0 %v2030
        %v2047 = vpop.xlane.xlu0 %2046
        %2048 = vadd.xlane.f32.xlu0 %v2031
        %v2049 = vpop.xlane.xlu0 %2048
        %2050 = vadd.xlane.f32.xlu0 %v2032
        %v2051 = vpop.xlane.xlu0 %2050
        %2052 = vadd.xlane.f32.xlu0 %v2033
        %v2053 = vpop.xlane.xlu0 %2052
        %2054 = vadd.xlane.f32.xlu0 %v2034
        %v2055 = vpop.xlane.xlu0 %2054
        %2056 = vadd.xlane.f32.xlu0 %v2035
        %v2057 = vpop.xlane.xlu0 %2056
        %2058 = vadd.xlane.f32.xlu0 %v2036
        %v2059 = vpop.xlane.xlu0 %2058
        %2060 = vadd.xlane.f32.xlu0 %v2037
        %v2061 = vpop.xlane.xlu0 %2060
        %2062 = vadd.xlane.f32.xlu0 %v2038
        %v2063 = vpop.xlane.xlu0 %2062
        %2064 = vadd.xlane.f32.xlu0 %v2039
        %v2065 = vpop.xlane.xlu0 %2064
        %2066 = vadd.xlane.f32.xlu0 %v2040
        %v2067 = vpop.xlane.xlu0 %2066
        %2068 = vadd.xlane.f32.xlu0 %v2041
        %v2069 = vpop.xlane.xlu0 %2068
        %2070 = vadd.xlane.f32.xlu0 %v2042
        %v2071 = vpop.xlane.xlu0 %2070
        %2072 = vadd.xlane.f32.xlu0 %v2043
        %v2073 = vpop.xlane.xlu0 %2072
        %2074 = vadd.xlane.f32.xlu0 %v2044
        %v2075 = vpop.xlane.xlu0 %2074
        %2076 = vadd.xlane.f32.xlu0 %v2045
        %v2077 = vpop.xlane.xlu0 %2076
        %v2078 = vmul.f32 %v2047, %v1997
        %v2079 = vmul.f32 %v2049, %v1997
        %v2080 = vmul.f32 %v2051, %v1997
        %v2081 = vmul.f32 %v2053, %v1997
        %v2082 = vmul.f32 %v2055, %v1997
        %v2083 = vmul.f32 %v2057, %v1997
        %v2084 = vmul.f32 %v2059, %v1997
        %v2085 = vmul.f32 %v2061, %v1997
        %v2086 = vmul.f32 %v2063, %v1997
        %v2087 = vmul.f32 %v2065, %v1997
        %v2088 = vmul.f32 %v2067, %v1997
        %v2089 = vmul.f32 %v2069, %v1997
        %v2090 = vmul.f32 %v2071, %v1997
        %v2091 = vmul.f32 %v2073, %v1997
        %v2092 = vmul.f32 %v2075, %v1997
        %v2093 = vmul.f32 %v2077, %v1997
        %v2094 = vadd.f32 %v2078, 1e-05
        %v2095 = vadd.f32 %v2079, 1e-05
        %v2096 = vadd.f32 %v2080, 1e-05
        %v2097 = vadd.f32 %v2081, 1e-05
        %v2098 = vadd.f32 %v2082, 1e-05
        %v2099 = vadd.f32 %v2083, 1e-05
        %v2100 = vadd.f32 %v2084, 1e-05
        %v2101 = vadd.f32 %v2085, 1e-05
        %v2102 = vadd.f32 %v2086, 1e-05
        %v2103 = vadd.f32 %v2087, 1e-05
        %v2104 = vadd.f32 %v2088, 1e-05
        %v2105 = vadd.f32 %v2089, 1e-05
        %v2106 = vadd.f32 %v2090, 1e-05
        %v2107 = vadd.f32 %v2091, 1e-05
        %v2108 = vadd.f32 %v2092, 1e-05
        %v2109 = vadd.f32 %v2093, 1e-05
        %v2110 = vrsqrt.pop %v2094
        %v2111 = vmul.f32 %v2110, %v2094
        %v2112 = vmul.f32 %v2111, %v2110
        %v2113 = vmul.f32 0.5, %v2112
        %v2114 = vsub.f32 1.5, %v2113
        %v2115 = vmul.f32 %v2110, %v2114
        %vm2116 = vweird.f32 %v2094
        %vm2117 = vweird.f32 %v2110
        %vm2118 = vmor %vm2116, %vm2117
        %v2119 = vsel %vm2118, %v2110, %v2115
        %v2120 = vrsqrt.pop %v2095
        %v2121 = vmul.f32 %v2120, %v2095
        %v2122 = vmul.f32 %v2121, %v2120
        %v2123 = vmul.f32 0.5, %v2122
        %v2124 = vsub.f32 1.5, %v2123
        %v2125 = vmul.f32 %v2120, %v2124
        %vm2126 = vweird.f32 %v2095
        %vm2127 = vweird.f32 %v2120
        %vm2128 = vmor %vm2126, %vm2127
        %v2129 = vsel %vm2128, %v2120, %v2125
        %v2130 = vrsqrt.pop %v2096
        %v2131 = vmul.f32 %v2130, %v2096
        %v2132 = vmul.f32 %v2131, %v2130
        %v2133 = vmul.f32 0.5, %v2132
        %v2134 = vsub.f32 1.5, %v2133
        %v2135 = vmul.f32 %v2130, %v2134
        %vm2136 = vweird.f32 %v2096
        %vm2137 = vweird.f32 %v2130
        %vm2138 = vmor %vm2136, %vm2137
        %v2139 = vsel %vm2138, %v2130, %v2135
        %v2140 = vrsqrt.pop %v2097
        %v2141 = vmul.f32 %v2140, %v2097
        %v2142 = vmul.f32 %v2141, %v2140
        %v2143 = vmul.f32 0.5, %v2142
        %v2144 = vsub.f32 1.5, %v2143
        %v2145 = vmul.f32 %v2140, %v2144
        %vm2146 = vweird.f32 %v2097
        %vm2147 = vweird.f32 %v2140
        %vm2148 = vmor %vm2146, %vm2147
        %v2149 = vsel %vm2148, %v2140, %v2145
        %v2150 = vrsqrt.pop %v2098
        %v2151 = vmul.f32 %v2150, %v2098
        %v2152 = vmul.f32 %v2151, %v2150
        %v2153 = vmul.f32 0.5, %v2152
        %v2154 = vsub.f32 1.5, %v2153
        %v2155 = vmul.f32 %v2150, %v2154
        %vm2156 = vweird.f32 %v2098
        %vm2157 = vweird.f32 %v2150
        %vm2158 = vmor %vm2156, %vm2157
        %v2159 = vsel %vm2158, %v2150, %v2155
        %v2160 = vrsqrt.pop %v2099
        %v2161 = vmul.f32 %v2160, %v2099
        %v2162 = vmul.f32 %v2161, %v2160
        %v2163 = vmul.f32 0.5, %v2162
        %v2164 = vsub.f32 1.5, %v2163
        %v2165 = vmul.f32 %v2160, %v2164
        %vm2166 = vweird.f32 %v2099
        %vm2167 = vweird.f32 %v2160
        %vm2168 = vmor %vm2166, %vm2167
        %v2169 = vsel %vm2168, %v2160, %v2165
        %v2170 = vrsqrt.pop %v2100
        %v2171 = vmul.f32 %v2170, %v2100
        %v2172 = vmul.f32 %v2171, %v2170
        %v2173 = vmul.f32 0.5, %v2172
        %v2174 = vsub.f32 1.5, %v2173
        %v2175 = vmul.f32 %v2170, %v2174
        %vm2176 = vweird.f32 %v2100
        %vm2177 = vweird.f32 %v2170
        %vm2178 = vmor %vm2176, %vm2177
        %v2179 = vsel %vm2178, %v2170, %v2175
        %v2180 = vrsqrt.pop %v2101
        %v2181 = vmul.f32 %v2180, %v2101
        %v2182 = vmul.f32 %v2181, %v2180
        %v2183 = vmul.f32 0.5, %v2182
        %v2184 = vsub.f32 1.5, %v2183
        %v2185 = vmul.f32 %v2180, %v2184
        %vm2186 = vweird.f32 %v2101
        %vm2187 = vweird.f32 %v2180
        %vm2188 = vmor %vm2186, %vm2187
        %v2189 = vsel %vm2188, %v2180, %v2185
        %v2190 = vrsqrt.pop %v2102
        %v2191 = vmul.f32 %v2190, %v2102
        %v2192 = vmul.f32 %v2191, %v2190
        %v2193 = vmul.f32 0.5, %v2192
        %v2194 = vsub.f32 1.5, %v2193
        %v2195 = vmul.f32 %v2190, %v2194
        %vm2196 = vweird.f32 %v2102
        %vm2197 = vweird.f32 %v2190
        %vm2198 = vmor %vm2196, %vm2197
        %v2199 = vsel %vm2198, %v2190, %v2195
        %v2200 = vrsqrt.pop %v2103
        %v2201 = vmul.f32 %v2200, %v2103
        %v2202 = vmul.f32 %v2201, %v2200
        %v2203 = vmul.f32 0.5, %v2202
        %v2204 = vsub.f32 1.5, %v2203
        %v2205 = vmul.f32 %v2200, %v2204
        %vm2206 = vweird.f32 %v2103
        %vm2207 = vweird.f32 %v2200
        %vm2208 = vmor %vm2206, %vm2207
        %v2209 = vsel %vm2208, %v2200, %v2205
        %v2210 = vrsqrt.pop %v2104
        %v2211 = vmul.f32 %v2210, %v2104
        %v2212 = vmul.f32 %v2211, %v2210
        %v2213 = vmul.f32 0.5, %v2212
        %v2214 = vsub.f32 1.5, %v2213
        %v2215 = vmul.f32 %v2210, %v2214
        %vm2216 = vweird.f32 %v2104
        %vm2217 = vweird.f32 %v2210
        %vm2218 = vmor %vm2216, %vm2217
        %v2219 = vsel %vm2218, %v2210, %v2215
        %v2220 = vrsqrt.pop %v2105
        %v2221 = vmul.f32 %v2220, %v2105
        %v2222 = vmul.f32 %v2221, %v2220
        %v2223 = vmul.f32 0.5, %v2222
        %v2224 = vsub.f32 1.5, %v2223
        %v2225 = vmul.f32 %v2220, %v2224
        %vm2226 = vweird.f32 %v2105
        %vm2227 = vweird.f32 %v2220
        %vm2228 = vmor %vm2226, %vm2227
        %v2229 = vsel %vm2228, %v2220, %v2225
        %v2230 = vrsqrt.pop %v2106
        %v2231 = vmul.f32 %v2230, %v2106
        %v2232 = vmul.f32 %v2231, %v2230
        %v2233 = vmul.f32 0.5, %v2232
        %v2234 = vsub.f32 1.5, %v2233
        %v2235 = vmul.f32 %v2230, %v2234
        %vm2236 = vweird.f32 %v2106
        %vm2237 = vweird.f32 %v2230
        %vm2238 = vmor %vm2236, %vm2237
        %v2239 = vsel %vm2238, %v2230, %v2235
        %v2240 = vrsqrt.pop %v2107
        %v2241 = vmul.f32 %v2240, %v2107
        %v2242 = vmul.f32 %v2241, %v2240
        %v2243 = vmul.f32 0.5, %v2242
        %v2244 = vsub.f32 1.5, %v2243
        %v2245 = vmul.f32 %v2240, %v2244
        %vm2246 = vweird.f32 %v2107
        %vm2247 = vweird.f32 %v2240
        %vm2248 = vmor %vm2246, %vm2247
        %v2249 = vsel %vm2248, %v2240, %v2245
        %v2250 = vrsqrt.pop %v2108
        %v2251 = vmul.f32 %v2250, %v2108
        %v2252 = vmul.f32 %v2251, %v2250
        %v2253 = vmul.f32 0.5, %v2252
        %v2254 = vsub.f32 1.5, %v2253
        %v2255 = vmul.f32 %v2250, %v2254
        %vm2256 = vweird.f32 %v2108
        %vm2257 = vweird.f32 %v2250
        %vm2258 = vmor %vm2256, %vm2257
        %v2259 = vsel %vm2258, %v2250, %v2255
        %v2260 = vrsqrt.pop %v2109
        %v2261 = vmul.f32 %v2260, %v2109
        %v2262 = vmul.f32 %v2261, %v2260
        %v2263 = vmul.f32 0.5, %v2262
        %v2264 = vsub.f32 1.5, %v2263
        %v2265 = vmul.f32 %v2260, %v2264
        %vm2266 = vweird.f32 %v2109
        %vm2267 = vweird.f32 %v2260
        %vm2268 = vmor %vm2266, %vm2267
        %v2269 = vsel %vm2268, %v2260, %v2265
        %v2270 = vmul.f32 %v2014, %v2119
        %v2271 = vmul.f32 %v2015, %v2129
        %v2272 = vmul.f32 %v2016, %v2139
        %v2273 = vmul.f32 %v2017, %v2149
        %v2274 = vmul.f32 %v2018, %v2159
        %v2275 = vmul.f32 %v2019, %v2169
        %v2276 = vmul.f32 %v2020, %v2179
        %v2277 = vmul.f32 %v2021, %v2189
        %v2278 = vmul.f32 %v2022, %v2199
        %v2279 = vmul.f32 %v2023, %v2209
        %v2280 = vmul.f32 %v2024, %v2219
        %v2281 = vmul.f32 %v2025, %v2229
        %v2282 = vmul.f32 %v2026, %v2239
        %v2283 = vmul.f32 %v2027, %v2249
        %v2284 = vmul.f32 %v2028, %v2259
        %v2285 = vmul.f32 %v2029, %v2269
        %v2287 = vperm.slane %v1957, 0
        %v2289 = vmul.f32 %v2270, %v2287
        %v2290 = vmul.f32 %v2271, %v2287
        %v2291 = vmul.f32 %v2272, %v2287
        %v2292 = vmul.f32 %v2273, %v2287
        %v2293 = vmul.f32 %v2274, %v2287
        %v2294 = vmul.f32 %v2275, %v2287
        %v2295 = vmul.f32 %v2276, %v2287
        %v2296 = vmul.f32 %v2277, %v2287
        %v2297 = vmul.f32 %v2278, %v2287
        %v2298 = vmul.f32 %v2279, %v2287
        %v2299 = vmul.f32 %v2280, %v2287
        %v2300 = vmul.f32 %v2281, %v2287
        %v2301 = vmul.f32 %v2282, %v2287
        %v2302 = vmul.f32 %v2283, %v2287
        %v2303 = vmul.f32 %v2284, %v2287
        %v2304 = vmul.f32 %v2285, %v2287
        %v2306 = vperm.slane %v1958, 0
        %v2308 = vadd.f32 %v2289, %v2306
        %v2309 = vadd.f32 %v2290, %v2306
        %v2310 = vadd.f32 %v2291, %v2306
        %v2311 = vadd.f32 %v2292, %v2306
        %v2312 = vadd.f32 %v2293, %v2306
        %v2313 = vadd.f32 %v2294, %v2306
        %v2314 = vadd.f32 %v2295, %v2306
        %v2315 = vadd.f32 %v2296, %v2306
        %v2316 = vadd.f32 %v2297, %v2306
        %v2317 = vadd.f32 %v2298, %v2306
        %v2318 = vadd.f32 %v2299, %v2306
        %v2319 = vadd.f32 %v2300, %v2306
        %v2320 = vadd.f32 %v2301, %v2306
        %v2321 = vadd.f32 %v2302, %v2306
        %v2322 = vadd.f32 %v2303, %v2306
        %v2323 = vadd.f32 %v2304, %v2306
        %v2324 = vpack.c.bf16 %v2309, %v2308
        %v2325 = vpack.c.bf16 %v2311, %v2310
        %v2326 = vpack.c.bf16 %v2313, %v2312
        %v2327 = vpack.c.bf16 %v2315, %v2314
        %v2328 = vpack.c.bf16 %v2317, %v2316
        %v2329 = vpack.c.bf16 %v2319, %v2318
        %v2330 = vpack.c.bf16 %v2321, %v2320
        %v2331 = vpack.c.bf16 %v2323, %v2322
        %v2332 = vld [vmem:[#allocation15] sm:$0xff]
        %v2333 = vld [vmem:[#allocation15 + $0x10] sm:$0xff]
        %v2334 = vld [vmem:[#allocation15 + $0x20] sm:$0xff]
        %v2335 = vld [vmem:[#allocation15 + $0x30] sm:$0xff]
        %v2336 = vld [vmem:[#allocation15 + $0x40] sm:$0xff]
        %v2337 = vld [vmem:[#allocation15 + $0x50] sm:$0xff]
        %v2338 = vld [vmem:[#allocation15 + $0x60] sm:$0xff]
        %v2339 = vld [vmem:[#allocation15 + $0x70] sm:$0xff]
        %v2340 = vld [vmem:[#allocation15 + $0x80] sm:$0xff]
        %v2341 = vld [vmem:[#allocation15 + $0x90] sm:$0xff]
        %v2342 = vld [vmem:[#allocation15 + $0xa0] sm:$0xff]
        %v2343 = vld [vmem:[#allocation15 + $0xb0] sm:$0xff]
        %v2344 = vld [vmem:[#allocation15 + $0xc0] sm:$0xff]
        %v2345 = vld [vmem:[#allocation15 + $0xd0] sm:$0xff]
        %v2346 = vld [vmem:[#allocation15 + $0xe0] sm:$0xff]
        %v2347 = vld [vmem:[#allocation15 + $0xf0] sm:$0xff]
        %v2348 = vld [vmem:[%s14] sm:$0x3]
        %v2349 = vld [vmem:[#allocation16] sm:$0xf]
        %v2350 = vld [vmem:[#allocation16 + $0x4] sm:$0xf]
        %v2351 = vld [vmem:[#allocation16 + $0x8] sm:$0xf]
        %v2352 = vld [vmem:[#allocation16 + $0xc] sm:$0xf]
        %v2353 = vld [vmem:[#allocation16 + $0x10] sm:$0xf]
        %v2354 = vld [vmem:[#allocation16 + $0x14] sm:$0xf]
        %v2355 = vld [vmem:[#allocation16 + $0x18] sm:$0xf]
        %v2356 = vld [vmem:[#allocation16 + $0x1c] sm:$0xf]
        %v2357 = vld [vmem:[#allocation16 + $0x20] sm:$0xf]
        %v2358 = vld [vmem:[#allocation16 + $0x24] sm:$0xf]
        %v2359 = vld [vmem:[#allocation16 + $0x28] sm:$0xf]
        %v2360 = vld [vmem:[#allocation16 + $0x2c] sm:$0xf]
        %v2361 = vld [vmem:[#allocation16 + $0x30] sm:$0xf]
        %v2362 = vld [vmem:[#allocation16 + $0x34] sm:$0xf]
        %v2363 = vld [vmem:[#allocation16 + $0x38] sm:$0xf]
        %v2364 = vld [vmem:[#allocation16 + $0x3c] sm:$0xf]
        %v2365 = vld [vmem:[#allocation16 + $0x40] sm:$0xf]
        %v2366 = vld [vmem:[#allocation16 + $0x44] sm:$0xf]
        %v2367 = vld [vmem:[#allocation16 + $0x48] sm:$0xf]
        %v2368 = vld [vmem:[#allocation16 + $0x4c] sm:$0xf]
        %v2369 = vld [vmem:[#allocation16 + $0x50] sm:$0xf]
        %v2370 = vld [vmem:[#allocation16 + $0x54] sm:$0xf]
        %v2371 = vld [vmem:[#allocation16 + $0x58] sm:$0xf]
        %v2372 = vld [vmem:[#allocation16 + $0x5c] sm:$0xf]
        %v2373 = vld [vmem:[#allocation16 + $0x60] sm:$0xf]
        %v2374 = vld [vmem:[#allocation16 + $0x64] sm:$0xf]
        %v2375 = vld [vmem:[#allocation16 + $0x68] sm:$0xf]
        %v2376 = vld [vmem:[#allocation16 + $0x6c] sm:$0xf]
        %v2377 = vld [vmem:[#allocation16 + $0x70] sm:$0xf]
        %v2378 = vld [vmem:[#allocation16 + $0x74] sm:$0xf]
        %v2379 = vld [vmem:[#allocation16 + $0x78] sm:$0xf]
        %v2380 = vld [vmem:[#allocation16 + $0x7c] sm:$0xf]
        %v2382 = vperm.slane %v2348, 0
        %v2383 = vperm.slane %v2348, 1
        %v2402 = vunpack.c.l.b16 %v2332
        %v2403 = vunpack.c.h.b16 %v2332
        %v2404 = vunpack.c.l.b16 %v2333
        %v2405 = vunpack.c.h.b16 %v2333
        %v2406 = vunpack.c.l.b16 %v2334
        %v2407 = vunpack.c.h.b16 %v2334
        %v2408 = vunpack.c.l.b16 %v2335
        %v2409 = vunpack.c.h.b16 %v2335
        %v2410 = vunpack.c.l.b16 %v2336
        %v2411 = vunpack.c.h.b16 %v2336
        %v2412 = vunpack.c.l.b16 %v2337
        %v2413 = vunpack.c.h.b16 %v2337
        %v2414 = vunpack.c.l.b16 %v2338
        %v2415 = vunpack.c.h.b16 %v2338
        %v2416 = vunpack.c.l.b16 %v2339
        %v2417 = vunpack.c.h.b16 %v2339
        %v2418 = vunpack.c.l.b16 %v2340
        %v2419 = vunpack.c.h.b16 %v2340
        %v2420 = vunpack.c.l.b16 %v2341
        %v2421 = vunpack.c.h.b16 %v2341
        %v2422 = vunpack.c.l.b16 %v2342
        %v2423 = vunpack.c.h.b16 %v2342
        %v2424 = vunpack.c.l.b16 %v2343
        %v2425 = vunpack.c.h.b16 %v2343
        %v2426 = vunpack.c.l.b16 %v2344
        %v2427 = vunpack.c.h.b16 %v2344
        %v2428 = vunpack.c.l.b16 %v2345
        %v2429 = vunpack.c.h.b16 %v2345
        %v2430 = vunpack.c.l.b16 %v2346
        %v2431 = vunpack.c.h.b16 %v2346
        %v2432 = vunpack.c.l.b16 %v2347
        %v2433 = vunpack.c.h.b16 %v2347
        %v2434 = vpack.c.b16 %v2404, %v2402
        %v2435 = vpack.c.b16 %v2405, %v2403
        %v2436 = vpack.c.b16 %v2408, %v2406
        %v2437 = vpack.c.b16 %v2409, %v2407
        %v2438 = vpack.c.b16 %v2412, %v2410
        %v2439 = vpack.c.b16 %v2413, %v2411
        %v2440 = vpack.c.b16 %v2416, %v2414
        %v2441 = vpack.c.b16 %v2417, %v2415
        %v2442 = vpack.c.b16 %v2420, %v2418
        %v2443 = vpack.c.b16 %v2421, %v2419
        %v2444 = vpack.c.b16 %v2424, %v2422
        %v2445 = vpack.c.b16 %v2425, %v2423
        %v2446 = vpack.c.b16 %v2428, %v2426
        %v2447 = vpack.c.b16 %v2429, %v2427
        %v2448 = vpack.c.b16 %v2432, %v2430
        %v2449 = vpack.c.b16 %v2433, %v2431
        %2466 = vmatpush.bf16.msra.mxu0 %v2448
        %2467 = vmatpush.bf16.msra.mxu0 %v2446
        %2468 = vmatpush.bf16.msra.mxu0 %v2444
        %2469 = vmatpush.bf16.msra.mxu0 %v2442
        %2470 = vmatpush.bf16.msra.mxu0 %v2440
        %2471 = vmatpush.bf16.msra.mxu0 %v2438
        %2472 = vmatpush.bf16.msra.mxu0 %v2436
        %2473 = vmatpush.bf16.msra.mxu0 %v2434
        %2474 = vmatmul.bf16.gmra.mxu0 %v2324
        %v2475 = vpop.f32.mrf.mxu0
        %v2476 = vadd.f32 %v2382, %v2475
        %v2477 = vpop.f32.mrf.mxu0
        %v2478 = vadd.f32 %v2382, %v2477
        %2479 = vmatmul.bf16.gmra.mxu0 %v2325
        %v2480 = vpop.f32.mrf.mxu0
        %v2481 = vadd.f32 %v2382, %v2480
        %v2482 = vpop.f32.mrf.mxu0
        %v2483 = vadd.f32 %v2382, %v2482
        %2484 = vmatmul.bf16.gmra.mxu0 %v2326
        %v2485 = vpop.f32.mrf.mxu0
        %v2486 = vadd.f32 %v2382, %v2485
        %v2487 = vpop.f32.mrf.mxu0
        %v2488 = vadd.f32 %v2382, %v2487
        %2489 = vmatmul.bf16.gmra.mxu0 %v2327
        %v2490 = vpop.f32.mrf.mxu0
        %v2491 = vadd.f32 %v2382, %v2490
        %v2492 = vpop.f32.mrf.mxu0
        %v2493 = vadd.f32 %v2382, %v2492
        %2494 = vmatmul.bf16.gmra.mxu0 %v2328
        %v2495 = vpop.f32.mrf.mxu0
        %v2496 = vadd.f32 %v2382, %v2495
        %v2497 = vpop.f32.mrf.mxu0
        %v2498 = vadd.f32 %v2382, %v2497
        %2499 = vmatmul.bf16.gmra.mxu0 %v2329
        %v2500 = vpop.f32.mrf.mxu0
        %v2501 = vadd.f32 %v2382, %v2500
        %v2502 = vpop.f32.mrf.mxu0
        %v2503 = vadd.f32 %v2382, %v2502
        %2504 = vmatmul.bf16.gmra.mxu0 %v2330
        %v2505 = vpop.f32.mrf.mxu0
        %v2506 = vadd.f32 %v2382, %v2505
        %v2507 = vpop.f32.mrf.mxu0
        %v2508 = vadd.f32 %v2382, %v2507
        %2509 = vmatmul.bf16.gmra.mxu0 %v2331
        %v2510 = vpop.f32.mrf.mxu0
        %v2511 = vadd.f32 %v2382, %v2510
        %v2512 = vpop.f32.mrf.mxu0
        %v2513 = vadd.f32 %v2382, %v2512
        %2514 = vdwg.mxu0
        %2515 = vmatpush.bf16.msra.mxu0 %v2449
        %2516 = vmatpush.bf16.msra.mxu0 %v2447
        %2517 = vmatpush.bf16.msra.mxu0 %v2445
        %2518 = vmatpush.bf16.msra.mxu0 %v2443
        %2519 = vmatpush.bf16.msra.mxu0 %v2441
        %2520 = vmatpush.bf16.msra.mxu0 %v2439
        %2521 = vmatpush.bf16.msra.mxu0 %v2437
        %2522 = vmatpush.bf16.msra.mxu0 %v2435
        %2523 = vmatmul.bf16.gmra.mxu0 %v2324
        %v2524 = vpop.f32.mrf.mxu0
        %v2525 = vadd.f32 %v2383, %v2524
        %v2526 = vpop.f32.mrf.mxu0
        %v2527 = vadd.f32 %v2383, %v2526
        %2528 = vmatmul.bf16.gmra.mxu0 %v2325
        %v2529 = vpop.f32.mrf.mxu0
        %v2530 = vadd.f32 %v2383, %v2529
        %v2531 = vpop.f32.mrf.mxu0
        %v2532 = vadd.f32 %v2383, %v2531
        %2533 = vmatmul.bf16.gmra.mxu0 %v2326
        %v2534 = vpop.f32.mrf.mxu0
        %v2535 = vadd.f32 %v2383, %v2534
        %v2536 = vpop.f32.mrf.mxu0
        %v2537 = vadd.f32 %v2383, %v2536
        %2538 = vmatmul.bf16.gmra.mxu0 %v2327
        %v2539 = vpop.f32.mrf.mxu0
        %v2540 = vadd.f32 %v2383, %v2539
        %v2541 = vpop.f32.mrf.mxu0
        %v2542 = vadd.f32 %v2383, %v2541
        %2543 = vmatmul.bf16.gmra.mxu0 %v2328
        %v2544 = vpop.f32.mrf.mxu0
        %v2545 = vadd.f32 %v2383, %v2544
        %v2546 = vpop.f32.mrf.mxu0
        %v2547 = vadd.f32 %v2383, %v2546
        %2548 = vmatmul.bf16.gmra.mxu0 %v2329
        %v2549 = vpop.f32.mrf.mxu0
        %v2550 = vadd.f32 %v2383, %v2549
        %v2551 = vpop.f32.mrf.mxu0
        %v2552 = vadd.f32 %v2383, %v2551
        %2553 = vmatmul.bf16.gmra.mxu0 %v2330
        %v2554 = vpop.f32.mrf.mxu0
        %v2555 = vadd.f32 %v2383, %v2554
        %v2556 = vpop.f32.mrf.mxu0
        %v2557 = vadd.f32 %v2383, %v2556
        %2558 = vmatmul.bf16.gmra.mxu0 %v2331
        %v2559 = vpop.f32.mrf.mxu0
        %v2560 = vadd.f32 %v2383, %v2559
        %v2561 = vpop.f32.mrf.mxu0
        %v2562 = vadd.f32 %v2383, %v2561
        %2563 = vdwg.mxu0
        %v2564 = vmul.f32 %v2476, 0.5
        %v2565 = vmul.f32 %v2525, 0.5
        %v2566 = vmul.f32 %v2478, 0.5
        %v2567 = vmul.f32 %v2527, 0.5
        %v2568 = vmul.f32 %v2481, 0.5
        %v2569 = vmul.f32 %v2530, 0.5
        %v2570 = vmul.f32 %v2483, 0.5
        %v2571 = vmul.f32 %v2532, 0.5
        %v2572 = vmul.f32 %v2486, 0.5
        %v2573 = vmul.f32 %v2535, 0.5
        %v2574 = vmul.f32 %v2488, 0.5
        %v2575 = vmul.f32 %v2537, 0.5
        %v2576 = vmul.f32 %v2491, 0.5
        %v2577 = vmul.f32 %v2540, 0.5
        %v2578 = vmul.f32 %v2493, 0.5
        %v2579 = vmul.f32 %v2542, 0.5
        %v2580 = vmul.f32 %v2496, 0.5
        %v2581 = vmul.f32 %v2545, 0.5
        %v2582 = vmul.f32 %v2498, 0.5
        %v2583 = vmul.f32 %v2547, 0.5
        %v2584 = vmul.f32 %v2501, 0.5
        %v2585 = vmul.f32 %v2550, 0.5
        %v2586 = vmul.f32 %v2503, 0.5
        %v2587 = vmul.f32 %v2552, 0.5
        %v2588 = vmul.f32 %v2506, 0.5
        %v2589 = vmul.f32 %v2555, 0.5
        %v2590 = vmul.f32 %v2508, 0.5
        %v2591 = vmul.f32 %v2557, 0.5
        %v2592 = vmul.f32 %v2511, 0.5
        %v2593 = vmul.f32 %v2560, 0.5
        %v2594 = vmul.f32 %v2513, 0.5
        %v2595 = vmul.f32 %v2562, 0.5
        %v2596 = vmul.f32 %v2476, 0.70710677
        %v2597 = vmul.f32 %v2525, 0.70710677
        %v2598 = vmul.f32 %v2478, 0.70710677
        %v2599 = vmul.f32 %v2527, 0.70710677
        %v2600 = vmul.f32 %v2481, 0.70710677
        %v2601 = vmul.f32 %v2530, 0.70710677
        %v2602 = vmul.f32 %v2483, 0.70710677
        %v2603 = vmul.f32 %v2532, 0.70710677
        %v2604 = vmul.f32 %v2486, 0.70710677
        %v2605 = vmul.f32 %v2535, 0.70710677
        %v2606 = vmul.f32 %v2488, 0.70710677
        %v2607 = vmul.f32 %v2537, 0.70710677
        %v2608 = vmul.f32 %v2491, 0.70710677
        %v2609 = vmul.f32 %v2540, 0.70710677
        %v2610 = vmul.f32 %v2493, 0.70710677
        %v2611 = vmul.f32 %v2542, 0.70710677
        %v2612 = vmul.f32 %v2496, 0.70710677
        %v2613 = vmul.f32 %v2545, 0.70710677
        %v2614 = vmul.f32 %v2498, 0.70710677
        %v2615 = vmul.f32 %v2547, 0.70710677
        %v2616 = vmul.f32 %v2501, 0.70710677
        %v2617 = vmul.f32 %v2550, 0.70710677
        %v2618 = vmul.f32 %v2503, 0.70710677
        %v2619 = vmul.f32 %v2552, 0.70710677
        %v2620 = vmul.f32 %v2506, 0.70710677
        %v2621 = vmul.f32 %v2555, 0.70710677
        %v2622 = vmul.f32 %v2508, 0.70710677
        %v2623 = vmul.f32 %v2557, 0.70710677
        %v2624 = vmul.f32 %v2511, 0.70710677
        %v2625 = vmul.f32 %v2560, 0.70710677
        %v2626 = vmul.f32 %v2513, 0.70710677
        %v2627 = vmul.f32 %v2562, 0.70710677
        %v2628 = vmul.f32 %v2596, %v2596
        %v2629 = vmin.f32 16.0, %v2628
        %v2630 = vmul.f32 %v2629, 2.1237322e-06
        %v2631 = vadd.f32 %v2630, 0.00028619796
        %v2632 = vmul.f32 %v2629, %v2631
        %v2633 = vadd.f32 %v2632, 0.0036580483
        %v2634 = vmul.f32 %v2629, %v2633
        %v2635 = vadd.f32 %v2634, 0.05243302
        %v2636 = vmul.f32 %v2629, %v2635
        %v2637 = vadd.f32 %v2636, 0.18741608
        %v2638 = vmul.f32 %v2629, %v2637
        %v2639 = vadd.f32 %v2638, 1.1283791
        %v2640 = vmul.f32 %v2596, %v2639
        %v2641 = vmul.f32 %v2629, 3.8918573e-05
        %v2642 = vadd.f32 %v2641, 0.001143296
        %v2643 = vmul.f32 %v2629, %v2642
        %v2644 = vadd.f32 %v2643, 0.014752088
        %v2645 = vmul.f32 %v2629, %v2644
        %v2646 = vadd.f32 %v2645, 0.112945676
        %v2647 = vmul.f32 %v2629, %v2646
        %v2648 = vadd.f32 %v2647, 0.4994258
        %v2649 = vmul.f32 %v2629, %v2648
        %v2650 = vadd.f32 %v2649, 1.0
        %v2651 = vrcp.pop %v2650
        %v2652 = vmul.f32 %v2650, %v2651
        %v2653 = vsub.f32 1.0, %v2652
        %v2654 = vmul.f32 %v2651, %v2653
        %v2655 = vadd.f32 %v2651, %v2654
        %vm2656 = vweird.f32 %v2650
        %vm2657 = vweird.f32 %v2651
        %vm2658 = vmor %vm2656, %vm2657
        %v2659 = vsel %vm2658, %v2651, %v2655
        %v2660 = vand.u32 2147483647, %v2650
        %vm2661 = vcmp.eq.f32.partialorder %v2660, 8.507059e+37
        %v2662 = vand.u32 %v2650, 2147483648
        %v2663 = vor.u32 1.1754944e-38, %v2662
        %v2664 = vsel %vm2661, %v2663, %v2659
        %v2665 = vmul.f32 %v2640, %v2664
        %v2666 = vmin.f32 %v2665, 1.0
        %v2667 = vmax.f32 %v2666, -1.0
        %v2668 = vmul.f32 %v2597, %v2597
        %v2669 = vmin.f32 16.0, %v2668
        %v2670 = vmul.f32 %v2669, 2.1237322e-06
        %v2671 = vadd.f32 %v2670, 0.00028619796
        %v2672 = vmul.f32 %v2669, %v2671
        %v2673 = vadd.f32 %v2672, 0.0036580483
        %v2674 = vmul.f32 %v2669, %v2673
        %v2675 = vadd.f32 %v2674, 0.05243302
        %v2676 = vmul.f32 %v2669, %v2675
        %v2677 = vadd.f32 %v2676, 0.18741608
        %v2678 = vmul.f32 %v2669, %v2677
        %v2679 = vadd.f32 %v2678, 1.1283791
        %v2680 = vmul.f32 %v2597, %v2679
        %v2681 = vmul.f32 %v2669, 3.8918573e-05
        %v2682 = vadd.f32 %v2681, 0.001143296
        %v2683 = vmul.f32 %v2669, %v2682
        %v2684 = vadd.f32 %v2683, 0.014752088
        %v2685 = vmul.f32 %v2669, %v2684
        %v2686 = vadd.f32 %v2685, 0.112945676
        %v2687 = vmul.f32 %v2669, %v2686
        %v2688 = vadd.f32 %v2687, 0.4994258
        %v2689 = vmul.f32 %v2669, %v2688
        %v2690 = vadd.f32 %v2689, 1.0
        %v2691 = vrcp.pop %v2690
        %v2692 = vmul.f32 %v2690, %v2691
        %v2693 = vsub.f32 1.0, %v2692
        %v2694 = vmul.f32 %v2691, %v2693
        %v2695 = vadd.f32 %v2691, %v2694
        %vm2696 = vweird.f32 %v2690
        %vm2697 = vweird.f32 %v2691
        %vm2698 = vmor %vm2696, %vm2697
        %v2699 = vsel %vm2698, %v2691, %v2695
        %v2700 = vand.u32 2147483647, %v2690
        %vm2701 = vcmp.eq.f32.partialorder %v2700, 8.507059e+37
        %v2702 = vand.u32 %v2690, 2147483648
        %v2703 = vor.u32 1.1754944e-38, %v2702
        %v2704 = vsel %vm2701, %v2703, %v2699
        %v2705 = vmul.f32 %v2680, %v2704
        %v2706 = vmin.f32 %v2705, 1.0
        %v2707 = vmax.f32 %v2706, -1.0
        %v2708 = vmul.f32 %v2598, %v2598
        %v2709 = vmin.f32 16.0, %v2708
        %v2710 = vmul.f32 %v2709, 2.1237322e-06
        %v2711 = vadd.f32 %v2710, 0.00028619796
        %v2712 = vmul.f32 %v2709, %v2711
        %v2713 = vadd.f32 %v2712, 0.0036580483
        %v2714 = vmul.f32 %v2709, %v2713
        %v2715 = vadd.f32 %v2714, 0.05243302
        %v2716 = vmul.f32 %v2709, %v2715
        %v2717 = vadd.f32 %v2716, 0.18741608
        %v2718 = vmul.f32 %v2709, %v2717
        %v2719 = vadd.f32 %v2718, 1.1283791
        %v2720 = vmul.f32 %v2598, %v2719
        %v2721 = vmul.f32 %v2709, 3.8918573e-05
        %v2722 = vadd.f32 %v2721, 0.001143296
        %v2723 = vmul.f32 %v2709, %v2722
        %v2724 = vadd.f32 %v2723, 0.014752088
        %v2725 = vmul.f32 %v2709, %v2724
        %v2726 = vadd.f32 %v2725, 0.112945676
        %v2727 = vmul.f32 %v2709, %v2726
        %v2728 = vadd.f32 %v2727, 0.4994258
        %v2729 = vmul.f32 %v2709, %v2728
        %v2730 = vadd.f32 %v2729, 1.0
        %v2731 = vrcp.pop %v2730
        %v2732 = vmul.f32 %v2730, %v2731
        %v2733 = vsub.f32 1.0, %v2732
        %v2734 = vmul.f32 %v2731, %v2733
        %v2735 = vadd.f32 %v2731, %v2734
        %vm2736 = vweird.f32 %v2730
        %vm2737 = vweird.f32 %v2731
        %vm2738 = vmor %vm2736, %vm2737
        %v2739 = vsel %vm2738, %v2731, %v2735
        %v2740 = vand.u32 2147483647, %v2730
        %vm2741 = vcmp.eq.f32.partialorder %v2740, 8.507059e+37
        %v2742 = vand.u32 %v2730, 2147483648
        %v2743 = vor.u32 1.1754944e-38, %v2742
        %v2744 = vsel %vm2741, %v2743, %v2739
        %v2745 = vmul.f32 %v2720, %v2744
        %v2746 = vmin.f32 %v2745, 1.0
        %v2747 = vmax.f32 %v2746, -1.0
        %v2748 = vmul.f32 %v2599, %v2599
        %v2749 = vmin.f32 16.0, %v2748
        %v2750 = vmul.f32 %v2749, 2.1237322e-06
        %v2751 = vadd.f32 %v2750, 0.00028619796
        %v2752 = vmul.f32 %v2749, %v2751
        %v2753 = vadd.f32 %v2752, 0.0036580483
        %v2754 = vmul.f32 %v2749, %v2753
        %v2755 = vadd.f32 %v2754, 0.05243302
        %v2756 = vmul.f32 %v2749, %v2755
        %v2757 = vadd.f32 %v2756, 0.18741608
        %v2758 = vmul.f32 %v2749, %v2757
        %v2759 = vadd.f32 %v2758, 1.1283791
        %v2760 = vmul.f32 %v2599, %v2759
        %v2761 = vmul.f32 %v2749, 3.8918573e-05
        %v2762 = vadd.f32 %v2761, 0.001143296
        %v2763 = vmul.f32 %v2749, %v2762
        %v2764 = vadd.f32 %v2763, 0.014752088
        %v2765 = vmul.f32 %v2749, %v2764
        %v2766 = vadd.f32 %v2765, 0.112945676
        %v2767 = vmul.f32 %v2749, %v2766
        %v2768 = vadd.f32 %v2767, 0.4994258
        %v2769 = vmul.f32 %v2749, %v2768
        %v2770 = vadd.f32 %v2769, 1.0
        %v2771 = vrcp.pop %v2770
        %v2772 = vmul.f32 %v2770, %v2771
        %v2773 = vsub.f32 1.0, %v2772
        %v2774 = vmul.f32 %v2771, %v2773
        %v2775 = vadd.f32 %v2771, %v2774
        %vm2776 = vweird.f32 %v2770
        %vm2777 = vweird.f32 %v2771
        %vm2778 = vmor %vm2776, %vm2777
        %v2779 = vsel %vm2778, %v2771, %v2775
        %v2780 = vand.u32 2147483647, %v2770
        %vm2781 = vcmp.eq.f32.partialorder %v2780, 8.507059e+37
        %v2782 = vand.u32 %v2770, 2147483648
        %v2783 = vor.u32 1.1754944e-38, %v2782
        %v2784 = vsel %vm2781, %v2783, %v2779
        %v2785 = vmul.f32 %v2760, %v2784
        %v2786 = vmin.f32 %v2785, 1.0
        %v2787 = vmax.f32 %v2786, -1.0
        %v2788 = vmul.f32 %v2600, %v2600
        %v2789 = vmin.f32 16.0, %v2788
        %v2790 = vmul.f32 %v2789, 2.1237322e-06
        %v2791 = vadd.f32 %v2790, 0.00028619796
        %v2792 = vmul.f32 %v2789, %v2791
        %v2793 = vadd.f32 %v2792, 0.0036580483
        %v2794 = vmul.f32 %v2789, %v2793
        %v2795 = vadd.f32 %v2794, 0.05243302
        %v2796 = vmul.f32 %v2789, %v2795
        %v2797 = vadd.f32 %v2796, 0.18741608
        %v2798 = vmul.f32 %v2789, %v2797
        %v2799 = vadd.f32 %v2798, 1.1283791
        %v2800 = vmul.f32 %v2600, %v2799
        %v2801 = vmul.f32 %v2789, 3.8918573e-05
        %v2802 = vadd.f32 %v2801, 0.001143296
        %v2803 = vmul.f32 %v2789, %v2802
        %v2804 = vadd.f32 %v2803, 0.014752088
        %v2805 = vmul.f32 %v2789, %v2804
        %v2806 = vadd.f32 %v2805, 0.112945676
        %v2807 = vmul.f32 %v2789, %v2806
        %v2808 = vadd.f32 %v2807, 0.4994258
        %v2809 = vmul.f32 %v2789, %v2808
        %v2810 = vadd.f32 %v2809, 1.0
        %v2811 = vrcp.pop %v2810
        %v2812 = vmul.f32 %v2810, %v2811
        %v2813 = vsub.f32 1.0, %v2812
        %v2814 = vmul.f32 %v2811, %v2813
        %v2815 = vadd.f32 %v2811, %v2814
        %vm2816 = vweird.f32 %v2810
        %vm2817 = vweird.f32 %v2811
        %vm2818 = vmor %vm2816, %vm2817
        %v2819 = vsel %vm2818, %v2811, %v2815
        %v2820 = vand.u32 2147483647, %v2810
        %vm2821 = vcmp.eq.f32.partialorder %v2820, 8.507059e+37
        %v2822 = vand.u32 %v2810, 2147483648
        %v2823 = vor.u32 1.1754944e-38, %v2822
        %v2824 = vsel %vm2821, %v2823, %v2819
        %v2825 = vmul.f32 %v2800, %v2824
        %v2826 = vmin.f32 %v2825, 1.0
        %v2827 = vmax.f32 %v2826, -1.0
        %v2828 = vmul.f32 %v2601, %v2601
        %v2829 = vmin.f32 16.0, %v2828
        %v2830 = vmul.f32 %v2829, 2.1237322e-06
        %v2831 = vadd.f32 %v2830, 0.00028619796
        %v2832 = vmul.f32 %v2829, %v2831
        %v2833 = vadd.f32 %v2832, 0.0036580483
        %v2834 = vmul.f32 %v2829, %v2833
        %v2835 = vadd.f32 %v2834, 0.05243302
        %v2836 = vmul.f32 %v2829, %v2835
        %v2837 = vadd.f32 %v2836, 0.18741608
        %v2838 = vmul.f32 %v2829, %v2837
        %v2839 = vadd.f32 %v2838, 1.1283791
        %v2840 = vmul.f32 %v2601, %v2839
        %v2841 = vmul.f32 %v2829, 3.8918573e-05
        %v2842 = vadd.f32 %v2841, 0.001143296
        %v2843 = vmul.f32 %v2829, %v2842
        %v2844 = vadd.f32 %v2843, 0.014752088
        %v2845 = vmul.f32 %v2829, %v2844
        %v2846 = vadd.f32 %v2845, 0.112945676
        %v2847 = vmul.f32 %v2829, %v2846
        %v2848 = vadd.f32 %v2847, 0.4994258
        %v2849 = vmul.f32 %v2829, %v2848
        %v2850 = vadd.f32 %v2849, 1.0
        %v2851 = vrcp.pop %v2850
        %v2852 = vmul.f32 %v2850, %v2851
        %v2853 = vsub.f32 1.0, %v2852
        %v2854 = vmul.f32 %v2851, %v2853
        %v2855 = vadd.f32 %v2851, %v2854
        %vm2856 = vweird.f32 %v2850
        %vm2857 = vweird.f32 %v2851
        %vm2858 = vmor %vm2856, %vm2857
        %v2859 = vsel %vm2858, %v2851, %v2855
        %v2860 = vand.u32 2147483647, %v2850
        %vm2861 = vcmp.eq.f32.partialorder %v2860, 8.507059e+37
        %v2862 = vand.u32 %v2850, 2147483648
        %v2863 = vor.u32 1.1754944e-38, %v2862
        %v2864 = vsel %vm2861, %v2863, %v2859
        %v2865 = vmul.f32 %v2840, %v2864
        %v2866 = vmin.f32 %v2865, 1.0
        %v2867 = vmax.f32 %v2866, -1.0
        %v2868 = vmul.f32 %v2602, %v2602
        %v2869 = vmin.f32 16.0, %v2868
        %v2870 = vmul.f32 %v2869, 2.1237322e-06
        %v2871 = vadd.f32 %v2870, 0.00028619796
        %v2872 = vmul.f32 %v2869, %v2871
        %v2873 = vadd.f32 %v2872, 0.0036580483
        %v2874 = vmul.f32 %v2869, %v2873
        %v2875 = vadd.f32 %v2874, 0.05243302
        %v2876 = vmul.f32 %v2869, %v2875
        %v2877 = vadd.f32 %v2876, 0.18741608
        %v2878 = vmul.f32 %v2869, %v2877
        %v2879 = vadd.f32 %v2878, 1.1283791
        %v2880 = vmul.f32 %v2602, %v2879
        %v2881 = vmul.f32 %v2869, 3.8918573e-05
        %v2882 = vadd.f32 %v2881, 0.001143296
        %v2883 = vmul.f32 %v2869, %v2882
        %v2884 = vadd.f32 %v2883, 0.014752088
        %v2885 = vmul.f32 %v2869, %v2884
        %v2886 = vadd.f32 %v2885, 0.112945676
        %v2887 = vmul.f32 %v2869, %v2886
        %v2888 = vadd.f32 %v2887, 0.4994258
        %v2889 = vmul.f32 %v2869, %v2888
        %v2890 = vadd.f32 %v2889, 1.0
        %v2891 = vrcp.pop %v2890
        %v2892 = vmul.f32 %v2890, %v2891
        %v2893 = vsub.f32 1.0, %v2892
        %v2894 = vmul.f32 %v2891, %v2893
        %v2895 = vadd.f32 %v2891, %v2894
        %vm2896 = vweird.f32 %v2890
        %vm2897 = vweird.f32 %v2891
        %vm2898 = vmor %vm2896, %vm2897
        %v2899 = vsel %vm2898, %v2891, %v2895
        %v2900 = vand.u32 2147483647, %v2890
        %vm2901 = vcmp.eq.f32.partialorder %v2900, 8.507059e+37
        %v2902 = vand.u32 %v2890, 2147483648
        %v2903 = vor.u32 1.1754944e-38, %v2902
        %v2904 = vsel %vm2901, %v2903, %v2899
        %v2905 = vmul.f32 %v2880, %v2904
        %v2906 = vmin.f32 %v2905, 1.0
        %v2907 = vmax.f32 %v2906, -1.0
        %v2908 = vmul.f32 %v2603, %v2603
        %v2909 = vmin.f32 16.0, %v2908
        %v2910 = vmul.f32 %v2909, 2.1237322e-06
        %v2911 = vadd.f32 %v2910, 0.00028619796
        %v2912 = vmul.f32 %v2909, %v2911
        %v2913 = vadd.f32 %v2912, 0.0036580483
        %v2914 = vmul.f32 %v2909, %v2913
        %v2915 = vadd.f32 %v2914, 0.05243302
        %v2916 = vmul.f32 %v2909, %v2915
        %v2917 = vadd.f32 %v2916, 0.18741608
        %v2918 = vmul.f32 %v2909, %v2917
        %v2919 = vadd.f32 %v2918, 1.1283791
        %v2920 = vmul.f32 %v2603, %v2919
        %v2921 = vmul.f32 %v2909, 3.8918573e-05
        %v2922 = vadd.f32 %v2921, 0.001143296
        %v2923 = vmul.f32 %v2909, %v2922
        %v2924 = vadd.f32 %v2923, 0.014752088
        %v2925 = vmul.f32 %v2909, %v2924
        %v2926 = vadd.f32 %v2925, 0.112945676
        %v2927 = vmul.f32 %v2909, %v2926
        %v2928 = vadd.f32 %v2927, 0.4994258
        %v2929 = vmul.f32 %v2909, %v2928
        %v2930 = vadd.f32 %v2929, 1.0
        %v2931 = vrcp.pop %v2930
        %v2932 = vmul.f32 %v2930, %v2931
        %v2933 = vsub.f32 1.0, %v2932
        %v2934 = vmul.f32 %v2931, %v2933
        %v2935 = vadd.f32 %v2931, %v2934
        %vm2936 = vweird.f32 %v2930
        %vm2937 = vweird.f32 %v2931
        %vm2938 = vmor %vm2936, %vm2937
        %v2939 = vsel %vm2938, %v2931, %v2935
        %v2940 = vand.u32 2147483647, %v2930
        %vm2941 = vcmp.eq.f32.partialorder %v2940, 8.507059e+37
        %v2942 = vand.u32 %v2930, 2147483648
        %v2943 = vor.u32 1.1754944e-38, %v2942
        %v2944 = vsel %vm2941, %v2943, %v2939
        %v2945 = vmul.f32 %v2920, %v2944
        %v2946 = vmin.f32 %v2945, 1.0
        %v2947 = vmax.f32 %v2946, -1.0
        %v2948 = vmul.f32 %v2604, %v2604
        %v2949 = vmin.f32 16.0, %v2948
        %v2950 = vmul.f32 %v2949, 2.1237322e-06
        %v2951 = vadd.f32 %v2950, 0.00028619796
        %v2952 = vmul.f32 %v2949, %v2951
        %v2953 = vadd.f32 %v2952, 0.0036580483
        %v2954 = vmul.f32 %v2949, %v2953
        %v2955 = vadd.f32 %v2954, 0.05243302
        %v2956 = vmul.f32 %v2949, %v2955
        %v2957 = vadd.f32 %v2956, 0.18741608
        %v2958 = vmul.f32 %v2949, %v2957
        %v2959 = vadd.f32 %v2958, 1.1283791
        %v2960 = vmul.f32 %v2604, %v2959
        %v2961 = vmul.f32 %v2949, 3.8918573e-05
        %v2962 = vadd.f32 %v2961, 0.001143296
        %v2963 = vmul.f32 %v2949, %v2962
        %v2964 = vadd.f32 %v2963, 0.014752088
        %v2965 = vmul.f32 %v2949, %v2964
        %v2966 = vadd.f32 %v2965, 0.112945676
        %v2967 = vmul.f32 %v2949, %v2966
        %v2968 = vadd.f32 %v2967, 0.4994258
        %v2969 = vmul.f32 %v2949, %v2968
        %v2970 = vadd.f32 %v2969, 1.0
        %v2971 = vrcp.pop %v2970
        %v2972 = vmul.f32 %v2970, %v2971
        %v2973 = vsub.f32 1.0, %v2972
        %v2974 = vmul.f32 %v2971, %v2973
        %v2975 = vadd.f32 %v2971, %v2974
        %vm2976 = vweird.f32 %v2970
        %vm2977 = vweird.f32 %v2971
        %vm2978 = vmor %vm2976, %vm2977
        %v2979 = vsel %vm2978, %v2971, %v2975
        %v2980 = vand.u32 2147483647, %v2970
        %vm2981 = vcmp.eq.f32.partialorder %v2980, 8.507059e+37
        %v2982 = vand.u32 %v2970, 2147483648
        %v2983 = vor.u32 1.1754944e-38, %v2982
        %v2984 = vsel %vm2981, %v2983, %v2979
        %v2985 = vmul.f32 %v2960, %v2984
        %v2986 = vmin.f32 %v2985, 1.0
        %v2987 = vmax.f32 %v2986, -1.0
        %v2988 = vmul.f32 %v2605, %v2605
        %v2989 = vmin.f32 16.0, %v2988
        %v2990 = vmul.f32 %v2989, 2.1237322e-06
        %v2991 = vadd.f32 %v2990, 0.00028619796
        %v2992 = vmul.f32 %v2989, %v2991
        %v2993 = vadd.f32 %v2992, 0.0036580483
        %v2994 = vmul.f32 %v2989, %v2993
        %v2995 = vadd.f32 %v2994, 0.05243302
        %v2996 = vmul.f32 %v2989, %v2995
        %v2997 = vadd.f32 %v2996, 0.18741608
        %v2998 = vmul.f32 %v2989, %v2997
        %v2999 = vadd.f32 %v2998, 1.1283791
        %v3000 = vmul.f32 %v2605, %v2999
        %v3001 = vmul.f32 %v2989, 3.8918573e-05
        %v3002 = vadd.f32 %v3001, 0.001143296
        %v3003 = vmul.f32 %v2989, %v3002
        %v3004 = vadd.f32 %v3003, 0.014752088
        %v3005 = vmul.f32 %v2989, %v3004
        %v3006 = vadd.f32 %v3005, 0.112945676
        %v3007 = vmul.f32 %v2989, %v3006
        %v3008 = vadd.f32 %v3007, 0.4994258
        %v3009 = vmul.f32 %v2989, %v3008
        %v3010 = vadd.f32 %v3009, 1.0
        %v3011 = vrcp.pop %v3010
        %v3012 = vmul.f32 %v3010, %v3011
        %v3013 = vsub.f32 1.0, %v3012
        %v3014 = vmul.f32 %v3011, %v3013
        %v3015 = vadd.f32 %v3011, %v3014
        %vm3016 = vweird.f32 %v3010
        %vm3017 = vweird.f32 %v3011
        %vm3018 = vmor %vm3016, %vm3017
        %v3019 = vsel %vm3018, %v3011, %v3015
        %v3020 = vand.u32 2147483647, %v3010
        %vm3021 = vcmp.eq.f32.partialorder %v3020, 8.507059e+37
        %v3022 = vand.u32 %v3010, 2147483648
        %v3023 = vor.u32 1.1754944e-38, %v3022
        %v3024 = vsel %vm3021, %v3023, %v3019
        %v3025 = vmul.f32 %v3000, %v3024
        %v3026 = vmin.f32 %v3025, 1.0
        %v3027 = vmax.f32 %v3026, -1.0
        %v3028 = vmul.f32 %v2606, %v2606
        %v3029 = vmin.f32 16.0, %v3028
        %v3030 = vmul.f32 %v3029, 2.1237322e-06
        %v3031 = vadd.f32 %v3030, 0.00028619796
        %v3032 = vmul.f32 %v3029, %v3031
        %v3033 = vadd.f32 %v3032, 0.0036580483
        %v3034 = vmul.f32 %v3029, %v3033
        %v3035 = vadd.f32 %v3034, 0.05243302
        %v3036 = vmul.f32 %v3029, %v3035
        %v3037 = vadd.f32 %v3036, 0.18741608
        %v3038 = vmul.f32 %v3029, %v3037
        %v3039 = vadd.f32 %v3038, 1.1283791
        %v3040 = vmul.f32 %v2606, %v3039
        %v3041 = vmul.f32 %v3029, 3.8918573e-05
        %v3042 = vadd.f32 %v3041, 0.001143296
        %v3043 = vmul.f32 %v3029, %v3042
        %v3044 = vadd.f32 %v3043, 0.014752088
        %v3045 = vmul.f32 %v3029, %v3044
        %v3046 = vadd.f32 %v3045, 0.112945676
        %v3047 = vmul.f32 %v3029, %v3046
        %v3048 = vadd.f32 %v3047, 0.4994258
        %v3049 = vmul.f32 %v3029, %v3048
        %v3050 = vadd.f32 %v3049, 1.0
        %v3051 = vrcp.pop %v3050
        %v3052 = vmul.f32 %v3050, %v3051
        %v3053 = vsub.f32 1.0, %v3052
        %v3054 = vmul.f32 %v3051, %v3053
        %v3055 = vadd.f32 %v3051, %v3054
        %vm3056 = vweird.f32 %v3050
        %vm3057 = vweird.f32 %v3051
        %vm3058 = vmor %vm3056, %vm3057
        %v3059 = vsel %vm3058, %v3051, %v3055
        %v3060 = vand.u32 2147483647, %v3050
        %vm3061 = vcmp.eq.f32.partialorder %v3060, 8.507059e+37
        %v3062 = vand.u32 %v3050, 2147483648
        %v3063 = vor.u32 1.1754944e-38, %v3062
        %v3064 = vsel %vm3061, %v3063, %v3059
        %v3065 = vmul.f32 %v3040, %v3064
        %v3066 = vmin.f32 %v3065, 1.0
        %v3067 = vmax.f32 %v3066, -1.0
        %v3068 = vmul.f32 %v2607, %v2607
        %v3069 = vmin.f32 16.0, %v3068
        %v3070 = vmul.f32 %v3069, 2.1237322e-06
        %v3071 = vadd.f32 %v3070, 0.00028619796
        %v3072 = vmul.f32 %v3069, %v3071
        %v3073 = vadd.f32 %v3072, 0.0036580483
        %v3074 = vmul.f32 %v3069, %v3073
        %v3075 = vadd.f32 %v3074, 0.05243302
        %v3076 = vmul.f32 %v3069, %v3075
        %v3077 = vadd.f32 %v3076, 0.18741608
        %v3078 = vmul.f32 %v3069, %v3077
        %v3079 = vadd.f32 %v3078, 1.1283791
        %v3080 = vmul.f32 %v2607, %v3079
        %v3081 = vmul.f32 %v3069, 3.8918573e-05
        %v3082 = vadd.f32 %v3081, 0.001143296
        %v3083 = vmul.f32 %v3069, %v3082
        %v3084 = vadd.f32 %v3083, 0.014752088
        %v3085 = vmul.f32 %v3069, %v3084
        %v3086 = vadd.f32 %v3085, 0.112945676
        %v3087 = vmul.f32 %v3069, %v3086
        %v3088 = vadd.f32 %v3087, 0.4994258
        %v3089 = vmul.f32 %v3069, %v3088
        %v3090 = vadd.f32 %v3089, 1.0
        %v3091 = vrcp.pop %v3090
        %v3092 = vmul.f32 %v3090, %v3091
        %v3093 = vsub.f32 1.0, %v3092
        %v3094 = vmul.f32 %v3091, %v3093
        %v3095 = vadd.f32 %v3091, %v3094
        %vm3096 = vweird.f32 %v3090
        %vm3097 = vweird.f32 %v3091
        %vm3098 = vmor %vm3096, %vm3097
        %v3099 = vsel %vm3098, %v3091, %v3095
        %v3100 = vand.u32 2147483647, %v3090
        %vm3101 = vcmp.eq.f32.partialorder %v3100, 8.507059e+37
        %v3102 = vand.u32 %v3090, 2147483648
        %v3103 = vor.u32 1.1754944e-38, %v3102
        %v3104 = vsel %vm3101, %v3103, %v3099
        %v3105 = vmul.f32 %v3080, %v3104
        %v3106 = vmin.f32 %v3105, 1.0
        %v3107 = vmax.f32 %v3106, -1.0
        %v3108 = vmul.f32 %v2608, %v2608
        %v3109 = vmin.f32 16.0, %v3108
        %v3110 = vmul.f32 %v3109, 2.1237322e-06
        %v3111 = vadd.f32 %v3110, 0.00028619796
        %v3112 = vmul.f32 %v3109, %v3111
        %v3113 = vadd.f32 %v3112, 0.0036580483
        %v3114 = vmul.f32 %v3109, %v3113
        %v3115 = vadd.f32 %v3114, 0.05243302
        %v3116 = vmul.f32 %v3109, %v3115
        %v3117 = vadd.f32 %v3116, 0.18741608
        %v3118 = vmul.f32 %v3109, %v3117
        %v3119 = vadd.f32 %v3118, 1.1283791
        %v3120 = vmul.f32 %v2608, %v3119
        %v3121 = vmul.f32 %v3109, 3.8918573e-05
        %v3122 = vadd.f32 %v3121, 0.001143296
        %v3123 = vmul.f32 %v3109, %v3122
        %v3124 = vadd.f32 %v3123, 0.014752088
        %v3125 = vmul.f32 %v3109, %v3124
        %v3126 = vadd.f32 %v3125, 0.112945676
        %v3127 = vmul.f32 %v3109, %v3126
        %v3128 = vadd.f32 %v3127, 0.4994258
        %v3129 = vmul.f32 %v3109, %v3128
        %v3130 = vadd.f32 %v3129, 1.0
        %v3131 = vrcp.pop %v3130
        %v3132 = vmul.f32 %v3130, %v3131
        %v3133 = vsub.f32 1.0, %v3132
        %v3134 = vmul.f32 %v3131, %v3133
        %v3135 = vadd.f32 %v3131, %v3134
        %vm3136 = vweird.f32 %v3130
        %vm3137 = vweird.f32 %v3131
        %vm3138 = vmor %vm3136, %vm3137
        %v3139 = vsel %vm3138, %v3131, %v3135
        %v3140 = vand.u32 2147483647, %v3130
        %vm3141 = vcmp.eq.f32.partialorder %v3140, 8.507059e+37
        %v3142 = vand.u32 %v3130, 2147483648
        %v3143 = vor.u32 1.1754944e-38, %v3142
        %v3144 = vsel %vm3141, %v3143, %v3139
        %v3145 = vmul.f32 %v3120, %v3144
        %v3146 = vmin.f32 %v3145, 1.0
        %v3147 = vmax.f32 %v3146, -1.0
        %v3148 = vmul.f32 %v2609, %v2609
        %v3149 = vmin.f32 16.0, %v3148
        %v3150 = vmul.f32 %v3149, 2.1237322e-06
        %v3151 = vadd.f32 %v3150, 0.00028619796
        %v3152 = vmul.f32 %v3149, %v3151
        %v3153 = vadd.f32 %v3152, 0.0036580483
        %v3154 = vmul.f32 %v3149, %v3153
        %v3155 = vadd.f32 %v3154, 0.05243302
        %v3156 = vmul.f32 %v3149, %v3155
        %v3157 = vadd.f32 %v3156, 0.18741608
        %v3158 = vmul.f32 %v3149, %v3157
        %v3159 = vadd.f32 %v3158, 1.1283791
        %v3160 = vmul.f32 %v2609, %v3159
        %v3161 = vmul.f32 %v3149, 3.8918573e-05
        %v3162 = vadd.f32 %v3161, 0.001143296
        %v3163 = vmul.f32 %v3149, %v3162
        %v3164 = vadd.f32 %v3163, 0.014752088
        %v3165 = vmul.f32 %v3149, %v3164
        %v3166 = vadd.f32 %v3165, 0.112945676
        %v3167 = vmul.f32 %v3149, %v3166
        %v3168 = vadd.f32 %v3167, 0.4994258
        %v3169 = vmul.f32 %v3149, %v3168
        %v3170 = vadd.f32 %v3169, 1.0
        %v3171 = vrcp.pop %v3170
        %v3172 = vmul.f32 %v3170, %v3171
        %v3173 = vsub.f32 1.0, %v3172
        %v3174 = vmul.f32 %v3171, %v3173
        %v3175 = vadd.f32 %v3171, %v3174
        %vm3176 = vweird.f32 %v3170
        %vm3177 = vweird.f32 %v3171
        %vm3178 = vmor %vm3176, %vm3177
        %v3179 = vsel %vm3178, %v3171, %v3175
        %v3180 = vand.u32 2147483647, %v3170
        %vm3181 = vcmp.eq.f32.partialorder %v3180, 8.507059e+37
        %v3182 = vand.u32 %v3170, 2147483648
        %v3183 = vor.u32 1.1754944e-38, %v3182
        %v3184 = vsel %vm3181, %v3183, %v3179
        %v3185 = vmul.f32 %v3160, %v3184
        %v3186 = vmin.f32 %v3185, 1.0
        %v3187 = vmax.f32 %v3186, -1.0
        %v3188 = vmul.f32 %v2610, %v2610
        %v3189 = vmin.f32 16.0, %v3188
        %v3190 = vmul.f32 %v3189, 2.1237322e-06
        %v3191 = vadd.f32 %v3190, 0.00028619796
        %v3192 = vmul.f32 %v3189, %v3191
        %v3193 = vadd.f32 %v3192, 0.0036580483
        %v3194 = vmul.f32 %v3189, %v3193
        %v3195 = vadd.f32 %v3194, 0.05243302
        %v3196 = vmul.f32 %v3189, %v3195
        %v3197 = vadd.f32 %v3196, 0.18741608
        %v3198 = vmul.f32 %v3189, %v3197
        %v3199 = vadd.f32 %v3198, 1.1283791
        %v3200 = vmul.f32 %v2610, %v3199
        %v3201 = vmul.f32 %v3189, 3.8918573e-05
        %v3202 = vadd.f32 %v3201, 0.001143296
        %v3203 = vmul.f32 %v3189, %v3202
        %v3204 = vadd.f32 %v3203, 0.014752088
        %v3205 = vmul.f32 %v3189, %v3204
        %v3206 = vadd.f32 %v3205, 0.112945676
        %v3207 = vmul.f32 %v3189, %v3206
        %v3208 = vadd.f32 %v3207, 0.4994258
        %v3209 = vmul.f32 %v3189, %v3208
        %v3210 = vadd.f32 %v3209, 1.0
        %v3211 = vrcp.pop %v3210
        %v3212 = vmul.f32 %v3210, %v3211
        %v3213 = vsub.f32 1.0, %v3212
        %v3214 = vmul.f32 %v3211, %v3213
        %v3215 = vadd.f32 %v3211, %v3214
        %vm3216 = vweird.f32 %v3210
        %vm3217 = vweird.f32 %v3211
        %vm3218 = vmor %vm3216, %vm3217
        %v3219 = vsel %vm3218, %v3211, %v3215
        %v3220 = vand.u32 2147483647, %v3210
        %vm3221 = vcmp.eq.f32.partialorder %v3220, 8.507059e+37
        %v3222 = vand.u32 %v3210, 2147483648
        %v3223 = vor.u32 1.1754944e-38, %v3222
        %v3224 = vsel %vm3221, %v3223, %v3219
        %v3225 = vmul.f32 %v3200, %v3224
        %v3226 = vmin.f32 %v3225, 1.0
        %v3227 = vmax.f32 %v3226, -1.0
        %v3228 = vmul.f32 %v2611, %v2611
        %v3229 = vmin.f32 16.0, %v3228
        %v3230 = vmul.f32 %v3229, 2.1237322e-06
        %v3231 = vadd.f32 %v3230, 0.00028619796
        %v3232 = vmul.f32 %v3229, %v3231
        %v3233 = vadd.f32 %v3232, 0.0036580483
        %v3234 = vmul.f32 %v3229, %v3233
        %v3235 = vadd.f32 %v3234, 0.05243302
        %v3236 = vmul.f32 %v3229, %v3235
        %v3237 = vadd.f32 %v3236, 0.18741608
        %v3238 = vmul.f32 %v3229, %v3237
        %v3239 = vadd.f32 %v3238, 1.1283791
        %v3240 = vmul.f32 %v2611, %v3239
        %v3241 = vmul.f32 %v3229, 3.8918573e-05
        %v3242 = vadd.f32 %v3241, 0.001143296
        %v3243 = vmul.f32 %v3229, %v3242
        %v3244 = vadd.f32 %v3243, 0.014752088
        %v3245 = vmul.f32 %v3229, %v3244
        %v3246 = vadd.f32 %v3245, 0.112945676
        %v3247 = vmul.f32 %v3229, %v3246
        %v3248 = vadd.f32 %v3247, 0.4994258
        %v3249 = vmul.f32 %v3229, %v3248
        %v3250 = vadd.f32 %v3249, 1.0
        %v3251 = vrcp.pop %v3250
        %v3252 = vmul.f32 %v3250, %v3251
        %v3253 = vsub.f32 1.0, %v3252
        %v3254 = vmul.f32 %v3251, %v3253
        %v3255 = vadd.f32 %v3251, %v3254
        %vm3256 = vweird.f32 %v3250
        %vm3257 = vweird.f32 %v3251
        %vm3258 = vmor %vm3256, %vm3257
        %v3259 = vsel %vm3258, %v3251, %v3255
        %v3260 = vand.u32 2147483647, %v3250
        %vm3261 = vcmp.eq.f32.partialorder %v3260, 8.507059e+37
        %v3262 = vand.u32 %v3250, 2147483648
        %v3263 = vor.u32 1.1754944e-38, %v3262
        %v3264 = vsel %vm3261, %v3263, %v3259
        %v3265 = vmul.f32 %v3240, %v3264
        %v3266 = vmin.f32 %v3265, 1.0
        %v3267 = vmax.f32 %v3266, -1.0
        %v3268 = vmul.f32 %v2612, %v2612
        %v3269 = vmin.f32 16.0, %v3268
        %v3270 = vmul.f32 %v3269, 2.1237322e-06
        %v3271 = vadd.f32 %v3270, 0.00028619796
        %v3272 = vmul.f32 %v3269, %v3271
        %v3273 = vadd.f32 %v3272, 0.0036580483
        %v3274 = vmul.f32 %v3269, %v3273
        %v3275 = vadd.f32 %v3274, 0.05243302
        %v3276 = vmul.f32 %v3269, %v3275
        %v3277 = vadd.f32 %v3276, 0.18741608
        %v3278 = vmul.f32 %v3269, %v3277
        %v3279 = vadd.f32 %v3278, 1.1283791
        %v3280 = vmul.f32 %v2612, %v3279
        %v3281 = vmul.f32 %v3269, 3.8918573e-05
        %v3282 = vadd.f32 %v3281, 0.001143296
        %v3283 = vmul.f32 %v3269, %v3282
        %v3284 = vadd.f32 %v3283, 0.014752088
        %v3285 = vmul.f32 %v3269, %v3284
        %v3286 = vadd.f32 %v3285, 0.112945676
        %v3287 = vmul.f32 %v3269, %v3286
        %v3288 = vadd.f32 %v3287, 0.4994258
        %v3289 = vmul.f32 %v3269, %v3288
        %v3290 = vadd.f32 %v3289, 1.0
        %v3291 = vrcp.pop %v3290
        %v3292 = vmul.f32 %v3290, %v3291
        %v3293 = vsub.f32 1.0, %v3292
        %v3294 = vmul.f32 %v3291, %v3293
        %v3295 = vadd.f32 %v3291, %v3294
        %vm3296 = vweird.f32 %v3290
        %vm3297 = vweird.f32 %v3291
        %vm3298 = vmor %vm3296, %vm3297
        %v3299 = vsel %vm3298, %v3291, %v3295
        %v3300 = vand.u32 2147483647, %v3290
        %vm3301 = vcmp.eq.f32.partialorder %v3300, 8.507059e+37
        %v3302 = vand.u32 %v3290, 2147483648
        %v3303 = vor.u32 1.1754944e-38, %v3302
        %v3304 = vsel %vm3301, %v3303, %v3299
        %v3305 = vmul.f32 %v3280, %v3304
        %v3306 = vmin.f32 %v3305, 1.0
        %v3307 = vmax.f32 %v3306, -1.0
        %v3308 = vmul.f32 %v2613, %v2613
        %v3309 = vmin.f32 16.0, %v3308
        %v3310 = vmul.f32 %v3309, 2.1237322e-06
        %v3311 = vadd.f32 %v3310, 0.00028619796
        %v3312 = vmul.f32 %v3309, %v3311
        %v3313 = vadd.f32 %v3312, 0.0036580483
        %v3314 = vmul.f32 %v3309, %v3313
        %v3315 = vadd.f32 %v3314, 0.05243302
        %v3316 = vmul.f32 %v3309, %v3315
        %v3317 = vadd.f32 %v3316, 0.18741608
        %v3318 = vmul.f32 %v3309, %v3317
        %v3319 = vadd.f32 %v3318, 1.1283791
        %v3320 = vmul.f32 %v2613, %v3319
        %v3321 = vmul.f32 %v3309, 3.8918573e-05
        %v3322 = vadd.f32 %v3321, 0.001143296
        %v3323 = vmul.f32 %v3309, %v3322
        %v3324 = vadd.f32 %v3323, 0.014752088
        %v3325 = vmul.f32 %v3309, %v3324
        %v3326 = vadd.f32 %v3325, 0.112945676
        %v3327 = vmul.f32 %v3309, %v3326
        %v3328 = vadd.f32 %v3327, 0.4994258
        %v3329 = vmul.f32 %v3309, %v3328
        %v3330 = vadd.f32 %v3329, 1.0
        %v3331 = vrcp.pop %v3330
        %v3332 = vmul.f32 %v3330, %v3331
        %v3333 = vsub.f32 1.0, %v3332
        %v3334 = vmul.f32 %v3331, %v3333
        %v3335 = vadd.f32 %v3331, %v3334
        %vm3336 = vweird.f32 %v3330
        %vm3337 = vweird.f32 %v3331
        %vm3338 = vmor %vm3336, %vm3337
        %v3339 = vsel %vm3338, %v3331, %v3335
        %v3340 = vand.u32 2147483647, %v3330
        %vm3341 = vcmp.eq.f32.partialorder %v3340, 8.507059e+37
        %v3342 = vand.u32 %v3330, 2147483648
        %v3343 = vor.u32 1.1754944e-38, %v3342
        %v3344 = vsel %vm3341, %v3343, %v3339
        %v3345 = vmul.f32 %v3320, %v3344
        %v3346 = vmin.f32 %v3345, 1.0
        %v3347 = vmax.f32 %v3346, -1.0
        %v3348 = vmul.f32 %v2614, %v2614
        %v3349 = vmin.f32 16.0, %v3348
        %v3350 = vmul.f32 %v3349, 2.1237322e-06
        %v3351 = vadd.f32 %v3350, 0.00028619796
        %v3352 = vmul.f32 %v3349, %v3351
        %v3353 = vadd.f32 %v3352, 0.0036580483
        %v3354 = vmul.f32 %v3349, %v3353
        %v3355 = vadd.f32 %v3354, 0.05243302
        %v3356 = vmul.f32 %v3349, %v3355
        %v3357 = vadd.f32 %v3356, 0.18741608
        %v3358 = vmul.f32 %v3349, %v3357
        %v3359 = vadd.f32 %v3358, 1.1283791
        %v3360 = vmul.f32 %v2614, %v3359
        %v3361 = vmul.f32 %v3349, 3.8918573e-05
        %v3362 = vadd.f32 %v3361, 0.001143296
        %v3363 = vmul.f32 %v3349, %v3362
        %v3364 = vadd.f32 %v3363, 0.014752088
        %v3365 = vmul.f32 %v3349, %v3364
        %v3366 = vadd.f32 %v3365, 0.112945676
        %v3367 = vmul.f32 %v3349, %v3366
        %v3368 = vadd.f32 %v3367, 0.4994258
        %v3369 = vmul.f32 %v3349, %v3368
        %v3370 = vadd.f32 %v3369, 1.0
        %v3371 = vrcp.pop %v3370
        %v3372 = vmul.f32 %v3370, %v3371
        %v3373 = vsub.f32 1.0, %v3372
        %v3374 = vmul.f32 %v3371, %v3373
        %v3375 = vadd.f32 %v3371, %v3374
        %vm3376 = vweird.f32 %v3370
        %vm3377 = vweird.f32 %v3371
        %vm3378 = vmor %vm3376, %vm3377
        %v3379 = vsel %vm3378, %v3371, %v3375
        %v3380 = vand.u32 2147483647, %v3370
        %vm3381 = vcmp.eq.f32.partialorder %v3380, 8.507059e+37
        %v3382 = vand.u32 %v3370, 2147483648
        %v3383 = vor.u32 1.1754944e-38, %v3382
        %v3384 = vsel %vm3381, %v3383, %v3379
        %v3385 = vmul.f32 %v3360, %v3384
        %v3386 = vmin.f32 %v3385, 1.0
        %v3387 = vmax.f32 %v3386, -1.0
        %v3388 = vmul.f32 %v2615, %v2615
        %v3389 = vmin.f32 16.0, %v3388
        %v3390 = vmul.f32 %v3389, 2.1237322e-06
        %v3391 = vadd.f32 %v3390, 0.00028619796
        %v3392 = vmul.f32 %v3389, %v3391
        %v3393 = vadd.f32 %v3392, 0.0036580483
        %v3394 = vmul.f32 %v3389, %v3393
        %v3395 = vadd.f32 %v3394, 0.05243302
        %v3396 = vmul.f32 %v3389, %v3395
        %v3397 = vadd.f32 %v3396, 0.18741608
        %v3398 = vmul.f32 %v3389, %v3397
        %v3399 = vadd.f32 %v3398, 1.1283791
        %v3400 = vmul.f32 %v2615, %v3399
        %v3401 = vmul.f32 %v3389, 3.8918573e-05
        %v3402 = vadd.f32 %v3401, 0.001143296
        %v3403 = vmul.f32 %v3389, %v3402
        %v3404 = vadd.f32 %v3403, 0.014752088
        %v3405 = vmul.f32 %v3389, %v3404
        %v3406 = vadd.f32 %v3405, 0.112945676
        %v3407 = vmul.f32 %v3389, %v3406
        %v3408 = vadd.f32 %v3407, 0.4994258
        %v3409 = vmul.f32 %v3389, %v3408
        %v3410 = vadd.f32 %v3409, 1.0
        %v3411 = vrcp.pop %v3410
        %v3412 = vmul.f32 %v3410, %v3411
        %v3413 = vsub.f32 1.0, %v3412
        %v3414 = vmul.f32 %v3411, %v3413
        %v3415 = vadd.f32 %v3411, %v3414
        %vm3416 = vweird.f32 %v3410
        %vm3417 = vweird.f32 %v3411
        %vm3418 = vmor %vm3416, %vm3417
        %v3419 = vsel %vm3418, %v3411, %v3415
        %v3420 = vand.u32 2147483647, %v3410
        %vm3421 = vcmp.eq.f32.partialorder %v3420, 8.507059e+37
        %v3422 = vand.u32 %v3410, 2147483648
        %v3423 = vor.u32 1.1754944e-38, %v3422
        %v3424 = vsel %vm3421, %v3423, %v3419
        %v3425 = vmul.f32 %v3400, %v3424
        %v3426 = vmin.f32 %v3425, 1.0
        %v3427 = vmax.f32 %v3426, -1.0
        %v3428 = vmul.f32 %v2616, %v2616
        %v3429 = vmin.f32 16.0, %v3428
        %v3430 = vmul.f32 %v3429, 2.1237322e-06
        %v3431 = vadd.f32 %v3430, 0.00028619796
        %v3432 = vmul.f32 %v3429, %v3431
        %v3433 = vadd.f32 %v3432, 0.0036580483
        %v3434 = vmul.f32 %v3429, %v3433
        %v3435 = vadd.f32 %v3434, 0.05243302
        %v3436 = vmul.f32 %v3429, %v3435
        %v3437 = vadd.f32 %v3436, 0.18741608
        %v3438 = vmul.f32 %v3429, %v3437
        %v3439 = vadd.f32 %v3438, 1.1283791
        %v3440 = vmul.f32 %v2616, %v3439
        %v3441 = vmul.f32 %v3429, 3.8918573e-05
        %v3442 = vadd.f32 %v3441, 0.001143296
        %v3443 = vmul.f32 %v3429, %v3442
        %v3444 = vadd.f32 %v3443, 0.014752088
        %v3445 = vmul.f32 %v3429, %v3444
        %v3446 = vadd.f32 %v3445, 0.112945676
        %v3447 = vmul.f32 %v3429, %v3446
        %v3448 = vadd.f32 %v3447, 0.4994258
        %v3449 = vmul.f32 %v3429, %v3448
        %v3450 = vadd.f32 %v3449, 1.0
        %v3451 = vrcp.pop %v3450
        %v3452 = vmul.f32 %v3450, %v3451
        %v3453 = vsub.f32 1.0, %v3452
        %v3454 = vmul.f32 %v3451, %v3453
        %v3455 = vadd.f32 %v3451, %v3454
        %vm3456 = vweird.f32 %v3450
        %vm3457 = vweird.f32 %v3451
        %vm3458 = vmor %vm3456, %vm3457
        %v3459 = vsel %vm3458, %v3451, %v3455
        %v3460 = vand.u32 2147483647, %v3450
        %vm3461 = vcmp.eq.f32.partialorder %v3460, 8.507059e+37
        %v3462 = vand.u32 %v3450, 2147483648
        %v3463 = vor.u32 1.1754944e-38, %v3462
        %v3464 = vsel %vm3461, %v3463, %v3459
        %v3465 = vmul.f32 %v3440, %v3464
        %v3466 = vmin.f32 %v3465, 1.0
        %v3467 = vmax.f32 %v3466, -1.0
        %v3468 = vmul.f32 %v2617, %v2617
        %v3469 = vmin.f32 16.0, %v3468
        %v3470 = vmul.f32 %v3469, 2.1237322e-06
        %v3471 = vadd.f32 %v3470, 0.00028619796
        %v3472 = vmul.f32 %v3469, %v3471
        %v3473 = vadd.f32 %v3472, 0.0036580483
        %v3474 = vmul.f32 %v3469, %v3473
        %v3475 = vadd.f32 %v3474, 0.05243302
        %v3476 = vmul.f32 %v3469, %v3475
        %v3477 = vadd.f32 %v3476, 0.18741608
        %v3478 = vmul.f32 %v3469, %v3477
        %v3479 = vadd.f32 %v3478, 1.1283791
        %v3480 = vmul.f32 %v2617, %v3479
        %v3481 = vmul.f32 %v3469, 3.8918573e-05
        %v3482 = vadd.f32 %v3481, 0.001143296
        %v3483 = vmul.f32 %v3469, %v3482
        %v3484 = vadd.f32 %v3483, 0.014752088
        %v3485 = vmul.f32 %v3469, %v3484
        %v3486 = vadd.f32 %v3485, 0.112945676
        %v3487 = vmul.f32 %v3469, %v3486
        %v3488 = vadd.f32 %v3487, 0.4994258
        %v3489 = vmul.f32 %v3469, %v3488
        %v3490 = vadd.f32 %v3489, 1.0
        %v3491 = vrcp.pop %v3490
        %v3492 = vmul.f32 %v3490, %v3491
        %v3493 = vsub.f32 1.0, %v3492
        %v3494 = vmul.f32 %v3491, %v3493
        %v3495 = vadd.f32 %v3491, %v3494
        %vm3496 = vweird.f32 %v3490
        %vm3497 = vweird.f32 %v3491
        %vm3498 = vmor %vm3496, %vm3497
        %v3499 = vsel %vm3498, %v3491, %v3495
        %v3500 = vand.u32 2147483647, %v3490
        %vm3501 = vcmp.eq.f32.partialorder %v3500, 8.507059e+37
        %v3502 = vand.u32 %v3490, 2147483648
        %v3503 = vor.u32 1.1754944e-38, %v3502
        %v3504 = vsel %vm3501, %v3503, %v3499
        %v3505 = vmul.f32 %v3480, %v3504
        %v3506 = vmin.f32 %v3505, 1.0
        %v3507 = vmax.f32 %v3506, -1.0
        %v3508 = vmul.f32 %v2618, %v2618
        %v3509 = vmin.f32 16.0, %v3508
        %v3510 = vmul.f32 %v3509, 2.1237322e-06
        %v3511 = vadd.f32 %v3510, 0.00028619796
        %v3512 = vmul.f32 %v3509, %v3511
        %v3513 = vadd.f32 %v3512, 0.0036580483
        %v3514 = vmul.f32 %v3509, %v3513
        %v3515 = vadd.f32 %v3514, 0.05243302
        %v3516 = vmul.f32 %v3509, %v3515
        %v3517 = vadd.f32 %v3516, 0.18741608
        %v3518 = vmul.f32 %v3509, %v3517
        %v3519 = vadd.f32 %v3518, 1.1283791
        %v3520 = vmul.f32 %v2618, %v3519
        %v3521 = vmul.f32 %v3509, 3.8918573e-05
        %v3522 = vadd.f32 %v3521, 0.001143296
        %v3523 = vmul.f32 %v3509, %v3522
        %v3524 = vadd.f32 %v3523, 0.014752088
        %v3525 = vmul.f32 %v3509, %v3524
        %v3526 = vadd.f32 %v3525, 0.112945676
        %v3527 = vmul.f32 %v3509, %v3526
        %v3528 = vadd.f32 %v3527, 0.4994258
        %v3529 = vmul.f32 %v3509, %v3528
        %v3530 = vadd.f32 %v3529, 1.0
        %v3531 = vrcp.pop %v3530
        %v3532 = vmul.f32 %v3530, %v3531
        %v3533 = vsub.f32 1.0, %v3532
        %v3534 = vmul.f32 %v3531, %v3533
        %v3535 = vadd.f32 %v3531, %v3534
        %vm3536 = vweird.f32 %v3530
        %vm3537 = vweird.f32 %v3531
        %vm3538 = vmor %vm3536, %vm3537
        %v3539 = vsel %vm3538, %v3531, %v3535
        %v3540 = vand.u32 2147483647, %v3530
        %vm3541 = vcmp.eq.f32.partialorder %v3540, 8.507059e+37
        %v3542 = vand.u32 %v3530, 2147483648
        %v3543 = vor.u32 1.1754944e-38, %v3542
        %v3544 = vsel %vm3541, %v3543, %v3539
        %v3545 = vmul.f32 %v3520, %v3544
        %v3546 = vmin.f32 %v3545, 1.0
        %v3547 = vmax.f32 %v3546, -1.0
        %v3548 = vmul.f32 %v2619, %v2619
        %v3549 = vmin.f32 16.0, %v3548
        %v3550 = vmul.f32 %v3549, 2.1237322e-06
        %v3551 = vadd.f32 %v3550, 0.00028619796
        %v3552 = vmul.f32 %v3549, %v3551
        %v3553 = vadd.f32 %v3552, 0.0036580483
        %v3554 = vmul.f32 %v3549, %v3553
        %v3555 = vadd.f32 %v3554, 0.05243302
        %v3556 = vmul.f32 %v3549, %v3555
        %v3557 = vadd.f32 %v3556, 0.18741608
        %v3558 = vmul.f32 %v3549, %v3557
        %v3559 = vadd.f32 %v3558, 1.1283791
        %v3560 = vmul.f32 %v2619, %v3559
        %v3561 = vmul.f32 %v3549, 3.8918573e-05
        %v3562 = vadd.f32 %v3561, 0.001143296
        %v3563 = vmul.f32 %v3549, %v3562
        %v3564 = vadd.f32 %v3563, 0.014752088
        %v3565 = vmul.f32 %v3549, %v3564
        %v3566 = vadd.f32 %v3565, 0.112945676
        %v3567 = vmul.f32 %v3549, %v3566
        %v3568 = vadd.f32 %v3567, 0.4994258
        %v3569 = vmul.f32 %v3549, %v3568
        %v3570 = vadd.f32 %v3569, 1.0
        %v3571 = vrcp.pop %v3570
        %v3572 = vmul.f32 %v3570, %v3571
        %v3573 = vsub.f32 1.0, %v3572
        %v3574 = vmul.f32 %v3571, %v3573
        %v3575 = vadd.f32 %v3571, %v3574
        %vm3576 = vweird.f32 %v3570
        %vm3577 = vweird.f32 %v3571
        %vm3578 = vmor %vm3576, %vm3577
        %v3579 = vsel %vm3578, %v3571, %v3575
        %v3580 = vand.u32 2147483647, %v3570
        %vm3581 = vcmp.eq.f32.partialorder %v3580, 8.507059e+37
        %v3582 = vand.u32 %v3570, 2147483648
        %v3583 = vor.u32 1.1754944e-38, %v3582
        %v3584 = vsel %vm3581, %v3583, %v3579
        %v3585 = vmul.f32 %v3560, %v3584
        %v3586 = vmin.f32 %v3585, 1.0
        %v3587 = vmax.f32 %v3586, -1.0
        %v3588 = vmul.f32 %v2620, %v2620
        %v3589 = vmin.f32 16.0, %v3588
        %v3590 = vmul.f32 %v3589, 2.1237322e-06
        %v3591 = vadd.f32 %v3590, 0.00028619796
        %v3592 = vmul.f32 %v3589, %v3591
        %v3593 = vadd.f32 %v3592, 0.0036580483
        %v3594 = vmul.f32 %v3589, %v3593
        %v3595 = vadd.f32 %v3594, 0.05243302
        %v3596 = vmul.f32 %v3589, %v3595
        %v3597 = vadd.f32 %v3596, 0.18741608
        %v3598 = vmul.f32 %v3589, %v3597
        %v3599 = vadd.f32 %v3598, 1.1283791
        %v3600 = vmul.f32 %v2620, %v3599
        %v3601 = vmul.f32 %v3589, 3.8918573e-05
        %v3602 = vadd.f32 %v3601, 0.001143296
        %v3603 = vmul.f32 %v3589, %v3602
        %v3604 = vadd.f32 %v3603, 0.014752088
        %v3605 = vmul.f32 %v3589, %v3604
        %v3606 = vadd.f32 %v3605, 0.112945676
        %v3607 = vmul.f32 %v3589, %v3606
        %v3608 = vadd.f32 %v3607, 0.4994258
        %v3609 = vmul.f32 %v3589, %v3608
        %v3610 = vadd.f32 %v3609, 1.0
        %v3611 = vrcp.pop %v3610
        %v3612 = vmul.f32 %v3610, %v3611
        %v3613 = vsub.f32 1.0, %v3612
        %v3614 = vmul.f32 %v3611, %v3613
        %v3615 = vadd.f32 %v3611, %v3614
        %vm3616 = vweird.f32 %v3610
        %vm3617 = vweird.f32 %v3611
        %vm3618 = vmor %vm3616, %vm3617
        %v3619 = vsel %vm3618, %v3611, %v3615
        %v3620 = vand.u32 2147483647, %v3610
        %vm3621 = vcmp.eq.f32.partialorder %v3620, 8.507059e+37
        %v3622 = vand.u32 %v3610, 2147483648
        %v3623 = vor.u32 1.1754944e-38, %v3622
        %v3624 = vsel %vm3621, %v3623, %v3619
        %v3625 = vmul.f32 %v3600, %v3624
        %v3626 = vmin.f32 %v3625, 1.0
        %v3627 = vmax.f32 %v3626, -1.0
        %v3628 = vmul.f32 %v2621, %v2621
        %v3629 = vmin.f32 16.0, %v3628
        %v3630 = vmul.f32 %v3629, 2.1237322e-06
        %v3631 = vadd.f32 %v3630, 0.00028619796
        %v3632 = vmul.f32 %v3629, %v3631
        %v3633 = vadd.f32 %v3632, 0.0036580483
        %v3634 = vmul.f32 %v3629, %v3633
        %v3635 = vadd.f32 %v3634, 0.05243302
        %v3636 = vmul.f32 %v3629, %v3635
        %v3637 = vadd.f32 %v3636, 0.18741608
        %v3638 = vmul.f32 %v3629, %v3637
        %v3639 = vadd.f32 %v3638, 1.1283791
        %v3640 = vmul.f32 %v2621, %v3639
        %v3641 = vmul.f32 %v3629, 3.8918573e-05
        %v3642 = vadd.f32 %v3641, 0.001143296
        %v3643 = vmul.f32 %v3629, %v3642
        %v3644 = vadd.f32 %v3643, 0.014752088
        %v3645 = vmul.f32 %v3629, %v3644
        %v3646 = vadd.f32 %v3645, 0.112945676
        %v3647 = vmul.f32 %v3629, %v3646
        %v3648 = vadd.f32 %v3647, 0.4994258
        %v3649 = vmul.f32 %v3629, %v3648
        %v3650 = vadd.f32 %v3649, 1.0
        %v3651 = vrcp.pop %v3650
        %v3652 = vmul.f32 %v3650, %v3651
        %v3653 = vsub.f32 1.0, %v3652
        %v3654 = vmul.f32 %v3651, %v3653
        %v3655 = vadd.f32 %v3651, %v3654
        %vm3656 = vweird.f32 %v3650
        %vm3657 = vweird.f32 %v3651
        %vm3658 = vmor %vm3656, %vm3657
        %v3659 = vsel %vm3658, %v3651, %v3655
        %v3660 = vand.u32 2147483647, %v3650
        %vm3661 = vcmp.eq.f32.partialorder %v3660, 8.507059e+37
        %v3662 = vand.u32 %v3650, 2147483648
        %v3663 = vor.u32 1.1754944e-38, %v3662
        %v3664 = vsel %vm3661, %v3663, %v3659
        %v3665 = vmul.f32 %v3640, %v3664
        %v3666 = vmin.f32 %v3665, 1.0
        %v3667 = vmax.f32 %v3666, -1.0
        %v3668 = vmul.f32 %v2622, %v2622
        %v3669 = vmin.f32 16.0, %v3668
        %v3670 = vmul.f32 %v3669, 2.1237322e-06
        %v3671 = vadd.f32 %v3670, 0.00028619796
        %v3672 = vmul.f32 %v3669, %v3671
        %v3673 = vadd.f32 %v3672, 0.0036580483
        %v3674 = vmul.f32 %v3669, %v3673
        %v3675 = vadd.f32 %v3674, 0.05243302
        %v3676 = vmul.f32 %v3669, %v3675
        %v3677 = vadd.f32 %v3676, 0.18741608
        %v3678 = vmul.f32 %v3669, %v3677
        %v3679 = vadd.f32 %v3678, 1.1283791
        %v3680 = vmul.f32 %v2622, %v3679
        %v3681 = vmul.f32 %v3669, 3.8918573e-05
        %v3682 = vadd.f32 %v3681, 0.001143296
        %v3683 = vmul.f32 %v3669, %v3682
        %v3684 = vadd.f32 %v3683, 0.014752088
        %v3685 = vmul.f32 %v3669, %v3684
        %v3686 = vadd.f32 %v3685, 0.112945676
        %v3687 = vmul.f32 %v3669, %v3686
        %v3688 = vadd.f32 %v3687, 0.4994258
        %v3689 = vmul.f32 %v3669, %v3688
        %v3690 = vadd.f32 %v3689, 1.0
        %v3691 = vrcp.pop %v3690
        %v3692 = vmul.f32 %v3690, %v3691
        %v3693 = vsub.f32 1.0, %v3692
        %v3694 = vmul.f32 %v3691, %v3693
        %v3695 = vadd.f32 %v3691, %v3694
        %vm3696 = vweird.f32 %v3690
        %vm3697 = vweird.f32 %v3691
        %vm3698 = vmor %vm3696, %vm3697
        %v3699 = vsel %vm3698, %v3691, %v3695
        %v3700 = vand.u32 2147483647, %v3690
        %vm3701 = vcmp.eq.f32.partialorder %v3700, 8.507059e+37
        %v3702 = vand.u32 %v3690, 2147483648
        %v3703 = vor.u32 1.1754944e-38, %v3702
        %v3704 = vsel %vm3701, %v3703, %v3699
        %v3705 = vmul.f32 %v3680, %v3704
        %v3706 = vmin.f32 %v3705, 1.0
        %v3707 = vmax.f32 %v3706, -1.0
        %v3708 = vmul.f32 %v2623, %v2623
        %v3709 = vmin.f32 16.0, %v3708
        %v3710 = vmul.f32 %v3709, 2.1237322e-06
        %v3711 = vadd.f32 %v3710, 0.00028619796
        %v3712 = vmul.f32 %v3709, %v3711
        %v3713 = vadd.f32 %v3712, 0.0036580483
        %v3714 = vmul.f32 %v3709, %v3713
        %v3715 = vadd.f32 %v3714, 0.05243302
        %v3716 = vmul.f32 %v3709, %v3715
        %v3717 = vadd.f32 %v3716, 0.18741608
        %v3718 = vmul.f32 %v3709, %v3717
        %v3719 = vadd.f32 %v3718, 1.1283791
        %v3720 = vmul.f32 %v2623, %v3719
        %v3721 = vmul.f32 %v3709, 3.8918573e-05
        %v3722 = vadd.f32 %v3721, 0.001143296
        %v3723 = vmul.f32 %v3709, %v3722
        %v3724 = vadd.f32 %v3723, 0.014752088
        %v3725 = vmul.f32 %v3709, %v3724
        %v3726 = vadd.f32 %v3725, 0.112945676
        %v3727 = vmul.f32 %v3709, %v3726
        %v3728 = vadd.f32 %v3727, 0.4994258
        %v3729 = vmul.f32 %v3709, %v3728
        %v3730 = vadd.f32 %v3729, 1.0
        %v3731 = vrcp.pop %v3730
        %v3732 = vmul.f32 %v3730, %v3731
        %v3733 = vsub.f32 1.0, %v3732
        %v3734 = vmul.f32 %v3731, %v3733
        %v3735 = vadd.f32 %v3731, %v3734
        %vm3736 = vweird.f32 %v3730
        %vm3737 = vweird.f32 %v3731
        %vm3738 = vmor %vm3736, %vm3737
        %v3739 = vsel %vm3738, %v3731, %v3735
        %v3740 = vand.u32 2147483647, %v3730
        %vm3741 = vcmp.eq.f32.partialorder %v3740, 8.507059e+37
        %v3742 = vand.u32 %v3730, 2147483648
        %v3743 = vor.u32 1.1754944e-38, %v3742
        %v3744 = vsel %vm3741, %v3743, %v3739
        %v3745 = vmul.f32 %v3720, %v3744
        %v3746 = vmin.f32 %v3745, 1.0
        %v3747 = vmax.f32 %v3746, -1.0
        %v3748 = vmul.f32 %v2624, %v2624
        %v3749 = vmin.f32 16.0, %v3748
        %v3750 = vmul.f32 %v3749, 2.1237322e-06
        %v3751 = vadd.f32 %v3750, 0.00028619796
        %v3752 = vmul.f32 %v3749, %v3751
        %v3753 = vadd.f32 %v3752, 0.0036580483
        %v3754 = vmul.f32 %v3749, %v3753
        %v3755 = vadd.f32 %v3754, 0.05243302
        %v3756 = vmul.f32 %v3749, %v3755
        %v3757 = vadd.f32 %v3756, 0.18741608
        %v3758 = vmul.f32 %v3749, %v3757
        %v3759 = vadd.f32 %v3758, 1.1283791
        %v3760 = vmul.f32 %v2624, %v3759
        %v3761 = vmul.f32 %v3749, 3.8918573e-05
        %v3762 = vadd.f32 %v3761, 0.001143296
        %v3763 = vmul.f32 %v3749, %v3762
        %v3764 = vadd.f32 %v3763, 0.014752088
        %v3765 = vmul.f32 %v3749, %v3764
        %v3766 = vadd.f32 %v3765, 0.112945676
        %v3767 = vmul.f32 %v3749, %v3766
        %v3768 = vadd.f32 %v3767, 0.4994258
        %v3769 = vmul.f32 %v3749, %v3768
        %v3770 = vadd.f32 %v3769, 1.0
        %v3771 = vrcp.pop %v3770
        %v3772 = vmul.f32 %v3770, %v3771
        %v3773 = vsub.f32 1.0, %v3772
        %v3774 = vmul.f32 %v3771, %v3773
        %v3775 = vadd.f32 %v3771, %v3774
        %vm3776 = vweird.f32 %v3770
        %vm3777 = vweird.f32 %v3771
        %vm3778 = vmor %vm3776, %vm3777
        %v3779 = vsel %vm3778, %v3771, %v3775
        %v3780 = vand.u32 2147483647, %v3770
        %vm3781 = vcmp.eq.f32.partialorder %v3780, 8.507059e+37
        %v3782 = vand.u32 %v3770, 2147483648
        %v3783 = vor.u32 1.1754944e-38, %v3782
        %v3784 = vsel %vm3781, %v3783, %v3779
        %v3785 = vmul.f32 %v3760, %v3784
        %v3786 = vmin.f32 %v3785, 1.0
        %v3787 = vmax.f32 %v3786, -1.0
        %v3788 = vmul.f32 %v2625, %v2625
        %v3789 = vmin.f32 16.0, %v3788
        %v3790 = vmul.f32 %v3789, 2.1237322e-06
        %v3791 = vadd.f32 %v3790, 0.00028619796
        %v3792 = vmul.f32 %v3789, %v3791
        %v3793 = vadd.f32 %v3792, 0.0036580483
        %v3794 = vmul.f32 %v3789, %v3793
        %v3795 = vadd.f32 %v3794, 0.05243302
        %v3796 = vmul.f32 %v3789, %v3795
        %v3797 = vadd.f32 %v3796, 0.18741608
        %v3798 = vmul.f32 %v3789, %v3797
        %v3799 = vadd.f32 %v3798, 1.1283791
        %v3800 = vmul.f32 %v2625, %v3799
        %v3801 = vmul.f32 %v3789, 3.8918573e-05
        %v3802 = vadd.f32 %v3801, 0.001143296
        %v3803 = vmul.f32 %v3789, %v3802
        %v3804 = vadd.f32 %v3803, 0.014752088
        %v3805 = vmul.f32 %v3789, %v3804
        %v3806 = vadd.f32 %v3805, 0.112945676
        %v3807 = vmul.f32 %v3789, %v3806
        %v3808 = vadd.f32 %v3807, 0.4994258
        %v3809 = vmul.f32 %v3789, %v3808
        %v3810 = vadd.f32 %v3809, 1.0
        %v3811 = vrcp.pop %v3810
        %v3812 = vmul.f32 %v3810, %v3811
        %v3813 = vsub.f32 1.0, %v3812
        %v3814 = vmul.f32 %v3811, %v3813
        %v3815 = vadd.f32 %v3811, %v3814
        %vm3816 = vweird.f32 %v3810
        %vm3817 = vweird.f32 %v3811
        %vm3818 = vmor %vm3816, %vm3817
        %v3819 = vsel %vm3818, %v3811, %v3815
        %v3820 = vand.u32 2147483647, %v3810
        %vm3821 = vcmp.eq.f32.partialorder %v3820, 8.507059e+37
        %v3822 = vand.u32 %v3810, 2147483648
        %v3823 = vor.u32 1.1754944e-38, %v3822
        %v3824 = vsel %vm3821, %v3823, %v3819
        %v3825 = vmul.f32 %v3800, %v3824
        %v3826 = vmin.f32 %v3825, 1.0
        %v3827 = vmax.f32 %v3826, -1.0
        %v3828 = vmul.f32 %v2626, %v2626
        %v3829 = vmin.f32 16.0, %v3828
        %v3830 = vmul.f32 %v3829, 2.1237322e-06
        %v3831 = vadd.f32 %v3830, 0.00028619796
        %v3832 = vmul.f32 %v3829, %v3831
        %v3833 = vadd.f32 %v3832, 0.0036580483
        %v3834 = vmul.f32 %v3829, %v3833
        %v3835 = vadd.f32 %v3834, 0.05243302
        %v3836 = vmul.f32 %v3829, %v3835
        %v3837 = vadd.f32 %v3836, 0.18741608
        %v3838 = vmul.f32 %v3829, %v3837
        %v3839 = vadd.f32 %v3838, 1.1283791
        %v3840 = vmul.f32 %v2626, %v3839
        %v3841 = vmul.f32 %v3829, 3.8918573e-05
        %v3842 = vadd.f32 %v3841, 0.001143296
        %v3843 = vmul.f32 %v3829, %v3842
        %v3844 = vadd.f32 %v3843, 0.014752088
        %v3845 = vmul.f32 %v3829, %v3844
        %v3846 = vadd.f32 %v3845, 0.112945676
        %v3847 = vmul.f32 %v3829, %v3846
        %v3848 = vadd.f32 %v3847, 0.4994258
        %v3849 = vmul.f32 %v3829, %v3848
        %v3850 = vadd.f32 %v3849, 1.0
        %v3851 = vrcp.pop %v3850
        %v3852 = vmul.f32 %v3850, %v3851
        %v3853 = vsub.f32 1.0, %v3852
        %v3854 = vmul.f32 %v3851, %v3853
        %v3855 = vadd.f32 %v3851, %v3854
        %vm3856 = vweird.f32 %v3850
        %vm3857 = vweird.f32 %v3851
        %vm3858 = vmor %vm3856, %vm3857
        %v3859 = vsel %vm3858, %v3851, %v3855
        %v3860 = vand.u32 2147483647, %v3850
        %vm3861 = vcmp.eq.f32.partialorder %v3860, 8.507059e+37
        %v3862 = vand.u32 %v3850, 2147483648
        %v3863 = vor.u32 1.1754944e-38, %v3862
        %v3864 = vsel %vm3861, %v3863, %v3859
        %v3865 = vmul.f32 %v3840, %v3864
        %v3866 = vmin.f32 %v3865, 1.0
        %v3867 = vmax.f32 %v3866, -1.0
        %v3868 = vmul.f32 %v2627, %v2627
        %v3869 = vmin.f32 16.0, %v3868
        %v3870 = vmul.f32 %v3869, 2.1237322e-06
        %v3871 = vadd.f32 %v3870, 0.00028619796
        %v3872 = vmul.f32 %v3869, %v3871
        %v3873 = vadd.f32 %v3872, 0.0036580483
        %v3874 = vmul.f32 %v3869, %v3873
        %v3875 = vadd.f32 %v3874, 0.05243302
        %v3876 = vmul.f32 %v3869, %v3875
        %v3877 = vadd.f32 %v3876, 0.18741608
        %v3878 = vmul.f32 %v3869, %v3877
        %v3879 = vadd.f32 %v3878, 1.1283791
        %v3880 = vmul.f32 %v2627, %v3879
        %v3881 = vmul.f32 %v3869, 3.8918573e-05
        %v3882 = vadd.f32 %v3881, 0.001143296
        %v3883 = vmul.f32 %v3869, %v3882
        %v3884 = vadd.f32 %v3883, 0.014752088
        %v3885 = vmul.f32 %v3869, %v3884
        %v3886 = vadd.f32 %v3885, 0.112945676
        %v3887 = vmul.f32 %v3869, %v3886
        %v3888 = vadd.f32 %v3887, 0.4994258
        %v3889 = vmul.f32 %v3869, %v3888
        %v3890 = vadd.f32 %v3889, 1.0
        %v3891 = vrcp.pop %v3890
        %v3892 = vmul.f32 %v3890, %v3891
        %v3893 = vsub.f32 1.0, %v3892
        %v3894 = vmul.f32 %v3891, %v3893
        %v3895 = vadd.f32 %v3891, %v3894
        %vm3896 = vweird.f32 %v3890
        %vm3897 = vweird.f32 %v3891
        %vm3898 = vmor %vm3896, %vm3897
        %v3899 = vsel %vm3898, %v3891, %v3895
        %v3900 = vand.u32 2147483647, %v3890
        %vm3901 = vcmp.eq.f32.partialorder %v3900, 8.507059e+37
        %v3902 = vand.u32 %v3890, 2147483648
        %v3903 = vor.u32 1.1754944e-38, %v3902
        %v3904 = vsel %vm3901, %v3903, %v3899
        %v3905 = vmul.f32 %v3880, %v3904
        %v3906 = vmin.f32 %v3905, 1.0
        %v3907 = vmax.f32 %v3906, -1.0
        %v3908 = vadd.f32 %v2667, 1.0
        %v3909 = vadd.f32 %v2707, 1.0
        %v3910 = vadd.f32 %v2747, 1.0
        %v3911 = vadd.f32 %v2787, 1.0
        %v3912 = vadd.f32 %v2827, 1.0
        %v3913 = vadd.f32 %v2867, 1.0
        %v3914 = vadd.f32 %v2907, 1.0
        %v3915 = vadd.f32 %v2947, 1.0
        %v3916 = vadd.f32 %v2987, 1.0
        %v3917 = vadd.f32 %v3027, 1.0
        %v3918 = vadd.f32 %v3067, 1.0
        %v3919 = vadd.f32 %v3107, 1.0
        %v3920 = vadd.f32 %v3147, 1.0
        %v3921 = vadd.f32 %v3187, 1.0
        %v3922 = vadd.f32 %v3227, 1.0
        %v3923 = vadd.f32 %v3267, 1.0
        %v3924 = vadd.f32 %v3307, 1.0
        %v3925 = vadd.f32 %v3347, 1.0
        %v3926 = vadd.f32 %v3387, 1.0
        %v3927 = vadd.f32 %v3427, 1.0
        %v3928 = vadd.f32 %v3467, 1.0
        %v3929 = vadd.f32 %v3507, 1.0
        %v3930 = vadd.f32 %v3547, 1.0
        %v3931 = vadd.f32 %v3587, 1.0
        %v3932 = vadd.f32 %v3627, 1.0
        %v3933 = vadd.f32 %v3667, 1.0
        %v3934 = vadd.f32 %v3707, 1.0
        %v3935 = vadd.f32 %v3747, 1.0
        %v3936 = vadd.f32 %v3787, 1.0
        %v3937 = vadd.f32 %v3827, 1.0
        %v3938 = vadd.f32 %v3867, 1.0
        %v3939 = vadd.f32 %v3907, 1.0
        %v3940 = vmul.f32 %v2564, %v3908
        %v3941 = vmul.f32 %v2565, %v3909
        %v3942 = vmul.f32 %v2566, %v3910
        %v3943 = vmul.f32 %v2567, %v3911
        %v3944 = vmul.f32 %v2568, %v3912
        %v3945 = vmul.f32 %v2569, %v3913
        %v3946 = vmul.f32 %v2570, %v3914
        %v3947 = vmul.f32 %v2571, %v3915
        %v3948 = vmul.f32 %v2572, %v3916
        %v3949 = vmul.f32 %v2573, %v3917
        %v3950 = vmul.f32 %v2574, %v3918
        %v3951 = vmul.f32 %v2575, %v3919
        %v3952 = vmul.f32 %v2576, %v3920
        %v3953 = vmul.f32 %v2577, %v3921
        %v3954 = vmul.f32 %v2578, %v3922
        %v3955 = vmul.f32 %v2579, %v3923
        %v3956 = vmul.f32 %v2580, %v3924
        %v3957 = vmul.f32 %v2581, %v3925
        %v3958 = vmul.f32 %v2582, %v3926
        %v3959 = vmul.f32 %v2583, %v3927
        %v3960 = vmul.f32 %v2584, %v3928
        %v3961 = vmul.f32 %v2585, %v3929
        %v3962 = vmul.f32 %v2586, %v3930
        %v3963 = vmul.f32 %v2587, %v3931
        %v3964 = vmul.f32 %v2588, %v3932
        %v3965 = vmul.f32 %v2589, %v3933
        %v3966 = vmul.f32 %v2590, %v3934
        %v3967 = vmul.f32 %v2591, %v3935
        %v3968 = vmul.f32 %v2592, %v3936
        %v3969 = vmul.f32 %v2593, %v3937
        %v3970 = vmul.f32 %v2594, %v3938
        %v3971 = vmul.f32 %v2595, %v3939
        %v3972 = vpack.c.bf16 %v3942, %v3940
        %v3973 = vpack.c.bf16 %v3943, %v3941
        %v3974 = vpack.c.bf16 %v3946, %v3944
        %v3975 = vpack.c.bf16 %v3947, %v3945
        %v3976 = vpack.c.bf16 %v3950, %v3948
        %v3977 = vpack.c.bf16 %v3951, %v3949
        %v3978 = vpack.c.bf16 %v3954, %v3952
        %v3979 = vpack.c.bf16 %v3955, %v3953
        %v3980 = vpack.c.bf16 %v3958, %v3956
        %v3981 = vpack.c.bf16 %v3959, %v3957
        %v3982 = vpack.c.bf16 %v3962, %v3960
        %v3983 = vpack.c.bf16 %v3963, %v3961
        %v3984 = vpack.c.bf16 %v3966, %v3964
        %v3985 = vpack.c.bf16 %v3967, %v3965
        %v3986 = vpack.c.bf16 %v3970, %v3968
        %v3987 = vpack.c.bf16 %v3971, %v3969
        %v3988 = vld [vmem:[#allocation15 + $0x8] sm:$0xff]
        %v3989 = vld [vmem:[#allocation15 + $0x18] sm:$0xff]
        %v3990 = vld [vmem:[#allocation15 + $0x28] sm:$0xff]
        %v3991 = vld [vmem:[#allocation15 + $0x38] sm:$0xff]
        %v3992 = vld [vmem:[#allocation15 + $0x48] sm:$0xff]
        %v3993 = vld [vmem:[#allocation15 + $0x58] sm:$0xff]
        %v3994 = vld [vmem:[#allocation15 + $0x68] sm:$0xff]
        %v3995 = vld [vmem:[#allocation15 + $0x78] sm:$0xff]
        %v3996 = vld [vmem:[#allocation15 + $0x88] sm:$0xff]
        %v3997 = vld [vmem:[#allocation15 + $0x98] sm:$0xff]
        %v3998 = vld [vmem:[#allocation15 + $0xa8] sm:$0xff]
        %v3999 = vld [vmem:[#allocation15 + $0xb8] sm:$0xff]
        %v4000 = vld [vmem:[#allocation15 + $0xc8] sm:$0xff]
        %v4001 = vld [vmem:[#allocation15 + $0xd8] sm:$0xff]
        %v4002 = vld [vmem:[#allocation15 + $0xe8] sm:$0xff]
        %v4003 = vld [vmem:[#allocation15 + $0xf8] sm:$0xff]
        %v4004 = vld [vmem:[%s14 + $0x2] sm:$0x3]
        %v4005 = vld [vmem:[#allocation16 + $0x80] sm:$0xf]
        %v4006 = vld [vmem:[#allocation16 + $0x84] sm:$0xf]
        %v4007 = vld [vmem:[#allocation16 + $0x88] sm:$0xf]
        %v4008 = vld [vmem:[#allocation16 + $0x8c] sm:$0xf]
        %v4009 = vld [vmem:[#allocation16 + $0x90] sm:$0xf]
        %v4010 = vld [vmem:[#allocation16 + $0x94] sm:$0xf]
        %v4011 = vld [vmem:[#allocation16 + $0x98] sm:$0xf]
        %v4012 = vld [vmem:[#allocation16 + $0x9c] sm:$0xf]
        %v4013 = vld [vmem:[#allocation16 + $0xa0] sm:$0xf]
        %v4014 = vld [vmem:[#allocation16 + $0xa4] sm:$0xf]
        %v4015 = vld [vmem:[#allocation16 + $0xa8] sm:$0xf]
        %v4016 = vld [vmem:[#allocation16 + $0xac] sm:$0xf]
        %v4017 = vld [vmem:[#allocation16 + $0xb0] sm:$0xf]
        %v4018 = vld [vmem:[#allocation16 + $0xb4] sm:$0xf]
        %v4019 = vld [vmem:[#allocation16 + $0xb8] sm:$0xf]
        %v4020 = vld [vmem:[#allocation16 + $0xbc] sm:$0xf]
        %v4021 = vld [vmem:[#allocation16 + $0xc0] sm:$0xf]
        %v4022 = vld [vmem:[#allocation16 + $0xc4] sm:$0xf]
        %v4023 = vld [vmem:[#allocation16 + $0xc8] sm:$0xf]
        %v4024 = vld [vmem:[#allocation16 + $0xcc] sm:$0xf]
        %v4025 = vld [vmem:[#allocation16 + $0xd0] sm:$0xf]
        %v4026 = vld [vmem:[#allocation16 + $0xd4] sm:$0xf]
        %v4027 = vld [vmem:[#allocation16 + $0xd8] sm:$0xf]
        %v4028 = vld [vmem:[#allocation16 + $0xdc] sm:$0xf]
        %v4029 = vld [vmem:[#allocation16 + $0xe0] sm:$0xf]
        %v4030 = vld [vmem:[#allocation16 + $0xe4] sm:$0xf]
        %v4031 = vld [vmem:[#allocation16 + $0xe8] sm:$0xf]
        %v4032 = vld [vmem:[#allocation16 + $0xec] sm:$0xf]
        %v4033 = vld [vmem:[#allocation16 + $0xf0] sm:$0xf]
        %v4034 = vld [vmem:[#allocation16 + $0xf4] sm:$0xf]
        %v4035 = vld [vmem:[#allocation16 + $0xf8] sm:$0xf]
        %v4036 = vld [vmem:[#allocation16 + $0xfc] sm:$0xf]
        %v4038 = vperm.slane %v4004, 0
        %v4039 = vperm.slane %v4004, 1
        %v4058 = vunpack.c.l.b16 %v3988
        %v4059 = vunpack.c.h.b16 %v3988
        %v4060 = vunpack.c.l.b16 %v3989
        %v4061 = vunpack.c.h.b16 %v3989
        %v4062 = vunpack.c.l.b16 %v3990
        %v4063 = vunpack.c.h.b16 %v3990
        %v4064 = vunpack.c.l.b16 %v3991
        %v4065 = vunpack.c.h.b16 %v3991
        %v4066 = vunpack.c.l.b16 %v3992
        %v4067 = vunpack.c.h.b16 %v3992
        %v4068 = vunpack.c.l.b16 %v3993
        %v4069 = vunpack.c.h.b16 %v3993
        %v4070 = vunpack.c.l.b16 %v3994
        %v4071 = vunpack.c.h.b16 %v3994
        %v4072 = vunpack.c.l.b16 %v3995
        %v4073 = vunpack.c.h.b16 %v3995
        %v4074 = vunpack.c.l.b16 %v3996
        %v4075 = vunpack.c.h.b16 %v3996
        %v4076 = vunpack.c.l.b16 %v3997
        %v4077 = vunpack.c.h.b16 %v3997
        %v4078 = vunpack.c.l.b16 %v3998
        %v4079 = vunpack.c.h.b16 %v3998
        %v4080 = vunpack.c.l.b16 %v3999
        %v4081 = vunpack.c.h.b16 %v3999
        %v4082 = vunpack.c.l.b16 %v4000
        %v4083 = vunpack.c.h.b16 %v4000
        %v4084 = vunpack.c.l.b16 %v4001
        %v4085 = vunpack.c.h.b16 %v4001
        %v4086 = vunpack.c.l.b16 %v4002
        %v4087 = vunpack.c.h.b16 %v4002
        %v4088 = vunpack.c.l.b16 %v4003
        %v4089 = vunpack.c.h.b16 %v4003
        %v4090 = vpack.c.b16 %v4060, %v4058
        %v4091 = vpack.c.b16 %v4061, %v4059
        %v4092 = vpack.c.b16 %v4064, %v4062
        %v4093 = vpack.c.b16 %v4065, %v4063
        %v4094 = vpack.c.b16 %v4068, %v4066
        %v4095 = vpack.c.b16 %v4069, %v4067
        %v4096 = vpack.c.b16 %v4072, %v4070
        %v4097 = vpack.c.b16 %v4073, %v4071
        %v4098 = vpack.c.b16 %v4076, %v4074
        %v4099 = vpack.c.b16 %v4077, %v4075
        %v4100 = vpack.c.b16 %v4080, %v4078
        %v4101 = vpack.c.b16 %v4081, %v4079
        %v4102 = vpack.c.b16 %v4084, %v4082
        %v4103 = vpack.c.b16 %v4085, %v4083
        %v4104 = vpack.c.b16 %v4088, %v4086
        %v4105 = vpack.c.b16 %v4089, %v4087
        %4122 = vmatpush.bf16.msra.mxu0 %v4104
        %4123 = vmatpush.bf16.msra.mxu0 %v4102
        %4124 = vmatpush.bf16.msra.mxu0 %v4100
        %4125 = vmatpush.bf16.msra.mxu0 %v4098
        %4126 = vmatpush.bf16.msra.mxu0 %v4096
        %4127 = vmatpush.bf16.msra.mxu0 %v4094
        %4128 = vmatpush.bf16.msra.mxu0 %v4092
        %4129 = vmatpush.bf16.msra.mxu0 %v4090
        %4130 = vmatmul.bf16.gmra.mxu0 %v2324
        %v4131 = vpop.f32.mrf.mxu0
        %v4132 = vadd.f32 %v4038, %v4131
        %v4133 = vpop.f32.mrf.mxu0
        %v4134 = vadd.f32 %v4038, %v4133
        %4135 = vmatmul.bf16.gmra.mxu0 %v2325
        %v4136 = vpop.f32.mrf.mxu0
        %v4137 = vadd.f32 %v4038, %v4136
        %v4138 = vpop.f32.mrf.mxu0
        %v4139 = vadd.f32 %v4038, %v4138
        %4140 = vmatmul.bf16.gmra.mxu0 %v2326
        %v4141 = vpop.f32.mrf.mxu0
        %v4142 = vadd.f32 %v4038, %v4141
        %v4143 = vpop.f32.mrf.mxu0
        %v4144 = vadd.f32 %v4038, %v4143
        %4145 = vmatmul.bf16.gmra.mxu0 %v2327
        %v4146 = vpop.f32.mrf.mxu0
        %v4147 = vadd.f32 %v4038, %v4146
        %v4148 = vpop.f32.mrf.mxu0
        %v4149 = vadd.f32 %v4038, %v4148
        %4150 = vmatmul.bf16.gmra.mxu0 %v2328
        %v4151 = vpop.f32.mrf.mxu0
        %v4152 = vadd.f32 %v4038, %v4151
        %v4153 = vpop.f32.mrf.mxu0
        %v4154 = vadd.f32 %v4038, %v4153
        %4155 = vmatmul.bf16.gmra.mxu0 %v2329
        %v4156 = vpop.f32.mrf.mxu0
        %v4157 = vadd.f32 %v4038, %v4156
        %v4158 = vpop.f32.mrf.mxu0
        %v4159 = vadd.f32 %v4038, %v4158
        %4160 = vmatmul.bf16.gmra.mxu0 %v2330
        %v4161 = vpop.f32.mrf.mxu0
        %v4162 = vadd.f32 %v4038, %v4161
        %v4163 = vpop.f32.mrf.mxu0
        %v4164 = vadd.f32 %v4038, %v4163
        %4165 = vmatmul.bf16.gmra.mxu0 %v2331
        %v4166 = vpop.f32.mrf.mxu0
        %v4167 = vadd.f32 %v4038, %v4166
        %v4168 = vpop.f32.mrf.mxu0
        %v4169 = vadd.f32 %v4038, %v4168
        %4170 = vdwg.mxu0
        %4171 = vmatpush.bf16.msra.mxu0 %v4105
        %4172 = vmatpush.bf16.msra.mxu0 %v4103
        %4173 = vmatpush.bf16.msra.mxu0 %v4101
        %4174 = vmatpush.bf16.msra.mxu0 %v4099
        %4175 = vmatpush.bf16.msra.mxu0 %v4097
        %4176 = vmatpush.bf16.msra.mxu0 %v4095
        %4177 = vmatpush.bf16.msra.mxu0 %v4093
        %4178 = vmatpush.bf16.msra.mxu0 %v4091
        %4179 = vmatmul.bf16.gmra.mxu0 %v2324
        %v4180 = vpop.f32.mrf.mxu0
        %v4181 = vadd.f32 %v4039, %v4180
        %v4182 = vpop.f32.mrf.mxu0
        %v4183 = vadd.f32 %v4039, %v4182
        %4184 = vmatmul.bf16.gmra.mxu0 %v2325
        %v4185 = vpop.f32.mrf.mxu0
        %v4186 = vadd.f32 %v4039, %v4185
        %v4187 = vpop.f32.mrf.mxu0
        %v4188 = vadd.f32 %v4039, %v4187
        %4189 = vmatmul.bf16.gmra.mxu0 %v2326
        %v4190 = vpop.f32.mrf.mxu0
        %v4191 = vadd.f32 %v4039, %v4190
        %v4192 = vpop.f32.mrf.mxu0
        %v4193 = vadd.f32 %v4039, %v4192
        %4194 = vmatmul.bf16.gmra.mxu0 %v2327
        %v4195 = vpop.f32.mrf.mxu0
        %v4196 = vadd.f32 %v4039, %v4195
        %v4197 = vpop.f32.mrf.mxu0
        %v4198 = vadd.f32 %v4039, %v4197
        %4199 = vmatmul.bf16.gmra.mxu0 %v2328
        %v4200 = vpop.f32.mrf.mxu0
        %v4201 = vadd.f32 %v4039, %v4200
        %v4202 = vpop.f32.mrf.mxu0
        %v4203 = vadd.f32 %v4039, %v4202
        %4204 = vmatmul.bf16.gmra.mxu0 %v2329
        %v4205 = vpop.f32.mrf.mxu0
        %v4206 = vadd.f32 %v4039, %v4205
        %v4207 = vpop.f32.mrf.mxu0
        %v4208 = vadd.f32 %v4039, %v4207
        %4209 = vmatmul.bf16.gmra.mxu0 %v2330
        %v4210 = vpop.f32.mrf.mxu0
        %v4211 = vadd.f32 %v4039, %v4210
        %v4212 = vpop.f32.mrf.mxu0
        %v4213 = vadd.f32 %v4039, %v4212
        %4214 = vmatmul.bf16.gmra.mxu0 %v2331
        %v4215 = vpop.f32.mrf.mxu0
        %v4216 = vadd.f32 %v4039, %v4215
        %v4217 = vpop.f32.mrf.mxu0
        %v4218 = vadd.f32 %v4039, %v4217
        %4219 = vdwg.mxu0
        %v4220 = vmul.f32 %v4132, 0.5
        %v4221 = vmul.f32 %v4181, 0.5
        %v4222 = vmul.f32 %v4134, 0.5
        %v4223 = vmul.f32 %v4183, 0.5
        %v4224 = vmul.f32 %v4137, 0.5
        %v4225 = vmul.f32 %v4186, 0.5
        %v4226 = vmul.f32 %v4139, 0.5
        %v4227 = vmul.f32 %v4188, 0.5
        %v4228 = vmul.f32 %v4142, 0.5
        %v4229 = vmul.f32 %v4191, 0.5
        %v4230 = vmul.f32 %v4144, 0.5
        %v4231 = vmul.f32 %v4193, 0.5
        %v4232 = vmul.f32 %v4147, 0.5
        %v4233 = vmul.f32 %v4196, 0.5
        %v4234 = vmul.f32 %v4149, 0.5
        %v4235 = vmul.f32 %v4198, 0.5
        %v4236 = vmul.f32 %v4152, 0.5
        %v4237 = vmul.f32 %v4201, 0.5
        %v4238 = vmul.f32 %v4154, 0.5
        %v4239 = vmul.f32 %v4203, 0.5
        %v4240 = vmul.f32 %v4157, 0.5
        %v4241 = vmul.f32 %v4206, 0.5
        %v4242 = vmul.f32 %v4159, 0.5
        %v4243 = vmul.f32 %v4208, 0.5
        %v4244 = vmul.f32 %v4162, 0.5
        %v4245 = vmul.f32 %v4211, 0.5
        %v4246 = vmul.f32 %v4164, 0.5
        %v4247 = vmul.f32 %v4213, 0.5
        %v4248 = vmul.f32 %v4167, 0.5
        %v4249 = vmul.f32 %v4216, 0.5
        %v4250 = vmul.f32 %v4169, 0.5
        %v4251 = vmul.f32 %v4218, 0.5
        %v4252 = vmul.f32 %v4132, 0.70710677
        %v4253 = vmul.f32 %v4181, 0.70710677
        %v4254 = vmul.f32 %v4134, 0.70710677
        %v4255 = vmul.f32 %v4183, 0.70710677
        %v4256 = vmul.f32 %v4137, 0.70710677
        %v4257 = vmul.f32 %v4186, 0.70710677
        %v4258 = vmul.f32 %v4139, 0.70710677
        %v4259 = vmul.f32 %v4188, 0.70710677
        %v4260 = vmul.f32 %v4142, 0.70710677
        %v4261 = vmul.f32 %v4191, 0.70710677
        %v4262 = vmul.f32 %v4144, 0.70710677
        %v4263 = vmul.f32 %v4193, 0.70710677
        %v4264 = vmul.f32 %v4147, 0.70710677
        %v4265 = vmul.f32 %v4196, 0.70710677
        %v4266 = vmul.f32 %v4149, 0.70710677
        %v4267 = vmul.f32 %v4198, 0.70710677
        %v4268 = vmul.f32 %v4152, 0.70710677
        %v4269 = vmul.f32 %v4201, 0.70710677
        %v4270 = vmul.f32 %v4154, 0.70710677
        %v4271 = vmul.f32 %v4203, 0.70710677
        %v4272 = vmul.f32 %v4157, 0.70710677
        %v4273 = vmul.f32 %v4206, 0.70710677
        %v4274 = vmul.f32 %v4159, 0.70710677
        %v4275 = vmul.f32 %v4208, 0.70710677
        %v4276 = vmul.f32 %v4162, 0.70710677
        %v4277 = vmul.f32 %v4211, 0.70710677
        %v4278 = vmul.f32 %v4164, 0.70710677
        %v4279 = vmul.f32 %v4213, 0.70710677
        %v4280 = vmul.f32 %v4167, 0.70710677
        %v4281 = vmul.f32 %v4216, 0.70710677
        %v4282 = vmul.f32 %v4169, 0.70710677
        %v4283 = vmul.f32 %v4218, 0.70710677
        %v4284 = vmul.f32 %v4252, %v4252
        %v4285 = vmin.f32 16.0, %v4284
        %v4286 = vmul.f32 %v4285, 2.1237322e-06
        %v4287 = vadd.f32 %v4286, 0.00028619796
        %v4288 = vmul.f32 %v4285, %v4287
        %v4289 = vadd.f32 %v4288, 0.0036580483
        %v4290 = vmul.f32 %v4285, %v4289
        %v4291 = vadd.f32 %v4290, 0.05243302
        %v4292 = vmul.f32 %v4285, %v4291
        %v4293 = vadd.f32 %v4292, 0.18741608
        %v4294 = vmul.f32 %v4285, %v4293
        %v4295 = vadd.f32 %v4294, 1.1283791
        %v4296 = vmul.f32 %v4252, %v4295
        %v4297 = vmul.f32 %v4285, 3.8918573e-05
        %v4298 = vadd.f32 %v4297, 0.001143296
        %v4299 = vmul.f32 %v4285, %v4298
        %v4300 = vadd.f32 %v4299, 0.014752088
        %v4301 = vmul.f32 %v4285, %v4300
        %v4302 = vadd.f32 %v4301, 0.112945676
        %v4303 = vmul.f32 %v4285, %v4302
        %v4304 = vadd.f32 %v4303, 0.4994258
        %v4305 = vmul.f32 %v4285, %v4304
        %v4306 = vadd.f32 %v4305, 1.0
        %v4307 = vrcp.pop %v4306
        %v4308 = vmul.f32 %v4306, %v4307
        %v4309 = vsub.f32 1.0, %v4308
        %v4310 = vmul.f32 %v4307, %v4309
        %v4311 = vadd.f32 %v4307, %v4310
        %vm4312 = vweird.f32 %v4306
        %vm4313 = vweird.f32 %v4307
        %vm4314 = vmor %vm4312, %vm4313
        %v4315 = vsel %vm4314, %v4307, %v4311
        %v4316 = vand.u32 2147483647, %v4306
        %vm4317 = vcmp.eq.f32.partialorder %v4316, 8.507059e+37
        %v4318 = vand.u32 %v4306, 2147483648
        %v4319 = vor.u32 1.1754944e-38, %v4318
        %v4320 = vsel %vm4317, %v4319, %v4315
        %v4321 = vmul.f32 %v4296, %v4320
        %v4322 = vmin.f32 %v4321, 1.0
        %v4323 = vmax.f32 %v4322, -1.0
        %v4324 = vmul.f32 %v4253, %v4253
        %v4325 = vmin.f32 16.0, %v4324
        %v4326 = vmul.f32 %v4325, 2.1237322e-06
        %v4327 = vadd.f32 %v4326, 0.00028619796
        %v4328 = vmul.f32 %v4325, %v4327
        %v4329 = vadd.f32 %v4328, 0.0036580483
        %v4330 = vmul.f32 %v4325, %v4329
        %v4331 = vadd.f32 %v4330, 0.05243302
        %v4332 = vmul.f32 %v4325, %v4331
        %v4333 = vadd.f32 %v4332, 0.18741608
        %v4334 = vmul.f32 %v4325, %v4333
        %v4335 = vadd.f32 %v4334, 1.1283791
        %v4336 = vmul.f32 %v4253, %v4335
        %v4337 = vmul.f32 %v4325, 3.8918573e-05
        %v4338 = vadd.f32 %v4337, 0.001143296
        %v4339 = vmul.f32 %v4325, %v4338
        %v4340 = vadd.f32 %v4339, 0.014752088
        %v4341 = vmul.f32 %v4325, %v4340
        %v4342 = vadd.f32 %v4341, 0.112945676
        %v4343 = vmul.f32 %v4325, %v4342
        %v4344 = vadd.f32 %v4343, 0.4994258
        %v4345 = vmul.f32 %v4325, %v4344
        %v4346 = vadd.f32 %v4345, 1.0
        %v4347 = vrcp.pop %v4346
        %v4348 = vmul.f32 %v4346, %v4347
        %v4349 = vsub.f32 1.0, %v4348
        %v4350 = vmul.f32 %v4347, %v4349
        %v4351 = vadd.f32 %v4347, %v4350
        %vm4352 = vweird.f32 %v4346
        %vm4353 = vweird.f32 %v4347
        %vm4354 = vmor %vm4352, %vm4353
        %v4355 = vsel %vm4354, %v4347, %v4351
        %v4356 = vand.u32 2147483647, %v4346
        %vm4357 = vcmp.eq.f32.partialorder %v4356, 8.507059e+37
        %v4358 = vand.u32 %v4346, 2147483648
        %v4359 = vor.u32 1.1754944e-38, %v4358
        %v4360 = vsel %vm4357, %v4359, %v4355
        %v4361 = vmul.f32 %v4336, %v4360
        %v4362 = vmin.f32 %v4361, 1.0
        %v4363 = vmax.f32 %v4362, -1.0
        %v4364 = vmul.f32 %v4254, %v4254
        %v4365 = vmin.f32 16.0, %v4364
        %v4366 = vmul.f32 %v4365, 2.1237322e-06
        %v4367 = vadd.f32 %v4366, 0.00028619796
        %v4368 = vmul.f32 %v4365, %v4367
        %v4369 = vadd.f32 %v4368, 0.0036580483
        %v4370 = vmul.f32 %v4365, %v4369
        %v4371 = vadd.f32 %v4370, 0.05243302
        %v4372 = vmul.f32 %v4365, %v4371
        %v4373 = vadd.f32 %v4372, 0.18741608
        %v4374 = vmul.f32 %v4365, %v4373
        %v4375 = vadd.f32 %v4374, 1.1283791
        %v4376 = vmul.f32 %v4254, %v4375
        %v4377 = vmul.f32 %v4365, 3.8918573e-05
        %v4378 = vadd.f32 %v4377, 0.001143296
        %v4379 = vmul.f32 %v4365, %v4378
        %v4380 = vadd.f32 %v4379, 0.014752088
        %v4381 = vmul.f32 %v4365, %v4380
        %v4382 = vadd.f32 %v4381, 0.112945676
        %v4383 = vmul.f32 %v4365, %v4382
        %v4384 = vadd.f32 %v4383, 0.4994258
        %v4385 = vmul.f32 %v4365, %v4384
        %v4386 = vadd.f32 %v4385, 1.0
        %v4387 = vrcp.pop %v4386
        %v4388 = vmul.f32 %v4386, %v4387
        %v4389 = vsub.f32 1.0, %v4388
        %v4390 = vmul.f32 %v4387, %v4389
        %v4391 = vadd.f32 %v4387, %v4390
        %vm4392 = vweird.f32 %v4386
        %vm4393 = vweird.f32 %v4387
        %vm4394 = vmor %vm4392, %vm4393
        %v4395 = vsel %vm4394, %v4387, %v4391
        %v4396 = vand.u32 2147483647, %v4386
        %vm4397 = vcmp.eq.f32.partialorder %v4396, 8.507059e+37
        %v4398 = vand.u32 %v4386, 2147483648
        %v4399 = vor.u32 1.1754944e-38, %v4398
        %v4400 = vsel %vm4397, %v4399, %v4395
        %v4401 = vmul.f32 %v4376, %v4400
        %v4402 = vmin.f32 %v4401, 1.0
        %v4403 = vmax.f32 %v4402, -1.0
        %v4404 = vmul.f32 %v4255, %v4255
        %v4405 = vmin.f32 16.0, %v4404
        %v4406 = vmul.f32 %v4405, 2.1237322e-06
        %v4407 = vadd.f32 %v4406, 0.00028619796
        %v4408 = vmul.f32 %v4405, %v4407
        %v4409 = vadd.f32 %v4408, 0.0036580483
        %v4410 = vmul.f32 %v4405, %v4409
        %v4411 = vadd.f32 %v4410, 0.05243302
        %v4412 = vmul.f32 %v4405, %v4411
        %v4413 = vadd.f32 %v4412, 0.18741608
        %v4414 = vmul.f32 %v4405, %v4413
        %v4415 = vadd.f32 %v4414, 1.1283791
        %v4416 = vmul.f32 %v4255, %v4415
        %v4417 = vmul.f32 %v4405, 3.8918573e-05
        %v4418 = vadd.f32 %v4417, 0.001143296
        %v4419 = vmul.f32 %v4405, %v4418
        %v4420 = vadd.f32 %v4419, 0.014752088
        %v4421 = vmul.f32 %v4405, %v4420
        %v4422 = vadd.f32 %v4421, 0.112945676
        %v4423 = vmul.f32 %v4405, %v4422
        %v4424 = vadd.f32 %v4423, 0.4994258
        %v4425 = vmul.f32 %v4405, %v4424
        %v4426 = vadd.f32 %v4425, 1.0
        %v4427 = vrcp.pop %v4426
        %v4428 = vmul.f32 %v4426, %v4427
        %v4429 = vsub.f32 1.0, %v4428
        %v4430 = vmul.f32 %v4427, %v4429
        %v4431 = vadd.f32 %v4427, %v4430
        %vm4432 = vweird.f32 %v4426
        %vm4433 = vweird.f32 %v4427
        %vm4434 = vmor %vm4432, %vm4433
        %v4435 = vsel %vm4434, %v4427, %v4431
        %v4436 = vand.u32 2147483647, %v4426
        %vm4437 = vcmp.eq.f32.partialorder %v4436, 8.507059e+37
        %v4438 = vand.u32 %v4426, 2147483648
        %v4439 = vor.u32 1.1754944e-38, %v4438
        %v4440 = vsel %vm4437, %v4439, %v4435
        %v4441 = vmul.f32 %v4416, %v4440
        %v4442 = vmin.f32 %v4441, 1.0
        %v4443 = vmax.f32 %v4442, -1.0
        %v4444 = vmul.f32 %v4256, %v4256
        %v4445 = vmin.f32 16.0, %v4444
        %v4446 = vmul.f32 %v4445, 2.1237322e-06
        %v4447 = vadd.f32 %v4446, 0.00028619796
        %v4448 = vmul.f32 %v4445, %v4447
        %v4449 = vadd.f32 %v4448, 0.0036580483
        %v4450 = vmul.f32 %v4445, %v4449
        %v4451 = vadd.f32 %v4450, 0.05243302
        %v4452 = vmul.f32 %v4445, %v4451
        %v4453 = vadd.f32 %v4452, 0.18741608
        %v4454 = vmul.f32 %v4445, %v4453
        %v4455 = vadd.f32 %v4454, 1.1283791
        %v4456 = vmul.f32 %v4256, %v4455
        %v4457 = vmul.f32 %v4445, 3.8918573e-05
        %v4458 = vadd.f32 %v4457, 0.001143296
        %v4459 = vmul.f32 %v4445, %v4458
        %v4460 = vadd.f32 %v4459, 0.014752088
        %v4461 = vmul.f32 %v4445, %v4460
        %v4462 = vadd.f32 %v4461, 0.112945676
        %v4463 = vmul.f32 %v4445, %v4462
        %v4464 = vadd.f32 %v4463, 0.4994258
        %v4465 = vmul.f32 %v4445, %v4464
        %v4466 = vadd.f32 %v4465, 1.0
        %v4467 = vrcp.pop %v4466
        %v4468 = vmul.f32 %v4466, %v4467
        %v4469 = vsub.f32 1.0, %v4468
        %v4470 = vmul.f32 %v4467, %v4469
        %v4471 = vadd.f32 %v4467, %v4470
        %vm4472 = vweird.f32 %v4466
        %vm4473 = vweird.f32 %v4467
        %vm4474 = vmor %vm4472, %vm4473
        %v4475 = vsel %vm4474, %v4467, %v4471
        %v4476 = vand.u32 2147483647, %v4466
        %vm4477 = vcmp.eq.f32.partialorder %v4476, 8.507059e+37
        %v4478 = vand.u32 %v4466, 2147483648
        %v4479 = vor.u32 1.1754944e-38, %v4478
        %v4480 = vsel %vm4477, %v4479, %v4475
        %v4481 = vmul.f32 %v4456, %v4480
        %v4482 = vmin.f32 %v4481, 1.0
        %v4483 = vmax.f32 %v4482, -1.0
        %v4484 = vmul.f32 %v4257, %v4257
        %v4485 = vmin.f32 16.0, %v4484
        %v4486 = vmul.f32 %v4485, 2.1237322e-06
        %v4487 = vadd.f32 %v4486, 0.00028619796
        %v4488 = vmul.f32 %v4485, %v4487
        %v4489 = vadd.f32 %v4488, 0.0036580483
        %v4490 = vmul.f32 %v4485, %v4489
        %v4491 = vadd.f32 %v4490, 0.05243302
        %v4492 = vmul.f32 %v4485, %v4491
        %v4493 = vadd.f32 %v4492, 0.18741608
        %v4494 = vmul.f32 %v4485, %v4493
        %v4495 = vadd.f32 %v4494, 1.1283791
        %v4496 = vmul.f32 %v4257, %v4495
        %v4497 = vmul.f32 %v4485, 3.8918573e-05
        %v4498 = vadd.f32 %v4497, 0.001143296
        %v4499 = vmul.f32 %v4485, %v4498
        %v4500 = vadd.f32 %v4499, 0.014752088
        %v4501 = vmul.f32 %v4485, %v4500
        %v4502 = vadd.f32 %v4501, 0.112945676
        %v4503 = vmul.f32 %v4485, %v4502
        %v4504 = vadd.f32 %v4503, 0.4994258
        %v4505 = vmul.f32 %v4485, %v4504
        %v4506 = vadd.f32 %v4505, 1.0
        %v4507 = vrcp.pop %v4506
        %v4508 = vmul.f32 %v4506, %v4507
        %v4509 = vsub.f32 1.0, %v4508
        %v4510 = vmul.f32 %v4507, %v4509
        %v4511 = vadd.f32 %v4507, %v4510
        %vm4512 = vweird.f32 %v4506
        %vm4513 = vweird.f32 %v4507
        %vm4514 = vmor %vm4512, %vm4513
        %v4515 = vsel %vm4514, %v4507, %v4511
        %v4516 = vand.u32 2147483647, %v4506
        %vm4517 = vcmp.eq.f32.partialorder %v4516, 8.507059e+37
        %v4518 = vand.u32 %v4506, 2147483648
        %v4519 = vor.u32 1.1754944e-38, %v4518
        %v4520 = vsel %vm4517, %v4519, %v4515
        %v4521 = vmul.f32 %v4496, %v4520
        %v4522 = vmin.f32 %v4521, 1.0
        %v4523 = vmax.f32 %v4522, -1.0
        %v4524 = vmul.f32 %v4258, %v4258
        %v4525 = vmin.f32 16.0, %v4524
        %v4526 = vmul.f32 %v4525, 2.1237322e-06
        %v4527 = vadd.f32 %v4526, 0.00028619796
        %v4528 = vmul.f32 %v4525, %v4527
        %v4529 = vadd.f32 %v4528, 0.0036580483
        %v4530 = vmul.f32 %v4525, %v4529
        %v4531 = vadd.f32 %v4530, 0.05243302
        %v4532 = vmul.f32 %v4525, %v4531
        %v4533 = vadd.f32 %v4532, 0.18741608
        %v4534 = vmul.f32 %v4525, %v4533
        %v4535 = vadd.f32 %v4534, 1.1283791
        %v4536 = vmul.f32 %v4258, %v4535
        %v4537 = vmul.f32 %v4525, 3.8918573e-05
        %v4538 = vadd.f32 %v4537, 0.001143296
        %v4539 = vmul.f32 %v4525, %v4538
        %v4540 = vadd.f32 %v4539, 0.014752088
        %v4541 = vmul.f32 %v4525, %v4540
        %v4542 = vadd.f32 %v4541, 0.112945676
        %v4543 = vmul.f32 %v4525, %v4542
        %v4544 = vadd.f32 %v4543, 0.4994258
        %v4545 = vmul.f32 %v4525, %v4544
        %v4546 = vadd.f32 %v4545, 1.0
        %v4547 = vrcp.pop %v4546
        %v4548 = vmul.f32 %v4546, %v4547
        %v4549 = vsub.f32 1.0, %v4548
        %v4550 = vmul.f32 %v4547, %v4549
        %v4551 = vadd.f32 %v4547, %v4550
        %vm4552 = vweird.f32 %v4546
        %vm4553 = vweird.f32 %v4547
        %vm4554 = vmor %vm4552, %vm4553
        %v4555 = vsel %vm4554, %v4547, %v4551
        %v4556 = vand.u32 2147483647, %v4546
        %vm4557 = vcmp.eq.f32.partialorder %v4556, 8.507059e+37
        %v4558 = vand.u32 %v4546, 2147483648
        %v4559 = vor.u32 1.1754944e-38, %v4558
        %v4560 = vsel %vm4557, %v4559, %v4555
        %v4561 = vmul.f32 %v4536, %v4560
        %v4562 = vmin.f32 %v4561, 1.0
        %v4563 = vmax.f32 %v4562, -1.0
        %v4564 = vmul.f32 %v4259, %v4259
        %v4565 = vmin.f32 16.0, %v4564
        %v4566 = vmul.f32 %v4565, 2.1237322e-06
        %v4567 = vadd.f32 %v4566, 0.00028619796
        %v4568 = vmul.f32 %v4565, %v4567
        %v4569 = vadd.f32 %v4568, 0.0036580483
        %v4570 = vmul.f32 %v4565, %v4569
        %v4571 = vadd.f32 %v4570, 0.05243302
        %v4572 = vmul.f32 %v4565, %v4571
        %v4573 = vadd.f32 %v4572, 0.18741608
        %v4574 = vmul.f32 %v4565, %v4573
        %v4575 = vadd.f32 %v4574, 1.1283791
        %v4576 = vmul.f32 %v4259, %v4575
        %v4577 = vmul.f32 %v4565, 3.8918573e-05
        %v4578 = vadd.f32 %v4577, 0.001143296
        %v4579 = vmul.f32 %v4565, %v4578
        %v4580 = vadd.f32 %v4579, 0.014752088
        %v4581 = vmul.f32 %v4565, %v4580
        %v4582 = vadd.f32 %v4581, 0.112945676
        %v4583 = vmul.f32 %v4565, %v4582
        %v4584 = vadd.f32 %v4583, 0.4994258
        %v4585 = vmul.f32 %v4565, %v4584
        %v4586 = vadd.f32 %v4585, 1.0
        %v4587 = vrcp.pop %v4586
        %v4588 = vmul.f32 %v4586, %v4587
        %v4589 = vsub.f32 1.0, %v4588
        %v4590 = vmul.f32 %v4587, %v4589
        %v4591 = vadd.f32 %v4587, %v4590
        %vm4592 = vweird.f32 %v4586
        %vm4593 = vweird.f32 %v4587
        %vm4594 = vmor %vm4592, %vm4593
        %v4595 = vsel %vm4594, %v4587, %v4591
        %v4596 = vand.u32 2147483647, %v4586
        %vm4597 = vcmp.eq.f32.partialorder %v4596, 8.507059e+37
        %v4598 = vand.u32 %v4586, 2147483648
        %v4599 = vor.u32 1.1754944e-38, %v4598
        %v4600 = vsel %vm4597, %v4599, %v4595
        %v4601 = vmul.f32 %v4576, %v4600
        %v4602 = vmin.f32 %v4601, 1.0
        %v4603 = vmax.f32 %v4602, -1.0
        %v4604 = vmul.f32 %v4260, %v4260
        %v4605 = vmin.f32 16.0, %v4604
        %v4606 = vmul.f32 %v4605, 2.1237322e-06
        %v4607 = vadd.f32 %v4606, 0.00028619796
        %v4608 = vmul.f32 %v4605, %v4607
        %v4609 = vadd.f32 %v4608, 0.0036580483
        %v4610 = vmul.f32 %v4605, %v4609
        %v4611 = vadd.f32 %v4610, 0.05243302
        %v4612 = vmul.f32 %v4605, %v4611
        %v4613 = vadd.f32 %v4612, 0.18741608
        %v4614 = vmul.f32 %v4605, %v4613
        %v4615 = vadd.f32 %v4614, 1.1283791
        %v4616 = vmul.f32 %v4260, %v4615
        %v4617 = vmul.f32 %v4605, 3.8918573e-05
        %v4618 = vadd.f32 %v4617, 0.001143296
        %v4619 = vmul.f32 %v4605, %v4618
        %v4620 = vadd.f32 %v4619, 0.014752088
        %v4621 = vmul.f32 %v4605, %v4620
        %v4622 = vadd.f32 %v4621, 0.112945676
        %v4623 = vmul.f32 %v4605, %v4622
        %v4624 = vadd.f32 %v4623, 0.4994258
        %v4625 = vmul.f32 %v4605, %v4624
        %v4626 = vadd.f32 %v4625, 1.0
        %v4627 = vrcp.pop %v4626
        %v4628 = vmul.f32 %v4626, %v4627
        %v4629 = vsub.f32 1.0, %v4628
        %v4630 = vmul.f32 %v4627, %v4629
        %v4631 = vadd.f32 %v4627, %v4630
        %vm4632 = vweird.f32 %v4626
        %vm4633 = vweird.f32 %v4627
        %vm4634 = vmor %vm4632, %vm4633
        %v4635 = vsel %vm4634, %v4627, %v4631
        %v4636 = vand.u32 2147483647, %v4626
        %vm4637 = vcmp.eq.f32.partialorder %v4636, 8.507059e+37
        %v4638 = vand.u32 %v4626, 2147483648
        %v4639 = vor.u32 1.1754944e-38, %v4638
        %v4640 = vsel %vm4637, %v4639, %v4635
        %v4641 = vmul.f32 %v4616, %v4640
        %v4642 = vmin.f32 %v4641, 1.0
        %v4643 = vmax.f32 %v4642, -1.0
        %v4644 = vmul.f32 %v4261, %v4261
        %v4645 = vmin.f32 16.0, %v4644
        %v4646 = vmul.f32 %v4645, 2.1237322e-06
        %v4647 = vadd.f32 %v4646, 0.00028619796
        %v4648 = vmul.f32 %v4645, %v4647
        %v4649 = vadd.f32 %v4648, 0.0036580483
        %v4650 = vmul.f32 %v4645, %v4649
        %v4651 = vadd.f32 %v4650, 0.05243302
        %v4652 = vmul.f32 %v4645, %v4651
        %v4653 = vadd.f32 %v4652, 0.18741608
        %v4654 = vmul.f32 %v4645, %v4653
        %v4655 = vadd.f32 %v4654, 1.1283791
        %v4656 = vmul.f32 %v4261, %v4655
        %v4657 = vmul.f32 %v4645, 3.8918573e-05
        %v4658 = vadd.f32 %v4657, 0.001143296
        %v4659 = vmul.f32 %v4645, %v4658
        %v4660 = vadd.f32 %v4659, 0.014752088
        %v4661 = vmul.f32 %v4645, %v4660
        %v4662 = vadd.f32 %v4661, 0.112945676
        %v4663 = vmul.f32 %v4645, %v4662
        %v4664 = vadd.f32 %v4663, 0.4994258
        %v4665 = vmul.f32 %v4645, %v4664
        %v4666 = vadd.f32 %v4665, 1.0
        %v4667 = vrcp.pop %v4666
        %v4668 = vmul.f32 %v4666, %v4667
        %v4669 = vsub.f32 1.0, %v4668
        %v4670 = vmul.f32 %v4667, %v4669
        %v4671 = vadd.f32 %v4667, %v4670
        %vm4672 = vweird.f32 %v4666
        %vm4673 = vweird.f32 %v4667
        %vm4674 = vmor %vm4672, %vm4673
        %v4675 = vsel %vm4674, %v4667, %v4671
        %v4676 = vand.u32 2147483647, %v4666
        %vm4677 = vcmp.eq.f32.partialorder %v4676, 8.507059e+37
        %v4678 = vand.u32 %v4666, 2147483648
        %v4679 = vor.u32 1.1754944e-38, %v4678
        %v4680 = vsel %vm4677, %v4679, %v4675
        %v4681 = vmul.f32 %v4656, %v4680
        %v4682 = vmin.f32 %v4681, 1.0
        %v4683 = vmax.f32 %v4682, -1.0
        %v4684 = vmul.f32 %v4262, %v4262
        %v4685 = vmin.f32 16.0, %v4684
        %v4686 = vmul.f32 %v4685, 2.1237322e-06
        %v4687 = vadd.f32 %v4686, 0.00028619796
        %v4688 = vmul.f32 %v4685, %v4687
        %v4689 = vadd.f32 %v4688, 0.0036580483
        %v4690 = vmul.f32 %v4685, %v4689
        %v4691 = vadd.f32 %v4690, 0.05243302
        %v4692 = vmul.f32 %v4685, %v4691
        %v4693 = vadd.f32 %v4692, 0.18741608
        %v4694 = vmul.f32 %v4685, %v4693
        %v4695 = vadd.f32 %v4694, 1.1283791
        %v4696 = vmul.f32 %v4262, %v4695
        %v4697 = vmul.f32 %v4685, 3.8918573e-05
        %v4698 = vadd.f32 %v4697, 0.001143296
        %v4699 = vmul.f32 %v4685, %v4698
        %v4700 = vadd.f32 %v4699, 0.014752088
        %v4701 = vmul.f32 %v4685, %v4700
        %v4702 = vadd.f32 %v4701, 0.112945676
        %v4703 = vmul.f32 %v4685, %v4702
        %v4704 = vadd.f32 %v4703, 0.4994258
        %v4705 = vmul.f32 %v4685, %v4704
        %v4706 = vadd.f32 %v4705, 1.0
        %v4707 = vrcp.pop %v4706
        %v4708 = vmul.f32 %v4706, %v4707
        %v4709 = vsub.f32 1.0, %v4708
        %v4710 = vmul.f32 %v4707, %v4709
        %v4711 = vadd.f32 %v4707, %v4710
        %vm4712 = vweird.f32 %v4706
        %vm4713 = vweird.f32 %v4707
        %vm4714 = vmor %vm4712, %vm4713
        %v4715 = vsel %vm4714, %v4707, %v4711
        %v4716 = vand.u32 2147483647, %v4706
        %vm4717 = vcmp.eq.f32.partialorder %v4716, 8.507059e+37
        %v4718 = vand.u32 %v4706, 2147483648
        %v4719 = vor.u32 1.1754944e-38, %v4718
        %v4720 = vsel %vm4717, %v4719, %v4715
        %v4721 = vmul.f32 %v4696, %v4720
        %v4722 = vmin.f32 %v4721, 1.0
        %v4723 = vmax.f32 %v4722, -1.0
        %v4724 = vmul.f32 %v4263, %v4263
        %v4725 = vmin.f32 16.0, %v4724
        %v4726 = vmul.f32 %v4725, 2.1237322e-06
        %v4727 = vadd.f32 %v4726, 0.00028619796
        %v4728 = vmul.f32 %v4725, %v4727
        %v4729 = vadd.f32 %v4728, 0.0036580483
        %v4730 = vmul.f32 %v4725, %v4729
        %v4731 = vadd.f32 %v4730, 0.05243302
        %v4732 = vmul.f32 %v4725, %v4731
        %v4733 = vadd.f32 %v4732, 0.18741608
        %v4734 = vmul.f32 %v4725, %v4733
        %v4735 = vadd.f32 %v4734, 1.1283791
        %v4736 = vmul.f32 %v4263, %v4735
        %v4737 = vmul.f32 %v4725, 3.8918573e-05
        %v4738 = vadd.f32 %v4737, 0.001143296
        %v4739 = vmul.f32 %v4725, %v4738
        %v4740 = vadd.f32 %v4739, 0.014752088
        %v4741 = vmul.f32 %v4725, %v4740
        %v4742 = vadd.f32 %v4741, 0.112945676
        %v4743 = vmul.f32 %v4725, %v4742
        %v4744 = vadd.f32 %v4743, 0.4994258
        %v4745 = vmul.f32 %v4725, %v4744
        %v4746 = vadd.f32 %v4745, 1.0
        %v4747 = vrcp.pop %v4746
        %v4748 = vmul.f32 %v4746, %v4747
        %v4749 = vsub.f32 1.0, %v4748
        %v4750 = vmul.f32 %v4747, %v4749
        %v4751 = vadd.f32 %v4747, %v4750
        %vm4752 = vweird.f32 %v4746
        %vm4753 = vweird.f32 %v4747
        %vm4754 = vmor %vm4752, %vm4753
        %v4755 = vsel %vm4754, %v4747, %v4751
        %v4756 = vand.u32 2147483647, %v4746
        %vm4757 = vcmp.eq.f32.partialorder %v4756, 8.507059e+37
        %v4758 = vand.u32 %v4746, 2147483648
        %v4759 = vor.u32 1.1754944e-38, %v4758
        %v4760 = vsel %vm4757, %v4759, %v4755
        %v4761 = vmul.f32 %v4736, %v4760
        %v4762 = vmin.f32 %v4761, 1.0
        %v4763 = vmax.f32 %v4762, -1.0
        %v4764 = vmul.f32 %v4264, %v4264
        %v4765 = vmin.f32 16.0, %v4764
        %v4766 = vmul.f32 %v4765, 2.1237322e-06
        %v4767 = vadd.f32 %v4766, 0.00028619796
        %v4768 = vmul.f32 %v4765, %v4767
        %v4769 = vadd.f32 %v4768, 0.0036580483
        %v4770 = vmul.f32 %v4765, %v4769
        %v4771 = vadd.f32 %v4770, 0.05243302
        %v4772 = vmul.f32 %v4765, %v4771
        %v4773 = vadd.f32 %v4772, 0.18741608
        %v4774 = vmul.f32 %v4765, %v4773
        %v4775 = vadd.f32 %v4774, 1.1283791
        %v4776 = vmul.f32 %v4264, %v4775
        %v4777 = vmul.f32 %v4765, 3.8918573e-05
        %v4778 = vadd.f32 %v4777, 0.001143296
        %v4779 = vmul.f32 %v4765, %v4778
        %v4780 = vadd.f32 %v4779, 0.014752088
        %v4781 = vmul.f32 %v4765, %v4780
        %v4782 = vadd.f32 %v4781, 0.112945676
        %v4783 = vmul.f32 %v4765, %v4782
        %v4784 = vadd.f32 %v4783, 0.4994258
        %v4785 = vmul.f32 %v4765, %v4784
        %v4786 = vadd.f32 %v4785, 1.0
        %v4787 = vrcp.pop %v4786
        %v4788 = vmul.f32 %v4786, %v4787
        %v4789 = vsub.f32 1.0, %v4788
        %v4790 = vmul.f32 %v4787, %v4789
        %v4791 = vadd.f32 %v4787, %v4790
        %vm4792 = vweird.f32 %v4786
        %vm4793 = vweird.f32 %v4787
        %vm4794 = vmor %vm4792, %vm4793
        %v4795 = vsel %vm4794, %v4787, %v4791
        %v4796 = vand.u32 2147483647, %v4786
        %vm4797 = vcmp.eq.f32.partialorder %v4796, 8.507059e+37
        %v4798 = vand.u32 %v4786, 2147483648
        %v4799 = vor.u32 1.1754944e-38, %v4798
        %v4800 = vsel %vm4797, %v4799, %v4795
        %v4801 = vmul.f32 %v4776, %v4800
        %v4802 = vmin.f32 %v4801, 1.0
        %v4803 = vmax.f32 %v4802, -1.0
        %v4804 = vmul.f32 %v4265, %v4265
        %v4805 = vmin.f32 16.0, %v4804
        %v4806 = vmul.f32 %v4805, 2.1237322e-06
        %v4807 = vadd.f32 %v4806, 0.00028619796
        %v4808 = vmul.f32 %v4805, %v4807
        %v4809 = vadd.f32 %v4808, 0.0036580483
        %v4810 = vmul.f32 %v4805, %v4809
        %v4811 = vadd.f32 %v4810, 0.05243302
        %v4812 = vmul.f32 %v4805, %v4811
        %v4813 = vadd.f32 %v4812, 0.18741608
        %v4814 = vmul.f32 %v4805, %v4813
        %v4815 = vadd.f32 %v4814, 1.1283791
        %v4816 = vmul.f32 %v4265, %v4815
        %v4817 = vmul.f32 %v4805, 3.8918573e-05
        %v4818 = vadd.f32 %v4817, 0.001143296
        %v4819 = vmul.f32 %v4805, %v4818
        %v4820 = vadd.f32 %v4819, 0.014752088
        %v4821 = vmul.f32 %v4805, %v4820
        %v4822 = vadd.f32 %v4821, 0.112945676
        %v4823 = vmul.f32 %v4805, %v4822
        %v4824 = vadd.f32 %v4823, 0.4994258
        %v4825 = vmul.f32 %v4805, %v4824
        %v4826 = vadd.f32 %v4825, 1.0
        %v4827 = vrcp.pop %v4826
        %v4828 = vmul.f32 %v4826, %v4827
        %v4829 = vsub.f32 1.0, %v4828
        %v4830 = vmul.f32 %v4827, %v4829
        %v4831 = vadd.f32 %v4827, %v4830
        %vm4832 = vweird.f32 %v4826
        %vm4833 = vweird.f32 %v4827
        %vm4834 = vmor %vm4832, %vm4833
        %v4835 = vsel %vm4834, %v4827, %v4831
        %v4836 = vand.u32 2147483647, %v4826
        %vm4837 = vcmp.eq.f32.partialorder %v4836, 8.507059e+37
        %v4838 = vand.u32 %v4826, 2147483648
        %v4839 = vor.u32 1.1754944e-38, %v4838
        %v4840 = vsel %vm4837, %v4839, %v4835
        %v4841 = vmul.f32 %v4816, %v4840
        %v4842 = vmin.f32 %v4841, 1.0
        %v4843 = vmax.f32 %v4842, -1.0
        %v4844 = vmul.f32 %v4266, %v4266
        %v4845 = vmin.f32 16.0, %v4844
        %v4846 = vmul.f32 %v4845, 2.1237322e-06
        %v4847 = vadd.f32 %v4846, 0.00028619796
        %v4848 = vmul.f32 %v4845, %v4847
        %v4849 = vadd.f32 %v4848, 0.0036580483
        %v4850 = vmul.f32 %v4845, %v4849
        %v4851 = vadd.f32 %v4850, 0.05243302
        %v4852 = vmul.f32 %v4845, %v4851
        %v4853 = vadd.f32 %v4852, 0.18741608
        %v4854 = vmul.f32 %v4845, %v4853
        %v4855 = vadd.f32 %v4854, 1.1283791
        %v4856 = vmul.f32 %v4266, %v4855
        %v4857 = vmul.f32 %v4845, 3.8918573e-05
        %v4858 = vadd.f32 %v4857, 0.001143296
        %v4859 = vmul.f32 %v4845, %v4858
        %v4860 = vadd.f32 %v4859, 0.014752088
        %v4861 = vmul.f32 %v4845, %v4860
        %v4862 = vadd.f32 %v4861, 0.112945676
        %v4863 = vmul.f32 %v4845, %v4862
        %v4864 = vadd.f32 %v4863, 0.4994258
        %v4865 = vmul.f32 %v4845, %v4864
        %v4866 = vadd.f32 %v4865, 1.0
        %v4867 = vrcp.pop %v4866
        %v4868 = vmul.f32 %v4866, %v4867
        %v4869 = vsub.f32 1.0, %v4868
        %v4870 = vmul.f32 %v4867, %v4869
        %v4871 = vadd.f32 %v4867, %v4870
        %vm4872 = vweird.f32 %v4866
        %vm4873 = vweird.f32 %v4867
        %vm4874 = vmor %vm4872, %vm4873
        %v4875 = vsel %vm4874, %v4867, %v4871
        %v4876 = vand.u32 2147483647, %v4866
        %vm4877 = vcmp.eq.f32.partialorder %v4876, 8.507059e+37
        %v4878 = vand.u32 %v4866, 2147483648
        %v4879 = vor.u32 1.1754944e-38, %v4878
        %v4880 = vsel %vm4877, %v4879, %v4875
        %v4881 = vmul.f32 %v4856, %v4880
        %v4882 = vmin.f32 %v4881, 1.0
        %v4883 = vmax.f32 %v4882, -1.0
        %v4884 = vmul.f32 %v4267, %v4267
        %v4885 = vmin.f32 16.0, %v4884
        %v4886 = vmul.f32 %v4885, 2.1237322e-06
        %v4887 = vadd.f32 %v4886, 0.00028619796
        %v4888 = vmul.f32 %v4885, %v4887
        %v4889 = vadd.f32 %v4888, 0.0036580483
        %v4890 = vmul.f32 %v4885, %v4889
        %v4891 = vadd.f32 %v4890, 0.05243302
        %v4892 = vmul.f32 %v4885, %v4891
        %v4893 = vadd.f32 %v4892, 0.18741608
        %v4894 = vmul.f32 %v4885, %v4893
        %v4895 = vadd.f32 %v4894, 1.1283791
        %v4896 = vmul.f32 %v4267, %v4895
        %v4897 = vmul.f32 %v4885, 3.8918573e-05
        %v4898 = vadd.f32 %v4897, 0.001143296
        %v4899 = vmul.f32 %v4885, %v4898
        %v4900 = vadd.f32 %v4899, 0.014752088
        %v4901 = vmul.f32 %v4885, %v4900
        %v4902 = vadd.f32 %v4901, 0.112945676
        %v4903 = vmul.f32 %v4885, %v4902
        %v4904 = vadd.f32 %v4903, 0.4994258
        %v4905 = vmul.f32 %v4885, %v4904
        %v4906 = vadd.f32 %v4905, 1.0
        %v4907 = vrcp.pop %v4906
        %v4908 = vmul.f32 %v4906, %v4907
        %v4909 = vsub.f32 1.0, %v4908
        %v4910 = vmul.f32 %v4907, %v4909
        %v4911 = vadd.f32 %v4907, %v4910
        %vm4912 = vweird.f32 %v4906
        %vm4913 = vweird.f32 %v4907
        %vm4914 = vmor %vm4912, %vm4913
        %v4915 = vsel %vm4914, %v4907, %v4911
        %v4916 = vand.u32 2147483647, %v4906
        %vm4917 = vcmp.eq.f32.partialorder %v4916, 8.507059e+37
        %v4918 = vand.u32 %v4906, 2147483648
        %v4919 = vor.u32 1.1754944e-38, %v4918
        %v4920 = vsel %vm4917, %v4919, %v4915
        %v4921 = vmul.f32 %v4896, %v4920
        %v4922 = vmin.f32 %v4921, 1.0
        %v4923 = vmax.f32 %v4922, -1.0
        %v4924 = vmul.f32 %v4268, %v4268
        %v4925 = vmin.f32 16.0, %v4924
        %v4926 = vmul.f32 %v4925, 2.1237322e-06
        %v4927 = vadd.f32 %v4926, 0.00028619796
        %v4928 = vmul.f32 %v4925, %v4927
        %v4929 = vadd.f32 %v4928, 0.0036580483
        %v4930 = vmul.f32 %v4925, %v4929
        %v4931 = vadd.f32 %v4930, 0.05243302
        %v4932 = vmul.f32 %v4925, %v4931
        %v4933 = vadd.f32 %v4932, 0.18741608
        %v4934 = vmul.f32 %v4925, %v4933
        %v4935 = vadd.f32 %v4934, 1.1283791
        %v4936 = vmul.f32 %v4268, %v4935
        %v4937 = vmul.f32 %v4925, 3.8918573e-05
        %v4938 = vadd.f32 %v4937, 0.001143296
        %v4939 = vmul.f32 %v4925, %v4938
        %v4940 = vadd.f32 %v4939, 0.014752088
        %v4941 = vmul.f32 %v4925, %v4940
        %v4942 = vadd.f32 %v4941, 0.112945676
        %v4943 = vmul.f32 %v4925, %v4942
        %v4944 = vadd.f32 %v4943, 0.4994258
        %v4945 = vmul.f32 %v4925, %v4944
        %v4946 = vadd.f32 %v4945, 1.0
        %v4947 = vrcp.pop %v4946
        %v4948 = vmul.f32 %v4946, %v4947
        %v4949 = vsub.f32 1.0, %v4948
        %v4950 = vmul.f32 %v4947, %v4949
        %v4951 = vadd.f32 %v4947, %v4950
        %vm4952 = vweird.f32 %v4946
        %vm4953 = vweird.f32 %v4947
        %vm4954 = vmor %vm4952, %vm4953
        %v4955 = vsel %vm4954, %v4947, %v4951
        %v4956 = vand.u32 2147483647, %v4946
        %vm4957 = vcmp.eq.f32.partialorder %v4956, 8.507059e+37
        %v4958 = vand.u32 %v4946, 2147483648
        %v4959 = vor.u32 1.1754944e-38, %v4958
        %v4960 = vsel %vm4957, %v4959, %v4955
        %v4961 = vmul.f32 %v4936, %v4960
        %v4962 = vmin.f32 %v4961, 1.0
        %v4963 = vmax.f32 %v4962, -1.0
        %v4964 = vmul.f32 %v4269, %v4269
        %v4965 = vmin.f32 16.0, %v4964
        %v4966 = vmul.f32 %v4965, 2.1237322e-06
        %v4967 = vadd.f32 %v4966, 0.00028619796
        %v4968 = vmul.f32 %v4965, %v4967
        %v4969 = vadd.f32 %v4968, 0.0036580483
        %v4970 = vmul.f32 %v4965, %v4969
        %v4971 = vadd.f32 %v4970, 0.05243302
        %v4972 = vmul.f32 %v4965, %v4971
        %v4973 = vadd.f32 %v4972, 0.18741608
        %v4974 = vmul.f32 %v4965, %v4973
        %v4975 = vadd.f32 %v4974, 1.1283791
        %v4976 = vmul.f32 %v4269, %v4975
        %v4977 = vmul.f32 %v4965, 3.8918573e-05
        %v4978 = vadd.f32 %v4977, 0.001143296
        %v4979 = vmul.f32 %v4965, %v4978
        %v4980 = vadd.f32 %v4979, 0.014752088
        %v4981 = vmul.f32 %v4965, %v4980
        %v4982 = vadd.f32 %v4981, 0.112945676
        %v4983 = vmul.f32 %v4965, %v4982
        %v4984 = vadd.f32 %v4983, 0.4994258
        %v4985 = vmul.f32 %v4965, %v4984
        %v4986 = vadd.f32 %v4985, 1.0
        %v4987 = vrcp.pop %v4986
        %v4988 = vmul.f32 %v4986, %v4987
        %v4989 = vsub.f32 1.0, %v4988
        %v4990 = vmul.f32 %v4987, %v4989
        %v4991 = vadd.f32 %v4987, %v4990
        %vm4992 = vweird.f32 %v4986
        %vm4993 = vweird.f32 %v4987
        %vm4994 = vmor %vm4992, %vm4993
        %v4995 = vsel %vm4994, %v4987, %v4991
        %v4996 = vand.u32 2147483647, %v4986
        %vm4997 = vcmp.eq.f32.partialorder %v4996, 8.507059e+37
        %v4998 = vand.u32 %v4986, 2147483648
        %v4999 = vor.u32 1.1754944e-38, %v4998
        %v5000 = vsel %vm4997, %v4999, %v4995
        %v5001 = vmul.f32 %v4976, %v5000
        %v5002 = vmin.f32 %v5001, 1.0
        %v5003 = vmax.f32 %v5002, -1.0
        %v5004 = vmul.f32 %v4270, %v4270
        %v5005 = vmin.f32 16.0, %v5004
        %v5006 = vmul.f32 %v5005, 2.1237322e-06
        %v5007 = vadd.f32 %v5006, 0.00028619796
        %v5008 = vmul.f32 %v5005, %v5007
        %v5009 = vadd.f32 %v5008, 0.0036580483
        %v5010 = vmul.f32 %v5005, %v5009
        %v5011 = vadd.f32 %v5010, 0.05243302
        %v5012 = vmul.f32 %v5005, %v5011
        %v5013 = vadd.f32 %v5012, 0.18741608
        %v5014 = vmul.f32 %v5005, %v5013
        %v5015 = vadd.f32 %v5014, 1.1283791
        %v5016 = vmul.f32 %v4270, %v5015
        %v5017 = vmul.f32 %v5005, 3.8918573e-05
        %v5018 = vadd.f32 %v5017, 0.001143296
        %v5019 = vmul.f32 %v5005, %v5018
        %v5020 = vadd.f32 %v5019, 0.014752088
        %v5021 = vmul.f32 %v5005, %v5020
        %v5022 = vadd.f32 %v5021, 0.112945676
        %v5023 = vmul.f32 %v5005, %v5022
        %v5024 = vadd.f32 %v5023, 0.4994258
        %v5025 = vmul.f32 %v5005, %v5024
        %v5026 = vadd.f32 %v5025, 1.0
        %v5027 = vrcp.pop %v5026
        %v5028 = vmul.f32 %v5026, %v5027
        %v5029 = vsub.f32 1.0, %v5028
        %v5030 = vmul.f32 %v5027, %v5029
        %v5031 = vadd.f32 %v5027, %v5030
        %vm5032 = vweird.f32 %v5026
        %vm5033 = vweird.f32 %v5027
        %vm5034 = vmor %vm5032, %vm5033
        %v5035 = vsel %vm5034, %v5027, %v5031
        %v5036 = vand.u32 2147483647, %v5026
        %vm5037 = vcmp.eq.f32.partialorder %v5036, 8.507059e+37
        %v5038 = vand.u32 %v5026, 2147483648
        %v5039 = vor.u32 1.1754944e-38, %v5038
        %v5040 = vsel %vm5037, %v5039, %v5035
        %v5041 = vmul.f32 %v5016, %v5040
        %v5042 = vmin.f32 %v5041, 1.0
        %v5043 = vmax.f32 %v5042, -1.0
        %v5044 = vmul.f32 %v4271, %v4271
        %v5045 = vmin.f32 16.0, %v5044
        %v5046 = vmul.f32 %v5045, 2.1237322e-06
        %v5047 = vadd.f32 %v5046, 0.00028619796
        %v5048 = vmul.f32 %v5045, %v5047
        %v5049 = vadd.f32 %v5048, 0.0036580483
        %v5050 = vmul.f32 %v5045, %v5049
        %v5051 = vadd.f32 %v5050, 0.05243302
        %v5052 = vmul.f32 %v5045, %v5051
        %v5053 = vadd.f32 %v5052, 0.18741608
        %v5054 = vmul.f32 %v5045, %v5053
        %v5055 = vadd.f32 %v5054, 1.1283791
        %v5056 = vmul.f32 %v4271, %v5055
        %v5057 = vmul.f32 %v5045, 3.8918573e-05
        %v5058 = vadd.f32 %v5057, 0.001143296
        %v5059 = vmul.f32 %v5045, %v5058
        %v5060 = vadd.f32 %v5059, 0.014752088
        %v5061 = vmul.f32 %v5045, %v5060
        %v5062 = vadd.f32 %v5061, 0.112945676
        %v5063 = vmul.f32 %v5045, %v5062
        %v5064 = vadd.f32 %v5063, 0.4994258
        %v5065 = vmul.f32 %v5045, %v5064
        %v5066 = vadd.f32 %v5065, 1.0
        %v5067 = vrcp.pop %v5066
        %v5068 = vmul.f32 %v5066, %v5067
        %v5069 = vsub.f32 1.0, %v5068
        %v5070 = vmul.f32 %v5067, %v5069
        %v5071 = vadd.f32 %v5067, %v5070
        %vm5072 = vweird.f32 %v5066
        %vm5073 = vweird.f32 %v5067
        %vm5074 = vmor %vm5072, %vm5073
        %v5075 = vsel %vm5074, %v5067, %v5071
        %v5076 = vand.u32 2147483647, %v5066
        %vm5077 = vcmp.eq.f32.partialorder %v5076, 8.507059e+37
        %v5078 = vand.u32 %v5066, 2147483648
        %v5079 = vor.u32 1.1754944e-38, %v5078
        %v5080 = vsel %vm5077, %v5079, %v5075
        %v5081 = vmul.f32 %v5056, %v5080
        %v5082 = vmin.f32 %v5081, 1.0
        %v5083 = vmax.f32 %v5082, -1.0
        %v5084 = vmul.f32 %v4272, %v4272
        %v5085 = vmin.f32 16.0, %v5084
        %v5086 = vmul.f32 %v5085, 2.1237322e-06
        %v5087 = vadd.f32 %v5086, 0.00028619796
        %v5088 = vmul.f32 %v5085, %v5087
        %v5089 = vadd.f32 %v5088, 0.0036580483
        %v5090 = vmul.f32 %v5085, %v5089
        %v5091 = vadd.f32 %v5090, 0.05243302
        %v5092 = vmul.f32 %v5085, %v5091
        %v5093 = vadd.f32 %v5092, 0.18741608
        %v5094 = vmul.f32 %v5085, %v5093
        %v5095 = vadd.f32 %v5094, 1.1283791
        %v5096 = vmul.f32 %v4272, %v5095
        %v5097 = vmul.f32 %v5085, 3.8918573e-05
        %v5098 = vadd.f32 %v5097, 0.001143296
        %v5099 = vmul.f32 %v5085, %v5098
        %v5100 = vadd.f32 %v5099, 0.014752088
        %v5101 = vmul.f32 %v5085, %v5100
        %v5102 = vadd.f32 %v5101, 0.112945676
        %v5103 = vmul.f32 %v5085, %v5102
        %v5104 = vadd.f32 %v5103, 0.4994258
        %v5105 = vmul.f32 %v5085, %v5104
        %v5106 = vadd.f32 %v5105, 1.0
        %v5107 = vrcp.pop %v5106
        %v5108 = vmul.f32 %v5106, %v5107
        %v5109 = vsub.f32 1.0, %v5108
        %v5110 = vmul.f32 %v5107, %v5109
        %v5111 = vadd.f32 %v5107, %v5110
        %vm5112 = vweird.f32 %v5106
        %vm5113 = vweird.f32 %v5107
        %vm5114 = vmor %vm5112, %vm5113
        %v5115 = vsel %vm5114, %v5107, %v5111
        %v5116 = vand.u32 2147483647, %v5106
        %vm5117 = vcmp.eq.f32.partialorder %v5116, 8.507059e+37
        %v5118 = vand.u32 %v5106, 2147483648
        %v5119 = vor.u32 1.1754944e-38, %v5118
        %v5120 = vsel %vm5117, %v5119, %v5115
        %v5121 = vmul.f32 %v5096, %v5120
        %v5122 = vmin.f32 %v5121, 1.0
        %v5123 = vmax.f32 %v5122, -1.0
        %v5124 = vmul.f32 %v4273, %v4273
        %v5125 = vmin.f32 16.0, %v5124
        %v5126 = vmul.f32 %v5125, 2.1237322e-06
        %v5127 = vadd.f32 %v5126, 0.00028619796
        %v5128 = vmul.f32 %v5125, %v5127
        %v5129 = vadd.f32 %v5128, 0.0036580483
        %v5130 = vmul.f32 %v5125, %v5129
        %v5131 = vadd.f32 %v5130, 0.05243302
        %v5132 = vmul.f32 %v5125, %v5131
        %v5133 = vadd.f32 %v5132, 0.18741608
        %v5134 = vmul.f32 %v5125, %v5133
        %v5135 = vadd.f32 %v5134, 1.1283791
        %v5136 = vmul.f32 %v4273, %v5135
        %v5137 = vmul.f32 %v5125, 3.8918573e-05
        %v5138 = vadd.f32 %v5137, 0.001143296
        %v5139 = vmul.f32 %v5125, %v5138
        %v5140 = vadd.f32 %v5139, 0.014752088
        %v5141 = vmul.f32 %v5125, %v5140
        %v5142 = vadd.f32 %v5141, 0.112945676
        %v5143 = vmul.f32 %v5125, %v5142
        %v5144 = vadd.f32 %v5143, 0.4994258
        %v5145 = vmul.f32 %v5125, %v5144
        %v5146 = vadd.f32 %v5145, 1.0
        %v5147 = vrcp.pop %v5146
        %v5148 = vmul.f32 %v5146, %v5147
        %v5149 = vsub.f32 1.0, %v5148
        %v5150 = vmul.f32 %v5147, %v5149
        %v5151 = vadd.f32 %v5147, %v5150
        %vm5152 = vweird.f32 %v5146
        %vm5153 = vweird.f32 %v5147
        %vm5154 = vmor %vm5152, %vm5153
        %v5155 = vsel %vm5154, %v5147, %v5151
        %v5156 = vand.u32 2147483647, %v5146
        %vm5157 = vcmp.eq.f32.partialorder %v5156, 8.507059e+37
        %v5158 = vand.u32 %v5146, 2147483648
        %v5159 = vor.u32 1.1754944e-38, %v5158
        %v5160 = vsel %vm5157, %v5159, %v5155
        %v5161 = vmul.f32 %v5136, %v5160
        %v5162 = vmin.f32 %v5161, 1.0
        %v5163 = vmax.f32 %v5162, -1.0
        %v5164 = vmul.f32 %v4274, %v4274
        %v5165 = vmin.f32 16.0, %v5164
        %v5166 = vmul.f32 %v5165, 2.1237322e-06
        %v5167 = vadd.f32 %v5166, 0.00028619796
        %v5168 = vmul.f32 %v5165, %v5167
        %v5169 = vadd.f32 %v5168, 0.0036580483
        %v5170 = vmul.f32 %v5165, %v5169
        %v5171 = vadd.f32 %v5170, 0.05243302
        %v5172 = vmul.f32 %v5165, %v5171
        %v5173 = vadd.f32 %v5172, 0.18741608
        %v5174 = vmul.f32 %v5165, %v5173
        %v5175 = vadd.f32 %v5174, 1.1283791
        %v5176 = vmul.f32 %v4274, %v5175
        %v5177 = vmul.f32 %v5165, 3.8918573e-05
        %v5178 = vadd.f32 %v5177, 0.001143296
        %v5179 = vmul.f32 %v5165, %v5178
        %v5180 = vadd.f32 %v5179, 0.014752088
        %v5181 = vmul.f32 %v5165, %v5180
        %v5182 = vadd.f32 %v5181, 0.112945676
        %v5183 = vmul.f32 %v5165, %v5182
        %v5184 = vadd.f32 %v5183, 0.4994258
        %v5185 = vmul.f32 %v5165, %v5184
        %v5186 = vadd.f32 %v5185, 1.0
        %v5187 = vrcp.pop %v5186
        %v5188 = vmul.f32 %v5186, %v5187
        %v5189 = vsub.f32 1.0, %v5188
        %v5190 = vmul.f32 %v5187, %v5189
        %v5191 = vadd.f32 %v5187, %v5190
        %vm5192 = vweird.f32 %v5186
        %vm5193 = vweird.f32 %v5187
        %vm5194 = vmor %vm5192, %vm5193
        %v5195 = vsel %vm5194, %v5187, %v5191
        %v5196 = vand.u32 2147483647, %v5186
        %vm5197 = vcmp.eq.f32.partialorder %v5196, 8.507059e+37
        %v5198 = vand.u32 %v5186, 2147483648
        %v5199 = vor.u32 1.1754944e-38, %v5198
        %v5200 = vsel %vm5197, %v5199, %v5195
        %v5201 = vmul.f32 %v5176, %v5200
        %v5202 = vmin.f32 %v5201, 1.0
        %v5203 = vmax.f32 %v5202, -1.0
        %v5204 = vmul.f32 %v4275, %v4275
        %v5205 = vmin.f32 16.0, %v5204
        %v5206 = vmul.f32 %v5205, 2.1237322e-06
        %v5207 = vadd.f32 %v5206, 0.00028619796
        %v5208 = vmul.f32 %v5205, %v5207
        %v5209 = vadd.f32 %v5208, 0.0036580483
        %v5210 = vmul.f32 %v5205, %v5209
        %v5211 = vadd.f32 %v5210, 0.05243302
        %v5212 = vmul.f32 %v5205, %v5211
        %v5213 = vadd.f32 %v5212, 0.18741608
        %v5214 = vmul.f32 %v5205, %v5213
        %v5215 = vadd.f32 %v5214, 1.1283791
        %v5216 = vmul.f32 %v4275, %v5215
        %v5217 = vmul.f32 %v5205, 3.8918573e-05
        %v5218 = vadd.f32 %v5217, 0.001143296
        %v5219 = vmul.f32 %v5205, %v5218
        %v5220 = vadd.f32 %v5219, 0.014752088
        %v5221 = vmul.f32 %v5205, %v5220
        %v5222 = vadd.f32 %v5221, 0.112945676
        %v5223 = vmul.f32 %v5205, %v5222
        %v5224 = vadd.f32 %v5223, 0.4994258
        %v5225 = vmul.f32 %v5205, %v5224
        %v5226 = vadd.f32 %v5225, 1.0
        %v5227 = vrcp.pop %v5226
        %v5228 = vmul.f32 %v5226, %v5227
        %v5229 = vsub.f32 1.0, %v5228
        %v5230 = vmul.f32 %v5227, %v5229
        %v5231 = vadd.f32 %v5227, %v5230
        %vm5232 = vweird.f32 %v5226
        %vm5233 = vweird.f32 %v5227
        %vm5234 = vmor %vm5232, %vm5233
        %v5235 = vsel %vm5234, %v5227, %v5231
        %v5236 = vand.u32 2147483647, %v5226
        %vm5237 = vcmp.eq.f32.partialorder %v5236, 8.507059e+37
        %v5238 = vand.u32 %v5226, 2147483648
        %v5239 = vor.u32 1.1754944e-38, %v5238
        %v5240 = vsel %vm5237, %v5239, %v5235
        %v5241 = vmul.f32 %v5216, %v5240
        %v5242 = vmin.f32 %v5241, 1.0
        %v5243 = vmax.f32 %v5242, -1.0
        %v5244 = vmul.f32 %v4276, %v4276
        %v5245 = vmin.f32 16.0, %v5244
        %v5246 = vmul.f32 %v5245, 2.1237322e-06
        %v5247 = vadd.f32 %v5246, 0.00028619796
        %v5248 = vmul.f32 %v5245, %v5247
        %v5249 = vadd.f32 %v5248, 0.0036580483
        %v5250 = vmul.f32 %v5245, %v5249
        %v5251 = vadd.f32 %v5250, 0.05243302
        %v5252 = vmul.f32 %v5245, %v5251
        %v5253 = vadd.f32 %v5252, 0.18741608
        %v5254 = vmul.f32 %v5245, %v5253
        %v5255 = vadd.f32 %v5254, 1.1283791
        %v5256 = vmul.f32 %v4276, %v5255
        %v5257 = vmul.f32 %v5245, 3.8918573e-05
        %v5258 = vadd.f32 %v5257, 0.001143296
        %v5259 = vmul.f32 %v5245, %v5258
        %v5260 = vadd.f32 %v5259, 0.014752088
        %v5261 = vmul.f32 %v5245, %v5260
        %v5262 = vadd.f32 %v5261, 0.112945676
        %v5263 = vmul.f32 %v5245, %v5262
        %v5264 = vadd.f32 %v5263, 0.4994258
        %v5265 = vmul.f32 %v5245, %v5264
        %v5266 = vadd.f32 %v5265, 1.0
        %v5267 = vrcp.pop %v5266
        %v5268 = vmul.f32 %v5266, %v5267
        %v5269 = vsub.f32 1.0, %v5268
        %v5270 = vmul.f32 %v5267, %v5269
        %v5271 = vadd.f32 %v5267, %v5270
        %vm5272 = vweird.f32 %v5266
        %vm5273 = vweird.f32 %v5267
        %vm5274 = vmor %vm5272, %vm5273
        %v5275 = vsel %vm5274, %v5267, %v5271
        %v5276 = vand.u32 2147483647, %v5266
        %vm5277 = vcmp.eq.f32.partialorder %v5276, 8.507059e+37
        %v5278 = vand.u32 %v5266, 2147483648
        %v5279 = vor.u32 1.1754944e-38, %v5278
        %v5280 = vsel %vm5277, %v5279, %v5275
        %v5281 = vmul.f32 %v5256, %v5280
        %v5282 = vmin.f32 %v5281, 1.0
        %v5283 = vmax.f32 %v5282, -1.0
        %v5284 = vmul.f32 %v4277, %v4277
        %v5285 = vmin.f32 16.0, %v5284
        %v5286 = vmul.f32 %v5285, 2.1237322e-06
        %v5287 = vadd.f32 %v5286, 0.00028619796
        %v5288 = vmul.f32 %v5285, %v5287
        %v5289 = vadd.f32 %v5288, 0.0036580483
        %v5290 = vmul.f32 %v5285, %v5289
        %v5291 = vadd.f32 %v5290, 0.05243302
        %v5292 = vmul.f32 %v5285, %v5291
        %v5293 = vadd.f32 %v5292, 0.18741608
        %v5294 = vmul.f32 %v5285, %v5293
        %v5295 = vadd.f32 %v5294, 1.1283791
        %v5296 = vmul.f32 %v4277, %v5295
        %v5297 = vmul.f32 %v5285, 3.8918573e-05
        %v5298 = vadd.f32 %v5297, 0.001143296
        %v5299 = vmul.f32 %v5285, %v5298
        %v5300 = vadd.f32 %v5299, 0.014752088
        %v5301 = vmul.f32 %v5285, %v5300
        %v5302 = vadd.f32 %v5301, 0.112945676
        %v5303 = vmul.f32 %v5285, %v5302
        %v5304 = vadd.f32 %v5303, 0.4994258
        %v5305 = vmul.f32 %v5285, %v5304
        %v5306 = vadd.f32 %v5305, 1.0
        %v5307 = vrcp.pop %v5306
        %v5308 = vmul.f32 %v5306, %v5307
        %v5309 = vsub.f32 1.0, %v5308
        %v5310 = vmul.f32 %v5307, %v5309
        %v5311 = vadd.f32 %v5307, %v5310
        %vm5312 = vweird.f32 %v5306
        %vm5313 = vweird.f32 %v5307
        %vm5314 = vmor %vm5312, %vm5313
        %v5315 = vsel %vm5314, %v5307, %v5311
        %v5316 = vand.u32 2147483647, %v5306
        %vm5317 = vcmp.eq.f32.partialorder %v5316, 8.507059e+37
        %v5318 = vand.u32 %v5306, 2147483648
        %v5319 = vor.u32 1.1754944e-38, %v5318
        %v5320 = vsel %vm5317, %v5319, %v5315
        %v5321 = vmul.f32 %v5296, %v5320
        %v5322 = vmin.f32 %v5321, 1.0
        %v5323 = vmax.f32 %v5322, -1.0
        %v5324 = vmul.f32 %v4278, %v4278
        %v5325 = vmin.f32 16.0, %v5324
        %v5326 = vmul.f32 %v5325, 2.1237322e-06
        %v5327 = vadd.f32 %v5326, 0.00028619796
        %v5328 = vmul.f32 %v5325, %v5327
        %v5329 = vadd.f32 %v5328, 0.0036580483
        %v5330 = vmul.f32 %v5325, %v5329
        %v5331 = vadd.f32 %v5330, 0.05243302
        %v5332 = vmul.f32 %v5325, %v5331
        %v5333 = vadd.f32 %v5332, 0.18741608
        %v5334 = vmul.f32 %v5325, %v5333
        %v5335 = vadd.f32 %v5334, 1.1283791
        %v5336 = vmul.f32 %v4278, %v5335
        %v5337 = vmul.f32 %v5325, 3.8918573e-05
        %v5338 = vadd.f32 %v5337, 0.001143296
        %v5339 = vmul.f32 %v5325, %v5338
        %v5340 = vadd.f32 %v5339, 0.014752088
        %v5341 = vmul.f32 %v5325, %v5340
        %v5342 = vadd.f32 %v5341, 0.112945676
        %v5343 = vmul.f32 %v5325, %v5342
        %v5344 = vadd.f32 %v5343, 0.4994258
        %v5345 = vmul.f32 %v5325, %v5344
        %v5346 = vadd.f32 %v5345, 1.0
        %v5347 = vrcp.pop %v5346
        %v5348 = vmul.f32 %v5346, %v5347
        %v5349 = vsub.f32 1.0, %v5348
        %v5350 = vmul.f32 %v5347, %v5349
        %v5351 = vadd.f32 %v5347, %v5350
        %vm5352 = vweird.f32 %v5346
        %vm5353 = vweird.f32 %v5347
        %vm5354 = vmor %vm5352, %vm5353
        %v5355 = vsel %vm5354, %v5347, %v5351
        %v5356 = vand.u32 2147483647, %v5346
        %vm5357 = vcmp.eq.f32.partialorder %v5356, 8.507059e+37
        %v5358 = vand.u32 %v5346, 2147483648
        %v5359 = vor.u32 1.1754944e-38, %v5358
        %v5360 = vsel %vm5357, %v5359, %v5355
        %v5361 = vmul.f32 %v5336, %v5360
        %v5362 = vmin.f32 %v5361, 1.0
        %v5363 = vmax.f32 %v5362, -1.0
        %v5364 = vmul.f32 %v4279, %v4279
        %v5365 = vmin.f32 16.0, %v5364
        %v5366 = vmul.f32 %v5365, 2.1237322e-06
        %v5367 = vadd.f32 %v5366, 0.00028619796
        %v5368 = vmul.f32 %v5365, %v5367
        %v5369 = vadd.f32 %v5368, 0.0036580483
        %v5370 = vmul.f32 %v5365, %v5369
        %v5371 = vadd.f32 %v5370, 0.05243302
        %v5372 = vmul.f32 %v5365, %v5371
        %v5373 = vadd.f32 %v5372, 0.18741608
        %v5374 = vmul.f32 %v5365, %v5373
        %v5375 = vadd.f32 %v5374, 1.1283791
        %v5376 = vmul.f32 %v4279, %v5375
        %v5377 = vmul.f32 %v5365, 3.8918573e-05
        %v5378 = vadd.f32 %v5377, 0.001143296
        %v5379 = vmul.f32 %v5365, %v5378
        %v5380 = vadd.f32 %v5379, 0.014752088
        %v5381 = vmul.f32 %v5365, %v5380
        %v5382 = vadd.f32 %v5381, 0.112945676
        %v5383 = vmul.f32 %v5365, %v5382
        %v5384 = vadd.f32 %v5383, 0.4994258
        %v5385 = vmul.f32 %v5365, %v5384
        %v5386 = vadd.f32 %v5385, 1.0
        %v5387 = vrcp.pop %v5386
        %v5388 = vmul.f32 %v5386, %v5387
        %v5389 = vsub.f32 1.0, %v5388
        %v5390 = vmul.f32 %v5387, %v5389
        %v5391 = vadd.f32 %v5387, %v5390
        %vm5392 = vweird.f32 %v5386
        %vm5393 = vweird.f32 %v5387
        %vm5394 = vmor %vm5392, %vm5393
        %v5395 = vsel %vm5394, %v5387, %v5391
        %v5396 = vand.u32 2147483647, %v5386
        %vm5397 = vcmp.eq.f32.partialorder %v5396, 8.507059e+37
        %v5398 = vand.u32 %v5386, 2147483648
        %v5399 = vor.u32 1.1754944e-38, %v5398
        %v5400 = vsel %vm5397, %v5399, %v5395
        %v5401 = vmul.f32 %v5376, %v5400
        %v5402 = vmin.f32 %v5401, 1.0
        %v5403 = vmax.f32 %v5402, -1.0
        %v5404 = vmul.f32 %v4280, %v4280
        %v5405 = vmin.f32 16.0, %v5404
        %v5406 = vmul.f32 %v5405, 2.1237322e-06
        %v5407 = vadd.f32 %v5406, 0.00028619796
        %v5408 = vmul.f32 %v5405, %v5407
        %v5409 = vadd.f32 %v5408, 0.0036580483
        %v5410 = vmul.f32 %v5405, %v5409
        %v5411 = vadd.f32 %v5410, 0.05243302
        %v5412 = vmul.f32 %v5405, %v5411
        %v5413 = vadd.f32 %v5412, 0.18741608
        %v5414 = vmul.f32 %v5405, %v5413
        %v5415 = vadd.f32 %v5414, 1.1283791
        %v5416 = vmul.f32 %v4280, %v5415
        %v5417 = vmul.f32 %v5405, 3.8918573e-05
        %v5418 = vadd.f32 %v5417, 0.001143296
        %v5419 = vmul.f32 %v5405, %v5418
        %v5420 = vadd.f32 %v5419, 0.014752088
        %v5421 = vmul.f32 %v5405, %v5420
        %v5422 = vadd.f32 %v5421, 0.112945676
        %v5423 = vmul.f32 %v5405, %v5422
        %v5424 = vadd.f32 %v5423, 0.4994258
        %v5425 = vmul.f32 %v5405, %v5424
        %v5426 = vadd.f32 %v5425, 1.0
        %v5427 = vrcp.pop %v5426
        %v5428 = vmul.f32 %v5426, %v5427
        %v5429 = vsub.f32 1.0, %v5428
        %v5430 = vmul.f32 %v5427, %v5429
        %v5431 = vadd.f32 %v5427, %v5430
        %vm5432 = vweird.f32 %v5426
        %vm5433 = vweird.f32 %v5427
        %vm5434 = vmor %vm5432, %vm5433
        %v5435 = vsel %vm5434, %v5427, %v5431
        %v5436 = vand.u32 2147483647, %v5426
        %vm5437 = vcmp.eq.f32.partialorder %v5436, 8.507059e+37
        %v5438 = vand.u32 %v5426, 2147483648
        %v5439 = vor.u32 1.1754944e-38, %v5438
        %v5440 = vsel %vm5437, %v5439, %v5435
        %v5441 = vmul.f32 %v5416, %v5440
        %v5442 = vmin.f32 %v5441, 1.0
        %v5443 = vmax.f32 %v5442, -1.0
        %v5444 = vmul.f32 %v4281, %v4281
        %v5445 = vmin.f32 16.0, %v5444
        %v5446 = vmul.f32 %v5445, 2.1237322e-06
        %v5447 = vadd.f32 %v5446, 0.00028619796
        %v5448 = vmul.f32 %v5445, %v5447
        %v5449 = vadd.f32 %v5448, 0.0036580483
        %v5450 = vmul.f32 %v5445, %v5449
        %v5451 = vadd.f32 %v5450, 0.05243302
        %v5452 = vmul.f32 %v5445, %v5451
        %v5453 = vadd.f32 %v5452, 0.18741608
        %v5454 = vmul.f32 %v5445, %v5453
        %v5455 = vadd.f32 %v5454, 1.1283791
        %v5456 = vmul.f32 %v4281, %v5455
        %v5457 = vmul.f32 %v5445, 3.8918573e-05
        %v5458 = vadd.f32 %v5457, 0.001143296
        %v5459 = vmul.f32 %v5445, %v5458
        %v5460 = vadd.f32 %v5459, 0.014752088
        %v5461 = vmul.f32 %v5445, %v5460
        %v5462 = vadd.f32 %v5461, 0.112945676
        %v5463 = vmul.f32 %v5445, %v5462
        %v5464 = vadd.f32 %v5463, 0.4994258
        %v5465 = vmul.f32 %v5445, %v5464
        %v5466 = vadd.f32 %v5465, 1.0
        %v5467 = vrcp.pop %v5466
        %v5468 = vmul.f32 %v5466, %v5467
        %v5469 = vsub.f32 1.0, %v5468
        %v5470 = vmul.f32 %v5467, %v5469
        %v5471 = vadd.f32 %v5467, %v5470
        %vm5472 = vweird.f32 %v5466
        %vm5473 = vweird.f32 %v5467
        %vm5474 = vmor %vm5472, %vm5473
        %v5475 = vsel %vm5474, %v5467, %v5471
        %v5476 = vand.u32 2147483647, %v5466
        %vm5477 = vcmp.eq.f32.partialorder %v5476, 8.507059e+37
        %v5478 = vand.u32 %v5466, 2147483648
        %v5479 = vor.u32 1.1754944e-38, %v5478
        %v5480 = vsel %vm5477, %v5479, %v5475
        %v5481 = vmul.f32 %v5456, %v5480
        %v5482 = vmin.f32 %v5481, 1.0
        %v5483 = vmax.f32 %v5482, -1.0
        %v5484 = vmul.f32 %v4282, %v4282
        %v5485 = vmin.f32 16.0, %v5484
        %v5486 = vmul.f32 %v5485, 2.1237322e-06
        %v5487 = vadd.f32 %v5486, 0.00028619796
        %v5488 = vmul.f32 %v5485, %v5487
        %v5489 = vadd.f32 %v5488, 0.0036580483
        %v5490 = vmul.f32 %v5485, %v5489
        %v5491 = vadd.f32 %v5490, 0.05243302
        %v5492 = vmul.f32 %v5485, %v5491
        %v5493 = vadd.f32 %v5492, 0.18741608
        %v5494 = vmul.f32 %v5485, %v5493
        %v5495 = vadd.f32 %v5494, 1.1283791
        %v5496 = vmul.f32 %v4282, %v5495
        %v5497 = vmul.f32 %v5485, 3.8918573e-05
        %v5498 = vadd.f32 %v5497, 0.001143296
        %v5499 = vmul.f32 %v5485, %v5498
        %v5500 = vadd.f32 %v5499, 0.014752088
        %v5501 = vmul.f32 %v5485, %v5500
        %v5502 = vadd.f32 %v5501, 0.112945676
        %v5503 = vmul.f32 %v5485, %v5502
        %v5504 = vadd.f32 %v5503, 0.4994258
        %v5505 = vmul.f32 %v5485, %v5504
        %v5506 = vadd.f32 %v5505, 1.0
        %v5507 = vrcp.pop %v5506
        %v5508 = vmul.f32 %v5506, %v5507
        %v5509 = vsub.f32 1.0, %v5508
        %v5510 = vmul.f32 %v5507, %v5509
        %v5511 = vadd.f32 %v5507, %v5510
        %vm5512 = vweird.f32 %v5506
        %vm5513 = vweird.f32 %v5507
        %vm5514 = vmor %vm5512, %vm5513
        %v5515 = vsel %vm5514, %v5507, %v5511
        %v5516 = vand.u32 2147483647, %v5506
        %vm5517 = vcmp.eq.f32.partialorder %v5516, 8.507059e+37
        %v5518 = vand.u32 %v5506, 2147483648
        %v5519 = vor.u32 1.1754944e-38, %v5518
        %v5520 = vsel %vm5517, %v5519, %v5515
        %v5521 = vmul.f32 %v5496, %v5520
        %v5522 = vmin.f32 %v5521, 1.0
        %v5523 = vmax.f32 %v5522, -1.0
        %v5524 = vmul.f32 %v4283, %v4283
        %v5525 = vmin.f32 16.0, %v5524
        %v5526 = vmul.f32 %v5525, 2.1237322e-06
        %v5527 = vadd.f32 %v5526, 0.00028619796
        %v5528 = vmul.f32 %v5525, %v5527
        %v5529 = vadd.f32 %v5528, 0.0036580483
        %v5530 = vmul.f32 %v5525, %v5529
        %v5531 = vadd.f32 %v5530, 0.05243302
        %v5532 = vmul.f32 %v5525, %v5531
        %v5533 = vadd.f32 %v5532, 0.18741608
        %v5534 = vmul.f32 %v5525, %v5533
        %v5535 = vadd.f32 %v5534, 1.1283791
        %v5536 = vmul.f32 %v4283, %v5535
        %v5537 = vmul.f32 %v5525, 3.8918573e-05
        %v5538 = vadd.f32 %v5537, 0.001143296
        %v5539 = vmul.f32 %v5525, %v5538
        %v5540 = vadd.f32 %v5539, 0.014752088
        %v5541 = vmul.f32 %v5525, %v5540
        %v5542 = vadd.f32 %v5541, 0.112945676
        %v5543 = vmul.f32 %v5525, %v5542
        %v5544 = vadd.f32 %v5543, 0.4994258
        %v5545 = vmul.f32 %v5525, %v5544
        %v5546 = vadd.f32 %v5545, 1.0
        %v5547 = vrcp.pop %v5546
        %v5548 = vmul.f32 %v5546, %v5547
        %v5549 = vsub.f32 1.0, %v5548
        %v5550 = vmul.f32 %v5547, %v5549
        %v5551 = vadd.f32 %v5547, %v5550
        %vm5552 = vweird.f32 %v5546
        %vm5553 = vweird.f32 %v5547
        %vm5554 = vmor %vm5552, %vm5553
        %v5555 = vsel %vm5554, %v5547, %v5551
        %v5556 = vand.u32 2147483647, %v5546
        %vm5557 = vcmp.eq.f32.partialorder %v5556, 8.507059e+37
        %v5558 = vand.u32 %v5546, 2147483648
        %v5559 = vor.u32 1.1754944e-38, %v5558
        %v5560 = vsel %vm5557, %v5559, %v5555
        %v5561 = vmul.f32 %v5536, %v5560
        %v5562 = vmin.f32 %v5561, 1.0
        %v5563 = vmax.f32 %v5562, -1.0
        %v5564 = vadd.f32 %v4323, 1.0
        %v5565 = vadd.f32 %v4363, 1.0
        %v5566 = vadd.f32 %v4403, 1.0
        %v5567 = vadd.f32 %v4443, 1.0
        %v5568 = vadd.f32 %v4483, 1.0
        %v5569 = vadd.f32 %v4523, 1.0
        %v5570 = vadd.f32 %v4563, 1.0
        %v5571 = vadd.f32 %v4603, 1.0
        %v5572 = vadd.f32 %v4643, 1.0
        %v5573 = vadd.f32 %v4683, 1.0
        %v5574 = vadd.f32 %v4723, 1.0
        %v5575 = vadd.f32 %v4763, 1.0
        %v5576 = vadd.f32 %v4803, 1.0
        %v5577 = vadd.f32 %v4843, 1.0
        %v5578 = vadd.f32 %v4883, 1.0
        %v5579 = vadd.f32 %v4923, 1.0
        %v5580 = vadd.f32 %v4963, 1.0
        %v5581 = vadd.f32 %v5003, 1.0
        %v5582 = vadd.f32 %v5043, 1.0
        %v5583 = vadd.f32 %v5083, 1.0
        %v5584 = vadd.f32 %v5123, 1.0
        %v5585 = vadd.f32 %v5163, 1.0
        %v5586 = vadd.f32 %v5203, 1.0
        %v5587 = vadd.f32 %v5243, 1.0
        %v5588 = vadd.f32 %v5283, 1.0
        %v5589 = vadd.f32 %v5323, 1.0
        %v5590 = vadd.f32 %v5363, 1.0
        %v5591 = vadd.f32 %v5403, 1.0
        %v5592 = vadd.f32 %v5443, 1.0
        %v5593 = vadd.f32 %v5483, 1.0
        %v5594 = vadd.f32 %v5523, 1.0
        %v5595 = vadd.f32 %v5563, 1.0
        %v5596 = vmul.f32 %v4220, %v5564
        %v5597 = vmul.f32 %v4221, %v5565
        %v5598 = vmul.f32 %v4222, %v5566
        %v5599 = vmul.f32 %v4223, %v5567
        %v5600 = vmul.f32 %v4224, %v5568
        %v5601 = vmul.f32 %v4225, %v5569
        %v5602 = vmul.f32 %v4226, %v5570
        %v5603 = vmul.f32 %v4227, %v5571
        %v5604 = vmul.f32 %v4228, %v5572
        %v5605 = vmul.f32 %v4229, %v5573
        %v5606 = vmul.f32 %v4230, %v5574
        %v5607 = vmul.f32 %v4231, %v5575
        %v5608 = vmul.f32 %v4232, %v5576
        %v5609 = vmul.f32 %v4233, %v5577
        %v5610 = vmul.f32 %v4234, %v5578
        %v5611 = vmul.f32 %v4235, %v5579
        %v5612 = vmul.f32 %v4236, %v5580
        %v5613 = vmul.f32 %v4237, %v5581
        %v5614 = vmul.f32 %v4238, %v5582
        %v5615 = vmul.f32 %v4239, %v5583
        %v5616 = vmul.f32 %v4240, %v5584
        %v5617 = vmul.f32 %v4241, %v5585
        %v5618 = vmul.f32 %v4242, %v5586
        %v5619 = vmul.f32 %v4243, %v5587
        %v5620 = vmul.f32 %v4244, %v5588
        %v5621 = vmul.f32 %v4245, %v5589
        %v5622 = vmul.f32 %v4246, %v5590
        %v5623 = vmul.f32 %v4247, %v5591
        %v5624 = vmul.f32 %v4248, %v5592
        %v5625 = vmul.f32 %v4249, %v5593
        %v5626 = vmul.f32 %v4250, %v5594
        %v5627 = vmul.f32 %v4251, %v5595
        %v5628 = vpack.c.bf16 %v5598, %v5596
        %v5629 = vpack.c.bf16 %v5599, %v5597
        %v5630 = vpack.c.bf16 %v5602, %v5600
        %v5631 = vpack.c.bf16 %v5603, %v5601
        %v5632 = vpack.c.bf16 %v5606, %v5604
        %v5633 = vpack.c.bf16 %v5607, %v5605
        %v5634 = vpack.c.bf16 %v5610, %v5608
        %v5635 = vpack.c.bf16 %v5611, %v5609
        %v5636 = vpack.c.bf16 %v5614, %v5612
        %v5637 = vpack.c.bf16 %v5615, %v5613
        %v5638 = vpack.c.bf16 %v5618, %v5616
        %v5639 = vpack.c.bf16 %v5619, %v5617
        %v5640 = vpack.c.bf16 %v5622, %v5620
        %v5641 = vpack.c.bf16 %v5623, %v5621
        %v5642 = vpack.c.bf16 %v5626, %v5624
        %v5643 = vpack.c.bf16 %v5627, %v5625
        %v5676 = vunpack.c.l.b16 %v4005
        %v5677 = vunpack.c.l.b16 %v4006
        %v5678 = vunpack.c.l.b16 %v4007
        %v5679 = vunpack.c.l.b16 %v4008
        %v5680 = vunpack.c.l.b16 %v4009
        %v5681 = vunpack.c.l.b16 %v4010
        %v5682 = vunpack.c.l.b16 %v4011
        %v5683 = vunpack.c.l.b16 %v4012
        %v5684 = vunpack.c.l.b16 %v4013
        %v5685 = vunpack.c.l.b16 %v4014
        %v5686 = vunpack.c.l.b16 %v4015
        %v5687 = vunpack.c.l.b16 %v4016
        %v5688 = vunpack.c.l.b16 %v4017
        %v5689 = vunpack.c.l.b16 %v4018
        %v5690 = vunpack.c.l.b16 %v4019
        %v5691 = vunpack.c.l.b16 %v4020
        %v5692 = vunpack.c.l.b16 %v4021
        %v5693 = vunpack.c.l.b16 %v4022
        %v5694 = vunpack.c.l.b16 %v4023
        %v5695 = vunpack.c.l.b16 %v4024
        %v5696 = vunpack.c.l.b16 %v4025
        %v5697 = vunpack.c.l.b16 %v4026
        %v5698 = vunpack.c.l.b16 %v4027
        %v5699 = vunpack.c.l.b16 %v4028
        %v5700 = vunpack.c.l.b16 %v4029
        %v5701 = vunpack.c.l.b16 %v4030
        %v5702 = vunpack.c.l.b16 %v4031
        %v5703 = vunpack.c.l.b16 %v4032
        %v5704 = vunpack.c.l.b16 %v4033
        %v5705 = vunpack.c.l.b16 %v4034
        %v5706 = vunpack.c.l.b16 %v4035
        %v5707 = vunpack.c.l.b16 %v4036
        %v5708 = vpack.c.b16 %v5677, %v5676
        %v5709 = vpack.c.b16 %v5679, %v5678
        %v5710 = vpack.c.b16 %v5681, %v5680
        %v5711 = vpack.c.b16 %v5683, %v5682
        %v5712 = vpack.c.b16 %v5685, %v5684
        %v5713 = vpack.c.b16 %v5687, %v5686
        %v5714 = vpack.c.b16 %v5689, %v5688
        %v5715 = vpack.c.b16 %v5691, %v5690
        %v5716 = vpack.c.b16 %v5693, %v5692
        %v5717 = vpack.c.b16 %v5695, %v5694
        %v5718 = vpack.c.b16 %v5697, %v5696
        %v5719 = vpack.c.b16 %v5699, %v5698
        %v5720 = vpack.c.b16 %v5701, %v5700
        %v5721 = vpack.c.b16 %v5703, %v5702
        %v5722 = vpack.c.b16 %v5705, %v5704
        %v5723 = vpack.c.b16 %v5707, %v5706
        %5740 = vmatpush.bf16.msra.mxu0 %v5715
        %5741 = vmatpush.bf16.msra.mxu0 %v5714
        %5742 = vmatpush.bf16.msra.mxu0 %v5713
        %5743 = vmatpush.bf16.msra.mxu0 %v5712
        %5744 = vmatpush.bf16.msra.mxu0 %v5711
        %5745 = vmatpush.bf16.msra.mxu0 %v5710
        %5746 = vmatpush.bf16.msra.mxu0 %v5709
        %5747 = vmatpush.bf16.msra.mxu0 %v5708
        %5748 = vmatmul.bf16.gmra.mxu0 %v5628
        %v5749 = vpop.f32.mrf.mxu0
        %v5750 = vadd.f32 0.0, %v5749
        %v5751 = vpop.f32.mrf.mxu0
        %v5752 = vadd.f32 0.0, %v5751
        %5753 = vmatmul.bf16.gmra.mxu0 %v5630
        %v5754 = vpop.f32.mrf.mxu0
        %v5755 = vadd.f32 0.0, %v5754
        %v5756 = vpop.f32.mrf.mxu0
        %v5757 = vadd.f32 0.0, %v5756
        %5758 = vmatmul.bf16.gmra.mxu0 %v5632
        %v5759 = vpop.f32.mrf.mxu0
        %v5760 = vadd.f32 0.0, %v5759
        %v5761 = vpop.f32.mrf.mxu0
        %v5762 = vadd.f32 0.0, %v5761
        %5763 = vmatmul.bf16.gmra.mxu0 %v5634
        %v5764 = vpop.f32.mrf.mxu0
        %v5765 = vadd.f32 0.0, %v5764
        %v5766 = vpop.f32.mrf.mxu0
        %v5767 = vadd.f32 0.0, %v5766
        %5768 = vmatmul.bf16.gmra.mxu0 %v5636
        %v5769 = vpop.f32.mrf.mxu0
        %v5770 = vadd.f32 0.0, %v5769
        %v5771 = vpop.f32.mrf.mxu0
        %v5772 = vadd.f32 0.0, %v5771
        %5773 = vmatmul.bf16.gmra.mxu0 %v5638
        %v5774 = vpop.f32.mrf.mxu0
        %v5775 = vadd.f32 0.0, %v5774
        %v5776 = vpop.f32.mrf.mxu0
        %v5777 = vadd.f32 0.0, %v5776
        %5778 = vmatmul.bf16.gmra.mxu0 %v5640
        %v5779 = vpop.f32.mrf.mxu0
        %v5780 = vadd.f32 0.0, %v5779
        %v5781 = vpop.f32.mrf.mxu0
        %v5782 = vadd.f32 0.0, %v5781
        %5783 = vmatmul.bf16.gmra.mxu0 %v5642
        %v5784 = vpop.f32.mrf.mxu0
        %v5785 = vadd.f32 0.0, %v5784
        %v5786 = vpop.f32.mrf.mxu0
        %v5787 = vadd.f32 0.0, %v5786
        %5788 = vdwg.mxu0
        %5789 = vmatpush.bf16.msra.mxu0 %v5723
        %5790 = vmatpush.bf16.msra.mxu0 %v5722
        %5791 = vmatpush.bf16.msra.mxu0 %v5721
        %5792 = vmatpush.bf16.msra.mxu0 %v5720
        %5793 = vmatpush.bf16.msra.mxu0 %v5719
        %5794 = vmatpush.bf16.msra.mxu0 %v5718
        %5795 = vmatpush.bf16.msra.mxu0 %v5717
        %5796 = vmatpush.bf16.msra.mxu0 %v5716
        %5797 = vmatmul.bf16.gmra.mxu0 %v5629
        %v5798 = vpop.f32.mrf.mxu0
        %v5799 = vadd.f32 %v5750, %v5798
        %v5800 = vpop.f32.mrf.mxu0
        %v5801 = vadd.f32 %v5752, %v5800
        %5802 = vmatmul.bf16.gmra.mxu0 %v5631
        %v5803 = vpop.f32.mrf.mxu0
        %v5804 = vadd.f32 %v5755, %v5803
        %v5805 = vpop.f32.mrf.mxu0
        %v5806 = vadd.f32 %v5757, %v5805
        %5807 = vmatmul.bf16.gmra.mxu0 %v5633
        %v5808 = vpop.f32.mrf.mxu0
        %v5809 = vadd.f32 %v5760, %v5808
        %v5810 = vpop.f32.mrf.mxu0
        %v5811 = vadd.f32 %v5762, %v5810
        %5812 = vmatmul.bf16.gmra.mxu0 %v5635
        %v5813 = vpop.f32.mrf.mxu0
        %v5814 = vadd.f32 %v5765, %v5813
        %v5815 = vpop.f32.mrf.mxu0
        %v5816 = vadd.f32 %v5767, %v5815
        %5817 = vmatmul.bf16.gmra.mxu0 %v5637
        %v5818 = vpop.f32.mrf.mxu0
        %v5819 = vadd.f32 %v5770, %v5818
        %v5820 = vpop.f32.mrf.mxu0
        %v5821 = vadd.f32 %v5772, %v5820
        %5822 = vmatmul.bf16.gmra.mxu0 %v5639
        %v5823 = vpop.f32.mrf.mxu0
        %v5824 = vadd.f32 %v5775, %v5823
        %v5825 = vpop.f32.mrf.mxu0
        %v5826 = vadd.f32 %v5777, %v5825
        %5827 = vmatmul.bf16.gmra.mxu0 %v5641
        %v5828 = vpop.f32.mrf.mxu0
        %v5829 = vadd.f32 %v5780, %v5828
        %v5830 = vpop.f32.mrf.mxu0
        %v5831 = vadd.f32 %v5782, %v5830
        %5832 = vmatmul.bf16.gmra.mxu0 %v5643
        %v5833 = vpop.f32.mrf.mxu0
        %v5834 = vadd.f32 %v5785, %v5833
        %v5835 = vpop.f32.mrf.mxu0
        %v5836 = vadd.f32 %v5787, %v5835
        %5837 = vdwg.mxu0
        %v5870 = vunpack.c.l.b16 %v2349
        %v5871 = vunpack.c.l.b16 %v2350
        %v5872 = vunpack.c.l.b16 %v2351
        %v5873 = vunpack.c.l.b16 %v2352
        %v5874 = vunpack.c.l.b16 %v2353
        %v5875 = vunpack.c.l.b16 %v2354
        %v5876 = vunpack.c.l.b16 %v2355
        %v5877 = vunpack.c.l.b16 %v2356
        %v5878 = vunpack.c.l.b16 %v2357
        %v5879 = vunpack.c.l.b16 %v2358
        %v5880 = vunpack.c.l.b16 %v2359
        %v5881 = vunpack.c.l.b16 %v2360
        %v5882 = vunpack.c.l.b16 %v2361
        %v5883 = vunpack.c.l.b16 %v2362
        %v5884 = vunpack.c.l.b16 %v2363
        %v5885 = vunpack.c.l.b16 %v2364
        %v5886 = vunpack.c.l.b16 %v2365
        %v5887 = vunpack.c.l.b16 %v2366
        %v5888 = vunpack.c.l.b16 %v2367
        %v5889 = vunpack.c.l.b16 %v2368
        %v5890 = vunpack.c.l.b16 %v2369
        %v5891 = vunpack.c.l.b16 %v2370
        %v5892 = vunpack.c.l.b16 %v2371
        %v5893 = vunpack.c.l.b16 %v2372
        %v5894 = vunpack.c.l.b16 %v2373
        %v5895 = vunpack.c.l.b16 %v2374
        %v5896 = vunpack.c.l.b16 %v2375
        %v5897 = vunpack.c.l.b16 %v2376
        %v5898 = vunpack.c.l.b16 %v2377
        %v5899 = vunpack.c.l.b16 %v2378
        %v5900 = vunpack.c.l.b16 %v2379
        %v5901 = vunpack.c.l.b16 %v2380
        %v5902 = vpack.c.b16 %v5871, %v5870
        %v5903 = vpack.c.b16 %v5873, %v5872
        %v5904 = vpack.c.b16 %v5875, %v5874
        %v5905 = vpack.c.b16 %v5877, %v5876
        %v5906 = vpack.c.b16 %v5879, %v5878
        %v5907 = vpack.c.b16 %v5881, %v5880
        %v5908 = vpack.c.b16 %v5883, %v5882
        %v5909 = vpack.c.b16 %v5885, %v5884
        %v5910 = vpack.c.b16 %v5887, %v5886
        %v5911 = vpack.c.b16 %v5889, %v5888
        %v5912 = vpack.c.b16 %v5891, %v5890
        %v5913 = vpack.c.b16 %v5893, %v5892
        %v5914 = vpack.c.b16 %v5895, %v5894
        %v5915 = vpack.c.b16 %v5897, %v5896
        %v5916 = vpack.c.b16 %v5899, %v5898
        %v5917 = vpack.c.b16 %v5901, %v5900
        %5934 = vmatpush.bf16.msra.mxu0 %v5909
        %5935 = vmatpush.bf16.msra.mxu0 %v5908
        %5936 = vmatpush.bf16.msra.mxu0 %v5907
        %5937 = vmatpush.bf16.msra.mxu0 %v5906
        %5938 = vmatpush.bf16.msra.mxu0 %v5905
        %5939 = vmatpush.bf16.msra.mxu0 %v5904
        %5940 = vmatpush.bf16.msra.mxu0 %v5903
        %5941 = vmatpush.bf16.msra.mxu0 %v5902
        %5942 = vmatmul.bf16.gmra.mxu0 %v3972
        %v5943 = vpop.f32.mrf.mxu0
        %v5944 = vadd.f32 %v5799, %v5943
        %v5945 = vpop.f32.mrf.mxu0
        %v5946 = vadd.f32 %v5801, %v5945
        %5947 = vmatmul.bf16.gmra.mxu0 %v3974
        %v5948 = vpop.f32.mrf.mxu0
        %v5949 = vadd.f32 %v5804, %v5948
        %v5950 = vpop.f32.mrf.mxu0
        %v5951 = vadd.f32 %v5806, %v5950
        %5952 = vmatmul.bf16.gmra.mxu0 %v3976
        %v5953 = vpop.f32.mrf.mxu0
        %v5954 = vadd.f32 %v5809, %v5953
        %v5955 = vpop.f32.mrf.mxu0
        %v5956 = vadd.f32 %v5811, %v5955
        %5957 = vmatmul.bf16.gmra.mxu0 %v3978
        %v5958 = vpop.f32.mrf.mxu0
        %v5959 = vadd.f32 %v5814, %v5958
        %v5960 = vpop.f32.mrf.mxu0
        %v5961 = vadd.f32 %v5816, %v5960
        %5962 = vmatmul.bf16.gmra.mxu0 %v3980
        %v5963 = vpop.f32.mrf.mxu0
        %v5964 = vadd.f32 %v5819, %v5963
        %v5965 = vpop.f32.mrf.mxu0
        %v5966 = vadd.f32 %v5821, %v5965
        %5967 = vmatmul.bf16.gmra.mxu0 %v3982
        %v5968 = vpop.f32.mrf.mxu0
        %v5969 = vadd.f32 %v5824, %v5968
        %v5970 = vpop.f32.mrf.mxu0
        %v5971 = vadd.f32 %v5826, %v5970
        %5972 = vmatmul.bf16.gmra.mxu0 %v3984
        %v5973 = vpop.f32.mrf.mxu0
        %v5974 = vadd.f32 %v5829, %v5973
        %v5975 = vpop.f32.mrf.mxu0
        %v5976 = vadd.f32 %v5831, %v5975
        %5977 = vmatmul.bf16.gmra.mxu0 %v3986
        %v5978 = vpop.f32.mrf.mxu0
        %v5979 = vadd.f32 %v5834, %v5978
        %v5980 = vpop.f32.mrf.mxu0
        %v5981 = vadd.f32 %v5836, %v5980
        %5982 = vdwg.mxu0
        %5983 = vmatpush.bf16.msra.mxu0 %v5917
        %5984 = vmatpush.bf16.msra.mxu0 %v5916
        %5985 = vmatpush.bf16.msra.mxu0 %v5915
        %5986 = vmatpush.bf16.msra.mxu0 %v5914
        %5987 = vmatpush.bf16.msra.mxu0 %v5913
        %5988 = vmatpush.bf16.msra.mxu0 %v5912
        %5989 = vmatpush.bf16.msra.mxu0 %v5911
        %5990 = vmatpush.bf16.msra.mxu0 %v5910
        %5991 = vmatmul.bf16.gmra.mxu0 %v3973
        %v5992 = vpop.f32.mrf.mxu0
        %v5993 = vadd.f32 %v5944, %v5992
        %v5994 = vpop.f32.mrf.mxu0
        %v5995 = vadd.f32 %v5946, %v5994
        %5996 = vmatmul.bf16.gmra.mxu0 %v3975
        %v5997 = vpop.f32.mrf.mxu0
        %v5998 = vadd.f32 %v5949, %v5997
        %v5999 = vpop.f32.mrf.mxu0
        %v6000 = vadd.f32 %v5951, %v5999
        %6001 = vmatmul.bf16.gmra.mxu0 %v3977
        %v6002 = vpop.f32.mrf.mxu0
        %v6003 = vadd.f32 %v5954, %v6002
        %v6004 = vpop.f32.mrf.mxu0
        %v6005 = vadd.f32 %v5956, %v6004
        %6006 = vmatmul.bf16.gmra.mxu0 %v3979
        %v6007 = vpop.f32.mrf.mxu0
        %v6008 = vadd.f32 %v5959, %v6007
        %v6009 = vpop.f32.mrf.mxu0
        %v6010 = vadd.f32 %v5961, %v6009
        %6011 = vmatmul.bf16.gmra.mxu0 %v3981
        %v6012 = vpop.f32.mrf.mxu0
        %v6013 = vadd.f32 %v5964, %v6012
        %v6014 = vpop.f32.mrf.mxu0
        %v6015 = vadd.f32 %v5966, %v6014
        %6016 = vmatmul.bf16.gmra.mxu0 %v3983
        %v6017 = vpop.f32.mrf.mxu0
        %v6018 = vadd.f32 %v5969, %v6017
        %v6019 = vpop.f32.mrf.mxu0
        %v6020 = vadd.f32 %v5971, %v6019
        %6021 = vmatmul.bf16.gmra.mxu0 %v3985
        %v6022 = vpop.f32.mrf.mxu0
        %v6023 = vadd.f32 %v5974, %v6022
        %v6024 = vpop.f32.mrf.mxu0
        %v6025 = vadd.f32 %v5976, %v6024
        %6026 = vmatmul.bf16.gmra.mxu0 %v3987
        %v6027 = vpop.f32.mrf.mxu0
        %v6028 = vadd.f32 %v5979, %v6027
        %v6029 = vpop.f32.mrf.mxu0
        %v6030 = vadd.f32 %v5981, %v6029
        %6031 = vdwg.mxu0
        %v6032 = vld [vmem:[%s16] sm:$0x1]
        %v6034 = vperm.slane %v6032, 0
        %v6036 = vadd.f32 %v5993, %v6034
        %v6037 = vadd.f32 %v5995, %v6034
        %v6038 = vadd.f32 %v5998, %v6034
        %v6039 = vadd.f32 %v6000, %v6034
        %v6040 = vadd.f32 %v6003, %v6034
        %v6041 = vadd.f32 %v6005, %v6034
        %v6042 = vadd.f32 %v6008, %v6034
        %v6043 = vadd.f32 %v6010, %v6034
        %v6044 = vadd.f32 %v6013, %v6034
        %v6045 = vadd.f32 %v6015, %v6034
        %v6046 = vadd.f32 %v6018, %v6034
        %v6047 = vadd.f32 %v6020, %v6034
        %v6048 = vadd.f32 %v6023, %v6034
        %v6049 = vadd.f32 %v6025, %v6034
        %v6050 = vadd.f32 %v6028, %v6034
        %v6051 = vadd.f32 %v6030, %v6034
        %v6052 = vadd.f32 %v2308, %v6036
        %v6053 = vadd.f32 %v2309, %v6037
        %v6054 = vadd.f32 %v2310, %v6038
        %v6055 = vadd.f32 %v2311, %v6039
        %v6056 = vadd.f32 %v2312, %v6040
        %v6057 = vadd.f32 %v2313, %v6041
        %v6058 = vadd.f32 %v2314, %v6042
        %v6059 = vadd.f32 %v2315, %v6043
        %v6060 = vadd.f32 %v2316, %v6044
        %v6061 = vadd.f32 %v2317, %v6045
        %v6062 = vadd.f32 %v2318, %v6046
        %v6063 = vadd.f32 %v2319, %v6047
        %v6064 = vadd.f32 %v2320, %v6048
        %v6065 = vadd.f32 %v2321, %v6049
        %v6066 = vadd.f32 %v2322, %v6050
        %v6067 = vadd.f32 %v2323, %v6051
        %v6068 = vld [vmem:[%s17] sm:$0x1]
        %v6069 = vld [vmem:[%s18] sm:$0x1]
        %6070 = vadd.xlane.f32.xlu0 %v6052
        %v6071 = vpop.xlane.xlu0 %6070
        %6072 = vadd.xlane.f32.xlu0 %v6053
        %v6073 = vpop.xlane.xlu0 %6072
        %6074 = vadd.xlane.f32.xlu0 %v6054
        %v6075 = vpop.xlane.xlu0 %6074
        %6076 = vadd.xlane.f32.xlu0 %v6055
        %v6077 = vpop.xlane.xlu0 %6076
        %6078 = vadd.xlane.f32.xlu0 %v6056
        %v6079 = vpop.xlane.xlu0 %6078
        %6080 = vadd.xlane.f32.xlu0 %v6057
        %v6081 = vpop.xlane.xlu0 %6080
        %6082 = vadd.xlane.f32.xlu0 %v6058
        %v6083 = vpop.xlane.xlu0 %6082
        %6084 = vadd.xlane.f32.xlu0 %v6059
        %v6085 = vpop.xlane.xlu0 %6084
        %6086 = vadd.xlane.f32.xlu0 %v6060
        %v6087 = vpop.xlane.xlu0 %6086
        %6088 = vadd.xlane.f32.xlu0 %v6061
        %v6089 = vpop.xlane.xlu0 %6088
        %6090 = vadd.xlane.f32.xlu0 %v6062
        %v6091 = vpop.xlane.xlu0 %6090
        %6092 = vadd.xlane.f32.xlu0 %v6063
        %v6093 = vpop.xlane.xlu0 %6092
        %6094 = vadd.xlane.f32.xlu0 %v6064
        %v6095 = vpop.xlane.xlu0 %6094
        %6096 = vadd.xlane.f32.xlu0 %v6065
        %v6097 = vpop.xlane.xlu0 %6096
        %6098 = vadd.xlane.f32.xlu0 %v6066
        %v6099 = vpop.xlane.xlu0 %6098
        %6100 = vadd.xlane.f32.xlu0 %v6067
        %v6101 = vpop.xlane.xlu0 %6100
        %v6102 = vmul.f32 %v6071, %v1997
        %v6103 = vmul.f32 %v6073, %v1997
        %v6104 = vmul.f32 %v6075, %v1997
        %v6105 = vmul.f32 %v6077, %v1997
        %v6106 = vmul.f32 %v6079, %v1997
        %v6107 = vmul.f32 %v6081, %v1997
        %v6108 = vmul.f32 %v6083, %v1997
        %v6109 = vmul.f32 %v6085, %v1997
        %v6110 = vmul.f32 %v6087, %v1997
        %v6111 = vmul.f32 %v6089, %v1997
        %v6112 = vmul.f32 %v6091, %v1997
        %v6113 = vmul.f32 %v6093, %v1997
        %v6114 = vmul.f32 %v6095, %v1997
        %v6115 = vmul.f32 %v6097, %v1997
        %v6116 = vmul.f32 %v6099, %v1997
        %v6117 = vmul.f32 %v6101, %v1997
        %v6118 = vsub.f32 %v6052, %v6102
        %v6119 = vsub.f32 %v6053, %v6103
        %v6120 = vsub.f32 %v6054, %v6104
        %v6121 = vsub.f32 %v6055, %v6105
        %v6122 = vsub.f32 %v6056, %v6106
        %v6123 = vsub.f32 %v6057, %v6107
        %v6124 = vsub.f32 %v6058, %v6108
        %v6125 = vsub.f32 %v6059, %v6109
        %v6126 = vsub.f32 %v6060, %v6110
        %v6127 = vsub.f32 %v6061, %v6111
        %v6128 = vsub.f32 %v6062, %v6112
        %v6129 = vsub.f32 %v6063, %v6113
        %v6130 = vsub.f32 %v6064, %v6114
        %v6131 = vsub.f32 %v6065, %v6115
        %v6132 = vsub.f32 %v6066, %v6116
        %v6133 = vsub.f32 %v6067, %v6117
        %v6134 = vmul.f32 %v6118, %v6118
        %v6135 = vmul.f32 %v6119, %v6119
        %v6136 = vmul.f32 %v6120, %v6120
        %v6137 = vmul.f32 %v6121, %v6121
        %v6138 = vmul.f32 %v6122, %v6122
        %v6139 = vmul.f32 %v6123, %v6123
        %v6140 = vmul.f32 %v6124, %v6124
        %v6141 = vmul.f32 %v6125, %v6125
        %v6142 = vmul.f32 %v6126, %v6126
        %v6143 = vmul.f32 %v6127, %v6127
        %v6144 = vmul.f32 %v6128, %v6128
        %v6145 = vmul.f32 %v6129, %v6129
        %v6146 = vmul.f32 %v6130, %v6130
        %v6147 = vmul.f32 %v6131, %v6131
        %v6148 = vmul.f32 %v6132, %v6132
        %v6149 = vmul.f32 %v6133, %v6133
        %6150 = vadd.xlane.f32.xlu0 %v6134
        %v6151 = vpop.xlane.xlu0 %6150
        %6152 = vadd.xlane.f32.xlu0 %v6135
        %v6153 = vpop.xlane.xlu0 %6152
        %6154 = vadd.xlane.f32.xlu0 %v6136
        %v6155 = vpop.xlane.xlu0 %6154
        %6156 = vadd.xlane.f32.xlu0 %v6137
        %v6157 = vpop.xlane.xlu0 %6156
        %6158 = vadd.xlane.f32.xlu0 %v6138
        %v6159 = vpop.xlane.xlu0 %6158
        %6160 = vadd.xlane.f32.xlu0 %v6139
        %v6161 = vpop.xlane.xlu0 %6160
        %6162 = vadd.xlane.f32.xlu0 %v6140
        %v6163 = vpop.xlane.xlu0 %6162
        %6164 = vadd.xlane.f32.xlu0 %v6141
        %v6165 = vpop.xlane.xlu0 %6164
        %6166 = vadd.xlane.f32.xlu0 %v6142
        %v6167 = vpop.xlane.xlu0 %6166
        %6168 = vadd.xlane.f32.xlu0 %v6143
        %v6169 = vpop.xlane.xlu0 %6168
        %6170 = vadd.xlane.f32.xlu0 %v6144
        %v6171 = vpop.xlane.xlu0 %6170
        %6172 = vadd.xlane.f32.xlu0 %v6145
        %v6173 = vpop.xlane.xlu0 %6172
        %6174 = vadd.xlane.f32.xlu0 %v6146
        %v6175 = vpop.xlane.xlu0 %6174
        %6176 = vadd.xlane.f32.xlu0 %v6147
        %v6177 = vpop.xlane.xlu0 %6176
        %6178 = vadd.xlane.f32.xlu0 %v6148
        %v6179 = vpop.xlane.xlu0 %6178
        %6180 = vadd.xlane.f32.xlu0 %v6149
        %v6181 = vpop.xlane.xlu0 %6180
        %v6182 = vmul.f32 %v6151, %v1997
        %v6183 = vmul.f32 %v6153, %v1997
        %v6184 = vmul.f32 %v6155, %v1997
        %v6185 = vmul.f32 %v6157, %v1997
        %v6186 = vmul.f32 %v6159, %v1997
        %v6187 = vmul.f32 %v6161, %v1997
        %v6188 = vmul.f32 %v6163, %v1997
        %v6189 = vmul.f32 %v6165, %v1997
        %v6190 = vmul.f32 %v6167, %v1997
        %v6191 = vmul.f32 %v6169, %v1997
        %v6192 = vmul.f32 %v6171, %v1997
        %v6193 = vmul.f32 %v6173, %v1997
        %v6194 = vmul.f32 %v6175, %v1997
        %v6195 = vmul.f32 %v6177, %v1997
        %v6196 = vmul.f32 %v6179, %v1997
        %v6197 = vmul.f32 %v6181, %v1997
        %v6198 = vadd.f32 %v6182, 1e-05
        %v6199 = vadd.f32 %v6183, 1e-05
        %v6200 = vadd.f32 %v6184, 1e-05
        %v6201 = vadd.f32 %v6185, 1e-05
        %v6202 = vadd.f32 %v6186, 1e-05
        %v6203 = vadd.f32 %v6187, 1e-05
        %v6204 = vadd.f32 %v6188, 1e-05
        %v6205 = vadd.f32 %v6189, 1e-05
        %v6206 = vadd.f32 %v6190, 1e-05
        %v6207 = vadd.f32 %v6191, 1e-05
        %v6208 = vadd.f32 %v6192, 1e-05
        %v6209 = vadd.f32 %v6193, 1e-05
        %v6210 = vadd.f32 %v6194, 1e-05
        %v6211 = vadd.f32 %v6195, 1e-05
        %v6212 = vadd.f32 %v6196, 1e-05
        %v6213 = vadd.f32 %v6197, 1e-05
        %v6214 = vrsqrt.pop %v6198
        %v6215 = vmul.f32 %v6214, %v6198
        %v6216 = vmul.f32 %v6215, %v6214
        %v6217 = vmul.f32 0.5, %v6216
        %v6218 = vsub.f32 1.5, %v6217
        %v6219 = vmul.f32 %v6214, %v6218
        %vm6220 = vweird.f32 %v6198
        %vm6221 = vweird.f32 %v6214
        %vm6222 = vmor %vm6220, %vm6221
        %v6223 = vsel %vm6222, %v6214, %v6219
        %v6224 = vrsqrt.pop %v6199
        %v6225 = vmul.f32 %v6224, %v6199
        %v6226 = vmul.f32 %v6225, %v6224
        %v6227 = vmul.f32 0.5, %v6226
        %v6228 = vsub.f32 1.5, %v6227
        %v6229 = vmul.f32 %v6224, %v6228
        %vm6230 = vweird.f32 %v6199
        %vm6231 = vweird.f32 %v6224
        %vm6232 = vmor %vm6230, %vm6231
        %v6233 = vsel %vm6232, %v6224, %v6229
        %v6234 = vrsqrt.pop %v6200
        %v6235 = vmul.f32 %v6234, %v6200
        %v6236 = vmul.f32 %v6235, %v6234
        %v6237 = vmul.f32 0.5, %v6236
        %v6238 = vsub.f32 1.5, %v6237
        %v6239 = vmul.f32 %v6234, %v6238
        %vm6240 = vweird.f32 %v6200
        %vm6241 = vweird.f32 %v6234
        %vm6242 = vmor %vm6240, %vm6241
        %v6243 = vsel %vm6242, %v6234, %v6239
        %v6244 = vrsqrt.pop %v6201
        %v6245 = vmul.f32 %v6244, %v6201
        %v6246 = vmul.f32 %v6245, %v6244
        %v6247 = vmul.f32 0.5, %v6246
        %v6248 = vsub.f32 1.5, %v6247
        %v6249 = vmul.f32 %v6244, %v6248
        %vm6250 = vweird.f32 %v6201
        %vm6251 = vweird.f32 %v6244
        %vm6252 = vmor %vm6250, %vm6251
        %v6253 = vsel %vm6252, %v6244, %v6249
        %v6254 = vrsqrt.pop %v6202
        %v6255 = vmul.f32 %v6254, %v6202
        %v6256 = vmul.f32 %v6255, %v6254
        %v6257 = vmul.f32 0.5, %v6256
        %v6258 = vsub.f32 1.5, %v6257
        %v6259 = vmul.f32 %v6254, %v6258
        %vm6260 = vweird.f32 %v6202
        %vm6261 = vweird.f32 %v6254
        %vm6262 = vmor %vm6260, %vm6261
        %v6263 = vsel %vm6262, %v6254, %v6259
        %v6264 = vrsqrt.pop %v6203
        %v6265 = vmul.f32 %v6264, %v6203
        %v6266 = vmul.f32 %v6265, %v6264
        %v6267 = vmul.f32 0.5, %v6266
        %v6268 = vsub.f32 1.5, %v6267
        %v6269 = vmul.f32 %v6264, %v6268
        %vm6270 = vweird.f32 %v6203
        %vm6271 = vweird.f32 %v6264
        %vm6272 = vmor %vm6270, %vm6271
        %v6273 = vsel %vm6272, %v6264, %v6269
        %v6274 = vrsqrt.pop %v6204
        %v6275 = vmul.f32 %v6274, %v6204
        %v6276 = vmul.f32 %v6275, %v6274
        %v6277 = vmul.f32 0.5, %v6276
        %v6278 = vsub.f32 1.5, %v6277
        %v6279 = vmul.f32 %v6274, %v6278
        %vm6280 = vweird.f32 %v6204
        %vm6281 = vweird.f32 %v6274
        %vm6282 = vmor %vm6280, %vm6281
        %v6283 = vsel %vm6282, %v6274, %v6279
        %v6284 = vrsqrt.pop %v6205
        %v6285 = vmul.f32 %v6284, %v6205
        %v6286 = vmul.f32 %v6285, %v6284
        %v6287 = vmul.f32 0.5, %v6286
        %v6288 = vsub.f32 1.5, %v6287
        %v6289 = vmul.f32 %v6284, %v6288
        %vm6290 = vweird.f32 %v6205
        %vm6291 = vweird.f32 %v6284
        %vm6292 = vmor %vm6290, %vm6291
        %v6293 = vsel %vm6292, %v6284, %v6289
        %v6294 = vrsqrt.pop %v6206
        %v6295 = vmul.f32 %v6294, %v6206
        %v6296 = vmul.f32 %v6295, %v6294
        %v6297 = vmul.f32 0.5, %v6296
        %v6298 = vsub.f32 1.5, %v6297
        %v6299 = vmul.f32 %v6294, %v6298
        %vm6300 = vweird.f32 %v6206
        %vm6301 = vweird.f32 %v6294
        %vm6302 = vmor %vm6300, %vm6301
        %v6303 = vsel %vm6302, %v6294, %v6299
        %v6304 = vrsqrt.pop %v6207
        %v6305 = vmul.f32 %v6304, %v6207
        %v6306 = vmul.f32 %v6305, %v6304
        %v6307 = vmul.f32 0.5, %v6306
        %v6308 = vsub.f32 1.5, %v6307
        %v6309 = vmul.f32 %v6304, %v6308
        %vm6310 = vweird.f32 %v6207
        %vm6311 = vweird.f32 %v6304
        %vm6312 = vmor %vm6310, %vm6311
        %v6313 = vsel %vm6312, %v6304, %v6309
        %v6314 = vrsqrt.pop %v6208
        %v6315 = vmul.f32 %v6314, %v6208
        %v6316 = vmul.f32 %v6315, %v6314
        %v6317 = vmul.f32 0.5, %v6316
        %v6318 = vsub.f32 1.5, %v6317
        %v6319 = vmul.f32 %v6314, %v6318
        %vm6320 = vweird.f32 %v6208
        %vm6321 = vweird.f32 %v6314
        %vm6322 = vmor %vm6320, %vm6321
        %v6323 = vsel %vm6322, %v6314, %v6319
        %v6324 = vrsqrt.pop %v6209
        %v6325 = vmul.f32 %v6324, %v6209
        %v6326 = vmul.f32 %v6325, %v6324
        %v6327 = vmul.f32 0.5, %v6326
        %v6328 = vsub.f32 1.5, %v6327
        %v6329 = vmul.f32 %v6324, %v6328
        %vm6330 = vweird.f32 %v6209
        %vm6331 = vweird.f32 %v6324
        %vm6332 = vmor %vm6330, %vm6331
        %v6333 = vsel %vm6332, %v6324, %v6329
        %v6334 = vrsqrt.pop %v6210
        %v6335 = vmul.f32 %v6334, %v6210
        %v6336 = vmul.f32 %v6335, %v6334
        %v6337 = vmul.f32 0.5, %v6336
        %v6338 = vsub.f32 1.5, %v6337
        %v6339 = vmul.f32 %v6334, %v6338
        %vm6340 = vweird.f32 %v6210
        %vm6341 = vweird.f32 %v6334
        %vm6342 = vmor %vm6340, %vm6341
        %v6343 = vsel %vm6342, %v6334, %v6339
        %v6344 = vrsqrt.pop %v6211
        %v6345 = vmul.f32 %v6344, %v6211
        %v6346 = vmul.f32 %v6345, %v6344
        %v6347 = vmul.f32 0.5, %v6346
        %v6348 = vsub.f32 1.5, %v6347
        %v6349 = vmul.f32 %v6344, %v6348
        %vm6350 = vweird.f32 %v6211
        %vm6351 = vweird.f32 %v6344
        %vm6352 = vmor %vm6350, %vm6351
        %v6353 = vsel %vm6352, %v6344, %v6349
        %v6354 = vrsqrt.pop %v6212
        %v6355 = vmul.f32 %v6354, %v6212
        %v6356 = vmul.f32 %v6355, %v6354
        %v6357 = vmul.f32 0.5, %v6356
        %v6358 = vsub.f32 1.5, %v6357
        %v6359 = vmul.f32 %v6354, %v6358
        %vm6360 = vweird.f32 %v6212
        %vm6361 = vweird.f32 %v6354
        %vm6362 = vmor %vm6360, %vm6361
        %v6363 = vsel %vm6362, %v6354, %v6359
        %v6364 = vrsqrt.pop %v6213
        %v6365 = vmul.f32 %v6364, %v6213
        %v6366 = vmul.f32 %v6365, %v6364
        %v6367 = vmul.f32 0.5, %v6366
        %v6368 = vsub.f32 1.5, %v6367
        %v6369 = vmul.f32 %v6364, %v6368
        %vm6370 = vweird.f32 %v6213
        %vm6371 = vweird.f32 %v6364
        %vm6372 = vmor %vm6370, %vm6371
        %v6373 = vsel %vm6372, %v6364, %v6369
        %v6374 = vmul.f32 %v6118, %v6223
        %v6375 = vmul.f32 %v6119, %v6233
        %v6376 = vmul.f32 %v6120, %v6243
        %v6377 = vmul.f32 %v6121, %v6253
        %v6378 = vmul.f32 %v6122, %v6263
        %v6379 = vmul.f32 %v6123, %v6273
        %v6380 = vmul.f32 %v6124, %v6283
        %v6381 = vmul.f32 %v6125, %v6293
        %v6382 = vmul.f32 %v6126, %v6303
        %v6383 = vmul.f32 %v6127, %v6313
        %v6384 = vmul.f32 %v6128, %v6323
        %v6385 = vmul.f32 %v6129, %v6333
        %v6386 = vmul.f32 %v6130, %v6343
        %v6387 = vmul.f32 %v6131, %v6353
        %v6388 = vmul.f32 %v6132, %v6363
        %v6389 = vmul.f32 %v6133, %v6373
        %v6391 = vperm.slane %v6068, 0
        %v6393 = vmul.f32 %v6374, %v6391
        %v6394 = vmul.f32 %v6375, %v6391
        %v6395 = vmul.f32 %v6376, %v6391
        %v6396 = vmul.f32 %v6377, %v6391
        %v6397 = vmul.f32 %v6378, %v6391
        %v6398 = vmul.f32 %v6379, %v6391
        %v6399 = vmul.f32 %v6380, %v6391
        %v6400 = vmul.f32 %v6381, %v6391
        %v6401 = vmul.f32 %v6382, %v6391
        %v6402 = vmul.f32 %v6383, %v6391
        %v6403 = vmul.f32 %v6384, %v6391
        %v6404 = vmul.f32 %v6385, %v6391
        %v6405 = vmul.f32 %v6386, %v6391
        %v6406 = vmul.f32 %v6387, %v6391
        %v6407 = vmul.f32 %v6388, %v6391
        %v6408 = vmul.f32 %v6389, %v6391
        %v6410 = vperm.slane %v6069, 0
        %v6412 = vadd.f32 %v6393, %v6410
        %v6413 = vadd.f32 %v6394, %v6410
        %v6414 = vadd.f32 %v6395, %v6410
        %v6415 = vadd.f32 %v6396, %v6410
        %v6416 = vadd.f32 %v6397, %v6410
        %v6417 = vadd.f32 %v6398, %v6410
        %v6418 = vadd.f32 %v6399, %v6410
        %v6419 = vadd.f32 %v6400, %v6410
        %v6420 = vadd.f32 %v6401, %v6410
        %v6421 = vadd.f32 %v6402, %v6410
        %v6422 = vadd.f32 %v6403, %v6410
        %v6423 = vadd.f32 %v6404, %v6410
        %v6424 = vadd.f32 %v6405, %v6410
        %v6425 = vadd.f32 %v6406, %v6410
        %v6426 = vadd.f32 %v6407, %v6410
        %v6427 = vadd.f32 %v6408, %v6410
        %6428 = vst [vmem:[%s763] sm:$0xff] %v6412
        %6429 = vst [vmem:[%s763 + $0x8] sm:$0xff] %v6413
        %6430 = vst [vmem:[%s763 + $0x10] sm:$0xff] %v6414
        %6431 = vst [vmem:[%s763 + $0x18] sm:$0xff] %v6415
        %6432 = vst [vmem:[%s763 + $0x20] sm:$0xff] %v6416
        %6433 = vst [vmem:[%s763 + $0x28] sm:$0xff] %v6417
        %6434 = vst [vmem:[%s763 + $0x30] sm:$0xff] %v6418
        %6435 = vst [vmem:[%s763 + $0x38] sm:$0xff] %v6419
        %6436 = vst [vmem:[%s763 + $0x40] sm:$0xff] %v6420
        %6437 = vst [vmem:[%s763 + $0x48] sm:$0xff] %v6421
        %6438 = vst [vmem:[%s763 + $0x50] sm:$0xff] %v6422
        %6439 = vst [vmem:[%s763 + $0x58] sm:$0xff] %v6423
        %6440 = vst [vmem:[%s763 + $0x60] sm:$0xff] %v6424
        %6441 = vst [vmem:[%s763 + $0x68] sm:$0xff] %v6425
        %6442 = vst [vmem:[%s763 + $0x70] sm:$0xff] %v6426
        %6443 = vst [vmem:[%s763 + $0x78] sm:$0xff] %v6427
        %s6444 = sand.u32 %s462, 1
        %s6445 = scalar_lea.sflag [#allocation6], %s6444
        %s6446 = sand.u32 %s462, 1
        %s6447 = smul.addr %s6446, 128
        %s6448 = scalar_lea.vmem [#allocation18], %s6447
        // Predicated region
        $region125: #{tpu_custom_call.1} parent=91 // pred_check
          %p6449 = pneg %p472
        $region126: #{tpu_custom_call.1} parent=91 // pred_check_branch
          %6451 = sbr.rel (%p6449) target = $region128
        $region127: #{tpu_custom_call.1} parent=91 // pred_region
          %s6452 = smul.u32 16, %s55
          %6454 = vsyncadd %s6445, 0
          %s6455 = smul.addr %s54, 32
          %s6456 = sadd.s32 %s6452, %s6455
          %s6457 = smul.addr %s6456, 8
          %s6458 = scalar_lea.hbm %s19, %s6457
          %s6459 = sshll.u32 %s6448, 4
          %s6460 = int_to_ptr.vmem [resolvable:$true] %s6459
          %s6461 = sshll.u32 %s6458, 4
          %s6462 = int_to_ptr.hbm [resolvable:$true] %s6461
          %6467 = dma.vmem_to_hbm [thread:$0]  %s6460, 2048, %s6462, %s6445, 128, 128, 8
        $region128: #{tpu_custom_call.1} parent=91 // pred_fallthru
          _
      $region92: #{tpu_custom_call.1} parent=5 // pred_fallthru
        _
      %p6468 = scmp.le.s32.totalorder 2, %s45
      // Predicated region
      $region129: #{tpu_custom_call.1} parent=5 // pred_check
        %p6469 = pneg %p6468
      $region130: #{tpu_custom_call.1} parent=5 // pred_check_branch
        %6471 = sbr.rel (%p6469) target = $region132
      $region131: #{tpu_custom_call.1} parent=5 // pred_region
        %s6472 = ssub.s32 %s45, 2
        // Predicated region
        $region133: #{tpu_custom_call.1} parent=131 // pred_check
          %p6473 = pneg %p478
        $region134: #{tpu_custom_call.1} parent=131 // pred_check_branch
          %6475 = sbr.rel (%p6473) target = $region136
        $region135: #{tpu_custom_call.1} parent=131 // pred_region
          %s6476 = sand.u32 %s463, 1
          %s6477 = scalar_lea.sflag [#allocation6], %s6476
          %s6478 = sand.u32 %s463, 1
          %s6479 = smul.addr %s6478, 128
          %s6480 = scalar_lea.vmem [#allocation18], %s6479
          %6482 = dma.done %s6477, 2048
        $region136: #{tpu_custom_call.1} parent=131 // pred_fallthru
          _
      $region132: #{tpu_custom_call.1} parent=5 // pred_fallthru
        _
    $region6: #{tpu_custom_call.1} parent=1 // loop_footer
      %s49 = sadd.s32 1, %s45
    $region7: #{tpu_custom_call.1} parent=1 // loop_footer_branch
      %44 = sbr.rel target = $region3
    $region8: #{tpu_custom_call.1} parent=1 // loop_exit
      _
    %6483 = vsyncpa [#allocation5], 1
    %s6484 = scalar_lea.sflag [#allocation5], 1
    %6485 = vsyncpa %s6484, 1
    %6486 = vsyncpa [#allocation8], 1
    %s6487 = scalar_lea.sflag [#allocation8], 1
    %6488 = vsyncpa %s6487, 1
    %6489 = vsyncpa [#allocation11], 1
    %6490 = vsyncpa [#allocation14], 1
    %6491 = vsyncpa [#allocation17], 1
    %6492 = vsyncpa [#allocation6], 1
    %s6493 = scalar_lea.sflag [#allocation6], 1
    %6494 = vsyncpa %s6493, 1

</llo_original>
